<compile_context>
chip_gen: v7x
topology: tpu7x:2x2x1
jax: 0.10.0
libtpu: 0.0.40
codegen_flags: <defaults>
</compile_context>

<pallas_src>
import functools
import math

import jax
import jax.numpy as jnp
from jax import lax
from jax.experimental import pallas as pl
from jax.experimental.pallas import tpu as pltpu


def _round_up(x, m):
    return ((x + m - 1) // m) * m


def _vmem_capacity_bytes():
    """Physical VMEM of the local chip; conservative fallback (v7x 64 MiB)."""
    try:
        return int(pltpu.get_tpu_info().vmem_capacity_bytes)
    except Exception:
        return 64 * 1024 * 1024


def _choose_hw_tile(HW, C, P_blk, vmem_cap):
    """Pick the HW tile from a VMEM byte budget (generation aware), not from a
    divisor search.  Costs per streamed row: double-buffered f32 feature tile
    (2*C*4 B) plus the in-kernel iota + sampling-matrix temporaries (~P_blk*8 B)."""
    budget = min(vmem_cap // 3, 28 * 1024 * 1024)
    per_row = 2 * C * 4 + P_blk * 8
    max_rows = max(512, budget // per_row)
    hw_tile = min(_round_up(HW, 8), (max_rows // 8) * 8)
    return max(8, min(hw_tile, 32768))


# --------------------------------------------------------------------------
# Pallas kernel: fused point sampling + positional encoding + MLP point head
# --------------------------------------------------------------------------
def _point_head_kernel(coords_ref, feat_ref, pe_ref,
                       w0s_ref, w0c_ref, w0i_ref, b0_ref,
                       *rest, sx, sy, H, W, hw_tile):
    """Grid = (B, n_pblk, K_hw).  Axis 0: batch (parallel).  Axis 1: point
    blocks (parallel; >1 only when B == 1 so v7x's second core gets work).
    Axis 2: flattened H*W tiles of the f32 feature map, reduced ("arbitrary")
    into a (P_blk, C) f32 scratch accumulator via a weight-folded sampling
    matmul.

    coords_ref : (1, P_blk, 2)      box-normalized (x, y) in [0, 1]
    feat_ref   : (1, hw_tile, C)    f32 feature tile (row-major over H, W)
    pe_ref     : (2, ch//2)         positional-encoding gaussian matrix
    w0s/w0c/w0i/b0 : split first Linear (sin / cos / image parts), weights bf16
    rest       : [w_i(bf16), b_i(f32)] middle layers..., wl_T (ncp, ch) bf16,
                 bl (ncp, 1) f32, out_ref (1, ncp, P_blk),
                 acc (P_blk, C) f32, idx_sc (P_blk, 1) i32, wgt_sc (P_blk, 4) f32
    """
    out_ref = rest[-4]
    acc_ref = rest[-3]
    idx_sc = rest[-2]
    wgt_sc = rest[-1]
    wl_ref = rest[-6]
    bl_ref = rest[-5]
    mids = rest[:-6]

    k = pl.program_id(2)
    n_k = pl.num_programs(2)
    P = coords_ref.shape[1]

    # ---- per-(batch, point-block) setup: coordinate math hoisted out of the
    #      HW reduction loop into tiny VMEM scratches.
    @pl.when(k == 0)
    def _():
        coords = coords_ref[0]                              # (P, 2)
        # grid_sample(align_corners=False) source pixel coordinates
        ix = coords[:, 0:1] * sx - 0.5
        iy = coords[:, 1:2] * sy - 0.5
        xb = jnp.clip(jnp.floor(ix).astype(jnp.int32), 0, W - 2)
        yb = jnp.clip(jnp.floor(iy).astype(jnp.int32), 0, H - 2)
        idx_sc[...] = yb * W + xb                           # always in [0, H*W-1]
        xbf = xb.astype(jnp.float32)
        ybf = yb.astype(jnp.float32)
        # relu-clamped bilinear weights: corners outside the feature map get
        # weight exactly 0, reproducing grid_sample's zeros padding.
        wx0 = jnp.maximum(0.0, 1.0 - jnp.abs(ix - xbf))
        wx1 = jnp.maximum(0.0, 1.0 - jnp.abs(ix - (xbf + 1.0)))
        wy0 = jnp.maximum(0.0, 1.0 - jnp.abs(iy - ybf))
        wy1 = jnp.maximum(0.0, 1.0 - jnp.abs(iy - (ybf + 1.0)))
        wgt_sc[:, 0:1] = wx0 * wy0
        wgt_sc[:, 1:2] = wx1 * wy0
        wgt_sc[:, 2:3] = wx0 * wy1
        wgt_sc[:, 3:4] = wx1 * wy1
        acc_ref[...] = jnp.zeros_like(acc_ref)

    # ---- weight-folded sampling matmul over this HW tile.  Each corner is
    #      matched against the global flat index independently, so corners that
    #      straddle a tile boundary are picked up in their own tile.
    f00 = idx_sc[...] - k * hw_tile                         # (P, 1) local base index
    w4 = wgt_sc[...]                                        # (P, 4) corner weights
    iota = lax.broadcasted_iota(jnp.int32, (P, hw_tile), 1)
    samp = jnp.where(iota == f00, w4[:, 0:1], 0.0)
    samp = jnp.where(iota == f00 + 1, w4[:, 1:2], samp)
    samp = jnp.where(iota == f00 + W, w4[:, 2:3], samp)
    samp = jnp.where(iota == f00 + (W + 1), w4[:, 3:4], samp)
    acc_ref[...] += jnp.dot(samp, feat_ref[0],
                            preferred_element_type=jnp.float32)      # (P, C) f32

    # ---- finalize: positional encoding + MLP (bf16 inputs, f32 accumulate)
    @pl.when(k == n_k - 1)
    def _():
        coords = coords_ref[0]
        pe = pe_ref[...]
        loc = 2.0 * coords - 1.0
        # positional encoding via a VPU broadcast-FMA instead of a K=2 matmul
        proj = (2.0 * math.pi) * (loc[:, 0:1] * pe[0:1, :] + loc[:, 1:2] * pe[1:2, :])
        sinp = jnp.sin(proj).astype(jnp.bfloat16)
        cosp = jnp.cos(proj).astype(jnp.bfloat16)
        sampled = acc_ref[...].astype(jnp.bfloat16)

        # first Linear split over [sin | cos | image] — no in-kernel concat
        h = (jnp.dot(sinp, w0s_ref[...], preferred_element_type=jnp.float32)
             + jnp.dot(cosp, w0c_ref[...], preferred_element_type=jnp.float32)
             + jnp.dot(sampled, w0i_ref[...], preferred_element_type=jnp.float32)
             + b0_ref[...])
        h = jnp.maximum(h, 0.0)                  # ReLU; Dropout(0.1) = id (eval)

        for i in range(len(mids) // 2):
            w = mids[2 * i][...]
            b = mids[2 * i + 1][...]
            h = jnp.maximum(
                jnp.dot(h.astype(jnp.bfloat16), w,
                        preferred_element_type=jnp.float32) + b, 0.0)

        # last Linear, written lane-dense as (num_classes_pad, P_blk)
        out = lax.dot_general(wl_ref[...], h.astype(jnp.bfloat16),
                              dimension_numbers=(((1,), (1,)), ((), ())),
                              preferred_element_type=jnp.float32)
        out_ref[0] = out + bl_ref[...]


def build_features(features):
    """(B, C, H, W) -> (B, H*W, C) float32, row-major over (H, W)."""
    B, C, H, W = features.shape
    return jnp.transpose(features, (0, 2, 3, 1)).reshape(B, H * W, C).astype(jnp.float32)


def _point_head_pallas(point_coords, feat_hw, params, *, H, W, C, sx, sy):
    """point_coords: (B, P, 2); feat_hw: (B, H*W, C) f32 -> (B, num_classes, P)."""
    B, P, _ = point_coords.shape
    HW = feat_hw.shape[1]
    ws, bs = params["ws"], params["bs"]
    pe = params["pe"].astype(jnp.float32)
    ch = pe.shape[1] * 2
    nc = ws[-1].shape[1]

    P_pad = _round_up(P, 128)
    nc_pad = _round_up(nc, 8)

    # v7x megacore: when B == 1, split the points over a second parallel axis.
    n_pblk = 2 if (B == 1 and P_pad >= 256 and P_pad % 256 == 0) else 1
    P_blk = P_pad // n_pblk

    vmem_cap = _vmem_capacity_bytes()
    hw_tile = _choose_hw_tile(HW, C, P_blk, vmem_cap)
    HW_pad = _round_up(HW, hw_tile)
    K = HW_pad // hw_tile

    coords_p = point_coords.astype(jnp.float32)
    if P_pad != P:
        coords_p = jnp.pad(coords_p, ((0, 0), (0, P_pad - P), (0, 0)))
    feat_p = feat_hw
    if HW_pad != HW:
        # zero rows are never selected (flat index < HW), so padding is exact
        feat_p = jnp.pad(feat_hw, ((0, 0), (0, HW_pad - HW), (0, 0)))

    # split / pad / bf16-cast the MLP parameters (zero padding is exact)
    w0 = ws[0]
    w0s = w0[:ch // 2].astype(jnp.bfloat16)
    w0c = w0[ch // 2:ch].astype(jnp.bfloat16)
    w0i = w0[ch:ch + C].astype(jnp.bfloat16)
    b0 = bs[0].reshape(1, ch).astype(jnp.float32)
    wl_t = jnp.zeros((nc_pad, ch), jnp.float32).at[:nc].set(ws[-1].T).astype(jnp.bfloat16)
    bl_c = jnp.zeros((nc_pad, 1), jnp.float32).at[:nc, 0].set(bs[-1])

    args = [coords_p, feat_p, pe, w0s, w0c, w0i, b0]
    in_specs = [
        pl.BlockSpec((1, P_blk, 2), lambda b, pb, k: (b, pb, 0)),
        pl.BlockSpec((1, hw_tile, C), lambda b, pb, k: (b, k, 0)),
        pl.BlockSpec(pe.shape, lambda b, pb, k: (0, 0)),
        pl.BlockSpec(w0s.shape, lambda b, pb, k: (0, 0)),
        pl.BlockSpec(w0c.shape, lambda b, pb, k: (0, 0)),
        pl.BlockSpec(w0i.shape, lambda b, pb, k: (0, 0)),
        pl.BlockSpec(b0.shape, lambda b, pb, k: (0, 0)),
    ]
    for w, bias in zip(ws[1:-1], bs[1:-1]):
        wb = w.astype(jnp.bfloat16)
        b2d = bias.reshape(1, -1).astype(jnp.float32)
        args += [wb, b2d]
        in_specs += [pl.BlockSpec(wb.shape, lambda b, pb, k: (0, 0)),
                     pl.BlockSpec(b2d.shape, lambda b, pb, k: (0, 0))]
    args += [wl_t, bl_c]
    in_specs += [pl.BlockSpec(wl_t.shape, lambda b, pb, k: (0, 0)),
                 pl.BlockSpec(bl_c.shape, lambda b, pb, k: (0, 0))]

    n_mid = len(ws) - 2
    weight_bytes = sum(int(a.size) * a.dtype.itemsize for a in args[2:])
    samp_flops = 2 * B * n_pblk * P_blk * HW_pad * C
    mlp_flops = 2 * B * P_pad * (ch * ch + C * ch + n_mid * ch * ch + ch * nc_pad)
    bytes_accessed = (B * n_pblk * HW_pad * C * 4          # feature stream
                      + int(coords_p.size) * 4
                      + B * nc_pad * P_pad * 4
                      + weight_bytes)
    cost = pl.CostEstimate(flops=int(samp_flops + mlp_flops),
                           transcendentals=int(B * P_pad * ch),
                           bytes_accessed=int(bytes_accessed))

    # explicit, generation-aware scoped-VMEM limit with headroom
    need = (2 * hw_tile * C * 4                 # double-buffered feature tile
            + P_blk * hw_tile * 8               # iota + sampling-matrix temporaries
            + P_blk * C * 4                     # accumulator
            + 2 * nc_pad * P_blk * 4            # double-buffered output block
            + 2 * P_blk * 2 * 4 + P_blk * 8     # coords + small scratches
            + weight_bytes)
    vmem_limit = int(min(0.9 * vmem_cap, max(32 * 1024 * 1024, 2 * need)))

    kernel = functools.partial(_point_head_kernel, sx=sx, sy=sy, H=H, W=W,
                               hw_tile=hw_tile)
    out = pl.pallas_call(
        kernel,
        out_shape=jax.ShapeDtypeStruct((B, nc_pad, P_pad), jnp.float32),
        grid=(B, n_pblk, K),
        in_specs=in_specs,
        out_specs=pl.BlockSpec((1, nc_pad, P_blk), lambda b, pb, k: (b, 0, pb)),
        scratch_shapes=[pltpu.VMEM((P_blk, C), jnp.float32),
                        pltpu.VMEM((P_blk, 1), jnp.int32),
                        pltpu.VMEM((P_blk, 4), jnp.float32)],
        compiler_params=pltpu.CompilerParams(
            dimension_semantics=("parallel", "parallel", "arbitrary"),
            vmem_limit_bytes=vmem_limit),
        cost_estimate=cost,
    )(*args)
    return out[:, :nc, :P]          # already (B, num_classes, P): no transpose


# --------------------------------------------------------------------------
# Plain-JAX glue (matches the PyTorch helper functions)
# --------------------------------------------------------------------------
def regular_grid_coords(R, H, W):
    """generate_regular_grid_point_coords: (R, H*W, 2), (x, y) = ((j+.5)/W, (i+.5)/H)."""
    xs = (jnp.arange(W, dtype=jnp.float32) + 0.5) / W
    ys = (jnp.arange(H, dtype=jnp.float32) + 0.5) / H
    gx, gy = jnp.meshgrid(xs, ys)                       # (H, W) each, 'xy' indexing
    coords = jnp.stack([gx, gy], axis=-1).reshape(1, H * W, 2)
    return jnp.broadcast_to(coords, (R, H * W, 2))


def upsample2x_bilinear(x):
    """F.interpolate(x, scale_factor=2, mode='bilinear', align_corners=False)."""
    B, C, H, W = x.shape

    def src_idx(out_size, in_size):
        i = jnp.arange(out_size, dtype=jnp.float32)
        src = jnp.maximum((i + 0.5) * (in_size / out_size) - 0.5, 0.0)
        i0 = jnp.floor(src).astype(jnp.int32)
        i0 = jnp.minimum(i0, in_size - 1)
        i1 = jnp.minimum(i0 + 1, in_size - 1)
        w1 = src - i0.astype(jnp.float32)
        return i0, i1, 1.0 - w1, w1

    y0, y1, wy0, wy1 = src_idx(2 * H, H)
    x0, x1, wx0, wx1 = src_idx(2 * W, W)
    rows = (x[:, :, y0, :] * wy0[None, None, :, None] +
            x[:, :, y1, :] * wy1[None, None, :, None])          # (B, C, 2H, W)
    return rows[:, :, :, x0] * wx0 + rows[:, :, :, x1] * wx1    # (B, C, 2H, 2W)


def calculate_uncertainty(logits):
    if logits.shape[1] == 1:
        g = logits
    else:
        t = jnp.moveaxis(logits, 1, -1)                         # (R, H, W, C)
        top2 = lax.top_k(t, 2)[0]
        g = jnp.moveaxis(top2[..., 0:1] - top2[..., 1:2], -1, 1)
    return -jnp.abs(g)


def uncertain_point_coords_on_grid(uncertainty_map, num_points):
    R, _, H, W = uncertainty_map.shape
    num_points = min(H * W, num_points)
    _, point_indices = lax.top_k(uncertainty_map.reshape(R, H * W), num_points)
    w_step, h_step = 1.0 / W, 1.0 / H
    px = w_step / 2.0 + (point_indices % W).astype(jnp.float32) * w_step
    py = h_step / 2.0 + (point_indices // W).astype(jnp.float32) * h_step
    return point_indices, jnp.stack([px, py], axis=-1)


def subdivision_inference(features, params, cfg):
    """SimplifiedPointRendMaskHead._subdivision_inference (eval mode)."""
    B, C_img, H, W = features.shape
    assert H >= 2 and W >= 2, "feature map must be at least 2x2 for bilinear sampling"
    scale = cfg["scale"]
    fs = int(2 ** cfg["subdivision_steps"] * scale)
    num_points = (H * W) // (fs * fs)
    nc = cfg["num_classes"]

    # constants reproducing point_sample_fine_grained_features' coordinate math
    Wn, Hn = W / scale, H / scale
    assert Wn > 1 and Hn > 1, "scaled feature map must be larger than 1x1"
    sx = (Wn - 2.0) / (Wn - 1.0) * W
    sy = (Hn - 2.0) / (Hn - 1.0) * H

    feat_hw = build_features(features)             # (B, H*W, C) f32, built once

    h0, w0 = H // fs, W // fs
    mask_logits = None
    # TODO(synk): fuse the whole subdivision loop (upsample / top-k / scatter) into a
    # single pallas_call with scalar-prefetched point indices so the feature map and
    # the MLP weights are streamed from HBM once per forward instead of once per step.
    for _ in range(cfg["subdivision_steps"] + 1):
        if mask_logits is None:
            point_coords = regular_grid_coords(B, h0, w0)
            point_indices = None
        else:
            mask_logits = upsample2x_bilinear(mask_logits)
            unc = calculate_uncertainty(mask_logits)
            point_indices, point_coords = uncertain_point_coords_on_grid(unc, num_points)

        point_logits = _point_head_pallas(point_coords, feat_hw, params,
                                          H=H, W=W, C=C_img, sx=sx, sy=sy)  # (B, nc, P)

        if mask_logits is None:
            mask_logits = point_logits.reshape(B, nc, h0, w0)
        else:
            R, Cc, Hm, Wm = mask_logits.shape
            flat = mask_logits.reshape(R, Cc, Hm * Wm)
            bi = jnp.arange(R)[:, None, None]
            ci = jnp.arange(Cc)[None, :, None]
            pi = point_indices[:, None, :]
            flat = flat.at[bi, ci, pi].set(point_logits)
            mask_logits = flat.reshape(R, Cc, Hm, Wm)
    return mask_logits


# --------------------------------------------------------------------------
# Pure-JAX reference of the point head (for a sanity check only)
# --------------------------------------------------------------------------
def _ref_point_head(features, point_coords, params, scale):
    B, C, H, W = features.shape
    Wn, Hn = W / scale, H / scale
    cx = point_coords[..., 0] * (Wn - 2.0) / (Wn - 1.0)
    cy = point_coords[..., 1] * (Hn - 2.0) / (Hn - 1.0)
    ix = cx * W - 0.5
    iy = cy * H - 0.5
    x0 = jnp.floor(ix)
    y0 = jnp.floor(iy)
    sampled = 0.0
    for dx, dy in ((0, 0), (1, 0), (0, 1), (1, 1)):
        xc, yc = x0 + dx, y0 + dy
        wgt = (1.0 - jnp.abs(ix - xc)) * (1.0 - jnp.abs(iy - yc))
        valid = ((xc >= 0) & (xc <= W - 1) & (yc >= 0) & (yc <= H - 1)).astype(jnp.float32)
        xi = jnp.clip(xc, 0, W - 1).astype(jnp.int32)
        yi = jnp.clip(yc, 0, H - 1).astype(jnp.int32)
        vals = features[jnp.arange(B)[:, None], :, yi, xi]        # (B, P, C)
        sampled = sampled + (wgt * valid)[..., None] * vals
    loc = 2.0 * point_coords - 1.0
    proj = 2.0 * math.pi * (loc @ params["pe"])
    pe = jnp.concatenate([jnp.sin(proj), jnp.cos(proj)], axis=-1)
    h = jnp.concatenate([pe, sampled], axis=-1)
    for i, (w, b) in enumerate(zip(params["ws"], params["bs"])):
        h = h @ w + b
        if i < len(params["ws"]) - 1:
            h = jnp.maximum(h, 0.0)
    return jnp.transpose(h, (0, 2, 1))


# --------------------------------------------------------------------------
def init_params(key, cfg):
    ch, nc = cfg["channels"], cfg["num_classes"]
    in_ch = cfg["in_channels"] + ch          # image features + positional enc.
    dims = [in_ch] + [ch] * cfg["num_layers"] + [nc]
    keys = jax.random.split(key, 2 * (len(dims) - 1) + 1)
    pe = jax.random.normal(keys[0], (2, ch // 2), jnp.float32)
    ws, bs = [], []
    for i in range(len(dims) - 1):
        ws.append(0.1 * jax.random.normal(keys[2 * i + 1], (dims[i], dims[i + 1]), jnp.float32))
        bs.append(0.01 * jax.random.normal(keys[2 * i + 2], (dims[i + 1],), jnp.float32))
    return {"pe": pe, "ws": ws, "bs": bs}


if __name__ == "__main__":
    B, C_in, H, W = 2, 4, 16, 16
    cfg = dict(in_channels=C_in, train_num_points=16, subdivision_steps=2,
               scale=1.0, num_layers=2, channels=32, num_classes=1,
               image_feature_enabled=True, positional_encoding_enabled=True)

    key = jax.random.PRNGKey(0)
    kf, kp, kc = jax.random.split(key, 3)
    features = jax.random.normal(kf, (B, C_in, H, W), jnp.float32)
    params = init_params(kp, cfg)

    # full subdivision inference under one jit (3 fused point-head launches)
    run = jax.jit(functools.partial(subdivision_inference, cfg=cfg))
    out = jax.block_until_ready(run(features, params))
    assert out.shape == (B, cfg["num_classes"], H, W)
    assert bool(jnp.all(jnp.isfinite(out)))

    # Sanity check 1: kernel point head vs pure-JAX reference at step-0 coords.
    fs = int(2 ** cfg["subdivision_steps"] * cfg["scale"])
    coords0 = regular_grid_coords(B, H // fs, W // fs)
    Wn, Hn = W / cfg["scale"], H / cfg["scale"]
    sx = (Wn - 2.0) / (Wn - 1.0) * W
    sy = (Hn - 2.0) / (Hn - 1.0) * H
    feat_hw = build_features(features)
    k_out = _point_head_pallas(coords0, feat_hw, params, H=H, W=W, C=C_in, sx=sx, sy=sy)
    r_out = _ref_point_head(features, coords0, params, cfg["scale"])
    k_out = jax.block_until_ready(k_out)
    err = float(jnp.max(jnp.abs(k_out - r_out)))
    tol = 5e-2 * max(1.0, float(jnp.max(jnp.abs(r_out))))
    assert err < tol, f"kernel/reference mismatch: {err}"

    # Sanity check 2: B == 1 path with 2 parallel point blocks (v7x megacore path).
    coords1 = jax.random.uniform(kc, (1, 256, 2), jnp.float32)
    k1 = _point_head_pallas(coords1, feat_hw[:1], params, H=H, W=W, C=C_in, sx=sx, sy=sy)
    r1 = _ref_point_head(features[:1], coords1, params, cfg["scale"])
    k1 = jax.block_until_ready(k1)
    err1 = float(jnp.max(jnp.abs(k1 - r1)))
    tol1 = 5e-2 * max(1.0, float(jnp.max(jnp.abs(r1))))
    assert err1 < tol1, f"kernel/reference mismatch (B=1 path): {err1}"

    print("KERNEL_OK")
</pallas_src>

<mosaic_0001>
module attributes {stable_mosaic.version = 11 : i64} {
  func.func @_point_head_kernel(%arg0: i32, %arg1: i32, %arg2: i32, %arg3: memref<1x128x2xf32, #tpu.memory_space<vmem>>, %arg4: memref<1x256x4xf32, #tpu.memory_space<vmem>>, %arg5: memref<2x16xf32, #tpu.memory_space<vmem>>, %arg6: memref<16x32xbf16, #tpu.memory_space<vmem>>, %arg7: memref<16x32xbf16, #tpu.memory_space<vmem>>, %arg8: memref<4x32xbf16, #tpu.memory_space<vmem>>, %arg9: memref<1x32xf32, #tpu.memory_space<vmem>>, %arg10: memref<32x32xbf16, #tpu.memory_space<vmem>>, %arg11: memref<1x32xf32, #tpu.memory_space<vmem>>, %arg12: memref<8x32xbf16, #tpu.memory_space<vmem>>, %arg13: memref<8x1xf32, #tpu.memory_space<vmem>>, %arg14: memref<1x8x128xf32, #tpu.memory_space<vmem>>, %arg15: memref<128x4xf32, #tpu.memory_space<vmem>>, %arg16: memref<128x1xi32, #tpu.memory_space<vmem>>, %arg17: memref<128x4xf32, #tpu.memory_space<vmem>>) attributes {dimension_semantics = [#tpu.dimension_semantics<parallel>, #tpu.dimension_semantics<parallel>, #tpu.dimension_semantics<arbitrary>], iteration_bounds = array<i64: 2, 1, 1>, scalar_prefetch = 0 : i64, scratch_operands = 3 : i64, tpu.core_type = #tpu.core_type<tc>, window_params = [{transform_indices = @transform_0, window_bounds = array<i64: 1, 128, 2>}, {transform_indices = @transform_1, window_bounds = array<i64: 1, 256, 4>}, {pipeline_mode = #tpu.pipeline_mode<synchronous>, transform_indices = @transform_2, window_bounds = array<i64: 2, 16>}, {pipeline_mode = #tpu.pipeline_mode<synchronous>, transform_indices = @transform_3, window_bounds = array<i64: 16, 32>}, {pipeline_mode = #tpu.pipeline_mode<synchronous>, transform_indices = @transform_4, window_bounds = array<i64: 16, 32>}, {pipeline_mode = #tpu.pipeline_mode<synchronous>, transform_indices = @transform_5, window_bounds = array<i64: 4, 32>}, {pipeline_mode = #tpu.pipeline_mode<synchronous>, transform_indices = @transform_6, window_bounds = array<i64: 1, 32>}, {pipeline_mode = #tpu.pipeline_mode<synchronous>, transform_indices = @transform_7, window_bounds = array<i64: 32, 32>}, {pipeline_mode = #tpu.pipeline_mode<synchronous>, transform_indices = @transform_8, window_bounds = array<i64: 1, 32>}, {pipeline_mode = #tpu.pipeline_mode<synchronous>, transform_indices = @transform_9, window_bounds = array<i64: 8, 32>}, {pipeline_mode = #tpu.pipeline_mode<synchronous>, transform_indices = @transform_10, window_bounds = array<i64: 8, 1>}, {transform_indices = @transform_11, window_bounds = array<i64: 1, 8, 128>}]} {
    %c0_i32 = arith.constant 0 : i32
    %0 = arith.cmpi eq, %arg2, %c0_i32 : i32
    %1 = arith.extui %0 : i1 to i32
    %c0_i32_0 = arith.constant 0 : i32
    %2 = arith.cmpi ne, %1, %c0_i32_0 : i32
    scf.if %2 {
      %c0_14 = arith.constant 0 : index
      %c0_15 = arith.constant 0 : index
      %c0_16 = arith.constant 0 : index
      %49 = vector.load %arg3[%c0_14, %c0_15, %c0_16] : memref<1x128x2xf32, #tpu.memory_space<vmem>>, vector<1x128x2xf32>
      %50 = vector.shape_cast %49 : vector<1x128x2xf32> to vector<128x2xf32>
      %51 = vector.extract_strided_slice %50 {offsets = [0, 0], sizes = [128, 1], strides = [1, 1]} : vector<128x2xf32> to vector<128x1xf32>
      %cst_17 = arith.constant 14.9333334 : f32
      %52 = vector.broadcast %cst_17 : f32 to vector<128x1xf32>
      %53 = arith.mulf %51, %52 : vector<128x1xf32>
      %cst_18 = arith.constant 5.000000e-01 : f32
      %54 = vector.broadcast %cst_18 : f32 to vector<128x1xf32>
      %55 = arith.subf %53, %54 : vector<128x1xf32>
      %56 = vector.extract_strided_slice %50 {offsets = [0, 1], sizes = [128, 1], strides = [1, 1]} : vector<128x2xf32> to vector<128x1xf32>
      %cst_19 = arith.constant 14.9333334 : f32
      %57 = vector.broadcast %cst_19 : f32 to vector<128x1xf32>
      %58 = arith.mulf %56, %57 : vector<128x1xf32>
      %cst_20 = arith.constant 5.000000e-01 : f32
      %59 = vector.broadcast %cst_20 : f32 to vector<128x1xf32>
      %60 = arith.subf %58, %59 : vector<128x1xf32>
      %61 = math.floor %55 : vector<128x1xf32>
      %62 = arith.fptosi %61 : vector<128x1xf32> to vector<128x1xi32>
      %c0_i32_21 = arith.constant 0 : i32
      %c14_i32 = arith.constant 14 : i32
      %63 = vector.broadcast %c0_i32_21 : i32 to vector<128x1xi32>
      %64 = arith.maxsi %63, %62 : vector<128x1xi32>
      %65 = vector.broadcast %c14_i32 : i32 to vector<128x1xi32>
      %66 = arith.minsi %65, %64 : vector<128x1xi32>
      %67 = math.floor %60 : vector<128x1xf32>
      %68 = arith.fptosi %67 : vector<128x1xf32> to vector<128x1xi32>
      %c0_i32_22 = arith.constant 0 : i32
      %c14_i32_23 = arith.constant 14 : i32
      %69 = vector.broadcast %c0_i32_22 : i32 to vector<128x1xi32>
      %70 = arith.maxsi %69, %68 : vector<128x1xi32>
      %71 = vector.broadcast %c14_i32_23 : i32 to vector<128x1xi32>
      %72 = arith.minsi %71, %70 : vector<128x1xi32>
      %c16_i32_24 = arith.constant 16 : i32
      %73 = vector.broadcast %c16_i32_24 : i32 to vector<128x1xi32>
      %74 = arith.muli %72, %73 : vector<128x1xi32>
      %75 = arith.addi %74, %66 : vector<128x1xi32>
      %c0_25 = arith.constant 0 : index
      %c0_26 = arith.constant 0 : index
      %76 = vector.load %arg16[%c0_25, %c0_26] : memref<128x1xi32, #tpu.memory_space<vmem>>, vector<128x1xi32>
      tpu.vector_store %arg16[%c0_25, %c0_26], %75 {strides = array<i32>} : memref<128x1xi32, #tpu.memory_space<vmem>>, vector<128x1xi32>,
      %77 = arith.sitofp %66 : vector<128x1xi32> to vector<128x1xf32>
      %78 = arith.sitofp %72 : vector<128x1xi32> to vector<128x1xf32>
      %79 = arith.subf %55, %77 : vector<128x1xf32>
      %80 = math.absf %79 : vector<128x1xf32>
      %cst_27 = arith.constant 1.000000e+00 : f32
      %81 = vector.broadcast %cst_27 : f32 to vector<128x1xf32>
      %82 = arith.subf %81, %80 : vector<128x1xf32>
      %cst_28 = arith.constant 0.000000e+00 : f32
      %83 = vector.broadcast %cst_28 : f32 to vector<128x1xf32>
      %84 = arith.maximumf %83, %82 : vector<128x1xf32>
      %cst_29 = arith.constant 1.000000e+00 : f32
      %85 = vector.broadcast %cst_29 : f32 to vector<128x1xf32>
      %86 = arith.addf %77, %85 : vector<128x1xf32>
      %87 = arith.subf %55, %86 : vector<128x1xf32>
      %88 = math.absf %87 : vector<128x1xf32>
      %cst_30 = arith.constant 1.000000e+00 : f32
      %89 = vector.broadcast %cst_30 : f32 to vector<128x1xf32>
      %90 = arith.subf %89, %88 : vector<128x1xf32>
      %cst_31 = arith.constant 0.000000e+00 : f32
      %91 = vector.broadcast %cst_31 : f32 to vector<128x1xf32>
      %92 = arith.maximumf %91, %90 : vector<128x1xf32>
      %93 = arith.subf %60, %78 : vector<128x1xf32>
      %94 = math.absf %93 : vector<128x1xf32>
      %cst_32 = arith.constant 1.000000e+00 : f32
      %95 = vector.broadcast %cst_32 : f32 to vector<128x1xf32>
      %96 = arith.subf %95, %94 : vector<128x1xf32>
      %cst_33 = arith.constant 0.000000e+00 : f32
      %97 = vector.broadcast %cst_33 : f32 to vector<128x1xf32>
      %98 = arith.maximumf %97, %96 : vector<128x1xf32>
      %cst_34 = arith.constant 1.000000e+00 : f32
      %99 = vector.broadcast %cst_34 : f32 to vector<128x1xf32>
      %100 = arith.addf %78, %99 : vector<128x1xf32>
      %101 = arith.subf %60, %100 : vector<128x1xf32>
      %102 = math.absf %101 : vector<128x1xf32>
      %cst_35 = arith.constant 1.000000e+00 : f32
      %103 = vector.broadcast %cst_35 : f32 to vector<128x1xf32>
      %104 = arith.subf %103, %102 : vector<128x1xf32>
      %cst_36 = arith.constant 0.000000e+00 : f32
      %105 = vector.broadcast %cst_36 : f32 to vector<128x1xf32>
      %106 = arith.maximumf %105, %104 : vector<128x1xf32>
      %107 = arith.mulf %84, %98 : vector<128x1xf32>
      %c0_37 = arith.constant 0 : index
      %c0_38 = arith.constant 0 : index
      %108 = vector.load %arg17[%c0_37, %c0_38] : memref<128x4xf32, #tpu.memory_space<vmem>>, vector<128x1xf32>
      tpu.vector_store %arg17[%c0_37, %c0_38], %107 {strides = array<i32>} : memref<128x4xf32, #tpu.memory_space<vmem>>, vector<128x1xf32>,
      %109 = arith.mulf %92, %98 : vector<128x1xf32>
      %c0_39 = arith.constant 0 : index
      %c1 = arith.constant 1 : index
      %110 = vector.load %arg17[%c0_39, %c1] : memref<128x4xf32, #tpu.memory_space<vmem>>, vector<128x1xf32>
      tpu.vector_store %arg17[%c0_39, %c1], %109 {strides = array<i32>} : memref<128x4xf32, #tpu.memory_space<vmem>>, vector<128x1xf32>,
      %111 = arith.mulf %84, %106 : vector<128x1xf32>
      %c0_40 = arith.constant 0 : index
      %c2 = arith.constant 2 : index
      %112 = vector.load %arg17[%c0_40, %c2] : memref<128x4xf32, #tpu.memory_space<vmem>>, vector<128x1xf32>
      tpu.vector_store %arg17[%c0_40, %c2], %111 {strides = array<i32>} : memref<128x4xf32, #tpu.memory_space<vmem>>, vector<128x1xf32>,
      %113 = arith.mulf %92, %106 : vector<128x1xf32>
      %c0_41 = arith.constant 0 : index
      %c3 = arith.constant 3 : index
      %114 = vector.load %arg17[%c0_41, %c3] : memref<128x4xf32, #tpu.memory_space<vmem>>, vector<128x1xf32>
      tpu.vector_store %arg17[%c0_41, %c3], %113 {strides = array<i32>} : memref<128x4xf32, #tpu.memory_space<vmem>>, vector<128x1xf32>,
      %cst_42 = arith.constant 0.000000e+00 : f32
      %115 = vector.broadcast %cst_42 : f32 to vector<128x4xf32>
      %c0_43 = arith.constant 0 : index
      %c0_44 = arith.constant 0 : index
      %116 = vector.load %arg15[%c0_43, %c0_44] : memref<128x4xf32, #tpu.memory_space<vmem>>, vector<128x4xf32>
      tpu.vector_store %arg15[%c0_43, %c0_44], %115 {strides = array<i32>} : memref<128x4xf32, #tpu.memory_space<vmem>>, vector<128x4xf32>,
    } else {
    }
    %c0 = arith.constant 0 : index
    %c0_1 = arith.constant 0 : index
    %3 = vector.load %arg16[%c0, %c0_1] : memref<128x1xi32, #tpu.memory_space<vmem>>, vector<128x1xi32>
    %c256_i32 = arith.constant 256 : i32
    %4 = arith.muli %arg2, %c256_i32 : i32
    %5 = vector.broadcast %4 : i32 to vector<128x1xi32>
    %6 = arith.subi %3, %5 : vector<128x1xi32>
    %c0_2 = arith.constant 0 : index
    %c0_3 = arith.constant 0 : index
    %7 = vector.load %arg17[%c0_2, %c0_3] : memref<128x4xf32, #tpu.memory_space<vmem>>, vector<128x4xf32>
    %8 = tpu.iota {dimensions = array<i32: 1>} : vector<128x256xi32>
    %9 = vector.broadcast %6 : vector<128x1xi32> to vector<128x256xi32>
    %10 = arith.cmpi eq, %8, %9 : vector<128x256xi32>
    %11 = vector.extract_strided_slice %7 {offsets = [0, 0], sizes = [128, 1], strides = [1, 1]} : vector<128x4xf32> to vector<128x1xf32>
    %cst = arith.constant 0.000000e+00 : f32
    %12 = vector.shape_cast %11 : vector<128x1xf32> to vector<128x1xf32>
    %13 = vector.broadcast %12 : vector<128x1xf32> to vector<128x256xf32>
    %14 = vector.broadcast %cst : f32 to vector<128x256xf32>
    %15 = arith.select %10, %13, %14 : vector<128x256xi1>, vector<128x256xf32>
    %c1_i32 = arith.constant 1 : i32
    %16 = vector.broadcast %c1_i32 : i32 to vector<128x1xi32>
    %17 = arith.addi %6, %16 : vector<128x1xi32>
    %18 = vector.broadcast %17 : vector<128x1xi32> to vector<128x256xi32>
    %19 = arith.cmpi eq, %8, %18 : vector<128x256xi32>
    %20 = vector.extract_strided_slice %7 {offsets = [0, 1], sizes = [128, 1], strides = [1, 1]} : vector<128x4xf32> to vector<128x1xf32>
    %21 = vector.shape_cast %20 : vector<128x1xf32> to vector<128x1xf32>
    %22 = vector.broadcast %21 : vector<128x1xf32> to vector<128x256xf32>
    %23 = arith.select %19, %22, %15 : vector<128x256xi1>, vector<128x256xf32>
    %c16_i32 = arith.constant 16 : i32
    %24 = vector.broadcast %c16_i32 : i32 to vector<128x1xi32>
    %25 = arith.addi %6, %24 : vector<128x1xi32>
    %26 = vector.broadcast %25 : vector<128x1xi32> to vector<128x256xi32>
    %27 = arith.cmpi eq, %8, %26 : vector<128x256xi32>
    %28 = vector.extract_strided_slice %7 {offsets = [0, 2], sizes = [128, 1], strides = [1, 1]} : vector<128x4xf32> to vector<128x1xf32>
    %29 = vector.shape_cast %28 : vector<128x1xf32> to vector<128x1xf32>
    %30 = vector.broadcast %29 : vector<128x1xf32> to vector<128x256xf32>
    %31 = arith.select %27, %30, %23 : vector<128x256xi1>, vector<128x256xf32>
    %c17_i32 = arith.constant 17 : i32
    %32 = vector.broadcast %c17_i32 : i32 to vector<128x1xi32>
    %33 = arith.addi %6, %32 : vector<128x1xi32>
    %34 = vector.broadcast %33 : vector<128x1xi32> to vector<128x256xi32>
    %35 = arith.cmpi eq, %8, %34 : vector<128x256xi32>
    %36 = vector.extract_strided_slice %7 {offsets = [0, 3], sizes = [128, 1], strides = [1, 1]} : vector<128x4xf32> to vector<128x1xf32>
    %37 = vector.shape_cast %36 : vector<128x1xf32> to vector<128x1xf32>
    %38 = vector.broadcast %37 : vector<128x1xf32> to vector<128x256xf32>
    %39 = arith.select %35, %38, %31 : vector<128x256xi1>, vector<128x256xf32>
    %c0_4 = arith.constant 0 : index
    %c0_5 = arith.constant 0 : index
    %40 = vector.load %arg15[%c0_4, %c0_5] : memref<128x4xf32, #tpu.memory_space<vmem>>, vector<128x4xf32>
    %c0_6 = arith.constant 0 : index
    %c0_7 = arith.constant 0 : index
    %c0_8 = arith.constant 0 : index
    %41 = vector.load %arg4[%c0_6, %c0_7, %c0_8] : memref<1x256x4xf32, #tpu.memory_space<vmem>>, vector<1x256x4xf32>
    %42 = vector.shape_cast %41 : vector<1x256x4xf32> to vector<256x4xf32>
    %cst_9 = arith.constant dense<0.000000e+00> : vector<128x4xf32>
    %43 = tpu.matmul %39, %42, %cst_9 {dimension_numbers = #tpu.dot_dimension_numbers<[1], [0], [0], [1], [0, 0, 1, 1], [], []>} : vector<128x256xf32>, vector<256x4xf32>, vector<128x4xf32> -> vector<128x4xf32>
    %44 = arith.addf %40, %43 : vector<128x4xf32>
    %c0_10 = arith.constant 0 : index
    %c0_11 = arith.constant 0 : index
    %45 = vector.load %arg15[%c0_10, %c0_11] : memref<128x4xf32, #tpu.memory_space<vmem>>, vector<128x4xf32>
    tpu.vector_store %arg15[%c0_10, %c0_11], %44 {strides = array<i32>} : memref<128x4xf32, #tpu.memory_space<vmem>>, vector<128x4xf32>,
    %c0_i32_12 = arith.constant 0 : i32
    %46 = arith.cmpi eq, %arg2, %c0_i32_12 : i32
    %47 = arith.extui %46 : i1 to i32
    %c0_i32_13 = arith.constant 0 : i32
    %48 = arith.cmpi ne, %47, %c0_i32_13 : i32
    scf.if %48 {
      %c0_14 = arith.constant 0 : index
      %c0_15 = arith.constant 0 : index
      %c0_16 = arith.constant 0 : index
      %49 = vector.load %arg3[%c0_14, %c0_15, %c0_16] : memref<1x128x2xf32, #tpu.memory_space<vmem>>, vector<1x128x2xf32>
      %50 = vector.shape_cast %49 : vector<1x128x2xf32> to vector<128x2xf32>
      %c0_17 = arith.constant 0 : index
      %c0_18 = arith.constant 0 : index
      %51 = vector.load %arg5[%c0_17, %c0_18] : memref<2x16xf32, #tpu.memory_space<vmem>>, vector<2x16xf32>
      %cst_19 = arith.constant 2.000000e+00 : f32
      %52 = vector.broadcast %cst_19 : f32 to vector<128x2xf32>
      %53 = arith.mulf %52, %50 : vector<128x2xf32>
      %cst_20 = arith.constant 1.000000e+00 : f32
      %54 = vector.broadcast %cst_20 : f32 to vector<128x2xf32>
      %55 = arith.subf %53, %54 : vector<128x2xf32>
      %56 = vector.extract_strided_slice %55 {offsets = [0, 0], sizes = [128, 1], strides = [1, 1]} : vector<128x2xf32> to vector<128x1xf32>
      %57 = vector.extract_strided_slice %51 {offsets = [0, 0], sizes = [1, 16], strides = [1, 1]} : vector<2x16xf32> to vector<1x16xf32>
      %58 = vector.broadcast %56 : vector<128x1xf32> to vector<128x16xf32>
      %59 = vector.broadcast %57 : vector<1x16xf32> to vector<128x16xf32>
      %60 = arith.mulf %58, %59 : vector<128x16xf32>
      %61 = vector.extract_strided_slice %55 {offsets = [0, 1], sizes = [128, 1], strides = [1, 1]} : vector<128x2xf32> to vector<128x1xf32>
      %62 = vector.extract_strided_slice %51 {offsets = [1, 0], sizes = [1, 16], strides = [1, 1]} : vector<2x16xf32> to vector<1x16xf32>
      %63 = vector.broadcast %61 : vector<128x1xf32> to vector<128x16xf32>
      %64 = vector.broadcast %62 : vector<1x16xf32> to vector<128x16xf32>
      %65 = arith.mulf %63, %64 : vector<128x16xf32>
      %66 = arith.addf %60, %65 : vector<128x16xf32>
      %cst_21 = arith.constant 6.28318548 : f32
      %67 = vector.broadcast %cst_21 : f32 to vector<128x16xf32>
      %68 = arith.mulf %67, %66 : vector<128x16xf32>
      %69 = math.sin %68 : vector<128x16xf32>
      %70 = arith.truncf %69 : vector<128x16xf32> to vector<128x16xbf16>
      %71 = math.cos %68 : vector<128x16xf32>
      %72 = arith.truncf %71 : vector<128x16xf32> to vector<128x16xbf16>
      %c0_22 = arith.constant 0 : index
      %c0_23 = arith.constant 0 : index
      %73 = vector.load %arg15[%c0_22, %c0_23] : memref<128x4xf32, #tpu.memory_space<vmem>>, vector<128x4xf32>
      %74 = arith.truncf %73 : vector<128x4xf32> to vector<128x4xbf16>
      %c0_24 = arith.constant 0 : index
      %c0_25 = arith.constant 0 : index
      %75 = vector.load %arg6[%c0_24, %c0_25] : memref<16x32xbf16, #tpu.memory_space<vmem>>, vector<16x32xbf16>
      %cst_26 = arith.constant dense<0.000000e+00> : vector<128x32xf32>
      %76 = tpu.matmul %70, %75, %cst_26 {dimension_numbers = #tpu.dot_dimension_numbers<[1], [0], [0], [1], [0, 0, 1, 1], [], []>} : vector<128x16xbf16>, vector<16x32xbf16>, vector<128x32xf32> -> vector<128x32xf32>
      %c0_27 = arith.constant 0 : index
      %c0_28 = arith.constant 0 : index
      %77 = vector.load %arg7[%c0_27, %c0_28] : memref<16x32xbf16, #tpu.memory_space<vmem>>, vector<16x32xbf16>
      %cst_29 = arith.constant dense<0.000000e+00> : vector<128x32xf32>
      %78 = tpu.matmul %72, %77, %cst_29 {dimension_numbers = #tpu.dot_dimension_numbers<[1], [0], [0], [1], [0, 0, 1, 1], [], []>} : vector<128x16xbf16>, vector<16x32xbf16>, vector<128x32xf32> -> vector<128x32xf32>
      %79 = arith.addf %76, %78 : vector<128x32xf32>
      %c0_30 = arith.constant 0 : index
      %c0_31 = arith.constant 0 : index
      %80 = vector.load %arg8[%c0_30, %c0_31] : memref<4x32xbf16, #tpu.memory_space<vmem>>, vector<4x32xbf16>
      %cst_32 = arith.constant dense<0.000000e+00> : vector<128x32xf32>
      %81 = tpu.matmul %74, %80, %cst_32 {dimension_numbers = #tpu.dot_dimension_numbers<[1], [0], [0], [1], [0, 0, 1, 1], [], []>} : vector<128x4xbf16>, vector<4x32xbf16>, vector<128x32xf32> -> vector<128x32xf32>
      %82 = arith.addf %79, %81 : vector<128x32xf32>
      %c0_33 = arith.constant 0 : index
      %c0_34 = arith.constant 0 : index
      %83 = vector.load %arg9[%c0_33, %c0_34] : memref<1x32xf32, #tpu.memory_space<vmem>>, vector<1x32xf32>
      %84 = vector.broadcast %83 : vector<1x32xf32> to vector<128x32xf32>
      %85 = arith.addf %82, %84 : vector<128x32xf32>
      %cst_35 = arith.constant 0.000000e+00 : f32
      %86 = vector.broadcast %cst_35 : f32 to vector<128x32xf32>
      %87 = arith.maximumf %85, %86 : vector<128x32xf32>
      %c0_36 = arith.constant 0 : index
      %c0_37 = arith.constant 0 : index
      %88 = vector.load %arg10[%c0_36, %c0_37] : memref<32x32xbf16, #tpu.memory_space<vmem>>, vector<32x32xbf16>
      %c0_38 = arith.constant 0 : index
      %c0_39 = arith.constant 0 : index
      %89 = vector.load %arg11[%c0_38, %c0_39] : memref<1x32xf32, #tpu.memory_space<vmem>>, vector<1x32xf32>
      %90 = arith.truncf %87 : vector<128x32xf32> to vector<128x32xbf16>
      %cst_40 = arith.constant dense<0.000000e+00> : vector<128x32xf32>
      %91 = tpu.matmul %90, %88, %cst_40 {dimension_numbers = #tpu.dot_dimension_numbers<[1], [0], [0], [1], [0, 0, 1, 1], [], []>} : vector<128x32xbf16>, vector<32x32xbf16>, vector<128x32xf32> -> vector<128x32xf32>
      %92 = vector.broadcast %89 : vector<1x32xf32> to vector<128x32xf32>
      %93 = arith.addf %91, %92 : vector<128x32xf32>
      %cst_41 = arith.constant 0.000000e+00 : f32
      %94 = vector.broadcast %cst_41 : f32 to vector<128x32xf32>
      %95 = arith.maximumf %93, %94 : vector<128x32xf32>
      %c0_42 = arith.constant 0 : index
      %c0_43 = arith.constant 0 : index
      %96 = vector.load %arg12[%c0_42, %c0_43] : memref<8x32xbf16, #tpu.memory_space<vmem>>, vector<8x32xbf16>
      %97 = arith.truncf %95 : vector<128x32xf32> to vector<128x32xbf16>
      %cst_44 = arith.constant dense<0.000000e+00> : vector<8x128xf32>
      %98 = tpu.matmul %96, %97, %cst_44 {dimension_numbers = #tpu.dot_dimension_numbers<[1], [1], [0], [0], [0, 0, 1, 0], [], []>} : vector<8x32xbf16>, vector<128x32xbf16>, vector<8x128xf32> -> vector<8x128xf32>
      %c0_45 = arith.constant 0 : index
      %c0_46 = arith.constant 0 : index
      %99 = vector.load %arg13[%c0_45, %c0_46] : memref<8x1xf32, #tpu.memory_space<vmem>>, vector<8x1xf32>
      %100 = vector.broadcast %99 : vector<8x1xf32> to vector<8x128xf32>
      %101 = arith.addf %98, %100 : vector<8x128xf32>
      %c0_47 = arith.constant 0 : index
      %c0_48 = arith.constant 0 : index
      %c0_49 = arith.constant 0 : index
      %102 = vector.load %arg14[%c0_47, %c0_48, %c0_49] : memref<1x8x128xf32, #tpu.memory_space<vmem>>, vector<1x8x128xf32>
      %103 = vector.shape_cast %102 : vector<1x8x128xf32> to vector<8x128xf32>
      %104 = vector.shape_cast %101 : vector<8x128xf32> to vector<1x8x128xf32>
      tpu.vector_store %arg14[%c0_47, %c0_48, %c0_49], %104 {strides = array<i32>} : memref<1x8x128xf32, #tpu.memory_space<vmem>>, vector<1x8x128xf32>,
    } else {
    }
    return
  }
  func.func @transform_0(%arg0: i32, %arg1: i32, %arg2: i32) -> (i32, i32, i32) {
    %c0_i32 = arith.constant 0 : i32
    %c0_i32_0 = arith.constant 0 : i32
    return %arg0, %arg1, %c0_i32 : i32, i32, i32
  }
  func.func @transform_1(%arg0: i32, %arg1: i32, %arg2: i32) -> (i32, i32, i32) {
    %c0_i32 = arith.constant 0 : i32
    %c0_i32_0 = arith.constant 0 : i32
    return %arg0, %arg2, %c0_i32 : i32, i32, i32
  }
  func.func @transform_2(%arg0: i32, %arg1: i32, %arg2: i32) -> (i32, i32) {
    %c0_i32 = arith.constant 0 : i32
    %c0_i32_0 = arith.constant 0 : i32
    %c0_i32_1 = arith.constant 0 : i32
    return %c0_i32, %c0_i32_0 : i32, i32
  }
  func.func @transform_3(%arg0: i32, %arg1: i32, %arg2: i32) -> (i32, i32) {
    %c0_i32 = arith.constant 0 : i32
    %c0_i32_0 = arith.constant 0 : i32
    %c0_i32_1 = arith.constant 0 : i32
    return %c0_i32, %c0_i32_0 : i32, i32
  }
  func.func @transform_4(%arg0: i32, %arg1: i32, %arg2: i32) -> (i32, i32) {
    %c0_i32 = arith.constant 0 : i32
    %c0_i32_0 = arith.constant 0 : i32
    %c0_i32_1 = arith.constant 0 : i32
    return %c0_i32, %c0_i32_0 : i32, i32
  }
  func.func @transform_5(%arg0: i32, %arg1: i32, %arg2: i32) -> (i32, i32) {
    %c0_i32 = arith.constant 0 : i32
    %c0_i32_0 = arith.constant 0 : i32
    %c0_i32_1 = arith.constant 0 : i32
    return %c0_i32, %c0_i32_0 : i32, i32
  }
  func.func @transform_6(%arg0: i32, %arg1: i32, %arg2: i32) -> (i32, i32) {
    %c0_i32 = arith.constant 0 : i32
    %c0_i32_0 = arith.constant 0 : i32
    %c0_i32_1 = arith.constant 0 : i32
    return %c0_i32, %c0_i32_0 : i32, i32
  }
  func.func @transform_7(%arg0: i32, %arg1: i32, %arg2: i32) -> (i32, i32) {
    %c0_i32 = arith.constant 0 : i32
    %c0_i32_0 = arith.constant 0 : i32
    %c0_i32_1 = arith.constant 0 : i32
    return %c0_i32, %c0_i32_0 : i32, i32
  }
  func.func @transform_8(%arg0: i32, %arg1: i32, %arg2: i32) -> (i32, i32) {
    %c0_i32 = arith.constant 0 : i32
    %c0_i32_0 = arith.constant 0 : i32
    %c0_i32_1 = arith.constant 0 : i32
    return %c0_i32, %c0_i32_0 : i32, i32
  }
  func.func @transform_9(%arg0: i32, %arg1: i32, %arg2: i32) -> (i32, i32) {
    %c0_i32 = arith.constant 0 : i32
    %c0_i32_0 = arith.constant 0 : i32
    %c0_i32_1 = arith.constant 0 : i32
    return %c0_i32, %c0_i32_0 : i32, i32
  }
  func.func @transform_10(%arg0: i32, %arg1: i32, %arg2: i32) -> (i32, i32) {
    %c0_i32 = arith.constant 0 : i32
    %c0_i32_0 = arith.constant 0 : i32
    %c0_i32_1 = arith.constant 0 : i32
    return %c0_i32, %c0_i32_0 : i32, i32
  }
  func.func @transform_11(%arg0: i32, %arg1: i32, %arg2: i32) -> (i32, i32, i32) {
    %c0_i32 = arith.constant 0 : i32
    %c0_i32_0 = arith.constant 0 : i32
    return %arg0, %c0_i32, %arg1 : i32, i32, i32
  }
}

</mosaic_0001>

<llo_original>
// kernel: subdivision_inference.3
$region0: #{subdivision_inference.3}
  #allocation0 [shape = 'u32[]', space=smem, size = 0x4, offset = 0x4, fixed_abs, tag = 'smem constant byte address 0x4 - core index']
  #allocation1 [shape = 'u32[144,128]{1,0:T(1,128)}', space=vmem, size = 0x12000, scoped, tag = 'internal scratch']
  #allocation2 [shape = 'f32[128,4]{1,0:T(8,128)}', space=vmem, size = 0x10000, scoped, tag = 'scratch operand']
  #allocation3 [shape = 's32[128,1]{1,0:T(8,128)}', space=vmem, size = 0x10000, scoped, tag = 'scratch operand']
  #allocation4 [shape = 'f32[128,4]{1,0:T(8,128)}', space=vmem, size = 0x10000, scoped, tag = 'scratch operand']
  %s0 = inlined_call_operand.vmem [shape: f32[2,128,2], index: 0, kind: input, shape index: {}]
  %s1 = inlined_call_operand.vmem [shape: f32[2,256,4], index: 1, kind: input, shape index: {}]
  %s2 = inlined_call_operand.vmem [shape: f32[2,16], index: 2, kind: input, shape index: {}]
  %s3 = inlined_call_operand.vmem [shape: bf16[16,32], index: 3, kind: input, shape index: {}]
  %s4 = inlined_call_operand.vmem [shape: bf16[16,32], index: 4, kind: input, shape index: {}]
  %s5 = inlined_call_operand.vmem [shape: bf16[4,32], index: 5, kind: input, shape index: {}]
  %s6 = inlined_call_operand.vmem [shape: f32[1,32], index: 6, kind: input, shape index: {}]
  %s7 = inlined_call_operand.vmem [shape: bf16[32,32], index: 7, kind: input, shape index: {}]
  %s8 = inlined_call_operand.vmem [shape: f32[1,32], index: 8, kind: input, shape index: {}]
  %s9 = inlined_call_operand.vmem [shape: bf16[8,32], index: 9, kind: input, shape index: {}]
  %s10 = inlined_call_operand.vmem [shape: f32[8,1], index: 10, kind: input, shape index: {}]
  %s11 = inlined_call_operand.vmem [shape: f32[2,8,128], index: 11, kind: output, shape index: {}]
  %s12 = sld [smem:[#allocation0]]
  $region85: #{subdivision_inference.3} parent=0
    _
  %s14 = ssub.s32 1, %s12
  %s15 = scalar_select 0, %s14, %s12
  loop: start=0, step=1, limit=4
  $region2: #{subdivision_inference.3} parent=0 // loop_pre_header
    _
  $region3: #{subdivision_inference.3} parent=0 // loop_header
    %s17 = sphi 0, %s21
    %p18 = scmp.ge.s32.totalorder %s17, 4
    %s24 = sphi 0, %s43
    %s25 = sphi 0, %s39
    %s26 = sphi 0, %s35
    %s27 = sphi 0, %s24
    %s28 = sphi 0, %s25
    %s29 = sphi 0, %s26
    %s30 = sphi 0, %s27
    %s31 = sphi 0, %s28
    %s32 = sphi 0, %s29
    %s48 = sphi 0, %s50
    %s51 = sphi 0, %s48
    %s52 = sphi 0, %s51
    %s68 = sphi 0, %s52
    %s76 = sphi 0, %s78
    %s79 = sphi 0, %s76
    %s80 = sphi 0, %s79
    %s96 = sphi 0, %s80
    %s100 = sphi 0, %s100
    %s102 = sphi 0, %s100
    %s103 = sphi 0, %s102
    %s117 = sphi 0, %s103
    %s121 = sphi 0, %s121
    %s123 = sphi 0, %s121
    %s124 = sphi 0, %s123
    %s138 = sphi 0, %s124
    %s142 = sphi 0, %s142
    %s144 = sphi 0, %s142
    %s145 = sphi 0, %s144
    %s159 = sphi 0, %s145
    %s163 = sphi 0, %s163
    %s165 = sphi 0, %s163
    %s166 = sphi 0, %s165
    %s180 = sphi 0, %s166
    %s184 = sphi 0, %s184
    %s186 = sphi 0, %s184
    %s187 = sphi 0, %s186
    %s201 = sphi 0, %s187
    %s205 = sphi 0, %s205
    %s207 = sphi 0, %s205
    %s208 = sphi 0, %s207
    %s222 = sphi 0, %s208
    %s226 = sphi 0, %s226
    %s228 = sphi 0, %s226
    %s229 = sphi 0, %s228
    %s243 = sphi 0, %s229
    %s247 = sphi 0, %s247
    %s249 = sphi 0, %s247
    %s250 = sphi 0, %s249
    %s264 = sphi 0, %s250
    %s268 = sphi 0, %s268
    %s270 = sphi 0, %s268
    %s271 = sphi 0, %s270
    %s285 = sphi 0, %s271
    %s293 = sphi 0, %s295
    %s296 = sphi 0, %s293
    %s297 = sphi 0, %s296
    %s313 = sphi 0, %s297
  $region4: #{subdivision_inference.3} parent=0 // loop_header_branch
    %20 = sbr.rel (%p18) target = $region8
  $region5: #{subdivision_inference.3} parent=0 // loop_body
    %s22 = ssub.s32 %s17, 1
    %s23 = ssub.s32 %s17, 2
    %s33 = sadd.s32 1, %s26
    %p34 = scmp.ge.s32.totalorder %s33, 1
    %s35 = scalar_select %p34, 0, %s33
    %s36 = sadd.s32 1, %s25
    %s37 = scalar_select %p34, %s36, %s25
    %p38 = scmp.ge.s32.totalorder %s37, 1
    %s39 = scalar_select %p38, 0, %s37
    %s40 = sadd.s32 1, %s24
    %s41 = scalar_select %p38, %s40, %s24
    %p42 = scmp.ge.s32.totalorder %s41, 2
    %s43 = scalar_select %p42, 0, %s41
    %s44 = ssub.s32 %s24, %s43
    %s45 = ssub.s32 %s25, %s39
    %s46 = sor.u32 %s44, %s45
    %p47 = scmp.eq.s32.totalorder %s46, 0
    %s49 = sadd.s32 %s48, 1
    %s50 = scalar_select %p47, %s48, %s49
    %p53 = pneg %p47
    %p54 = scmp.eq.s32.totalorder %s17, 1
    %p55 = por %p53, %p54
    %p56 = scmp.ne.s32.totalorder %s48, %s51
    %p57 = scmp.eq.s32.totalorder %s17, 0
    %p58 = por %p56, %p57
    %p59 = scmp.ne.s32.totalorder %s48, %s51
    %p60 = scmp.eq.s32.totalorder %s22, 1
    %p61 = por %p59, %p60
    %p62 = scmp.ne.s32.totalorder %s51, %s52
    %p63 = scmp.eq.s32.totalorder %s22, 0
    %p64 = por %p62, %p63
    %p65 = scmp.ne.s32.totalorder %s51, %s52
    %p66 = scmp.eq.s32.totalorder %s23, 1
    %p67 = por %p65, %p66
    %p69 = scmp.ne.s32.totalorder %s52, %s68
    %p70 = scmp.eq.s32.totalorder %s23, 0
    %p71 = por %p69, %p70
    %s72 = ssub.s32 %s24, %s43
    %s73 = ssub.s32 %s26, %s35
    %s74 = sor.u32 %s72, %s73
    %p75 = scmp.eq.s32.totalorder %s74, 0
    %s77 = sadd.s32 %s76, 1
    %s78 = scalar_select %p75, %s76, %s77
    %p81 = pneg %p75
    %p82 = scmp.eq.s32.totalorder %s17, 1
    %p83 = por %p81, %p82
    %p84 = scmp.ne.s32.totalorder %s76, %s79
    %p85 = scmp.eq.s32.totalorder %s17, 0
    %p86 = por %p84, %p85
    %p87 = scmp.ne.s32.totalorder %s76, %s79
    %p88 = scmp.eq.s32.totalorder %s22, 1
    %p89 = por %p87, %p88
    %p90 = scmp.ne.s32.totalorder %s79, %s80
    %p91 = scmp.eq.s32.totalorder %s22, 0
    %p92 = por %p90, %p91
    %p93 = scmp.ne.s32.totalorder %s79, %s80
    %p94 = scmp.eq.s32.totalorder %s23, 1
    %p95 = por %p93, %p94
    %p97 = scmp.ne.s32.totalorder %s80, %s96
    %p98 = scmp.eq.s32.totalorder %s23, 0
    %p99 = por %p97, %p98
    %s101 = sadd.s32 %s100, 1
    %p104 = scmp.eq.s32.totalorder %s17, 1
    %p105 = scmp.ne.s32.totalorder %s100, %s102
    %p106 = scmp.eq.s32.totalorder %s17, 0
    %p107 = por %p105, %p106
    %p108 = scmp.ne.s32.totalorder %s100, %s102
    %p109 = scmp.eq.s32.totalorder %s22, 1
    %p110 = por %p108, %p109
    %p111 = scmp.ne.s32.totalorder %s102, %s103
    %p112 = scmp.eq.s32.totalorder %s22, 0
    %p113 = por %p111, %p112
    %p114 = scmp.ne.s32.totalorder %s102, %s103
    %p115 = scmp.eq.s32.totalorder %s23, 1
    %p116 = por %p114, %p115
    %p118 = scmp.ne.s32.totalorder %s103, %s117
    %p119 = scmp.eq.s32.totalorder %s23, 0
    %p120 = por %p118, %p119
    %s122 = sadd.s32 %s121, 1
    %p125 = scmp.eq.s32.totalorder %s17, 1
    %p126 = scmp.ne.s32.totalorder %s121, %s123
    %p127 = scmp.eq.s32.totalorder %s17, 0
    %p128 = por %p126, %p127
    %p129 = scmp.ne.s32.totalorder %s121, %s123
    %p130 = scmp.eq.s32.totalorder %s22, 1
    %p131 = por %p129, %p130
    %p132 = scmp.ne.s32.totalorder %s123, %s124
    %p133 = scmp.eq.s32.totalorder %s22, 0
    %p134 = por %p132, %p133
    %p135 = scmp.ne.s32.totalorder %s123, %s124
    %p136 = scmp.eq.s32.totalorder %s23, 1
    %p137 = por %p135, %p136
    %p139 = scmp.ne.s32.totalorder %s124, %s138
    %p140 = scmp.eq.s32.totalorder %s23, 0
    %p141 = por %p139, %p140
    %s143 = sadd.s32 %s142, 1
    %p146 = scmp.eq.s32.totalorder %s17, 1
    %p147 = scmp.ne.s32.totalorder %s142, %s144
    %p148 = scmp.eq.s32.totalorder %s17, 0
    %p149 = por %p147, %p148
    %p150 = scmp.ne.s32.totalorder %s142, %s144
    %p151 = scmp.eq.s32.totalorder %s22, 1
    %p152 = por %p150, %p151
    %p153 = scmp.ne.s32.totalorder %s144, %s145
    %p154 = scmp.eq.s32.totalorder %s22, 0
    %p155 = por %p153, %p154
    %p156 = scmp.ne.s32.totalorder %s144, %s145
    %p157 = scmp.eq.s32.totalorder %s23, 1
    %p158 = por %p156, %p157
    %p160 = scmp.ne.s32.totalorder %s145, %s159
    %p161 = scmp.eq.s32.totalorder %s23, 0
    %p162 = por %p160, %p161
    %s164 = sadd.s32 %s163, 1
    %p167 = scmp.eq.s32.totalorder %s17, 1
    %p168 = scmp.ne.s32.totalorder %s163, %s165
    %p169 = scmp.eq.s32.totalorder %s17, 0
    %p170 = por %p168, %p169
    %p171 = scmp.ne.s32.totalorder %s163, %s165
    %p172 = scmp.eq.s32.totalorder %s22, 1
    %p173 = por %p171, %p172
    %p174 = scmp.ne.s32.totalorder %s165, %s166
    %p175 = scmp.eq.s32.totalorder %s22, 0
    %p176 = por %p174, %p175
    %p177 = scmp.ne.s32.totalorder %s165, %s166
    %p178 = scmp.eq.s32.totalorder %s23, 1
    %p179 = por %p177, %p178
    %p181 = scmp.ne.s32.totalorder %s166, %s180
    %p182 = scmp.eq.s32.totalorder %s23, 0
    %p183 = por %p181, %p182
    %s185 = sadd.s32 %s184, 1
    %p188 = scmp.eq.s32.totalorder %s17, 1
    %p189 = scmp.ne.s32.totalorder %s184, %s186
    %p190 = scmp.eq.s32.totalorder %s17, 0
    %p191 = por %p189, %p190
    %p192 = scmp.ne.s32.totalorder %s184, %s186
    %p193 = scmp.eq.s32.totalorder %s22, 1
    %p194 = por %p192, %p193
    %p195 = scmp.ne.s32.totalorder %s186, %s187
    %p196 = scmp.eq.s32.totalorder %s22, 0
    %p197 = por %p195, %p196
    %p198 = scmp.ne.s32.totalorder %s186, %s187
    %p199 = scmp.eq.s32.totalorder %s23, 1
    %p200 = por %p198, %p199
    %p202 = scmp.ne.s32.totalorder %s187, %s201
    %p203 = scmp.eq.s32.totalorder %s23, 0
    %p204 = por %p202, %p203
    %s206 = sadd.s32 %s205, 1
    %p209 = scmp.eq.s32.totalorder %s17, 1
    %p210 = scmp.ne.s32.totalorder %s205, %s207
    %p211 = scmp.eq.s32.totalorder %s17, 0
    %p212 = por %p210, %p211
    %p213 = scmp.ne.s32.totalorder %s205, %s207
    %p214 = scmp.eq.s32.totalorder %s22, 1
    %p215 = por %p213, %p214
    %p216 = scmp.ne.s32.totalorder %s207, %s208
    %p217 = scmp.eq.s32.totalorder %s22, 0
    %p218 = por %p216, %p217
    %p219 = scmp.ne.s32.totalorder %s207, %s208
    %p220 = scmp.eq.s32.totalorder %s23, 1
    %p221 = por %p219, %p220
    %p223 = scmp.ne.s32.totalorder %s208, %s222
    %p224 = scmp.eq.s32.totalorder %s23, 0
    %p225 = por %p223, %p224
    %s227 = sadd.s32 %s226, 1
    %p230 = scmp.eq.s32.totalorder %s17, 1
    %p231 = scmp.ne.s32.totalorder %s226, %s228
    %p232 = scmp.eq.s32.totalorder %s17, 0
    %p233 = por %p231, %p232
    %p234 = scmp.ne.s32.totalorder %s226, %s228
    %p235 = scmp.eq.s32.totalorder %s22, 1
    %p236 = por %p234, %p235
    %p237 = scmp.ne.s32.totalorder %s228, %s229
    %p238 = scmp.eq.s32.totalorder %s22, 0
    %p239 = por %p237, %p238
    %p240 = scmp.ne.s32.totalorder %s228, %s229
    %p241 = scmp.eq.s32.totalorder %s23, 1
    %p242 = por %p240, %p241
    %p244 = scmp.ne.s32.totalorder %s229, %s243
    %p245 = scmp.eq.s32.totalorder %s23, 0
    %p246 = por %p244, %p245
    %s248 = sadd.s32 %s247, 1
    %p251 = scmp.eq.s32.totalorder %s17, 1
    %p252 = scmp.ne.s32.totalorder %s247, %s249
    %p253 = scmp.eq.s32.totalorder %s17, 0
    %p254 = por %p252, %p253
    %p255 = scmp.ne.s32.totalorder %s247, %s249
    %p256 = scmp.eq.s32.totalorder %s22, 1
    %p257 = por %p255, %p256
    %p258 = scmp.ne.s32.totalorder %s249, %s250
    %p259 = scmp.eq.s32.totalorder %s22, 0
    %p260 = por %p258, %p259
    %p261 = scmp.ne.s32.totalorder %s249, %s250
    %p262 = scmp.eq.s32.totalorder %s23, 1
    %p263 = por %p261, %p262
    %p265 = scmp.ne.s32.totalorder %s250, %s264
    %p266 = scmp.eq.s32.totalorder %s23, 0
    %p267 = por %p265, %p266
    %s269 = sadd.s32 %s268, 1
    %p272 = scmp.eq.s32.totalorder %s17, 1
    %p273 = scmp.ne.s32.totalorder %s268, %s270
    %p274 = scmp.eq.s32.totalorder %s17, 0
    %p275 = por %p273, %p274
    %p276 = scmp.ne.s32.totalorder %s268, %s270
    %p277 = scmp.eq.s32.totalorder %s22, 1
    %p278 = por %p276, %p277
    %p279 = scmp.ne.s32.totalorder %s270, %s271
    %p280 = scmp.eq.s32.totalorder %s22, 0
    %p281 = por %p279, %p280
    %p282 = scmp.ne.s32.totalorder %s270, %s271
    %p283 = scmp.eq.s32.totalorder %s23, 1
    %p284 = por %p282, %p283
    %p286 = scmp.ne.s32.totalorder %s271, %s285
    %p287 = scmp.eq.s32.totalorder %s23, 0
    %p288 = por %p286, %p287
    %s289 = ssub.s32 %s24, %s43
    %s290 = ssub.s32 %s25, %s39
    %s291 = sor.u32 %s289, %s290
    %p292 = scmp.eq.s32.totalorder %s291, 0
    %s294 = sadd.s32 %s293, 1
    %s295 = scalar_select %p292, %s293, %s294
    %p298 = pneg %p292
    %p299 = scmp.eq.s32.totalorder %s17, 1
    %p300 = por %p298, %p299
    %p301 = scmp.ne.s32.totalorder %s293, %s296
    %p302 = scmp.eq.s32.totalorder %s17, 0
    %p303 = por %p301, %p302
    %p304 = scmp.ne.s32.totalorder %s293, %s296
    %p305 = scmp.eq.s32.totalorder %s22, 1
    %p306 = por %p304, %p305
    %p307 = scmp.ne.s32.totalorder %s296, %s297
    %p308 = scmp.eq.s32.totalorder %s22, 0
    %p309 = por %p307, %p308
    %p310 = scmp.ne.s32.totalorder %s296, %s297
    %p311 = scmp.eq.s32.totalorder %s23, 1
    %p312 = por %p310, %p311
    %p314 = scmp.ne.s32.totalorder %s297, %s313
    %p315 = scmp.eq.s32.totalorder %s23, 0
    %p316 = por %p314, %p315
    %p317 = scmp.le.s32.totalorder 1, %s17
    %p318 = scmp.lt.s32.totalorder %s17, 3
    %p319 = pnand %p317, %p318
    %p320 = pneg %p319
    // Predicated region
    $region9: #{subdivision_inference.3} parent=5 // pred_check
      _
    $region10: #{subdivision_inference.3} parent=5 // pred_check_branch
      %322 = sbr.rel (%p319) target = $region12
    $region11: #{subdivision_inference.3} parent=5 // pred_region
      %s323 = ssub.s32 %s17, 1
      // Predicated region
      $region13: #{subdivision_inference.3} parent=11 // pred_check
        %p324 = pneg %p113
      $region14: #{subdivision_inference.3} parent=11 // pred_check_branch
        %326 = sbr.rel (%p324) target = $region16
      $region15: #{subdivision_inference.3} parent=11 // pred_region
        _
      $region16: #{subdivision_inference.3} parent=11 // pred_fallthru
        _
      // Predicated region
      $region17: #{subdivision_inference.3} parent=11 // pred_check
        %p327 = pneg %p134
      $region18: #{subdivision_inference.3} parent=11 // pred_check_branch
        %329 = sbr.rel (%p327) target = $region20
      $region19: #{subdivision_inference.3} parent=11 // pred_region
        _
      $region20: #{subdivision_inference.3} parent=11 // pred_fallthru
        _
      // Predicated region
      $region21: #{subdivision_inference.3} parent=11 // pred_check
        %p330 = pneg %p155
      $region22: #{subdivision_inference.3} parent=11 // pred_check_branch
        %332 = sbr.rel (%p330) target = $region24
      $region23: #{subdivision_inference.3} parent=11 // pred_region
        _
      $region24: #{subdivision_inference.3} parent=11 // pred_fallthru
        _
      // Predicated region
      $region25: #{subdivision_inference.3} parent=11 // pred_check
        %p333 = pneg %p176
      $region26: #{subdivision_inference.3} parent=11 // pred_check_branch
        %335 = sbr.rel (%p333) target = $region28
      $region27: #{subdivision_inference.3} parent=11 // pred_region
        _
      $region28: #{subdivision_inference.3} parent=11 // pred_fallthru
        _
      // Predicated region
      $region29: #{subdivision_inference.3} parent=11 // pred_check
        %p336 = pneg %p197
      $region30: #{subdivision_inference.3} parent=11 // pred_check_branch
        %338 = sbr.rel (%p336) target = $region32
      $region31: #{subdivision_inference.3} parent=11 // pred_region
        _
      $region32: #{subdivision_inference.3} parent=11 // pred_fallthru
        _
      // Predicated region
      $region33: #{subdivision_inference.3} parent=11 // pred_check
        %p339 = pneg %p218
      $region34: #{subdivision_inference.3} parent=11 // pred_check_branch
        %341 = sbr.rel (%p339) target = $region36
      $region35: #{subdivision_inference.3} parent=11 // pred_region
        _
      $region36: #{subdivision_inference.3} parent=11 // pred_fallthru
        _
      // Predicated region
      $region37: #{subdivision_inference.3} parent=11 // pred_check
        %p342 = pneg %p239
      $region38: #{subdivision_inference.3} parent=11 // pred_check_branch
        %344 = sbr.rel (%p342) target = $region40
      $region39: #{subdivision_inference.3} parent=11 // pred_region
        _
      $region40: #{subdivision_inference.3} parent=11 // pred_fallthru
        _
      // Predicated region
      $region41: #{subdivision_inference.3} parent=11 // pred_check
        %p345 = pneg %p260
      $region42: #{subdivision_inference.3} parent=11 // pred_check_branch
        %347 = sbr.rel (%p345) target = $region44
      $region43: #{subdivision_inference.3} parent=11 // pred_region
        _
      $region44: #{subdivision_inference.3} parent=11 // pred_fallthru
        _
      // Predicated region
      $region45: #{subdivision_inference.3} parent=11 // pred_check
        %p348 = pneg %p281
      $region46: #{subdivision_inference.3} parent=11 // pred_check_branch
        %350 = sbr.rel (%p348) target = $region48
      $region47: #{subdivision_inference.3} parent=11 // pred_region
        _
      $region48: #{subdivision_inference.3} parent=11 // pred_fallthru
        _
    $region12: #{subdivision_inference.3} parent=5 // pred_fallthru
      _
    %p351 = scmp.lt.s32.totalorder %s17, 2
    // Predicated region
    $region49: #{subdivision_inference.3} parent=5 // pred_check
      %p352 = pneg %p351
    $region50: #{subdivision_inference.3} parent=5 // pred_check_branch
      %354 = sbr.rel (%p352) target = $region52
    $region51: #{subdivision_inference.3} parent=5 // pred_region
      // Predicated region
      $region53: #{subdivision_inference.3} parent=51 // pred_check
        %p355 = pneg %p58
      $region54: #{subdivision_inference.3} parent=51 // pred_check_branch
        %357 = sbr.rel (%p355) target = $region56
      $region55: #{subdivision_inference.3} parent=51 // pred_region
        %s358 = smul.u32 16, %s25
        %p359 = scmp.lt.s32.totalorder %s24, 1
        %s360 = scalar_select %p359, %s24, 1
        %p361 = scmp.lt.s32.totalorder %s358, 15
        %s362 = scalar_select %p361, %s358, 15
        %s363 = smul.addr %s360, 16
        %s364 = sadd.s32 %s362, %s363
        %s365 = smul.addr %s364, 8
        %s366 = scalar_lea.vmem %s0, %s365
        %s367 = smul.u32 16, %s25
      $region56: #{subdivision_inference.3} parent=51 // pred_fallthru
        _
      // Predicated region
      $region57: #{subdivision_inference.3} parent=51 // pred_check
        %p368 = pneg %p86
      $region58: #{subdivision_inference.3} parent=51 // pred_check_branch
        %370 = sbr.rel (%p368) target = $region60
      $region59: #{subdivision_inference.3} parent=51 // pred_region
        %s371 = smul.u32 32, %s26
        %p372 = scmp.lt.s32.totalorder %s24, 1
        %s373 = scalar_select %p372, %s24, 1
        %p374 = scmp.lt.s32.totalorder %s371, 31
        %s375 = scalar_select %p374, %s371, 31
        %s376 = smul.addr %s373, 32
        %s377 = sadd.s32 %s375, %s376
        %s378 = smul.addr %s377, 8
        %s379 = scalar_lea.vmem %s1, %s378
        %s380 = smul.u32 32, %s26
      $region60: #{subdivision_inference.3} parent=51 // pred_fallthru
        _
    $region52: #{subdivision_inference.3} parent=5 // pred_fallthru
      _
    %p381 = scmp.le.s32.totalorder 1, %s17
    %p382 = scmp.lt.s32.totalorder %s17, 3
    %p383 = pnand %p381, %p382
    %p384 = pneg %p383
    // Predicated region
    $region61: #{subdivision_inference.3} parent=5 // pred_check
      _
    $region62: #{subdivision_inference.3} parent=5 // pred_check_branch
      %386 = sbr.rel (%p383) target = $region64
    $region63: #{subdivision_inference.3} parent=5 // pred_region
      %s387 = ssub.s32 %s17, 1
      %s388 = smul.u32 16, %s28
      %p389 = scmp.lt.s32.totalorder %s27, 1
      %s390 = scalar_select %p389, %s27, 1
      %p391 = scmp.lt.s32.totalorder %s388, 15
      %s392 = scalar_select %p391, %s388, 15
      %s393 = smul.addr %s390, 16
      %s394 = sadd.s32 %s392, %s393
      %s395 = smul.addr %s394, 8
      %s396 = scalar_lea.vmem %s0, %s395
      %p397 = pneg %p64
      %p398 = pneg %p61
      %s399 = smul.u32 32, %s29
      %p400 = scmp.lt.s32.totalorder %s27, 1
      %s401 = scalar_select %p400, %s27, 1
      %p402 = scmp.lt.s32.totalorder %s399, 31
      %s403 = scalar_select %p402, %s399, 31
      %s404 = smul.addr %s401, 32
      %s405 = sadd.s32 %s403, %s404
      %s406 = smul.addr %s405, 8
      %s407 = scalar_lea.vmem %s1, %s406
      %p408 = pneg %p92
      %p409 = pneg %p89
      %p410 = pneg %p113
      %p411 = pneg %p110
      %p412 = pneg %p134
      %p413 = pneg %p131
      %p414 = pneg %p155
      %p415 = pneg %p152
      %p416 = pneg %p176
      %p417 = pneg %p173
      %p418 = pneg %p197
      %p419 = pneg %p194
      %p420 = pneg %p218
      %p421 = pneg %p215
      %p422 = pneg %p239
      %p423 = pneg %p236
      %p424 = pneg %p260
      %p425 = pneg %p257
      %p426 = pneg %p281
      %p427 = pneg %p278
      %p428 = pneg %p309
      %p429 = pneg %p306
      %p430 = scmp.lt.s32.totalorder %s27, 1
      %s431 = scalar_select %p430, %s27, 1
      %p432 = scmp.lt.s32.totalorder %s28, 0
      %s433 = scalar_select %p432, %s28, 0
      %s434 = sadd.s32 %s433, %s431
      %s435 = smul.addr %s434, 8
      %s436 = scalar_lea.vmem %s11, %s435
      %s437 = smul.u32 16, %s28
      %p438 = scmp.lt.s32.totalorder %s27, 1
      %s439 = scalar_select %p438, %s27, 1
      %p440 = scmp.lt.s32.totalorder %s437, 15
      %s441 = scalar_select %p440, %s437, 15
      %s442 = smul.addr %s439, 16
      %s443 = sadd.s32 %s441, %s442
      %s444 = smul.addr %s443, 8
      %s445 = scalar_lea.vmem %s0, %s444
      %s446 = smul.u32 16, %s28
      %s447 = smul.u32 32, %s29
      %p448 = scmp.lt.s32.totalorder %s27, 1
      %s449 = scalar_select %p448, %s27, 1
      %p450 = scmp.lt.s32.totalorder %s447, 31
      %s451 = scalar_select %p450, %s447, 31
      %s452 = smul.addr %s449, 32
      %s453 = sadd.s32 %s451, %s452
      %s454 = smul.addr %s453, 8
      %s455 = scalar_lea.vmem %s1, %s454
      %s456 = smul.u32 32, %s29
      %p457 = scmp.lt.s32.totalorder %s27, 1
      %s458 = scalar_select %p457, %s27, 1
      %p459 = scmp.lt.s32.totalorder %s28, 0
      %s460 = scalar_select %p459, %s28, 0
      %s461 = sadd.s32 %s460, %s458
      %s462 = smul.addr %s461, 8
      %s463 = scalar_lea.vmem %s11, %s462
      %p465 = scmp.eq.s32.totalorder %s29, 0
      // Predicated region
      $region65: #{subdivision_inference.3} parent=63 // pred_check
        %p466 = pneg %p465
      $region66: #{subdivision_inference.3} parent=63 // pred_check_branch
        %468 = sbr.rel (%p466) target = $region68
      $region67: #{subdivision_inference.3} parent=63 // pred_region
        %v469 = vld [vmem:[%s445] sm:$0xff]
        %v470 = vld [vmem:[%s445 + $0x8] sm:$0xff]
        %v471 = vld [vmem:[%s445 + $0x10] sm:$0xff]
        %v472 = vld [vmem:[%s445 + $0x18] sm:$0xff]
        %v473 = vld [vmem:[%s445 + $0x20] sm:$0xff]
        %v474 = vld [vmem:[%s445 + $0x28] sm:$0xff]
        %v475 = vld [vmem:[%s445 + $0x30] sm:$0xff]
        %v476 = vld [vmem:[%s445 + $0x38] sm:$0xff]
        %v477 = vld [vmem:[%s445 + $0x40] sm:$0xff]
        %v478 = vld [vmem:[%s445 + $0x48] sm:$0xff]
        %v479 = vld [vmem:[%s445 + $0x50] sm:$0xff]
        %v480 = vld [vmem:[%s445 + $0x58] sm:$0xff]
        %v481 = vld [vmem:[%s445 + $0x60] sm:$0xff]
        %v482 = vld [vmem:[%s445 + $0x68] sm:$0xff]
        %v483 = vld [vmem:[%s445 + $0x70] sm:$0xff]
        %v484 = vld [vmem:[%s445 + $0x78] sm:$0xff]
        %v485 = vmul.f32 %v469, 14.933333
        %v486 = vmul.f32 %v470, 14.933333
        %v487 = vmul.f32 %v471, 14.933333
        %v488 = vmul.f32 %v472, 14.933333
        %v489 = vmul.f32 %v473, 14.933333
        %v490 = vmul.f32 %v474, 14.933333
        %v491 = vmul.f32 %v475, 14.933333
        %v492 = vmul.f32 %v476, 14.933333
        %v493 = vmul.f32 %v477, 14.933333
        %v494 = vmul.f32 %v478, 14.933333
        %v495 = vmul.f32 %v479, 14.933333
        %v496 = vmul.f32 %v480, 14.933333
        %v497 = vmul.f32 %v481, 14.933333
        %v498 = vmul.f32 %v482, 14.933333
        %v499 = vmul.f32 %v483, 14.933333
        %v500 = vmul.f32 %v484, 14.933333
        %v501 = vsub.f32 %v485, 0.5
        %v502 = vsub.f32 %v486, 0.5
        %v503 = vsub.f32 %v487, 0.5
        %v504 = vsub.f32 %v488, 0.5
        %v505 = vsub.f32 %v489, 0.5
        %v506 = vsub.f32 %v490, 0.5
        %v507 = vsub.f32 %v491, 0.5
        %v508 = vsub.f32 %v492, 0.5
        %v509 = vsub.f32 %v493, 0.5
        %v510 = vsub.f32 %v494, 0.5
        %v511 = vsub.f32 %v495, 0.5
        %v512 = vsub.f32 %v496, 0.5
        %v513 = vsub.f32 %v497, 0.5
        %v514 = vsub.f32 %v498, 0.5
        %v515 = vsub.f32 %v499, 0.5
        %v516 = vsub.f32 %v500, 0.5
        %v517 = vfloor.f32 %v501
        %v518 = vfloor.f32 %v502
        %v519 = vfloor.f32 %v503
        %v520 = vfloor.f32 %v504
        %v521 = vfloor.f32 %v505
        %v522 = vfloor.f32 %v506
        %v523 = vfloor.f32 %v507
        %v524 = vfloor.f32 %v508
        %v525 = vfloor.f32 %v509
        %v526 = vfloor.f32 %v510
        %v527 = vfloor.f32 %v511
        %v528 = vfloor.f32 %v512
        %v529 = vfloor.f32 %v513
        %v530 = vfloor.f32 %v514
        %v531 = vfloor.f32 %v515
        %v532 = vfloor.f32 %v516
        %v533 = vcvt.f32.s32.to.zero.pseudo %v517
        %v534 = vcvt.f32.s32.to.zero.pseudo %v518
        %v535 = vcvt.f32.s32.to.zero.pseudo %v519
        %v536 = vcvt.f32.s32.to.zero.pseudo %v520
        %v537 = vcvt.f32.s32.to.zero.pseudo %v521
        %v538 = vcvt.f32.s32.to.zero.pseudo %v522
        %v539 = vcvt.f32.s32.to.zero.pseudo %v523
        %v540 = vcvt.f32.s32.to.zero.pseudo %v524
        %v541 = vcvt.f32.s32.to.zero.pseudo %v525
        %v542 = vcvt.f32.s32.to.zero.pseudo %v526
        %v543 = vcvt.f32.s32.to.zero.pseudo %v527
        %v544 = vcvt.f32.s32.to.zero.pseudo %v528
        %v545 = vcvt.f32.s32.to.zero.pseudo %v529
        %v546 = vcvt.f32.s32.to.zero.pseudo %v530
        %v547 = vcvt.f32.s32.to.zero.pseudo %v531
        %v548 = vcvt.f32.s32.to.zero.pseudo %v532
        %vm549 = vcmp.gt.s32.totalorder %v533, 0
        %v550 = vsel %vm549, %v533, 0
        %vm551 = vcmp.gt.s32.totalorder %v534, 0
        %v552 = vsel %vm551, %v534, 0
        %vm553 = vcmp.gt.s32.totalorder %v535, 0
        %v554 = vsel %vm553, %v535, 0
        %vm555 = vcmp.gt.s32.totalorder %v536, 0
        %v556 = vsel %vm555, %v536, 0
        %vm557 = vcmp.gt.s32.totalorder %v537, 0
        %v558 = vsel %vm557, %v537, 0
        %vm559 = vcmp.gt.s32.totalorder %v538, 0
        %v560 = vsel %vm559, %v538, 0
        %vm561 = vcmp.gt.s32.totalorder %v539, 0
        %v562 = vsel %vm561, %v539, 0
        %vm563 = vcmp.gt.s32.totalorder %v540, 0
        %v564 = vsel %vm563, %v540, 0
        %vm565 = vcmp.gt.s32.totalorder %v541, 0
        %v566 = vsel %vm565, %v541, 0
        %vm567 = vcmp.gt.s32.totalorder %v542, 0
        %v568 = vsel %vm567, %v542, 0
        %vm569 = vcmp.gt.s32.totalorder %v543, 0
        %v570 = vsel %vm569, %v543, 0
        %vm571 = vcmp.gt.s32.totalorder %v544, 0
        %v572 = vsel %vm571, %v544, 0
        %vm573 = vcmp.gt.s32.totalorder %v545, 0
        %v574 = vsel %vm573, %v545, 0
        %vm575 = vcmp.gt.s32.totalorder %v546, 0
        %v576 = vsel %vm575, %v546, 0
        %vm577 = vcmp.gt.s32.totalorder %v547, 0
        %v578 = vsel %vm577, %v547, 0
        %vm579 = vcmp.gt.s32.totalorder %v548, 0
        %v580 = vsel %vm579, %v548, 0
        %vm581 = vcmp.lt.s32.totalorder %v550, 14
        %v582 = vsel %vm581, %v550, 14
        %vm583 = vcmp.lt.s32.totalorder %v552, 14
        %v584 = vsel %vm583, %v552, 14
        %vm585 = vcmp.lt.s32.totalorder %v554, 14
        %v586 = vsel %vm585, %v554, 14
        %vm587 = vcmp.lt.s32.totalorder %v556, 14
        %v588 = vsel %vm587, %v556, 14
        %vm589 = vcmp.lt.s32.totalorder %v558, 14
        %v590 = vsel %vm589, %v558, 14
        %vm591 = vcmp.lt.s32.totalorder %v560, 14
        %v592 = vsel %vm591, %v560, 14
        %vm593 = vcmp.lt.s32.totalorder %v562, 14
        %v594 = vsel %vm593, %v562, 14
        %vm595 = vcmp.lt.s32.totalorder %v564, 14
        %v596 = vsel %vm595, %v564, 14
        %vm597 = vcmp.lt.s32.totalorder %v566, 14
        %v598 = vsel %vm597, %v566, 14
        %vm599 = vcmp.lt.s32.totalorder %v568, 14
        %v600 = vsel %vm599, %v568, 14
        %vm601 = vcmp.lt.s32.totalorder %v570, 14
        %v602 = vsel %vm601, %v570, 14
        %vm603 = vcmp.lt.s32.totalorder %v572, 14
        %v604 = vsel %vm603, %v572, 14
        %vm605 = vcmp.lt.s32.totalorder %v574, 14
        %v606 = vsel %vm605, %v574, 14
        %vm607 = vcmp.lt.s32.totalorder %v576, 14
        %v608 = vsel %vm607, %v576, 14
        %vm609 = vcmp.lt.s32.totalorder %v578, 14
        %v610 = vsel %vm609, %v578, 14
        %vm611 = vcmp.lt.s32.totalorder %v580, 14
        %v612 = vsel %vm611, %v580, 14
        %v613 = vmul.u32 %v582, 16
        %v614 = vmul.u32 %v584, 16
        %v615 = vmul.u32 %v586, 16
        %v616 = vmul.u32 %v588, 16
        %v617 = vmul.u32 %v590, 16
        %v618 = vmul.u32 %v592, 16
        %v619 = vmul.u32 %v594, 16
        %v620 = vmul.u32 %v596, 16
        %v621 = vmul.u32 %v598, 16
        %v622 = vmul.u32 %v600, 16
        %v623 = vmul.u32 %v602, 16
        %v624 = vmul.u32 %v604, 16
        %v625 = vmul.u32 %v606, 16
        %v626 = vmul.u32 %v608, 16
        %v627 = vmul.u32 %v610, 16
        %v628 = vmul.u32 %v612, 16
        %629 = vrot.lane.b32.xlu0 %v582, 1
        %v630 = vpop.permute.xlu0 %629
        %631 = vrot.lane.b32.xlu0 %v584, 1
        %v632 = vpop.permute.xlu0 %631
        %633 = vrot.lane.b32.xlu0 %v586, 1
        %v634 = vpop.permute.xlu0 %633
        %635 = vrot.lane.b32.xlu0 %v588, 1
        %v636 = vpop.permute.xlu0 %635
        %637 = vrot.lane.b32.xlu0 %v590, 1
        %v638 = vpop.permute.xlu0 %637
        %639 = vrot.lane.b32.xlu0 %v592, 1
        %v640 = vpop.permute.xlu0 %639
        %641 = vrot.lane.b32.xlu0 %v594, 1
        %v642 = vpop.permute.xlu0 %641
        %643 = vrot.lane.b32.xlu0 %v596, 1
        %v644 = vpop.permute.xlu0 %643
        %645 = vrot.lane.b32.xlu0 %v598, 1
        %v646 = vpop.permute.xlu0 %645
        %647 = vrot.lane.b32.xlu0 %v600, 1
        %v648 = vpop.permute.xlu0 %647
        %649 = vrot.lane.b32.xlu0 %v602, 1
        %v650 = vpop.permute.xlu0 %649
        %651 = vrot.lane.b32.xlu0 %v604, 1
        %v652 = vpop.permute.xlu0 %651
        %653 = vrot.lane.b32.xlu0 %v606, 1
        %v654 = vpop.permute.xlu0 %653
        %655 = vrot.lane.b32.xlu0 %v608, 1
        %v656 = vpop.permute.xlu0 %655
        %657 = vrot.lane.b32.xlu0 %v610, 1
        %v658 = vpop.permute.xlu0 %657
        %659 = vrot.lane.b32.xlu0 %v612, 1
        %v660 = vpop.permute.xlu0 %659
        %v661 = vadd.s32 %v613, %v630
        %v662 = vadd.s32 %v614, %v632
        %v663 = vadd.s32 %v615, %v634
        %v664 = vadd.s32 %v616, %v636
        %v665 = vadd.s32 %v617, %v638
        %v666 = vadd.s32 %v618, %v640
        %v667 = vadd.s32 %v619, %v642
        %v668 = vadd.s32 %v620, %v644
        %v669 = vadd.s32 %v621, %v646
        %v670 = vadd.s32 %v622, %v648
        %v671 = vadd.s32 %v623, %v650
        %v672 = vadd.s32 %v624, %v652
        %v673 = vadd.s32 %v625, %v654
        %v674 = vadd.s32 %v626, %v656
        %v675 = vadd.s32 %v627, %v658
        %v676 = vadd.s32 %v628, %v660
        %677 = vrot.lane.b32.xlu0 %v661, 127
        %v678 = vpop.permute.xlu0 %677
        %679 = vrot.lane.b32.xlu0 %v662, 127
        %v680 = vpop.permute.xlu0 %679
        %681 = vrot.lane.b32.xlu0 %v663, 127
        %v682 = vpop.permute.xlu0 %681
        %683 = vrot.lane.b32.xlu0 %v664, 127
        %v684 = vpop.permute.xlu0 %683
        %685 = vrot.lane.b32.xlu0 %v665, 127
        %v686 = vpop.permute.xlu0 %685
        %687 = vrot.lane.b32.xlu0 %v666, 127
        %v688 = vpop.permute.xlu0 %687
        %689 = vrot.lane.b32.xlu0 %v667, 127
        %v690 = vpop.permute.xlu0 %689
        %691 = vrot.lane.b32.xlu0 %v668, 127
        %v692 = vpop.permute.xlu0 %691
        %693 = vrot.lane.b32.xlu0 %v669, 127
        %v694 = vpop.permute.xlu0 %693
        %695 = vrot.lane.b32.xlu0 %v670, 127
        %v696 = vpop.permute.xlu0 %695
        %697 = vrot.lane.b32.xlu0 %v671, 127
        %v698 = vpop.permute.xlu0 %697
        %699 = vrot.lane.b32.xlu0 %v672, 127
        %v700 = vpop.permute.xlu0 %699
        %701 = vrot.lane.b32.xlu0 %v673, 127
        %v702 = vpop.permute.xlu0 %701
        %703 = vrot.lane.b32.xlu0 %v674, 127
        %v704 = vpop.permute.xlu0 %703
        %705 = vrot.lane.b32.xlu0 %v675, 127
        %v706 = vpop.permute.xlu0 %705
        %707 = vrot.lane.b32.xlu0 %v676, 127
        %v708 = vpop.permute.xlu0 %707
        %vm709 = vcmask 7168
        %710 = vst.msk [vmem:[#allocation3] sm:$0xff] %vm709, %v678
        %711 = vst.msk [vmem:[#allocation3 + $0x8] sm:$0xff] %vm709, %v680
        %712 = vst.msk [vmem:[#allocation3 + $0x10] sm:$0xff] %vm709, %v682
        %713 = vst.msk [vmem:[#allocation3 + $0x18] sm:$0xff] %vm709, %v684
        %714 = vst.msk [vmem:[#allocation3 + $0x20] sm:$0xff] %vm709, %v686
        %715 = vst.msk [vmem:[#allocation3 + $0x28] sm:$0xff] %vm709, %v688
        %716 = vst.msk [vmem:[#allocation3 + $0x30] sm:$0xff] %vm709, %v690
        %717 = vst.msk [vmem:[#allocation3 + $0x38] sm:$0xff] %vm709, %v692
        %718 = vst.msk [vmem:[#allocation3 + $0x40] sm:$0xff] %vm709, %v694
        %719 = vst.msk [vmem:[#allocation3 + $0x48] sm:$0xff] %vm709, %v696
        %720 = vst.msk [vmem:[#allocation3 + $0x50] sm:$0xff] %vm709, %v698
        %721 = vst.msk [vmem:[#allocation3 + $0x58] sm:$0xff] %vm709, %v700
        %722 = vst.msk [vmem:[#allocation3 + $0x60] sm:$0xff] %vm709, %v702
        %723 = vst.msk [vmem:[#allocation3 + $0x68] sm:$0xff] %vm709, %v704
        %724 = vst.msk [vmem:[#allocation3 + $0x70] sm:$0xff] %vm709, %v706
        %725 = vst.msk [vmem:[#allocation3 + $0x78] sm:$0xff] %vm709, %v708
        %v726 = vcvt.s32.f32 %v582
        %v727 = vcvt.s32.f32 %v584
        %v728 = vcvt.s32.f32 %v586
        %v729 = vcvt.s32.f32 %v588
        %v730 = vcvt.s32.f32 %v590
        %v731 = vcvt.s32.f32 %v592
        %v732 = vcvt.s32.f32 %v594
        %v733 = vcvt.s32.f32 %v596
        %v734 = vcvt.s32.f32 %v598
        %v735 = vcvt.s32.f32 %v600
        %v736 = vcvt.s32.f32 %v602
        %v737 = vcvt.s32.f32 %v604
        %v738 = vcvt.s32.f32 %v606
        %v739 = vcvt.s32.f32 %v608
        %v740 = vcvt.s32.f32 %v610
        %v741 = vcvt.s32.f32 %v612
        %v742 = vsub.f32 %v501, %v726
        %v743 = vsub.f32 %v502, %v727
        %v744 = vsub.f32 %v503, %v728
        %v745 = vsub.f32 %v504, %v729
        %v746 = vsub.f32 %v505, %v730
        %v747 = vsub.f32 %v506, %v731
        %v748 = vsub.f32 %v507, %v732
        %v749 = vsub.f32 %v508, %v733
        %v750 = vsub.f32 %v509, %v734
        %v751 = vsub.f32 %v510, %v735
        %v752 = vsub.f32 %v511, %v736
        %v753 = vsub.f32 %v512, %v737
        %v754 = vsub.f32 %v513, %v738
        %v755 = vsub.f32 %v514, %v739
        %v756 = vsub.f32 %v515, %v740
        %v757 = vsub.f32 %v516, %v741
        %v758 = vand.u32 2147483647, %v742
        %v759 = vand.u32 2147483647, %v743
        %v760 = vand.u32 2147483647, %v744
        %v761 = vand.u32 2147483647, %v745
        %v762 = vand.u32 2147483647, %v746
        %v763 = vand.u32 2147483647, %v747
        %v764 = vand.u32 2147483647, %v748
        %v765 = vand.u32 2147483647, %v749
        %v766 = vand.u32 2147483647, %v750
        %v767 = vand.u32 2147483647, %v751
        %v768 = vand.u32 2147483647, %v752
        %v769 = vand.u32 2147483647, %v753
        %v770 = vand.u32 2147483647, %v754
        %v771 = vand.u32 2147483647, %v755
        %v772 = vand.u32 2147483647, %v756
        %v773 = vand.u32 2147483647, %v757
        %v774 = vsub.f32 1.0, %v758
        %v775 = vsub.f32 1.0, %v759
        %v776 = vsub.f32 1.0, %v760
        %v777 = vsub.f32 1.0, %v761
        %v778 = vsub.f32 1.0, %v762
        %v779 = vsub.f32 1.0, %v763
        %v780 = vsub.f32 1.0, %v764
        %v781 = vsub.f32 1.0, %v765
        %v782 = vsub.f32 1.0, %v766
        %v783 = vsub.f32 1.0, %v767
        %v784 = vsub.f32 1.0, %v768
        %v785 = vsub.f32 1.0, %v769
        %v786 = vsub.f32 1.0, %v770
        %v787 = vsub.f32 1.0, %v771
        %v788 = vsub.f32 1.0, %v772
        %v789 = vsub.f32 1.0, %v773
        %v790 = vmax.f32 %v774, 0.0
        %v791 = vmax.f32 %v775, 0.0
        %v792 = vmax.f32 %v776, 0.0
        %v793 = vmax.f32 %v777, 0.0
        %v794 = vmax.f32 %v778, 0.0
        %v795 = vmax.f32 %v779, 0.0
        %v796 = vmax.f32 %v780, 0.0
        %v797 = vmax.f32 %v781, 0.0
        %v798 = vmax.f32 %v782, 0.0
        %v799 = vmax.f32 %v783, 0.0
        %v800 = vmax.f32 %v784, 0.0
        %v801 = vmax.f32 %v785, 0.0
        %v802 = vmax.f32 %v786, 0.0
        %v803 = vmax.f32 %v787, 0.0
        %v804 = vmax.f32 %v788, 0.0
        %v805 = vmax.f32 %v789, 0.0
        %v806 = vadd.f32 %v726, 1.0
        %v807 = vadd.f32 %v727, 1.0
        %v808 = vadd.f32 %v728, 1.0
        %v809 = vadd.f32 %v729, 1.0
        %v810 = vadd.f32 %v730, 1.0
        %v811 = vadd.f32 %v731, 1.0
        %v812 = vadd.f32 %v732, 1.0
        %v813 = vadd.f32 %v733, 1.0
        %v814 = vadd.f32 %v734, 1.0
        %v815 = vadd.f32 %v735, 1.0
        %v816 = vadd.f32 %v736, 1.0
        %v817 = vadd.f32 %v737, 1.0
        %v818 = vadd.f32 %v738, 1.0
        %v819 = vadd.f32 %v739, 1.0
        %v820 = vadd.f32 %v740, 1.0
        %v821 = vadd.f32 %v741, 1.0
        %v822 = vsub.f32 %v501, %v806
        %v823 = vsub.f32 %v502, %v807
        %v824 = vsub.f32 %v503, %v808
        %v825 = vsub.f32 %v504, %v809
        %v826 = vsub.f32 %v505, %v810
        %v827 = vsub.f32 %v506, %v811
        %v828 = vsub.f32 %v507, %v812
        %v829 = vsub.f32 %v508, %v813
        %v830 = vsub.f32 %v509, %v814
        %v831 = vsub.f32 %v510, %v815
        %v832 = vsub.f32 %v511, %v816
        %v833 = vsub.f32 %v512, %v817
        %v834 = vsub.f32 %v513, %v818
        %v835 = vsub.f32 %v514, %v819
        %v836 = vsub.f32 %v515, %v820
        %v837 = vsub.f32 %v516, %v821
        %v838 = vand.u32 2147483647, %v822
        %v839 = vand.u32 2147483647, %v823
        %v840 = vand.u32 2147483647, %v824
        %v841 = vand.u32 2147483647, %v825
        %v842 = vand.u32 2147483647, %v826
        %v843 = vand.u32 2147483647, %v827
        %v844 = vand.u32 2147483647, %v828
        %v845 = vand.u32 2147483647, %v829
        %v846 = vand.u32 2147483647, %v830
        %v847 = vand.u32 2147483647, %v831
        %v848 = vand.u32 2147483647, %v832
        %v849 = vand.u32 2147483647, %v833
        %v850 = vand.u32 2147483647, %v834
        %v851 = vand.u32 2147483647, %v835
        %v852 = vand.u32 2147483647, %v836
        %v853 = vand.u32 2147483647, %v837
        %v854 = vsub.f32 1.0, %v838
        %v855 = vsub.f32 1.0, %v839
        %v856 = vsub.f32 1.0, %v840
        %v857 = vsub.f32 1.0, %v841
        %v858 = vsub.f32 1.0, %v842
        %v859 = vsub.f32 1.0, %v843
        %v860 = vsub.f32 1.0, %v844
        %v861 = vsub.f32 1.0, %v845
        %v862 = vsub.f32 1.0, %v846
        %v863 = vsub.f32 1.0, %v847
        %v864 = vsub.f32 1.0, %v848
        %v865 = vsub.f32 1.0, %v849
        %v866 = vsub.f32 1.0, %v850
        %v867 = vsub.f32 1.0, %v851
        %v868 = vsub.f32 1.0, %v852
        %v869 = vsub.f32 1.0, %v853
        %v870 = vmax.f32 %v854, 0.0
        %v871 = vmax.f32 %v855, 0.0
        %v872 = vmax.f32 %v856, 0.0
        %v873 = vmax.f32 %v857, 0.0
        %v874 = vmax.f32 %v858, 0.0
        %v875 = vmax.f32 %v859, 0.0
        %v876 = vmax.f32 %v860, 0.0
        %v877 = vmax.f32 %v861, 0.0
        %v878 = vmax.f32 %v862, 0.0
        %v879 = vmax.f32 %v863, 0.0
        %v880 = vmax.f32 %v864, 0.0
        %v881 = vmax.f32 %v865, 0.0
        %v882 = vmax.f32 %v866, 0.0
        %v883 = vmax.f32 %v867, 0.0
        %v884 = vmax.f32 %v868, 0.0
        %v885 = vmax.f32 %v869, 0.0
        %902 = vrot.lane.b32.xlu0 %v790, 127
        %v903 = vpop.permute.xlu0 %902
        %904 = vrot.lane.b32.xlu0 %v791, 127
        %v905 = vpop.permute.xlu0 %904
        %906 = vrot.lane.b32.xlu0 %v792, 127
        %v907 = vpop.permute.xlu0 %906
        %908 = vrot.lane.b32.xlu0 %v793, 127
        %v909 = vpop.permute.xlu0 %908
        %910 = vrot.lane.b32.xlu0 %v794, 127
        %v911 = vpop.permute.xlu0 %910
        %912 = vrot.lane.b32.xlu0 %v795, 127
        %v913 = vpop.permute.xlu0 %912
        %914 = vrot.lane.b32.xlu0 %v796, 127
        %v915 = vpop.permute.xlu0 %914
        %916 = vrot.lane.b32.xlu0 %v797, 127
        %v917 = vpop.permute.xlu0 %916
        %918 = vrot.lane.b32.xlu0 %v798, 127
        %v919 = vpop.permute.xlu0 %918
        %920 = vrot.lane.b32.xlu0 %v799, 127
        %v921 = vpop.permute.xlu0 %920
        %922 = vrot.lane.b32.xlu0 %v800, 127
        %v923 = vpop.permute.xlu0 %922
        %924 = vrot.lane.b32.xlu0 %v801, 127
        %v925 = vpop.permute.xlu0 %924
        %926 = vrot.lane.b32.xlu0 %v802, 127
        %v927 = vpop.permute.xlu0 %926
        %928 = vrot.lane.b32.xlu0 %v803, 127
        %v929 = vpop.permute.xlu0 %928
        %930 = vrot.lane.b32.xlu0 %v804, 127
        %v931 = vpop.permute.xlu0 %930
        %932 = vrot.lane.b32.xlu0 %v805, 127
        %v933 = vpop.permute.xlu0 %932
        %v950 = vmul.f32 %v790, %v903
        %v951 = vmul.f32 %v791, %v905
        %v952 = vmul.f32 %v792, %v907
        %v953 = vmul.f32 %v793, %v909
        %v954 = vmul.f32 %v794, %v911
        %v955 = vmul.f32 %v795, %v913
        %v956 = vmul.f32 %v796, %v915
        %v957 = vmul.f32 %v797, %v917
        %v958 = vmul.f32 %v798, %v919
        %v959 = vmul.f32 %v799, %v921
        %v960 = vmul.f32 %v800, %v923
        %v961 = vmul.f32 %v801, %v925
        %v962 = vmul.f32 %v802, %v927
        %v963 = vmul.f32 %v803, %v929
        %v964 = vmul.f32 %v804, %v931
        %v965 = vmul.f32 %v805, %v933
        %966 = vst.msk [vmem:[#allocation4] sm:$0xff] %vm709, %v950
        %967 = vst.msk [vmem:[#allocation4 + $0x8] sm:$0xff] %vm709, %v951
        %968 = vst.msk [vmem:[#allocation4 + $0x10] sm:$0xff] %vm709, %v952
        %969 = vst.msk [vmem:[#allocation4 + $0x18] sm:$0xff] %vm709, %v953
        %970 = vst.msk [vmem:[#allocation4 + $0x20] sm:$0xff] %vm709, %v954
        %971 = vst.msk [vmem:[#allocation4 + $0x28] sm:$0xff] %vm709, %v955
        %972 = vst.msk [vmem:[#allocation4 + $0x30] sm:$0xff] %vm709, %v956
        %973 = vst.msk [vmem:[#allocation4 + $0x38] sm:$0xff] %vm709, %v957
        %974 = vst.msk [vmem:[#allocation4 + $0x40] sm:$0xff] %vm709, %v958
        %975 = vst.msk [vmem:[#allocation4 + $0x48] sm:$0xff] %vm709, %v959
        %976 = vst.msk [vmem:[#allocation4 + $0x50] sm:$0xff] %vm709, %v960
        %977 = vst.msk [vmem:[#allocation4 + $0x58] sm:$0xff] %vm709, %v961
        %978 = vst.msk [vmem:[#allocation4 + $0x60] sm:$0xff] %vm709, %v962
        %979 = vst.msk [vmem:[#allocation4 + $0x68] sm:$0xff] %vm709, %v963
        %980 = vst.msk [vmem:[#allocation4 + $0x70] sm:$0xff] %vm709, %v964
        %981 = vst.msk [vmem:[#allocation4 + $0x78] sm:$0xff] %vm709, %v965
        %v982 = vmul.f32 %v870, %v903
        %v983 = vmul.f32 %v871, %v905
        %v984 = vmul.f32 %v872, %v907
        %v985 = vmul.f32 %v873, %v909
        %v986 = vmul.f32 %v874, %v911
        %v987 = vmul.f32 %v875, %v913
        %v988 = vmul.f32 %v876, %v915
        %v989 = vmul.f32 %v877, %v917
        %v990 = vmul.f32 %v878, %v919
        %v991 = vmul.f32 %v879, %v921
        %v992 = vmul.f32 %v880, %v923
        %v993 = vmul.f32 %v881, %v925
        %v994 = vmul.f32 %v882, %v927
        %v995 = vmul.f32 %v883, %v929
        %v996 = vmul.f32 %v884, %v931
        %v997 = vmul.f32 %v885, %v933
        %1014 = vrot.lane.b32.xlu0 %v982, 1
        %v1015 = vpop.permute.xlu0 %1014
        %1016 = vrot.lane.b32.xlu0 %v983, 1
        %v1017 = vpop.permute.xlu0 %1016
        %1018 = vrot.lane.b32.xlu0 %v984, 1
        %v1019 = vpop.permute.xlu0 %1018
        %1020 = vrot.lane.b32.xlu0 %v985, 1
        %v1021 = vpop.permute.xlu0 %1020
        %1022 = vrot.lane.b32.xlu0 %v986, 1
        %v1023 = vpop.permute.xlu0 %1022
        %1024 = vrot.lane.b32.xlu0 %v987, 1
        %v1025 = vpop.permute.xlu0 %1024
        %1026 = vrot.lane.b32.xlu0 %v988, 1
        %v1027 = vpop.permute.xlu0 %1026
        %1028 = vrot.lane.b32.xlu0 %v989, 1
        %v1029 = vpop.permute.xlu0 %1028
        %1030 = vrot.lane.b32.xlu0 %v990, 1
        %v1031 = vpop.permute.xlu0 %1030
        %1032 = vrot.lane.b32.xlu0 %v991, 1
        %v1033 = vpop.permute.xlu0 %1032
        %1034 = vrot.lane.b32.xlu0 %v992, 1
        %v1035 = vpop.permute.xlu0 %1034
        %1036 = vrot.lane.b32.xlu0 %v993, 1
        %v1037 = vpop.permute.xlu0 %1036
        %1038 = vrot.lane.b32.xlu0 %v994, 1
        %v1039 = vpop.permute.xlu0 %1038
        %1040 = vrot.lane.b32.xlu0 %v995, 1
        %v1041 = vpop.permute.xlu0 %1040
        %1042 = vrot.lane.b32.xlu0 %v996, 1
        %v1043 = vpop.permute.xlu0 %1042
        %1044 = vrot.lane.b32.xlu0 %v997, 1
        %v1045 = vpop.permute.xlu0 %1044
        %vm1062 = vcmask 15368
        %1063 = vst.msk [vmem:[#allocation4] sm:$0xff] %vm1062, %v1015
        %1064 = vst.msk [vmem:[#allocation4 + $0x8] sm:$0xff] %vm1062, %v1017
        %1065 = vst.msk [vmem:[#allocation4 + $0x10] sm:$0xff] %vm1062, %v1019
        %1066 = vst.msk [vmem:[#allocation4 + $0x18] sm:$0xff] %vm1062, %v1021
        %1067 = vst.msk [vmem:[#allocation4 + $0x20] sm:$0xff] %vm1062, %v1023
        %1068 = vst.msk [vmem:[#allocation4 + $0x28] sm:$0xff] %vm1062, %v1025
        %1069 = vst.msk [vmem:[#allocation4 + $0x30] sm:$0xff] %vm1062, %v1027
        %1070 = vst.msk [vmem:[#allocation4 + $0x38] sm:$0xff] %vm1062, %v1029
        %1071 = vst.msk [vmem:[#allocation4 + $0x40] sm:$0xff] %vm1062, %v1031
        %1072 = vst.msk [vmem:[#allocation4 + $0x48] sm:$0xff] %vm1062, %v1033
        %1073 = vst.msk [vmem:[#allocation4 + $0x50] sm:$0xff] %vm1062, %v1035
        %1074 = vst.msk [vmem:[#allocation4 + $0x58] sm:$0xff] %vm1062, %v1037
        %1075 = vst.msk [vmem:[#allocation4 + $0x60] sm:$0xff] %vm1062, %v1039
        %1076 = vst.msk [vmem:[#allocation4 + $0x68] sm:$0xff] %vm1062, %v1041
        %1077 = vst.msk [vmem:[#allocation4 + $0x70] sm:$0xff] %vm1062, %v1043
        %1078 = vst.msk [vmem:[#allocation4 + $0x78] sm:$0xff] %vm1062, %v1045
        %1095 = vrot.lane.b32.xlu0 %v870, 127
        %v1096 = vpop.permute.xlu0 %1095
        %1097 = vrot.lane.b32.xlu0 %v871, 127
        %v1098 = vpop.permute.xlu0 %1097
        %1099 = vrot.lane.b32.xlu0 %v872, 127
        %v1100 = vpop.permute.xlu0 %1099
        %1101 = vrot.lane.b32.xlu0 %v873, 127
        %v1102 = vpop.permute.xlu0 %1101
        %1103 = vrot.lane.b32.xlu0 %v874, 127
        %v1104 = vpop.permute.xlu0 %1103
        %1105 = vrot.lane.b32.xlu0 %v875, 127
        %v1106 = vpop.permute.xlu0 %1105
        %1107 = vrot.lane.b32.xlu0 %v876, 127
        %v1108 = vpop.permute.xlu0 %1107
        %1109 = vrot.lane.b32.xlu0 %v877, 127
        %v1110 = vpop.permute.xlu0 %1109
        %1111 = vrot.lane.b32.xlu0 %v878, 127
        %v1112 = vpop.permute.xlu0 %1111
        %1113 = vrot.lane.b32.xlu0 %v879, 127
        %v1114 = vpop.permute.xlu0 %1113
        %1115 = vrot.lane.b32.xlu0 %v880, 127
        %v1116 = vpop.permute.xlu0 %1115
        %1117 = vrot.lane.b32.xlu0 %v881, 127
        %v1118 = vpop.permute.xlu0 %1117
        %1119 = vrot.lane.b32.xlu0 %v882, 127
        %v1120 = vpop.permute.xlu0 %1119
        %1121 = vrot.lane.b32.xlu0 %v883, 127
        %v1122 = vpop.permute.xlu0 %1121
        %1123 = vrot.lane.b32.xlu0 %v884, 127
        %v1124 = vpop.permute.xlu0 %1123
        %1125 = vrot.lane.b32.xlu0 %v885, 127
        %v1126 = vpop.permute.xlu0 %1125
        %v1143 = vmul.f32 %v790, %v1096
        %v1144 = vmul.f32 %v791, %v1098
        %v1145 = vmul.f32 %v792, %v1100
        %v1146 = vmul.f32 %v793, %v1102
        %v1147 = vmul.f32 %v794, %v1104
        %v1148 = vmul.f32 %v795, %v1106
        %v1149 = vmul.f32 %v796, %v1108
        %v1150 = vmul.f32 %v797, %v1110
        %v1151 = vmul.f32 %v798, %v1112
        %v1152 = vmul.f32 %v799, %v1114
        %v1153 = vmul.f32 %v800, %v1116
        %v1154 = vmul.f32 %v801, %v1118
        %v1155 = vmul.f32 %v802, %v1120
        %v1156 = vmul.f32 %v803, %v1122
        %v1157 = vmul.f32 %v804, %v1124
        %v1158 = vmul.f32 %v805, %v1126
        %1175 = vrot.lane.b32.xlu0 %v1143, 2
        %v1176 = vpop.permute.xlu0 %1175
        %1177 = vrot.lane.b32.xlu0 %v1144, 2
        %v1178 = vpop.permute.xlu0 %1177
        %1179 = vrot.lane.b32.xlu0 %v1145, 2
        %v1180 = vpop.permute.xlu0 %1179
        %1181 = vrot.lane.b32.xlu0 %v1146, 2
        %v1182 = vpop.permute.xlu0 %1181
        %1183 = vrot.lane.b32.xlu0 %v1147, 2
        %v1184 = vpop.permute.xlu0 %1183
        %1185 = vrot.lane.b32.xlu0 %v1148, 2
        %v1186 = vpop.permute.xlu0 %1185
        %1187 = vrot.lane.b32.xlu0 %v1149, 2
        %v1188 = vpop.permute.xlu0 %1187
        %1189 = vrot.lane.b32.xlu0 %v1150, 2
        %v1190 = vpop.permute.xlu0 %1189
        %1191 = vrot.lane.b32.xlu0 %v1151, 2
        %v1192 = vpop.permute.xlu0 %1191
        %1193 = vrot.lane.b32.xlu0 %v1152, 2
        %v1194 = vpop.permute.xlu0 %1193
        %1195 = vrot.lane.b32.xlu0 %v1153, 2
        %v1196 = vpop.permute.xlu0 %1195
        %1197 = vrot.lane.b32.xlu0 %v1154, 2
        %v1198 = vpop.permute.xlu0 %1197
        %1199 = vrot.lane.b32.xlu0 %v1155, 2
        %v1200 = vpop.permute.xlu0 %1199
        %1201 = vrot.lane.b32.xlu0 %v1156, 2
        %v1202 = vpop.permute.xlu0 %1201
        %1203 = vrot.lane.b32.xlu0 %v1157, 2
        %v1204 = vpop.permute.xlu0 %1203
        %1205 = vrot.lane.b32.xlu0 %v1158, 2
        %v1206 = vpop.permute.xlu0 %1205
        %vm1223 = vcmask 23568
        %1224 = vst.msk [vmem:[#allocation4] sm:$0xff] %vm1223, %v1176
        %1225 = vst.msk [vmem:[#allocation4 + $0x8] sm:$0xff] %vm1223, %v1178
        %1226 = vst.msk [vmem:[#allocation4 + $0x10] sm:$0xff] %vm1223, %v1180
        %1227 = vst.msk [vmem:[#allocation4 + $0x18] sm:$0xff] %vm1223, %v1182
        %1228 = vst.msk [vmem:[#allocation4 + $0x20] sm:$0xff] %vm1223, %v1184
        %1229 = vst.msk [vmem:[#allocation4 + $0x28] sm:$0xff] %vm1223, %v1186
        %1230 = vst.msk [vmem:[#allocation4 + $0x30] sm:$0xff] %vm1223, %v1188
        %1231 = vst.msk [vmem:[#allocation4 + $0x38] sm:$0xff] %vm1223, %v1190
        %1232 = vst.msk [vmem:[#allocation4 + $0x40] sm:$0xff] %vm1223, %v1192
        %1233 = vst.msk [vmem:[#allocation4 + $0x48] sm:$0xff] %vm1223, %v1194
        %1234 = vst.msk [vmem:[#allocation4 + $0x50] sm:$0xff] %vm1223, %v1196
        %1235 = vst.msk [vmem:[#allocation4 + $0x58] sm:$0xff] %vm1223, %v1198
        %1236 = vst.msk [vmem:[#allocation4 + $0x60] sm:$0xff] %vm1223, %v1200
        %1237 = vst.msk [vmem:[#allocation4 + $0x68] sm:$0xff] %vm1223, %v1202
        %1238 = vst.msk [vmem:[#allocation4 + $0x70] sm:$0xff] %vm1223, %v1204
        %1239 = vst.msk [vmem:[#allocation4 + $0x78] sm:$0xff] %vm1223, %v1206
        %v1240 = vmul.f32 %v870, %v1096
        %v1241 = vmul.f32 %v871, %v1098
        %v1242 = vmul.f32 %v872, %v1100
        %v1243 = vmul.f32 %v873, %v1102
        %v1244 = vmul.f32 %v874, %v1104
        %v1245 = vmul.f32 %v875, %v1106
        %v1246 = vmul.f32 %v876, %v1108
        %v1247 = vmul.f32 %v877, %v1110
        %v1248 = vmul.f32 %v878, %v1112
        %v1249 = vmul.f32 %v879, %v1114
        %v1250 = vmul.f32 %v880, %v1116
        %v1251 = vmul.f32 %v881, %v1118
        %v1252 = vmul.f32 %v882, %v1120
        %v1253 = vmul.f32 %v883, %v1122
        %v1254 = vmul.f32 %v884, %v1124
        %v1255 = vmul.f32 %v885, %v1126
        %1272 = vrot.lane.b32.xlu0 %v1240, 3
        %v1273 = vpop.permute.xlu0 %1272
        %1274 = vrot.lane.b32.xlu0 %v1241, 3
        %v1275 = vpop.permute.xlu0 %1274
        %1276 = vrot.lane.b32.xlu0 %v1242, 3
        %v1277 = vpop.permute.xlu0 %1276
        %1278 = vrot.lane.b32.xlu0 %v1243, 3
        %v1279 = vpop.permute.xlu0 %1278
        %1280 = vrot.lane.b32.xlu0 %v1244, 3
        %v1281 = vpop.permute.xlu0 %1280
        %1282 = vrot.lane.b32.xlu0 %v1245, 3
        %v1283 = vpop.permute.xlu0 %1282
        %1284 = vrot.lane.b32.xlu0 %v1246, 3
        %v1285 = vpop.permute.xlu0 %1284
        %1286 = vrot.lane.b32.xlu0 %v1247, 3
        %v1287 = vpop.permute.xlu0 %1286
        %1288 = vrot.lane.b32.xlu0 %v1248, 3
        %v1289 = vpop.permute.xlu0 %1288
        %1290 = vrot.lane.b32.xlu0 %v1249, 3
        %v1291 = vpop.permute.xlu0 %1290
        %1292 = vrot.lane.b32.xlu0 %v1250, 3
        %v1293 = vpop.permute.xlu0 %1292
        %1294 = vrot.lane.b32.xlu0 %v1251, 3
        %v1295 = vpop.permute.xlu0 %1294
        %1296 = vrot.lane.b32.xlu0 %v1252, 3
        %v1297 = vpop.permute.xlu0 %1296
        %1298 = vrot.lane.b32.xlu0 %v1253, 3
        %v1299 = vpop.permute.xlu0 %1298
        %1300 = vrot.lane.b32.xlu0 %v1254, 3
        %v1301 = vpop.permute.xlu0 %1300
        %1302 = vrot.lane.b32.xlu0 %v1255, 3
        %v1303 = vpop.permute.xlu0 %1302
        %vm1320 = vcmask 31768
        %1321 = vst.msk [vmem:[#allocation4] sm:$0xff] %vm1320, %v1273
        %1322 = vst.msk [vmem:[#allocation4 + $0x8] sm:$0xff] %vm1320, %v1275
        %1323 = vst.msk [vmem:[#allocation4 + $0x10] sm:$0xff] %vm1320, %v1277
        %1324 = vst.msk [vmem:[#allocation4 + $0x18] sm:$0xff] %vm1320, %v1279
        %1325 = vst.msk [vmem:[#allocation4 + $0x20] sm:$0xff] %vm1320, %v1281
        %1326 = vst.msk [vmem:[#allocation4 + $0x28] sm:$0xff] %vm1320, %v1283
        %1327 = vst.msk [vmem:[#allocation4 + $0x30] sm:$0xff] %vm1320, %v1285
        %1328 = vst.msk [vmem:[#allocation4 + $0x38] sm:$0xff] %vm1320, %v1287
        %1329 = vst.msk [vmem:[#allocation4 + $0x40] sm:$0xff] %vm1320, %v1289
        %1330 = vst.msk [vmem:[#allocation4 + $0x48] sm:$0xff] %vm1320, %v1291
        %1331 = vst.msk [vmem:[#allocation4 + $0x50] sm:$0xff] %vm1320, %v1293
        %1332 = vst.msk [vmem:[#allocation4 + $0x58] sm:$0xff] %vm1320, %v1295
        %1333 = vst.msk [vmem:[#allocation4 + $0x60] sm:$0xff] %vm1320, %v1297
        %1334 = vst.msk [vmem:[#allocation4 + $0x68] sm:$0xff] %vm1320, %v1299
        %1335 = vst.msk [vmem:[#allocation4 + $0x70] sm:$0xff] %vm1320, %v1301
        %1336 = vst.msk [vmem:[#allocation4 + $0x78] sm:$0xff] %vm1320, %v1303
        %vm1337 = vcmask 31744
        %1338 = vst.msk [vmem:[#allocation2] sm:$0xff] %vm1337, 0.0
        %1339 = vst.msk [vmem:[#allocation2 + $0x8] sm:$0xff] %vm1337, 0.0
        %1340 = vst.msk [vmem:[#allocation2 + $0x10] sm:$0xff] %vm1337, 0.0
        %1341 = vst.msk [vmem:[#allocation2 + $0x18] sm:$0xff] %vm1337, 0.0
        %1342 = vst.msk [vmem:[#allocation2 + $0x20] sm:$0xff] %vm1337, 0.0
        %1343 = vst.msk [vmem:[#allocation2 + $0x28] sm:$0xff] %vm1337, 0.0
        %1344 = vst.msk [vmem:[#allocation2 + $0x30] sm:$0xff] %vm1337, 0.0
        %1345 = vst.msk [vmem:[#allocation2 + $0x38] sm:$0xff] %vm1337, 0.0
        %1346 = vst.msk [vmem:[#allocation2 + $0x40] sm:$0xff] %vm1337, 0.0
        %1347 = vst.msk [vmem:[#allocation2 + $0x48] sm:$0xff] %vm1337, 0.0
        %1348 = vst.msk [vmem:[#allocation2 + $0x50] sm:$0xff] %vm1337, 0.0
        %1349 = vst.msk [vmem:[#allocation2 + $0x58] sm:$0xff] %vm1337, 0.0
        %1350 = vst.msk [vmem:[#allocation2 + $0x60] sm:$0xff] %vm1337, 0.0
        %1351 = vst.msk [vmem:[#allocation2 + $0x68] sm:$0xff] %vm1337, 0.0
        %1352 = vst.msk [vmem:[#allocation2 + $0x70] sm:$0xff] %vm1337, 0.0
        %1353 = vst.msk [vmem:[#allocation2 + $0x78] sm:$0xff] %vm1337, 0.0
      $region68: #{subdivision_inference.3} parent=63 // pred_fallthru
        _
      %v1354 = vld [vmem:[#allocation3] sm:$0xff]
      %v1355 = vld [vmem:[#allocation3 + $0x8] sm:$0xff]
      %v1356 = vld [vmem:[#allocation3 + $0x10] sm:$0xff]
      %v1357 = vld [vmem:[#allocation3 + $0x18] sm:$0xff]
      %v1358 = vld [vmem:[#allocation3 + $0x20] sm:$0xff]
      %v1359 = vld [vmem:[#allocation3 + $0x28] sm:$0xff]
      %v1360 = vld [vmem:[#allocation3 + $0x30] sm:$0xff]
      %v1361 = vld [vmem:[#allocation3 + $0x38] sm:$0xff]
      %v1362 = vld [vmem:[#allocation3 + $0x40] sm:$0xff]
      %v1363 = vld [vmem:[#allocation3 + $0x48] sm:$0xff]
      %v1364 = vld [vmem:[#allocation3 + $0x50] sm:$0xff]
      %v1365 = vld [vmem:[#allocation3 + $0x58] sm:$0xff]
      %v1366 = vld [vmem:[#allocation3 + $0x60] sm:$0xff]
      %v1367 = vld [vmem:[#allocation3 + $0x68] sm:$0xff]
      %v1368 = vld [vmem:[#allocation3 + $0x70] sm:$0xff]
      %v1369 = vld [vmem:[#allocation3 + $0x78] sm:$0xff]
      %s1370 = smul.u32 %s29, 256
      %v1371 = vstv %s1370
      %v1372 = vsub.s32 %v1354, %v1371
      %v1373 = vsub.s32 %v1355, %v1371
      %v1374 = vsub.s32 %v1356, %v1371
      %v1375 = vsub.s32 %v1357, %v1371
      %v1376 = vsub.s32 %v1358, %v1371
      %v1377 = vsub.s32 %v1359, %v1371
      %v1378 = vsub.s32 %v1360, %v1371
      %v1379 = vsub.s32 %v1361, %v1371
      %v1380 = vsub.s32 %v1362, %v1371
      %v1381 = vsub.s32 %v1363, %v1371
      %v1382 = vsub.s32 %v1364, %v1371
      %v1383 = vsub.s32 %v1365, %v1371
      %v1384 = vsub.s32 %v1366, %v1371
      %v1385 = vsub.s32 %v1367, %v1371
      %v1386 = vsub.s32 %v1368, %v1371
      %v1387 = vsub.s32 %v1369, %v1371
      %v1388 = vld [vmem:[#allocation4] sm:$0xff]
      %v1389 = vld [vmem:[#allocation4 + $0x8] sm:$0xff]
      %v1390 = vld [vmem:[#allocation4 + $0x10] sm:$0xff]
      %v1391 = vld [vmem:[#allocation4 + $0x18] sm:$0xff]
      %v1392 = vld [vmem:[#allocation4 + $0x20] sm:$0xff]
      %v1393 = vld [vmem:[#allocation4 + $0x28] sm:$0xff]
      %v1394 = vld [vmem:[#allocation4 + $0x30] sm:$0xff]
      %v1395 = vld [vmem:[#allocation4 + $0x38] sm:$0xff]
      %v1396 = vld [vmem:[#allocation4 + $0x40] sm:$0xff]
      %v1397 = vld [vmem:[#allocation4 + $0x48] sm:$0xff]
      %v1398 = vld [vmem:[#allocation4 + $0x50] sm:$0xff]
      %v1399 = vld [vmem:[#allocation4 + $0x58] sm:$0xff]
      %v1400 = vld [vmem:[#allocation4 + $0x60] sm:$0xff]
      %v1401 = vld [vmem:[#allocation4 + $0x68] sm:$0xff]
      %v1402 = vld [vmem:[#allocation4 + $0x70] sm:$0xff]
      %v1403 = vld [vmem:[#allocation4 + $0x78] sm:$0xff]
      %v1404 = vlaneseq
      %v1405 = vand.u32 %v1404, 127
      %v1406 = vadd.s32 %v1405, 128
      %1407 = vset.pattern.permute.xlu0 0
      %1408 = vperm.xlu0 %1407, %v1372
      %v1409 = vpop.permute.xlu0 %1408
      %1410 = vset.pattern.permute.xlu0 0
      %1411 = vperm.xlu0 %1410, %v1373
      %v1412 = vpop.permute.xlu0 %1411
      %1413 = vset.pattern.permute.xlu0 0
      %1414 = vperm.xlu0 %1413, %v1374
      %v1415 = vpop.permute.xlu0 %1414
      %1416 = vset.pattern.permute.xlu0 0
      %1417 = vperm.xlu0 %1416, %v1375
      %v1418 = vpop.permute.xlu0 %1417
      %1419 = vset.pattern.permute.xlu0 0
      %1420 = vperm.xlu0 %1419, %v1376
      %v1421 = vpop.permute.xlu0 %1420
      %1422 = vset.pattern.permute.xlu0 0
      %1423 = vperm.xlu0 %1422, %v1377
      %v1424 = vpop.permute.xlu0 %1423
      %1425 = vset.pattern.permute.xlu0 0
      %1426 = vperm.xlu0 %1425, %v1378
      %v1427 = vpop.permute.xlu0 %1426
      %1428 = vset.pattern.permute.xlu0 0
      %1429 = vperm.xlu0 %1428, %v1379
      %v1430 = vpop.permute.xlu0 %1429
      %1431 = vset.pattern.permute.xlu0 0
      %1432 = vperm.xlu0 %1431, %v1380
      %v1433 = vpop.permute.xlu0 %1432
      %1434 = vset.pattern.permute.xlu0 0
      %1435 = vperm.xlu0 %1434, %v1381
      %v1436 = vpop.permute.xlu0 %1435
      %1437 = vset.pattern.permute.xlu0 0
      %1438 = vperm.xlu0 %1437, %v1382
      %v1439 = vpop.permute.xlu0 %1438
      %1440 = vset.pattern.permute.xlu0 0
      %1441 = vperm.xlu0 %1440, %v1383
      %v1442 = vpop.permute.xlu0 %1441
      %1443 = vset.pattern.permute.xlu0 0
      %1444 = vperm.xlu0 %1443, %v1384
      %v1445 = vpop.permute.xlu0 %1444
      %1446 = vset.pattern.permute.xlu0 0
      %1447 = vperm.xlu0 %1446, %v1385
      %v1448 = vpop.permute.xlu0 %1447
      %1449 = vset.pattern.permute.xlu0 0
      %1450 = vperm.xlu0 %1449, %v1386
      %v1451 = vpop.permute.xlu0 %1450
      %1452 = vset.pattern.permute.xlu0 0
      %1453 = vperm.xlu0 %1452, %v1387
      %v1454 = vpop.permute.xlu0 %1453
      %vm1455 = vcmp.eq.s32.totalorder %v1405, %v1409
      %vm1456 = vcmp.eq.s32.totalorder %v1406, %v1409
      %vm1457 = vcmp.eq.s32.totalorder %v1405, %v1412
      %vm1458 = vcmp.eq.s32.totalorder %v1406, %v1412
      %vm1459 = vcmp.eq.s32.totalorder %v1405, %v1415
      %vm1460 = vcmp.eq.s32.totalorder %v1406, %v1415
      %vm1461 = vcmp.eq.s32.totalorder %v1405, %v1418
      %vm1462 = vcmp.eq.s32.totalorder %v1406, %v1418
      %vm1463 = vcmp.eq.s32.totalorder %v1405, %v1421
      %vm1464 = vcmp.eq.s32.totalorder %v1406, %v1421
      %vm1465 = vcmp.eq.s32.totalorder %v1405, %v1424
      %vm1466 = vcmp.eq.s32.totalorder %v1406, %v1424
      %vm1467 = vcmp.eq.s32.totalorder %v1405, %v1427
      %vm1468 = vcmp.eq.s32.totalorder %v1406, %v1427
      %vm1469 = vcmp.eq.s32.totalorder %v1405, %v1430
      %vm1470 = vcmp.eq.s32.totalorder %v1406, %v1430
      %vm1471 = vcmp.eq.s32.totalorder %v1405, %v1433
      %vm1472 = vcmp.eq.s32.totalorder %v1406, %v1433
      %vm1473 = vcmp.eq.s32.totalorder %v1405, %v1436
      %vm1474 = vcmp.eq.s32.totalorder %v1406, %v1436
      %vm1475 = vcmp.eq.s32.totalorder %v1405, %v1439
      %vm1476 = vcmp.eq.s32.totalorder %v1406, %v1439
      %vm1477 = vcmp.eq.s32.totalorder %v1405, %v1442
      %vm1478 = vcmp.eq.s32.totalorder %v1406, %v1442
      %vm1479 = vcmp.eq.s32.totalorder %v1405, %v1445
      %vm1480 = vcmp.eq.s32.totalorder %v1406, %v1445
      %vm1481 = vcmp.eq.s32.totalorder %v1405, %v1448
      %vm1482 = vcmp.eq.s32.totalorder %v1406, %v1448
      %vm1483 = vcmp.eq.s32.totalorder %v1405, %v1451
      %vm1484 = vcmp.eq.s32.totalorder %v1406, %v1451
      %vm1485 = vcmp.eq.s32.totalorder %v1405, %v1454
      %vm1486 = vcmp.eq.s32.totalorder %v1406, %v1454
      %1488 = vset.pattern.permute.xlu0 0
      %1489 = vperm.xlu0 %1488, %v1388
      %v1490 = vpop.permute.xlu0 %1489
      %1493 = vset.pattern.permute.xlu0 0
      %1494 = vperm.xlu0 %1493, %v1389
      %v1495 = vpop.permute.xlu0 %1494
      %1498 = vset.pattern.permute.xlu0 0
      %1499 = vperm.xlu0 %1498, %v1390
      %v1500 = vpop.permute.xlu0 %1499
      %1503 = vset.pattern.permute.xlu0 0
      %1504 = vperm.xlu0 %1503, %v1391
      %v1505 = vpop.permute.xlu0 %1504
      %1508 = vset.pattern.permute.xlu0 0
      %1509 = vperm.xlu0 %1508, %v1392
      %v1510 = vpop.permute.xlu0 %1509
      %1513 = vset.pattern.permute.xlu0 0
      %1514 = vperm.xlu0 %1513, %v1393
      %v1515 = vpop.permute.xlu0 %1514
      %1518 = vset.pattern.permute.xlu0 0
      %1519 = vperm.xlu0 %1518, %v1394
      %v1520 = vpop.permute.xlu0 %1519
      %1523 = vset.pattern.permute.xlu0 0
      %1524 = vperm.xlu0 %1523, %v1395
      %v1525 = vpop.permute.xlu0 %1524
      %1528 = vset.pattern.permute.xlu0 0
      %1529 = vperm.xlu0 %1528, %v1396
      %v1530 = vpop.permute.xlu0 %1529
      %1533 = vset.pattern.permute.xlu0 0
      %1534 = vperm.xlu0 %1533, %v1397
      %v1535 = vpop.permute.xlu0 %1534
      %1538 = vset.pattern.permute.xlu0 0
      %1539 = vperm.xlu0 %1538, %v1398
      %v1540 = vpop.permute.xlu0 %1539
      %1543 = vset.pattern.permute.xlu0 0
      %1544 = vperm.xlu0 %1543, %v1399
      %v1545 = vpop.permute.xlu0 %1544
      %1548 = vset.pattern.permute.xlu0 0
      %1549 = vperm.xlu0 %1548, %v1400
      %v1550 = vpop.permute.xlu0 %1549
      %1553 = vset.pattern.permute.xlu0 0
      %1554 = vperm.xlu0 %1553, %v1401
      %v1555 = vpop.permute.xlu0 %1554
      %1558 = vset.pattern.permute.xlu0 0
      %1559 = vperm.xlu0 %1558, %v1402
      %v1560 = vpop.permute.xlu0 %1559
      %1563 = vset.pattern.permute.xlu0 0
      %1564 = vperm.xlu0 %1563, %v1403
      %v1565 = vpop.permute.xlu0 %1564
      %v1567 = vsel %vm1455, %v1490, 0.0
      %v1568 = vsel %vm1456, %v1490, 0.0
      %v1569 = vsel %vm1457, %v1495, 0.0
      %v1570 = vsel %vm1458, %v1495, 0.0
      %v1571 = vsel %vm1459, %v1500, 0.0
      %v1572 = vsel %vm1460, %v1500, 0.0
      %v1573 = vsel %vm1461, %v1505, 0.0
      %v1574 = vsel %vm1462, %v1505, 0.0
      %v1575 = vsel %vm1463, %v1510, 0.0
      %v1576 = vsel %vm1464, %v1510, 0.0
      %v1577 = vsel %vm1465, %v1515, 0.0
      %v1578 = vsel %vm1466, %v1515, 0.0
      %v1579 = vsel %vm1467, %v1520, 0.0
      %v1580 = vsel %vm1468, %v1520, 0.0
      %v1581 = vsel %vm1469, %v1525, 0.0
      %v1582 = vsel %vm1470, %v1525, 0.0
      %v1583 = vsel %vm1471, %v1530, 0.0
      %v1584 = vsel %vm1472, %v1530, 0.0
      %v1585 = vsel %vm1473, %v1535, 0.0
      %v1586 = vsel %vm1474, %v1535, 0.0
      %v1587 = vsel %vm1475, %v1540, 0.0
      %v1588 = vsel %vm1476, %v1540, 0.0
      %v1589 = vsel %vm1477, %v1545, 0.0
      %v1590 = vsel %vm1478, %v1545, 0.0
      %v1591 = vsel %vm1479, %v1550, 0.0
      %v1592 = vsel %vm1480, %v1550, 0.0
      %v1593 = vsel %vm1481, %v1555, 0.0
      %v1594 = vsel %vm1482, %v1555, 0.0
      %v1595 = vsel %vm1483, %v1560, 0.0
      %v1596 = vsel %vm1484, %v1560, 0.0
      %v1597 = vsel %vm1485, %v1565, 0.0
      %v1598 = vsel %vm1486, %v1565, 0.0
      %v1599 = vadd.s32 %v1372, 1
      %v1600 = vadd.s32 %v1373, 1
      %v1601 = vadd.s32 %v1374, 1
      %v1602 = vadd.s32 %v1375, 1
      %v1603 = vadd.s32 %v1376, 1
      %v1604 = vadd.s32 %v1377, 1
      %v1605 = vadd.s32 %v1378, 1
      %v1606 = vadd.s32 %v1379, 1
      %v1607 = vadd.s32 %v1380, 1
      %v1608 = vadd.s32 %v1381, 1
      %v1609 = vadd.s32 %v1382, 1
      %v1610 = vadd.s32 %v1383, 1
      %v1611 = vadd.s32 %v1384, 1
      %v1612 = vadd.s32 %v1385, 1
      %v1613 = vadd.s32 %v1386, 1
      %v1614 = vadd.s32 %v1387, 1
      %1615 = vset.pattern.permute.xlu0 0
      %1616 = vperm.xlu0 %1615, %v1599
      %v1617 = vpop.permute.xlu0 %1616
      %1618 = vset.pattern.permute.xlu0 0
      %1619 = vperm.xlu0 %1618, %v1600
      %v1620 = vpop.permute.xlu0 %1619
      %1621 = vset.pattern.permute.xlu0 0
      %1622 = vperm.xlu0 %1621, %v1601
      %v1623 = vpop.permute.xlu0 %1622
      %1624 = vset.pattern.permute.xlu0 0
      %1625 = vperm.xlu0 %1624, %v1602
      %v1626 = vpop.permute.xlu0 %1625
      %1627 = vset.pattern.permute.xlu0 0
      %1628 = vperm.xlu0 %1627, %v1603
      %v1629 = vpop.permute.xlu0 %1628
      %1630 = vset.pattern.permute.xlu0 0
      %1631 = vperm.xlu0 %1630, %v1604
      %v1632 = vpop.permute.xlu0 %1631
      %1633 = vset.pattern.permute.xlu0 0
      %1634 = vperm.xlu0 %1633, %v1605
      %v1635 = vpop.permute.xlu0 %1634
      %1636 = vset.pattern.permute.xlu0 0
      %1637 = vperm.xlu0 %1636, %v1606
      %v1638 = vpop.permute.xlu0 %1637
      %1639 = vset.pattern.permute.xlu0 0
      %1640 = vperm.xlu0 %1639, %v1607
      %v1641 = vpop.permute.xlu0 %1640
      %1642 = vset.pattern.permute.xlu0 0
      %1643 = vperm.xlu0 %1642, %v1608
      %v1644 = vpop.permute.xlu0 %1643
      %1645 = vset.pattern.permute.xlu0 0
      %1646 = vperm.xlu0 %1645, %v1609
      %v1647 = vpop.permute.xlu0 %1646
      %1648 = vset.pattern.permute.xlu0 0
      %1649 = vperm.xlu0 %1648, %v1610
      %v1650 = vpop.permute.xlu0 %1649
      %1651 = vset.pattern.permute.xlu0 0
      %1652 = vperm.xlu0 %1651, %v1611
      %v1653 = vpop.permute.xlu0 %1652
      %1654 = vset.pattern.permute.xlu0 0
      %1655 = vperm.xlu0 %1654, %v1612
      %v1656 = vpop.permute.xlu0 %1655
      %1657 = vset.pattern.permute.xlu0 0
      %1658 = vperm.xlu0 %1657, %v1613
      %v1659 = vpop.permute.xlu0 %1658
      %1660 = vset.pattern.permute.xlu0 0
      %1661 = vperm.xlu0 %1660, %v1614
      %v1662 = vpop.permute.xlu0 %1661
      %vm1663 = vcmp.eq.s32.totalorder %v1405, %v1617
      %vm1664 = vcmp.eq.s32.totalorder %v1406, %v1617
      %vm1665 = vcmp.eq.s32.totalorder %v1405, %v1620
      %vm1666 = vcmp.eq.s32.totalorder %v1406, %v1620
      %vm1667 = vcmp.eq.s32.totalorder %v1405, %v1623
      %vm1668 = vcmp.eq.s32.totalorder %v1406, %v1623
      %vm1669 = vcmp.eq.s32.totalorder %v1405, %v1626
      %vm1670 = vcmp.eq.s32.totalorder %v1406, %v1626
      %vm1671 = vcmp.eq.s32.totalorder %v1405, %v1629
      %vm1672 = vcmp.eq.s32.totalorder %v1406, %v1629
      %vm1673 = vcmp.eq.s32.totalorder %v1405, %v1632
      %vm1674 = vcmp.eq.s32.totalorder %v1406, %v1632
      %vm1675 = vcmp.eq.s32.totalorder %v1405, %v1635
      %vm1676 = vcmp.eq.s32.totalorder %v1406, %v1635
      %vm1677 = vcmp.eq.s32.totalorder %v1405, %v1638
      %vm1678 = vcmp.eq.s32.totalorder %v1406, %v1638
      %vm1679 = vcmp.eq.s32.totalorder %v1405, %v1641
      %vm1680 = vcmp.eq.s32.totalorder %v1406, %v1641
      %vm1681 = vcmp.eq.s32.totalorder %v1405, %v1644
      %vm1682 = vcmp.eq.s32.totalorder %v1406, %v1644
      %vm1683 = vcmp.eq.s32.totalorder %v1405, %v1647
      %vm1684 = vcmp.eq.s32.totalorder %v1406, %v1647
      %vm1685 = vcmp.eq.s32.totalorder %v1405, %v1650
      %vm1686 = vcmp.eq.s32.totalorder %v1406, %v1650
      %vm1687 = vcmp.eq.s32.totalorder %v1405, %v1653
      %vm1688 = vcmp.eq.s32.totalorder %v1406, %v1653
      %vm1689 = vcmp.eq.s32.totalorder %v1405, %v1656
      %vm1690 = vcmp.eq.s32.totalorder %v1406, %v1656
      %vm1691 = vcmp.eq.s32.totalorder %v1405, %v1659
      %vm1692 = vcmp.eq.s32.totalorder %v1406, %v1659
      %vm1693 = vcmp.eq.s32.totalorder %v1405, %v1662
      %vm1694 = vcmp.eq.s32.totalorder %v1406, %v1662
      %1695 = vset.pattern.permute.xlu0 1
      %1696 = vperm.xlu0 %1695, %v1388
      %v1697 = vpop.permute.xlu0 %1696
      %1699 = vset.pattern.permute.xlu0 1
      %1700 = vperm.xlu0 %1699, %v1389
      %v1701 = vpop.permute.xlu0 %1700
      %1703 = vset.pattern.permute.xlu0 1
      %1704 = vperm.xlu0 %1703, %v1390
      %v1705 = vpop.permute.xlu0 %1704
      %1707 = vset.pattern.permute.xlu0 1
      %1708 = vperm.xlu0 %1707, %v1391
      %v1709 = vpop.permute.xlu0 %1708
      %1711 = vset.pattern.permute.xlu0 1
      %1712 = vperm.xlu0 %1711, %v1392
      %v1713 = vpop.permute.xlu0 %1712
      %1715 = vset.pattern.permute.xlu0 1
      %1716 = vperm.xlu0 %1715, %v1393
      %v1717 = vpop.permute.xlu0 %1716
      %1719 = vset.pattern.permute.xlu0 1
      %1720 = vperm.xlu0 %1719, %v1394
      %v1721 = vpop.permute.xlu0 %1720
      %1723 = vset.pattern.permute.xlu0 1
      %1724 = vperm.xlu0 %1723, %v1395
      %v1725 = vpop.permute.xlu0 %1724
      %1727 = vset.pattern.permute.xlu0 1
      %1728 = vperm.xlu0 %1727, %v1396
      %v1729 = vpop.permute.xlu0 %1728
      %1731 = vset.pattern.permute.xlu0 1
      %1732 = vperm.xlu0 %1731, %v1397
      %v1733 = vpop.permute.xlu0 %1732
      %1735 = vset.pattern.permute.xlu0 1
      %1736 = vperm.xlu0 %1735, %v1398
      %v1737 = vpop.permute.xlu0 %1736
      %1739 = vset.pattern.permute.xlu0 1
      %1740 = vperm.xlu0 %1739, %v1399
      %v1741 = vpop.permute.xlu0 %1740
      %1743 = vset.pattern.permute.xlu0 1
      %1744 = vperm.xlu0 %1743, %v1400
      %v1745 = vpop.permute.xlu0 %1744
      %1747 = vset.pattern.permute.xlu0 1
      %1748 = vperm.xlu0 %1747, %v1401
      %v1749 = vpop.permute.xlu0 %1748
      %1751 = vset.pattern.permute.xlu0 1
      %1752 = vperm.xlu0 %1751, %v1402
      %v1753 = vpop.permute.xlu0 %1752
      %1755 = vset.pattern.permute.xlu0 1
      %1756 = vperm.xlu0 %1755, %v1403
      %v1757 = vpop.permute.xlu0 %1756
      %v1759 = vsel %vm1663, %v1697, %v1567
      %v1760 = vsel %vm1664, %v1697, %v1568
      %v1761 = vsel %vm1665, %v1701, %v1569
      %v1762 = vsel %vm1666, %v1701, %v1570
      %v1763 = vsel %vm1667, %v1705, %v1571
      %v1764 = vsel %vm1668, %v1705, %v1572
      %v1765 = vsel %vm1669, %v1709, %v1573
      %v1766 = vsel %vm1670, %v1709, %v1574
      %v1767 = vsel %vm1671, %v1713, %v1575
      %v1768 = vsel %vm1672, %v1713, %v1576
      %v1769 = vsel %vm1673, %v1717, %v1577
      %v1770 = vsel %vm1674, %v1717, %v1578
      %v1771 = vsel %vm1675, %v1721, %v1579
      %v1772 = vsel %vm1676, %v1721, %v1580
      %v1773 = vsel %vm1677, %v1725, %v1581
      %v1774 = vsel %vm1678, %v1725, %v1582
      %v1775 = vsel %vm1679, %v1729, %v1583
      %v1776 = vsel %vm1680, %v1729, %v1584
      %v1777 = vsel %vm1681, %v1733, %v1585
      %v1778 = vsel %vm1682, %v1733, %v1586
      %v1779 = vsel %vm1683, %v1737, %v1587
      %v1780 = vsel %vm1684, %v1737, %v1588
      %v1781 = vsel %vm1685, %v1741, %v1589
      %v1782 = vsel %vm1686, %v1741, %v1590
      %v1783 = vsel %vm1687, %v1745, %v1591
      %v1784 = vsel %vm1688, %v1745, %v1592
      %v1785 = vsel %vm1689, %v1749, %v1593
      %v1786 = vsel %vm1690, %v1749, %v1594
      %v1787 = vsel %vm1691, %v1753, %v1595
      %v1788 = vsel %vm1692, %v1753, %v1596
      %v1789 = vsel %vm1693, %v1757, %v1597
      %v1790 = vsel %vm1694, %v1757, %v1598
      %v1791 = vadd.s32 %v1372, 16
      %v1792 = vadd.s32 %v1373, 16
      %v1793 = vadd.s32 %v1374, 16
      %v1794 = vadd.s32 %v1375, 16
      %v1795 = vadd.s32 %v1376, 16
      %v1796 = vadd.s32 %v1377, 16
      %v1797 = vadd.s32 %v1378, 16
      %v1798 = vadd.s32 %v1379, 16
      %v1799 = vadd.s32 %v1380, 16
      %v1800 = vadd.s32 %v1381, 16
      %v1801 = vadd.s32 %v1382, 16
      %v1802 = vadd.s32 %v1383, 16
      %v1803 = vadd.s32 %v1384, 16
      %v1804 = vadd.s32 %v1385, 16
      %v1805 = vadd.s32 %v1386, 16
      %v1806 = vadd.s32 %v1387, 16
      %1807 = vset.pattern.permute.xlu0 0
      %1808 = vperm.xlu0 %1807, %v1791
      %v1809 = vpop.permute.xlu0 %1808
      %1810 = vset.pattern.permute.xlu0 0
      %1811 = vperm.xlu0 %1810, %v1792
      %v1812 = vpop.permute.xlu0 %1811
      %1813 = vset.pattern.permute.xlu0 0
      %1814 = vperm.xlu0 %1813, %v1793
      %v1815 = vpop.permute.xlu0 %1814
      %1816 = vset.pattern.permute.xlu0 0
      %1817 = vperm.xlu0 %1816, %v1794
      %v1818 = vpop.permute.xlu0 %1817
      %1819 = vset.pattern.permute.xlu0 0
      %1820 = vperm.xlu0 %1819, %v1795
      %v1821 = vpop.permute.xlu0 %1820
      %1822 = vset.pattern.permute.xlu0 0
      %1823 = vperm.xlu0 %1822, %v1796
      %v1824 = vpop.permute.xlu0 %1823
      %1825 = vset.pattern.permute.xlu0 0
      %1826 = vperm.xlu0 %1825, %v1797
      %v1827 = vpop.permute.xlu0 %1826
      %1828 = vset.pattern.permute.xlu0 0
      %1829 = vperm.xlu0 %1828, %v1798
      %v1830 = vpop.permute.xlu0 %1829
      %1831 = vset.pattern.permute.xlu0 0
      %1832 = vperm.xlu0 %1831, %v1799
      %v1833 = vpop.permute.xlu0 %1832
      %1834 = vset.pattern.permute.xlu0 0
      %1835 = vperm.xlu0 %1834, %v1800
      %v1836 = vpop.permute.xlu0 %1835
      %1837 = vset.pattern.permute.xlu0 0
      %1838 = vperm.xlu0 %1837, %v1801
      %v1839 = vpop.permute.xlu0 %1838
      %1840 = vset.pattern.permute.xlu0 0
      %1841 = vperm.xlu0 %1840, %v1802
      %v1842 = vpop.permute.xlu0 %1841
      %1843 = vset.pattern.permute.xlu0 0
      %1844 = vperm.xlu0 %1843, %v1803
      %v1845 = vpop.permute.xlu0 %1844
      %1846 = vset.pattern.permute.xlu0 0
      %1847 = vperm.xlu0 %1846, %v1804
      %v1848 = vpop.permute.xlu0 %1847
      %1849 = vset.pattern.permute.xlu0 0
      %1850 = vperm.xlu0 %1849, %v1805
      %v1851 = vpop.permute.xlu0 %1850
      %1852 = vset.pattern.permute.xlu0 0
      %1853 = vperm.xlu0 %1852, %v1806
      %v1854 = vpop.permute.xlu0 %1853
      %vm1855 = vcmp.eq.s32.totalorder %v1405, %v1809
      %vm1856 = vcmp.eq.s32.totalorder %v1406, %v1809
      %vm1857 = vcmp.eq.s32.totalorder %v1405, %v1812
      %vm1858 = vcmp.eq.s32.totalorder %v1406, %v1812
      %vm1859 = vcmp.eq.s32.totalorder %v1405, %v1815
      %vm1860 = vcmp.eq.s32.totalorder %v1406, %v1815
      %vm1861 = vcmp.eq.s32.totalorder %v1405, %v1818
      %vm1862 = vcmp.eq.s32.totalorder %v1406, %v1818
      %vm1863 = vcmp.eq.s32.totalorder %v1405, %v1821
      %vm1864 = vcmp.eq.s32.totalorder %v1406, %v1821
      %vm1865 = vcmp.eq.s32.totalorder %v1405, %v1824
      %vm1866 = vcmp.eq.s32.totalorder %v1406, %v1824
      %vm1867 = vcmp.eq.s32.totalorder %v1405, %v1827
      %vm1868 = vcmp.eq.s32.totalorder %v1406, %v1827
      %vm1869 = vcmp.eq.s32.totalorder %v1405, %v1830
      %vm1870 = vcmp.eq.s32.totalorder %v1406, %v1830
      %vm1871 = vcmp.eq.s32.totalorder %v1405, %v1833
      %vm1872 = vcmp.eq.s32.totalorder %v1406, %v1833
      %vm1873 = vcmp.eq.s32.totalorder %v1405, %v1836
      %vm1874 = vcmp.eq.s32.totalorder %v1406, %v1836
      %vm1875 = vcmp.eq.s32.totalorder %v1405, %v1839
      %vm1876 = vcmp.eq.s32.totalorder %v1406, %v1839
      %vm1877 = vcmp.eq.s32.totalorder %v1405, %v1842
      %vm1878 = vcmp.eq.s32.totalorder %v1406, %v1842
      %vm1879 = vcmp.eq.s32.totalorder %v1405, %v1845
      %vm1880 = vcmp.eq.s32.totalorder %v1406, %v1845
      %vm1881 = vcmp.eq.s32.totalorder %v1405, %v1848
      %vm1882 = vcmp.eq.s32.totalorder %v1406, %v1848
      %vm1883 = vcmp.eq.s32.totalorder %v1405, %v1851
      %vm1884 = vcmp.eq.s32.totalorder %v1406, %v1851
      %vm1885 = vcmp.eq.s32.totalorder %v1405, %v1854
      %vm1886 = vcmp.eq.s32.totalorder %v1406, %v1854
      %1887 = vset.pattern.permute.xlu0 2
      %1888 = vperm.xlu0 %1887, %v1388
      %v1889 = vpop.permute.xlu0 %1888
      %1891 = vset.pattern.permute.xlu0 2
      %1892 = vperm.xlu0 %1891, %v1389
      %v1893 = vpop.permute.xlu0 %1892
      %1895 = vset.pattern.permute.xlu0 2
      %1896 = vperm.xlu0 %1895, %v1390
      %v1897 = vpop.permute.xlu0 %1896
      %1899 = vset.pattern.permute.xlu0 2
      %1900 = vperm.xlu0 %1899, %v1391
      %v1901 = vpop.permute.xlu0 %1900
      %1903 = vset.pattern.permute.xlu0 2
      %1904 = vperm.xlu0 %1903, %v1392
      %v1905 = vpop.permute.xlu0 %1904
      %1907 = vset.pattern.permute.xlu0 2
      %1908 = vperm.xlu0 %1907, %v1393
      %v1909 = vpop.permute.xlu0 %1908
      %1911 = vset.pattern.permute.xlu0 2
      %1912 = vperm.xlu0 %1911, %v1394
      %v1913 = vpop.permute.xlu0 %1912
      %1915 = vset.pattern.permute.xlu0 2
      %1916 = vperm.xlu0 %1915, %v1395
      %v1917 = vpop.permute.xlu0 %1916
      %1919 = vset.pattern.permute.xlu0 2
      %1920 = vperm.xlu0 %1919, %v1396
      %v1921 = vpop.permute.xlu0 %1920
      %1923 = vset.pattern.permute.xlu0 2
      %1924 = vperm.xlu0 %1923, %v1397
      %v1925 = vpop.permute.xlu0 %1924
      %1927 = vset.pattern.permute.xlu0 2
      %1928 = vperm.xlu0 %1927, %v1398
      %v1929 = vpop.permute.xlu0 %1928
      %1931 = vset.pattern.permute.xlu0 2
      %1932 = vperm.xlu0 %1931, %v1399
      %v1933 = vpop.permute.xlu0 %1932
      %1935 = vset.pattern.permute.xlu0 2
      %1936 = vperm.xlu0 %1935, %v1400
      %v1937 = vpop.permute.xlu0 %1936
      %1939 = vset.pattern.permute.xlu0 2
      %1940 = vperm.xlu0 %1939, %v1401
      %v1941 = vpop.permute.xlu0 %1940
      %1943 = vset.pattern.permute.xlu0 2
      %1944 = vperm.xlu0 %1943, %v1402
      %v1945 = vpop.permute.xlu0 %1944
      %1947 = vset.pattern.permute.xlu0 2
      %1948 = vperm.xlu0 %1947, %v1403
      %v1949 = vpop.permute.xlu0 %1948
      %v1951 = vsel %vm1855, %v1889, %v1759
      %v1952 = vsel %vm1856, %v1889, %v1760
      %v1953 = vsel %vm1857, %v1893, %v1761
      %v1954 = vsel %vm1858, %v1893, %v1762
      %v1955 = vsel %vm1859, %v1897, %v1763
      %v1956 = vsel %vm1860, %v1897, %v1764
      %v1957 = vsel %vm1861, %v1901, %v1765
      %v1958 = vsel %vm1862, %v1901, %v1766
      %v1959 = vsel %vm1863, %v1905, %v1767
      %v1960 = vsel %vm1864, %v1905, %v1768
      %v1961 = vsel %vm1865, %v1909, %v1769
      %v1962 = vsel %vm1866, %v1909, %v1770
      %v1963 = vsel %vm1867, %v1913, %v1771
      %v1964 = vsel %vm1868, %v1913, %v1772
      %v1965 = vsel %vm1869, %v1917, %v1773
      %v1966 = vsel %vm1870, %v1917, %v1774
      %v1967 = vsel %vm1871, %v1921, %v1775
      %v1968 = vsel %vm1872, %v1921, %v1776
      %v1969 = vsel %vm1873, %v1925, %v1777
      %v1970 = vsel %vm1874, %v1925, %v1778
      %v1971 = vsel %vm1875, %v1929, %v1779
      %v1972 = vsel %vm1876, %v1929, %v1780
      %v1973 = vsel %vm1877, %v1933, %v1781
      %v1974 = vsel %vm1878, %v1933, %v1782
      %v1975 = vsel %vm1879, %v1937, %v1783
      %v1976 = vsel %vm1880, %v1937, %v1784
      %v1977 = vsel %vm1881, %v1941, %v1785
      %v1978 = vsel %vm1882, %v1941, %v1786
      %v1979 = vsel %vm1883, %v1945, %v1787
      %v1980 = vsel %vm1884, %v1945, %v1788
      %v1981 = vsel %vm1885, %v1949, %v1789
      %v1982 = vsel %vm1886, %v1949, %v1790
      %v1983 = vadd.s32 %v1372, 17
      %v1984 = vadd.s32 %v1373, 17
      %v1985 = vadd.s32 %v1374, 17
      %v1986 = vadd.s32 %v1375, 17
      %v1987 = vadd.s32 %v1376, 17
      %v1988 = vadd.s32 %v1377, 17
      %v1989 = vadd.s32 %v1378, 17
      %v1990 = vadd.s32 %v1379, 17
      %v1991 = vadd.s32 %v1380, 17
      %v1992 = vadd.s32 %v1381, 17
      %v1993 = vadd.s32 %v1382, 17
      %v1994 = vadd.s32 %v1383, 17
      %v1995 = vadd.s32 %v1384, 17
      %v1996 = vadd.s32 %v1385, 17
      %v1997 = vadd.s32 %v1386, 17
      %v1998 = vadd.s32 %v1387, 17
      %1999 = vset.pattern.permute.xlu0 0
      %2000 = vperm.xlu0 %1999, %v1983
      %v2001 = vpop.permute.xlu0 %2000
      %2002 = vset.pattern.permute.xlu0 0
      %2003 = vperm.xlu0 %2002, %v1984
      %v2004 = vpop.permute.xlu0 %2003
      %2005 = vset.pattern.permute.xlu0 0
      %2006 = vperm.xlu0 %2005, %v1985
      %v2007 = vpop.permute.xlu0 %2006
      %2008 = vset.pattern.permute.xlu0 0
      %2009 = vperm.xlu0 %2008, %v1986
      %v2010 = vpop.permute.xlu0 %2009
      %2011 = vset.pattern.permute.xlu0 0
      %2012 = vperm.xlu0 %2011, %v1987
      %v2013 = vpop.permute.xlu0 %2012
      %2014 = vset.pattern.permute.xlu0 0
      %2015 = vperm.xlu0 %2014, %v1988
      %v2016 = vpop.permute.xlu0 %2015
      %2017 = vset.pattern.permute.xlu0 0
      %2018 = vperm.xlu0 %2017, %v1989
      %v2019 = vpop.permute.xlu0 %2018
      %2020 = vset.pattern.permute.xlu0 0
      %2021 = vperm.xlu0 %2020, %v1990
      %v2022 = vpop.permute.xlu0 %2021
      %2023 = vset.pattern.permute.xlu0 0
      %2024 = vperm.xlu0 %2023, %v1991
      %v2025 = vpop.permute.xlu0 %2024
      %2026 = vset.pattern.permute.xlu0 0
      %2027 = vperm.xlu0 %2026, %v1992
      %v2028 = vpop.permute.xlu0 %2027
      %2029 = vset.pattern.permute.xlu0 0
      %2030 = vperm.xlu0 %2029, %v1993
      %v2031 = vpop.permute.xlu0 %2030
      %2032 = vset.pattern.permute.xlu0 0
      %2033 = vperm.xlu0 %2032, %v1994
      %v2034 = vpop.permute.xlu0 %2033
      %2035 = vset.pattern.permute.xlu0 0
      %2036 = vperm.xlu0 %2035, %v1995
      %v2037 = vpop.permute.xlu0 %2036
      %2038 = vset.pattern.permute.xlu0 0
      %2039 = vperm.xlu0 %2038, %v1996
      %v2040 = vpop.permute.xlu0 %2039
      %2041 = vset.pattern.permute.xlu0 0
      %2042 = vperm.xlu0 %2041, %v1997
      %v2043 = vpop.permute.xlu0 %2042
      %2044 = vset.pattern.permute.xlu0 0
      %2045 = vperm.xlu0 %2044, %v1998
      %v2046 = vpop.permute.xlu0 %2045
      %vm2047 = vcmp.eq.s32.totalorder %v1405, %v2001
      %vm2048 = vcmp.eq.s32.totalorder %v1406, %v2001
      %vm2049 = vcmp.eq.s32.totalorder %v1405, %v2004
      %vm2050 = vcmp.eq.s32.totalorder %v1406, %v2004
      %vm2051 = vcmp.eq.s32.totalorder %v1405, %v2007
      %vm2052 = vcmp.eq.s32.totalorder %v1406, %v2007
      %vm2053 = vcmp.eq.s32.totalorder %v1405, %v2010
      %vm2054 = vcmp.eq.s32.totalorder %v1406, %v2010
      %vm2055 = vcmp.eq.s32.totalorder %v1405, %v2013
      %vm2056 = vcmp.eq.s32.totalorder %v1406, %v2013
      %vm2057 = vcmp.eq.s32.totalorder %v1405, %v2016
      %vm2058 = vcmp.eq.s32.totalorder %v1406, %v2016
      %vm2059 = vcmp.eq.s32.totalorder %v1405, %v2019
      %vm2060 = vcmp.eq.s32.totalorder %v1406, %v2019
      %vm2061 = vcmp.eq.s32.totalorder %v1405, %v2022
      %vm2062 = vcmp.eq.s32.totalorder %v1406, %v2022
      %vm2063 = vcmp.eq.s32.totalorder %v1405, %v2025
      %vm2064 = vcmp.eq.s32.totalorder %v1406, %v2025
      %vm2065 = vcmp.eq.s32.totalorder %v1405, %v2028
      %vm2066 = vcmp.eq.s32.totalorder %v1406, %v2028
      %vm2067 = vcmp.eq.s32.totalorder %v1405, %v2031
      %vm2068 = vcmp.eq.s32.totalorder %v1406, %v2031
      %vm2069 = vcmp.eq.s32.totalorder %v1405, %v2034
      %vm2070 = vcmp.eq.s32.totalorder %v1406, %v2034
      %vm2071 = vcmp.eq.s32.totalorder %v1405, %v2037
      %vm2072 = vcmp.eq.s32.totalorder %v1406, %v2037
      %vm2073 = vcmp.eq.s32.totalorder %v1405, %v2040
      %vm2074 = vcmp.eq.s32.totalorder %v1406, %v2040
      %vm2075 = vcmp.eq.s32.totalorder %v1405, %v2043
      %vm2076 = vcmp.eq.s32.totalorder %v1406, %v2043
      %vm2077 = vcmp.eq.s32.totalorder %v1405, %v2046
      %vm2078 = vcmp.eq.s32.totalorder %v1406, %v2046
      %2079 = vset.pattern.permute.xlu0 3
      %2080 = vperm.xlu0 %2079, %v1388
      %v2081 = vpop.permute.xlu0 %2080
      %2083 = vset.pattern.permute.xlu0 3
      %2084 = vperm.xlu0 %2083, %v1389
      %v2085 = vpop.permute.xlu0 %2084
      %2087 = vset.pattern.permute.xlu0 3
      %2088 = vperm.xlu0 %2087, %v1390
      %v2089 = vpop.permute.xlu0 %2088
      %2091 = vset.pattern.permute.xlu0 3
      %2092 = vperm.xlu0 %2091, %v1391
      %v2093 = vpop.permute.xlu0 %2092
      %2095 = vset.pattern.permute.xlu0 3
      %2096 = vperm.xlu0 %2095, %v1392
      %v2097 = vpop.permute.xlu0 %2096
      %2099 = vset.pattern.permute.xlu0 3
      %2100 = vperm.xlu0 %2099, %v1393
      %v2101 = vpop.permute.xlu0 %2100
      %2103 = vset.pattern.permute.xlu0 3
      %2104 = vperm.xlu0 %2103, %v1394
      %v2105 = vpop.permute.xlu0 %2104
      %2107 = vset.pattern.permute.xlu0 3
      %2108 = vperm.xlu0 %2107, %v1395
      %v2109 = vpop.permute.xlu0 %2108
      %2111 = vset.pattern.permute.xlu0 3
      %2112 = vperm.xlu0 %2111, %v1396
      %v2113 = vpop.permute.xlu0 %2112
      %2115 = vset.pattern.permute.xlu0 3
      %2116 = vperm.xlu0 %2115, %v1397
      %v2117 = vpop.permute.xlu0 %2116
      %2119 = vset.pattern.permute.xlu0 3
      %2120 = vperm.xlu0 %2119, %v1398
      %v2121 = vpop.permute.xlu0 %2120
      %2123 = vset.pattern.permute.xlu0 3
      %2124 = vperm.xlu0 %2123, %v1399
      %v2125 = vpop.permute.xlu0 %2124
      %2127 = vset.pattern.permute.xlu0 3
      %2128 = vperm.xlu0 %2127, %v1400
      %v2129 = vpop.permute.xlu0 %2128
      %2131 = vset.pattern.permute.xlu0 3
      %2132 = vperm.xlu0 %2131, %v1401
      %v2133 = vpop.permute.xlu0 %2132
      %2135 = vset.pattern.permute.xlu0 3
      %2136 = vperm.xlu0 %2135, %v1402
      %v2137 = vpop.permute.xlu0 %2136
      %2139 = vset.pattern.permute.xlu0 3
      %2140 = vperm.xlu0 %2139, %v1403
      %v2141 = vpop.permute.xlu0 %2140
      %v2143 = vsel %vm2047, %v2081, %v1951
      %v2144 = vsel %vm2048, %v2081, %v1952
      %v2145 = vsel %vm2049, %v2085, %v1953
      %v2146 = vsel %vm2050, %v2085, %v1954
      %v2147 = vsel %vm2051, %v2089, %v1955
      %v2148 = vsel %vm2052, %v2089, %v1956
      %v2149 = vsel %vm2053, %v2093, %v1957
      %v2150 = vsel %vm2054, %v2093, %v1958
      %v2151 = vsel %vm2055, %v2097, %v1959
      %v2152 = vsel %vm2056, %v2097, %v1960
      %v2153 = vsel %vm2057, %v2101, %v1961
      %v2154 = vsel %vm2058, %v2101, %v1962
      %v2155 = vsel %vm2059, %v2105, %v1963
      %v2156 = vsel %vm2060, %v2105, %v1964
      %v2157 = vsel %vm2061, %v2109, %v1965
      %v2158 = vsel %vm2062, %v2109, %v1966
      %v2159 = vsel %vm2063, %v2113, %v1967
      %v2160 = vsel %vm2064, %v2113, %v1968
      %v2161 = vsel %vm2065, %v2117, %v1969
      %v2162 = vsel %vm2066, %v2117, %v1970
      %v2163 = vsel %vm2067, %v2121, %v1971
      %v2164 = vsel %vm2068, %v2121, %v1972
      %v2165 = vsel %vm2069, %v2125, %v1973
      %v2166 = vsel %vm2070, %v2125, %v1974
      %v2167 = vsel %vm2071, %v2129, %v1975
      %v2168 = vsel %vm2072, %v2129, %v1976
      %v2169 = vsel %vm2073, %v2133, %v1977
      %v2170 = vsel %vm2074, %v2133, %v1978
      %v2171 = vsel %vm2075, %v2137, %v1979
      %v2172 = vsel %vm2076, %v2137, %v1980
      %v2173 = vsel %vm2077, %v2141, %v1981
      %v2174 = vsel %vm2078, %v2141, %v1982
      %v2175 = vld [vmem:[#allocation2] sm:$0xff]
      %v2176 = vld [vmem:[#allocation2 + $0x8] sm:$0xff]
      %v2177 = vld [vmem:[#allocation2 + $0x10] sm:$0xff]
      %v2178 = vld [vmem:[#allocation2 + $0x18] sm:$0xff]
      %v2179 = vld [vmem:[#allocation2 + $0x20] sm:$0xff]
      %v2180 = vld [vmem:[#allocation2 + $0x28] sm:$0xff]
      %v2181 = vld [vmem:[#allocation2 + $0x30] sm:$0xff]
      %v2182 = vld [vmem:[#allocation2 + $0x38] sm:$0xff]
      %v2183 = vld [vmem:[#allocation2 + $0x40] sm:$0xff]
      %v2184 = vld [vmem:[#allocation2 + $0x48] sm:$0xff]
      %v2185 = vld [vmem:[#allocation2 + $0x50] sm:$0xff]
      %v2186 = vld [vmem:[#allocation2 + $0x58] sm:$0xff]
      %v2187 = vld [vmem:[#allocation2 + $0x60] sm:$0xff]
      %v2188 = vld [vmem:[#allocation2 + $0x68] sm:$0xff]
      %v2189 = vld [vmem:[#allocation2 + $0x70] sm:$0xff]
      %v2190 = vld [vmem:[#allocation2 + $0x78] sm:$0xff]
      %v2191 = vld [vmem:[%s455] sm:$0xff]
      %v2192 = vld [vmem:[%s455 + $0x8] sm:$0xff]
      %v2193 = vld [vmem:[%s455 + $0x10] sm:$0xff]
      %v2194 = vld [vmem:[%s455 + $0x18] sm:$0xff]
      %v2195 = vld [vmem:[%s455 + $0x20] sm:$0xff]
      %v2196 = vld [vmem:[%s455 + $0x28] sm:$0xff]
      %v2197 = vld [vmem:[%s455 + $0x30] sm:$0xff]
      %v2198 = vld [vmem:[%s455 + $0x38] sm:$0xff]
      %v2199 = vld [vmem:[%s455 + $0x40] sm:$0xff]
      %v2200 = vld [vmem:[%s455 + $0x48] sm:$0xff]
      %v2201 = vld [vmem:[%s455 + $0x50] sm:$0xff]
      %v2202 = vld [vmem:[%s455 + $0x58] sm:$0xff]
      %v2203 = vld [vmem:[%s455 + $0x60] sm:$0xff]
      %v2204 = vld [vmem:[%s455 + $0x68] sm:$0xff]
      %v2205 = vld [vmem:[%s455 + $0x70] sm:$0xff]
      %v2206 = vld [vmem:[%s455 + $0x78] sm:$0xff]
      %v2207 = vld [vmem:[%s455 + $0x80] sm:$0xff]
      %v2208 = vld [vmem:[%s455 + $0x88] sm:$0xff]
      %v2209 = vld [vmem:[%s455 + $0x90] sm:$0xff]
      %v2210 = vld [vmem:[%s455 + $0x98] sm:$0xff]
      %v2211 = vld [vmem:[%s455 + $0xa0] sm:$0xff]
      %v2212 = vld [vmem:[%s455 + $0xa8] sm:$0xff]
      %v2213 = vld [vmem:[%s455 + $0xb0] sm:$0xff]
      %v2214 = vld [vmem:[%s455 + $0xb8] sm:$0xff]
      %v2215 = vld [vmem:[%s455 + $0xc0] sm:$0xff]
      %v2216 = vld [vmem:[%s455 + $0xc8] sm:$0xff]
      %v2217 = vld [vmem:[%s455 + $0xd0] sm:$0xff]
      %v2218 = vld [vmem:[%s455 + $0xd8] sm:$0xff]
      %v2219 = vld [vmem:[%s455 + $0xe0] sm:$0xff]
      %v2220 = vld [vmem:[%s455 + $0xe8] sm:$0xff]
      %v2221 = vld [vmem:[%s455 + $0xf0] sm:$0xff]
      %v2222 = vld [vmem:[%s455 + $0xf8] sm:$0xff]
      %2223 = vmatprep.subr.mxu0 0.0
      %2224 = vmatpush1.msra.mxu0 %v2191
      %2225 = vmatprep.subr.mxu0 0.0
      %2226 = vmatpush1.msra.mxu0 %v2192
      %2227 = vmatprep.subr.mxu0 0.0
      %2228 = vmatpush1.msra.mxu0 %v2193
      %2229 = vmatprep.subr.mxu0 0.0
      %2230 = vmatpush1.msra.mxu0 %v2194
      %2231 = vmatprep.subr.mxu0 0.0
      %2232 = vmatpush1.msra.mxu0 %v2195
      %2233 = vmatprep.subr.mxu0 0.0
      %2234 = vmatpush1.msra.mxu0 %v2196
      %2235 = vmatprep.subr.mxu0 0.0
      %2236 = vmatpush1.msra.mxu0 %v2197
      %2237 = vmatprep.subr.mxu0 0.0
      %2238 = vmatpush1.msra.mxu0 %v2198
      %2239 = vmatprep.subr.mxu0 0.0
      %2240 = vmatpush1.msra.mxu0 %v2199
      %2241 = vmatprep.subr.mxu0 0.0
      %2242 = vmatpush1.msra.mxu0 %v2200
      %2243 = vmatprep.subr.mxu0 0.0
      %2244 = vmatpush1.msra.mxu0 %v2201
      %2245 = vmatprep.subr.mxu0 0.0
      %2246 = vmatpush1.msra.mxu0 %v2202
      %2247 = vmatprep.subr.mxu0 0.0
      %2248 = vmatpush1.msra.mxu0 %v2203
      %2249 = vmatprep.subr.mxu0 0.0
      %2250 = vmatpush1.msra.mxu0 %v2204
      %2251 = vmatprep.subr.mxu0 0.0
      %2252 = vmatpush1.msra.mxu0 %v2205
      %2253 = vmatprep.subr.mxu0 0.0
      %2254 = vmatpush1.msra.mxu0 %v2206
      %2255 = vmatprep.subr.mxu0 0.0
      %2256 = vmatpush1.msra.mxu0 %v2207
      %2257 = vmatprep.subr.mxu0 0.0
      %2258 = vmatpush1.msra.mxu0 %v2208
      %2259 = vmatprep.subr.mxu0 0.0
      %2260 = vmatpush1.msra.mxu0 %v2209
      %2261 = vmatprep.subr.mxu0 0.0
      %2262 = vmatpush1.msra.mxu0 %v2210
      %2263 = vmatprep.subr.mxu0 0.0
      %2264 = vmatpush1.msra.mxu0 %v2211
      %2265 = vmatprep.subr.mxu0 0.0
      %2266 = vmatpush1.msra.mxu0 %v2212
      %2267 = vmatprep.subr.mxu0 0.0
      %2268 = vmatpush1.msra.mxu0 %v2213
      %2269 = vmatprep.subr.mxu0 0.0
      %2270 = vmatpush1.msra.mxu0 %v2214
      %2271 = vmatprep.subr.mxu0 0.0
      %2272 = vmatpush1.msra.mxu0 %v2215
      %2273 = vmatprep.subr.mxu0 0.0
      %2274 = vmatpush1.msra.mxu0 %v2216
      %2275 = vmatprep.subr.mxu0 0.0
      %2276 = vmatpush1.msra.mxu0 %v2217
      %2277 = vmatprep.subr.mxu0 0.0
      %2278 = vmatpush1.msra.mxu0 %v2218
      %2279 = vmatprep.subr.mxu0 0.0
      %2280 = vmatpush1.msra.mxu0 %v2219
      %2281 = vmatprep.subr.mxu0 0.0
      %2282 = vmatpush1.msra.mxu0 %v2220
      %2283 = vmatprep.subr.mxu0 0.0
      %2284 = vmatpush1.msra.mxu0 %v2221
      %2285 = vmatprep.subr.mxu0 0.0
      %2286 = vmatpush1.msra.mxu0 %v2222
      %2287 = vmatprep.mubr.f32.mxu0 %v2144
      %2288 = vmatmul.mubr.f32.gmra.mrb[0].mxu0 %v2143
      %v2289 = vpop.f32.mrb[0].mxu0
      %v2290 = vadd.f32 0.0, %v2289
      %v2291 = vpop.f32.mrb[0].mxu0
      %2292 = vmatprep.mubr.f32.mxu0 %v2146
      %2293 = vmatmul.mubr.f32.gmra.mrb[0].mxu0 %v2145
      %v2294 = vpop.f32.mrb[0].mxu0
      %v2295 = vadd.f32 0.0, %v2294
      %v2296 = vpop.f32.mrb[0].mxu0
      %2297 = vmatprep.mubr.f32.mxu0 %v2148
      %2298 = vmatmul.mubr.f32.gmra.mrb[0].mxu0 %v2147
      %v2299 = vpop.f32.mrb[0].mxu0
      %v2300 = vadd.f32 0.0, %v2299
      %v2301 = vpop.f32.mrb[0].mxu0
      %2302 = vmatprep.mubr.f32.mxu0 %v2150
      %2303 = vmatmul.mubr.f32.gmra.mrb[0].mxu0 %v2149
      %v2304 = vpop.f32.mrb[0].mxu0
      %v2305 = vadd.f32 0.0, %v2304
      %v2306 = vpop.f32.mrb[0].mxu0
      %2307 = vmatprep.mubr.f32.mxu0 %v2152
      %2308 = vmatmul.mubr.f32.gmra.mrb[0].mxu0 %v2151
      %v2309 = vpop.f32.mrb[0].mxu0
      %v2310 = vadd.f32 0.0, %v2309
      %v2311 = vpop.f32.mrb[0].mxu0
      %2312 = vmatprep.mubr.f32.mxu0 %v2154
      %2313 = vmatmul.mubr.f32.gmra.mrb[0].mxu0 %v2153
      %v2314 = vpop.f32.mrb[0].mxu0
      %v2315 = vadd.f32 0.0, %v2314
      %v2316 = vpop.f32.mrb[0].mxu0
      %2317 = vmatprep.mubr.f32.mxu0 %v2156
      %2318 = vmatmul.mubr.f32.gmra.mrb[0].mxu0 %v2155
      %v2319 = vpop.f32.mrb[0].mxu0
      %v2320 = vadd.f32 0.0, %v2319
      %v2321 = vpop.f32.mrb[0].mxu0
      %2322 = vmatprep.mubr.f32.mxu0 %v2158
      %2323 = vmatmul.mubr.f32.gmra.mrb[0].mxu0 %v2157
      %v2324 = vpop.f32.mrb[0].mxu0
      %v2325 = vadd.f32 0.0, %v2324
      %v2326 = vpop.f32.mrb[0].mxu0
      %2327 = vmatprep.mubr.f32.mxu0 %v2160
      %2328 = vmatmul.mubr.f32.gmra.mrb[0].mxu0 %v2159
      %v2329 = vpop.f32.mrb[0].mxu0
      %v2330 = vadd.f32 0.0, %v2329
      %v2331 = vpop.f32.mrb[0].mxu0
      %2332 = vmatprep.mubr.f32.mxu0 %v2162
      %2333 = vmatmul.mubr.f32.gmra.mrb[0].mxu0 %v2161
      %v2334 = vpop.f32.mrb[0].mxu0
      %v2335 = vadd.f32 0.0, %v2334
      %v2336 = vpop.f32.mrb[0].mxu0
      %2337 = vmatprep.mubr.f32.mxu0 %v2164
      %2338 = vmatmul.mubr.f32.gmra.mrb[0].mxu0 %v2163
      %v2339 = vpop.f32.mrb[0].mxu0
      %v2340 = vadd.f32 0.0, %v2339
      %v2341 = vpop.f32.mrb[0].mxu0
      %2342 = vmatprep.mubr.f32.mxu0 %v2166
      %2343 = vmatmul.mubr.f32.gmra.mrb[0].mxu0 %v2165
      %v2344 = vpop.f32.mrb[0].mxu0
      %v2345 = vadd.f32 0.0, %v2344
      %v2346 = vpop.f32.mrb[0].mxu0
      %2347 = vmatprep.mubr.f32.mxu0 %v2168
      %2348 = vmatmul.mubr.f32.gmra.mrb[0].mxu0 %v2167
      %v2349 = vpop.f32.mrb[0].mxu0
      %v2350 = vadd.f32 0.0, %v2349
      %v2351 = vpop.f32.mrb[0].mxu0
      %2352 = vmatprep.mubr.f32.mxu0 %v2170
      %2353 = vmatmul.mubr.f32.gmra.mrb[0].mxu0 %v2169
      %v2354 = vpop.f32.mrb[0].mxu0
      %v2355 = vadd.f32 0.0, %v2354
      %v2356 = vpop.f32.mrb[0].mxu0
      %2357 = vmatprep.mubr.f32.mxu0 %v2172
      %2358 = vmatmul.mubr.f32.gmra.mrb[0].mxu0 %v2171
      %v2359 = vpop.f32.mrb[0].mxu0
      %v2360 = vadd.f32 0.0, %v2359
      %v2361 = vpop.f32.mrb[0].mxu0
      %2362 = vmatprep.mubr.f32.mxu0 %v2174
      %2363 = vmatmul.mubr.f32.gmra.mrb[0].mxu0 %v2173
      %v2364 = vpop.f32.mrb[0].mxu0
      %v2365 = vadd.f32 0.0, %v2364
      %v2366 = vpop.f32.mrb[0].mxu0
      %2367 = vdwg.mxu0
      %v2368 = vadd.f32 %v2175, %v2290
      %v2369 = vadd.f32 %v2176, %v2295
      %v2370 = vadd.f32 %v2177, %v2300
      %v2371 = vadd.f32 %v2178, %v2305
      %v2372 = vadd.f32 %v2179, %v2310
      %v2373 = vadd.f32 %v2180, %v2315
      %v2374 = vadd.f32 %v2181, %v2320
      %v2375 = vadd.f32 %v2182, %v2325
      %v2376 = vadd.f32 %v2183, %v2330
      %v2377 = vadd.f32 %v2184, %v2335
      %v2378 = vadd.f32 %v2185, %v2340
      %v2379 = vadd.f32 %v2186, %v2345
      %v2380 = vadd.f32 %v2187, %v2350
      %v2381 = vadd.f32 %v2188, %v2355
      %v2382 = vadd.f32 %v2189, %v2360
      %v2383 = vadd.f32 %v2190, %v2365
      %vm2384 = vcmask 31744
      %2385 = vst.msk [vmem:[#allocation2] sm:$0xff] %vm2384, %v2368
      %2386 = vst.msk [vmem:[#allocation2 + $0x8] sm:$0xff] %vm2384, %v2369
      %2387 = vst.msk [vmem:[#allocation2 + $0x10] sm:$0xff] %vm2384, %v2370
      %2388 = vst.msk [vmem:[#allocation2 + $0x18] sm:$0xff] %vm2384, %v2371
      %2389 = vst.msk [vmem:[#allocation2 + $0x20] sm:$0xff] %vm2384, %v2372
      %2390 = vst.msk [vmem:[#allocation2 + $0x28] sm:$0xff] %vm2384, %v2373
      %2391 = vst.msk [vmem:[#allocation2 + $0x30] sm:$0xff] %vm2384, %v2374
      %2392 = vst.msk [vmem:[#allocation2 + $0x38] sm:$0xff] %vm2384, %v2375
      %2393 = vst.msk [vmem:[#allocation2 + $0x40] sm:$0xff] %vm2384, %v2376
      %2394 = vst.msk [vmem:[#allocation2 + $0x48] sm:$0xff] %vm2384, %v2377
      %2395 = vst.msk [vmem:[#allocation2 + $0x50] sm:$0xff] %vm2384, %v2378
      %2396 = vst.msk [vmem:[#allocation2 + $0x58] sm:$0xff] %vm2384, %v2379
      %2397 = vst.msk [vmem:[#allocation2 + $0x60] sm:$0xff] %vm2384, %v2380
      %2398 = vst.msk [vmem:[#allocation2 + $0x68] sm:$0xff] %vm2384, %v2381
      %2399 = vst.msk [vmem:[#allocation2 + $0x70] sm:$0xff] %vm2384, %v2382
      %2400 = vst.msk [vmem:[#allocation2 + $0x78] sm:$0xff] %vm2384, %v2383
      // Predicated region
      $region69: #{subdivision_inference.3} parent=63 // pred_check
        %p2401 = pneg %p465
      $region70: #{subdivision_inference.3} parent=63 // pred_check_branch
        %2403 = sbr.rel (%p2401) target = $region72
      $region71: #{subdivision_inference.3} parent=63 // pred_region
        %v2404 = vld [vmem:[%s445] sm:$0xff]
        %v2405 = vld [vmem:[%s445 + $0x8] sm:$0xff]
        %v2406 = vld [vmem:[%s445 + $0x10] sm:$0xff]
        %v2407 = vld [vmem:[%s445 + $0x18] sm:$0xff]
        %v2408 = vld [vmem:[%s445 + $0x20] sm:$0xff]
        %v2409 = vld [vmem:[%s445 + $0x28] sm:$0xff]
        %v2410 = vld [vmem:[%s445 + $0x30] sm:$0xff]
        %v2411 = vld [vmem:[%s445 + $0x38] sm:$0xff]
        %v2412 = vld [vmem:[%s445 + $0x40] sm:$0xff]
        %v2413 = vld [vmem:[%s445 + $0x48] sm:$0xff]
        %v2414 = vld [vmem:[%s445 + $0x50] sm:$0xff]
        %v2415 = vld [vmem:[%s445 + $0x58] sm:$0xff]
        %v2416 = vld [vmem:[%s445 + $0x60] sm:$0xff]
        %v2417 = vld [vmem:[%s445 + $0x68] sm:$0xff]
        %v2418 = vld [vmem:[%s445 + $0x70] sm:$0xff]
        %v2419 = vld [vmem:[%s445 + $0x78] sm:$0xff]
        %v2420 = vld [vmem:[%s2] sm:$0x3]
        %v2421 = vmul.f32 %v2404, 2.0
        %v2422 = vmul.f32 %v2405, 2.0
        %v2423 = vmul.f32 %v2406, 2.0
        %v2424 = vmul.f32 %v2407, 2.0
        %v2425 = vmul.f32 %v2408, 2.0
        %v2426 = vmul.f32 %v2409, 2.0
        %v2427 = vmul.f32 %v2410, 2.0
        %v2428 = vmul.f32 %v2411, 2.0
        %v2429 = vmul.f32 %v2412, 2.0
        %v2430 = vmul.f32 %v2413, 2.0
        %v2431 = vmul.f32 %v2414, 2.0
        %v2432 = vmul.f32 %v2415, 2.0
        %v2433 = vmul.f32 %v2416, 2.0
        %v2434 = vmul.f32 %v2417, 2.0
        %v2435 = vmul.f32 %v2418, 2.0
        %v2436 = vmul.f32 %v2419, 2.0
        %v2437 = vsub.f32 %v2421, 1.0
        %v2438 = vsub.f32 %v2422, 1.0
        %v2439 = vsub.f32 %v2423, 1.0
        %v2440 = vsub.f32 %v2424, 1.0
        %v2441 = vsub.f32 %v2425, 1.0
        %v2442 = vsub.f32 %v2426, 1.0
        %v2443 = vsub.f32 %v2427, 1.0
        %v2444 = vsub.f32 %v2428, 1.0
        %v2445 = vsub.f32 %v2429, 1.0
        %v2446 = vsub.f32 %v2430, 1.0
        %v2447 = vsub.f32 %v2431, 1.0
        %v2448 = vsub.f32 %v2432, 1.0
        %v2449 = vsub.f32 %v2433, 1.0
        %v2450 = vsub.f32 %v2434, 1.0
        %v2451 = vsub.f32 %v2435, 1.0
        %v2452 = vsub.f32 %v2436, 1.0
        %2454 = vset.pattern.permute.xlu0 0
        %2455 = vperm.xlu0 %2454, %v2437
        %v2456 = vpop.permute.xlu0 %2455
        %2459 = vset.pattern.permute.xlu0 0
        %2460 = vperm.xlu0 %2459, %v2438
        %v2461 = vpop.permute.xlu0 %2460
        %2464 = vset.pattern.permute.xlu0 0
        %2465 = vperm.xlu0 %2464, %v2439
        %v2466 = vpop.permute.xlu0 %2465
        %2469 = vset.pattern.permute.xlu0 0
        %2470 = vperm.xlu0 %2469, %v2440
        %v2471 = vpop.permute.xlu0 %2470
        %2474 = vset.pattern.permute.xlu0 0
        %2475 = vperm.xlu0 %2474, %v2441
        %v2476 = vpop.permute.xlu0 %2475
        %2479 = vset.pattern.permute.xlu0 0
        %2480 = vperm.xlu0 %2479, %v2442
        %v2481 = vpop.permute.xlu0 %2480
        %2484 = vset.pattern.permute.xlu0 0
        %2485 = vperm.xlu0 %2484, %v2443
        %v2486 = vpop.permute.xlu0 %2485
        %2489 = vset.pattern.permute.xlu0 0
        %2490 = vperm.xlu0 %2489, %v2444
        %v2491 = vpop.permute.xlu0 %2490
        %2494 = vset.pattern.permute.xlu0 0
        %2495 = vperm.xlu0 %2494, %v2445
        %v2496 = vpop.permute.xlu0 %2495
        %2499 = vset.pattern.permute.xlu0 0
        %2500 = vperm.xlu0 %2499, %v2446
        %v2501 = vpop.permute.xlu0 %2500
        %2504 = vset.pattern.permute.xlu0 0
        %2505 = vperm.xlu0 %2504, %v2447
        %v2506 = vpop.permute.xlu0 %2505
        %2509 = vset.pattern.permute.xlu0 0
        %2510 = vperm.xlu0 %2509, %v2448
        %v2511 = vpop.permute.xlu0 %2510
        %2514 = vset.pattern.permute.xlu0 0
        %2515 = vperm.xlu0 %2514, %v2449
        %v2516 = vpop.permute.xlu0 %2515
        %2519 = vset.pattern.permute.xlu0 0
        %2520 = vperm.xlu0 %2519, %v2450
        %v2521 = vpop.permute.xlu0 %2520
        %2524 = vset.pattern.permute.xlu0 0
        %2525 = vperm.xlu0 %2524, %v2451
        %v2526 = vpop.permute.xlu0 %2525
        %2529 = vset.pattern.permute.xlu0 0
        %2530 = vperm.xlu0 %2529, %v2452
        %v2531 = vpop.permute.xlu0 %2530
        %v2533 = vlaneseq
        %v2534 = vshrl.u32 %v2533, 7
        %v2535 = vsub.s32 0, %v2534
        %v2536 = vrot.slane %v2420, %v2535
        %v2537 = vmul.f32 %v2456, %v2536
        %v2538 = vmul.f32 %v2461, %v2536
        %v2539 = vmul.f32 %v2466, %v2536
        %v2540 = vmul.f32 %v2471, %v2536
        %v2541 = vmul.f32 %v2476, %v2536
        %v2542 = vmul.f32 %v2481, %v2536
        %v2543 = vmul.f32 %v2486, %v2536
        %v2544 = vmul.f32 %v2491, %v2536
        %v2545 = vmul.f32 %v2496, %v2536
        %v2546 = vmul.f32 %v2501, %v2536
        %v2547 = vmul.f32 %v2506, %v2536
        %v2548 = vmul.f32 %v2511, %v2536
        %v2549 = vmul.f32 %v2516, %v2536
        %v2550 = vmul.f32 %v2521, %v2536
        %v2551 = vmul.f32 %v2526, %v2536
        %v2552 = vmul.f32 %v2531, %v2536
        %2553 = vset.pattern.permute.xlu0 1
        %2554 = vperm.xlu0 %2553, %v2437
        %v2555 = vpop.permute.xlu0 %2554
        %2557 = vset.pattern.permute.xlu0 1
        %2558 = vperm.xlu0 %2557, %v2438
        %v2559 = vpop.permute.xlu0 %2558
        %2561 = vset.pattern.permute.xlu0 1
        %2562 = vperm.xlu0 %2561, %v2439
        %v2563 = vpop.permute.xlu0 %2562
        %2565 = vset.pattern.permute.xlu0 1
        %2566 = vperm.xlu0 %2565, %v2440
        %v2567 = vpop.permute.xlu0 %2566
        %2569 = vset.pattern.permute.xlu0 1
        %2570 = vperm.xlu0 %2569, %v2441
        %v2571 = vpop.permute.xlu0 %2570
        %2573 = vset.pattern.permute.xlu0 1
        %2574 = vperm.xlu0 %2573, %v2442
        %v2575 = vpop.permute.xlu0 %2574
        %2577 = vset.pattern.permute.xlu0 1
        %2578 = vperm.xlu0 %2577, %v2443
        %v2579 = vpop.permute.xlu0 %2578
        %2581 = vset.pattern.permute.xlu0 1
        %2582 = vperm.xlu0 %2581, %v2444
        %v2583 = vpop.permute.xlu0 %2582
        %2585 = vset.pattern.permute.xlu0 1
        %2586 = vperm.xlu0 %2585, %v2445
        %v2587 = vpop.permute.xlu0 %2586
        %2589 = vset.pattern.permute.xlu0 1
        %2590 = vperm.xlu0 %2589, %v2446
        %v2591 = vpop.permute.xlu0 %2590
        %2593 = vset.pattern.permute.xlu0 1
        %2594 = vperm.xlu0 %2593, %v2447
        %v2595 = vpop.permute.xlu0 %2594
        %2597 = vset.pattern.permute.xlu0 1
        %2598 = vperm.xlu0 %2597, %v2448
        %v2599 = vpop.permute.xlu0 %2598
        %2601 = vset.pattern.permute.xlu0 1
        %2602 = vperm.xlu0 %2601, %v2449
        %v2603 = vpop.permute.xlu0 %2602
        %2605 = vset.pattern.permute.xlu0 1
        %2606 = vperm.xlu0 %2605, %v2450
        %v2607 = vpop.permute.xlu0 %2606
        %2609 = vset.pattern.permute.xlu0 1
        %2610 = vperm.xlu0 %2609, %v2451
        %v2611 = vpop.permute.xlu0 %2610
        %2613 = vset.pattern.permute.xlu0 1
        %2614 = vperm.xlu0 %2613, %v2452
        %v2615 = vpop.permute.xlu0 %2614
        %v2617 = vlaneseq
        %v2618 = vshrl.u32 %v2617, 7
        %v2619 = vsub.s32 1, %v2618
        %v2620 = vrot.slane %v2420, %v2619
        %v2621 = vmul.f32 %v2555, %v2620
        %v2622 = vmul.f32 %v2559, %v2620
        %v2623 = vmul.f32 %v2563, %v2620
        %v2624 = vmul.f32 %v2567, %v2620
        %v2625 = vmul.f32 %v2571, %v2620
        %v2626 = vmul.f32 %v2575, %v2620
        %v2627 = vmul.f32 %v2579, %v2620
        %v2628 = vmul.f32 %v2583, %v2620
        %v2629 = vmul.f32 %v2587, %v2620
        %v2630 = vmul.f32 %v2591, %v2620
        %v2631 = vmul.f32 %v2595, %v2620
        %v2632 = vmul.f32 %v2599, %v2620
        %v2633 = vmul.f32 %v2603, %v2620
        %v2634 = vmul.f32 %v2607, %v2620
        %v2635 = vmul.f32 %v2611, %v2620
        %v2636 = vmul.f32 %v2615, %v2620
        %v2637 = vadd.f32 %v2537, %v2621
        %v2638 = vadd.f32 %v2538, %v2622
        %v2639 = vadd.f32 %v2539, %v2623
        %v2640 = vadd.f32 %v2540, %v2624
        %v2641 = vadd.f32 %v2541, %v2625
        %v2642 = vadd.f32 %v2542, %v2626
        %v2643 = vadd.f32 %v2543, %v2627
        %v2644 = vadd.f32 %v2544, %v2628
        %v2645 = vadd.f32 %v2545, %v2629
        %v2646 = vadd.f32 %v2546, %v2630
        %v2647 = vadd.f32 %v2547, %v2631
        %v2648 = vadd.f32 %v2548, %v2632
        %v2649 = vadd.f32 %v2549, %v2633
        %v2650 = vadd.f32 %v2550, %v2634
        %v2651 = vadd.f32 %v2551, %v2635
        %v2652 = vadd.f32 %v2552, %v2636
        %v2653 = vmul.f32 %v2637, 6.2831855
        %v2654 = vmul.f32 %v2638, 6.2831855
        %v2655 = vmul.f32 %v2639, 6.2831855
        %v2656 = vmul.f32 %v2640, 6.2831855
        %v2657 = vmul.f32 %v2641, 6.2831855
        %v2658 = vmul.f32 %v2642, 6.2831855
        %v2659 = vmul.f32 %v2643, 6.2831855
        %v2660 = vmul.f32 %v2644, 6.2831855
        %v2661 = vmul.f32 %v2645, 6.2831855
        %v2662 = vmul.f32 %v2646, 6.2831855
        %v2663 = vmul.f32 %v2647, 6.2831855
        %v2664 = vmul.f32 %v2648, 6.2831855
        %v2665 = vmul.f32 %v2649, 6.2831855
        %v2666 = vmul.f32 %v2650, 6.2831855
        %v2667 = vmul.f32 %v2651, 6.2831855
        %v2668 = vmul.f32 %v2652, 6.2831855
        %v2669 = vand.u32 2147483647, %v2653
        %vm2670 = vcmp.le.f32.partialorder %v2669, 0.7853982
        %vm2671 = vcmp.lt.s32.totalorder %v2653, 0
        %v2672 = vand.u32 %v2653, 2139095040
        %v2673 = vshrl.u32 %v2672, 23
        %v2674 = vsub.s32 %v2673, 127
        %v2675 = vand.u32 2147483647, %v2653
        %v2676 = vand.u32 %v2675, 8388607
        %v2677 = vor.u32 %v2676, 8388608
        %v2678 = vsub.s32 0, %v2677
        %v2679 = vadd.s32 %v2674, 1
        %vm2680 = vcmp.gt.s32.totalorder %v2679, 0
        %v2681 = vsel %vm2680, %v2679, 0
        %v2682 = vshrl.u32 %v2681, 5
        %v2683 = vand.u32 %v2681, 31
        %v2684 = vsub.s32 32, %v2683
        %v2685 = vshrl.u32 683565275, %v2684
        %v2686 = vshll.u32 683565275, %v2683
        %v2687 = vshrl.u32 2475754826, %v2684
        %v2688 = vor.u32 %v2686, %v2687
        %v2689 = vshll.u32 2475754826, %v2683
        %v2690 = vshrl.u32 2131351028, %v2684
        %v2691 = vor.u32 %v2689, %v2690
        %v2692 = vshll.u32 2131351028, %v2683
        %v2693 = vshrl.u32 2102212464, %v2684
        %v2694 = vor.u32 %v2692, %v2693
        %v2695 = vshll.u32 2102212464, %v2683
        %v2696 = vshrl.u32 920167782, %v2684
        %v2697 = vor.u32 %v2695, %v2696
        %v2698 = vshll.u32 920167782, %v2683
        %v2699 = vshrl.u32 1326507024, %v2684
        %v2700 = vor.u32 %v2698, %v2699
        %vm2701 = vcmp.lt.s32.totalorder %v2682, 1
        %vm2702 = vcmp.lt.s32.totalorder %v2682, 2
        %vm2703 = vcmp.lt.s32.totalorder %v2682, 3
        %vm2704 = vcmp.lt.s32.totalorder %v2682, 4
        %v2705 = vsel %vm2701, %v2685, %v2688
        %v2706 = vsel %vm2704, %v2694, 2102212464
        %v2707 = vsel %vm2703, %v2691, %v2706
        %v2708 = vsel %vm2702, %v2705, %v2707
        %v2709 = vsel %vm2701, %v2688, %v2691
        %v2710 = vsel %vm2704, %v2697, 920167782
        %v2711 = vsel %vm2703, %v2694, %v2710
        %v2712 = vsel %vm2702, %v2709, %v2711
        %v2713 = vsel %vm2701, %v2691, %v2694
        %v2714 = vsel %vm2704, %v2700, 1326507024
        %v2715 = vsel %vm2703, %v2697, %v2714
        %v2716 = vsel %vm2702, %v2713, %v2715
        %v2717 = vshll.u32 %v2677, 8
        %v2718 = vmul.u32.u64.compose %v2717, %v2716
        %v2719 = vextract.low.u32 %v2718
        %v2720 = vextract.high.u32 %v2718
        %v2721 = vmul.u32.u64.compose %v2717, %v2712
        %v2722 = vextract.low.u32 %v2721
        %v2723 = vextract.high.u32 %v2721
        %v2724 = vmul.u32 %v2717, %v2708
        %v2725 = vadd.s32 %v2720, %v2722
        %vm2726 = vc.u32 %v2720, %v2722
        %v2727 = vadd.s32 %v2723, 1
        %v2728 = vsel %vm2726, %v2727, %v2723
        %v2729 = vadd.s32 %v2724, %v2728
        %v2730 = vadd.s32 %v2729, 536870912
        %v2731 = vshrl.u32 %v2730, 30
        %v2732 = vshll.u32 %v2731, 30
        %v2733 = vsub.s32 %v2729, %v2732
        %vm2734 = vcmp.lt.s32.totalorder %v2733, 0
        %v2735 = vsub.s32 0, %v2733
        %v2736 = vsel %vm2734, %v2735, %v2733
        %v2737 = vclz %v2736
        %v2738 = vsub.s32 %v2737, 2
        %vm2739 = vcmp.gt.s32.totalorder 0, %v2738
        %v2740 = vsel %vm2739, 0, %v2738
        %v2741 = vsub.s32 32, %v2740
        %v2742 = vshll.u32 %v2733, %v2740
        %v2743 = vshrl.u32 %v2725, %v2741
        %v2744 = vor.u32 %v2742, %v2743
        %v2745 = vsub.s32 4294967266, %v2740
        %v2746 = vadd.s32 %v2745, 127
        %v2747 = vshll.u32 %v2746, 23
        %v2748 = vor.u32 4788187, %v2747
        %v2749 = vand.u32 2147483647, %v2748
        %v2751 = vcvt.s32.f32 %v2744
        %v2752 = vmul.f32 %v2751, %v2749
        %v2753 = vxor.u32 %v2752, 2147483648
        %v2754 = vsel %vm2671, %v2753, %v2752
        %v2755 = vsub.s32 4, %v2731
        %v2756 = vsel %vm2671, %v2755, %v2731
        %v2757 = vsel %vm2670, %v2653, %v2754
        %v2758 = vsel %vm2670, 0, %v2756
        %v2759 = vcosq.f32.pop %v2757
        %v2760 = vsinq.f32.pop %v2757
        %vm2761 = vweird.f32 %v2653
        %v2762 = vadd.s32 %v2758, 3
        %v2763 = vand.u32 %v2762, 3
        %vm2764 = vcmp.lt.s32.totalorder %v2763, 2
        %vm2765 = vcmp.eq.s32.totalorder %v2763, 0
        %v2766 = vxor.u32 %v2760, 2147483648
        %v2767 = vsel %vm2765, %v2759, %v2766
        %vm2768 = vcmp.eq.s32.totalorder %v2763, 2
        %v2769 = vxor.u32 %v2759, 2147483648
        %v2770 = vsel %vm2768, %v2769, %v2760
        %v2771 = vsel %vm2764, %v2767, %v2770
        %v2772 = vsel %vm2761, nan, %v2771
        %v2773 = vand.u32 2147483647, %v2654
        %vm2774 = vcmp.le.f32.partialorder %v2773, 0.7853982
        %vm2775 = vcmp.lt.s32.totalorder %v2654, 0
        %v2776 = vand.u32 %v2654, 2139095040
        %v2777 = vshrl.u32 %v2776, 23
        %v2778 = vsub.s32 %v2777, 127
        %v2779 = vand.u32 2147483647, %v2654
        %v2780 = vand.u32 %v2779, 8388607
        %v2781 = vor.u32 %v2780, 8388608
        %v2782 = vsub.s32 0, %v2781
        %v2783 = vadd.s32 %v2778, 1
        %vm2784 = vcmp.gt.s32.totalorder %v2783, 0
        %v2785 = vsel %vm2784, %v2783, 0
        %v2786 = vshrl.u32 %v2785, 5
        %v2787 = vand.u32 %v2785, 31
        %v2788 = vsub.s32 32, %v2787
        %v2789 = vshrl.u32 683565275, %v2788
        %v2790 = vshll.u32 683565275, %v2787
        %v2791 = vshrl.u32 2475754826, %v2788
        %v2792 = vor.u32 %v2790, %v2791
        %v2793 = vshll.u32 2475754826, %v2787
        %v2794 = vshrl.u32 2131351028, %v2788
        %v2795 = vor.u32 %v2793, %v2794
        %v2796 = vshll.u32 2131351028, %v2787
        %v2797 = vshrl.u32 2102212464, %v2788
        %v2798 = vor.u32 %v2796, %v2797
        %v2799 = vshll.u32 2102212464, %v2787
        %v2800 = vshrl.u32 920167782, %v2788
        %v2801 = vor.u32 %v2799, %v2800
        %v2802 = vshll.u32 920167782, %v2787
        %v2803 = vshrl.u32 1326507024, %v2788
        %v2804 = vor.u32 %v2802, %v2803
        %vm2805 = vcmp.lt.s32.totalorder %v2786, 1
        %vm2806 = vcmp.lt.s32.totalorder %v2786, 2
        %vm2807 = vcmp.lt.s32.totalorder %v2786, 3
        %vm2808 = vcmp.lt.s32.totalorder %v2786, 4
        %v2809 = vsel %vm2805, %v2789, %v2792
        %v2810 = vsel %vm2808, %v2798, 2102212464
        %v2811 = vsel %vm2807, %v2795, %v2810
        %v2812 = vsel %vm2806, %v2809, %v2811
        %v2813 = vsel %vm2805, %v2792, %v2795
        %v2814 = vsel %vm2808, %v2801, 920167782
        %v2815 = vsel %vm2807, %v2798, %v2814
        %v2816 = vsel %vm2806, %v2813, %v2815
        %v2817 = vsel %vm2805, %v2795, %v2798
        %v2818 = vsel %vm2808, %v2804, 1326507024
        %v2819 = vsel %vm2807, %v2801, %v2818
        %v2820 = vsel %vm2806, %v2817, %v2819
        %v2821 = vshll.u32 %v2781, 8
        %v2822 = vmul.u32.u64.compose %v2821, %v2820
        %v2823 = vextract.low.u32 %v2822
        %v2824 = vextract.high.u32 %v2822
        %v2825 = vmul.u32.u64.compose %v2821, %v2816
        %v2826 = vextract.low.u32 %v2825
        %v2827 = vextract.high.u32 %v2825
        %v2828 = vmul.u32 %v2821, %v2812
        %v2829 = vadd.s32 %v2824, %v2826
        %vm2830 = vc.u32 %v2824, %v2826
        %v2831 = vadd.s32 %v2827, 1
        %v2832 = vsel %vm2830, %v2831, %v2827
        %v2833 = vadd.s32 %v2828, %v2832
        %v2834 = vadd.s32 %v2833, 536870912
        %v2835 = vshrl.u32 %v2834, 30
        %v2836 = vshll.u32 %v2835, 30
        %v2837 = vsub.s32 %v2833, %v2836
        %vm2838 = vcmp.lt.s32.totalorder %v2837, 0
        %v2839 = vsub.s32 0, %v2837
        %v2840 = vsel %vm2838, %v2839, %v2837
        %v2841 = vclz %v2840
        %v2842 = vsub.s32 %v2841, 2
        %vm2843 = vcmp.gt.s32.totalorder 0, %v2842
        %v2844 = vsel %vm2843, 0, %v2842
        %v2845 = vsub.s32 32, %v2844
        %v2846 = vshll.u32 %v2837, %v2844
        %v2847 = vshrl.u32 %v2829, %v2845
        %v2848 = vor.u32 %v2846, %v2847
        %v2849 = vsub.s32 4294967266, %v2844
        %v2850 = vadd.s32 %v2849, 127
        %v2851 = vshll.u32 %v2850, 23
        %v2852 = vor.u32 4788187, %v2851
        %v2853 = vand.u32 2147483647, %v2852
        %v2855 = vcvt.s32.f32 %v2848
        %v2856 = vmul.f32 %v2855, %v2853
        %v2857 = vxor.u32 %v2856, 2147483648
        %v2858 = vsel %vm2775, %v2857, %v2856
        %v2859 = vsub.s32 4, %v2835
        %v2860 = vsel %vm2775, %v2859, %v2835
        %v2861 = vsel %vm2774, %v2654, %v2858
        %v2862 = vsel %vm2774, 0, %v2860
        %v2863 = vcosq.f32.pop %v2861
        %v2864 = vsinq.f32.pop %v2861
        %vm2865 = vweird.f32 %v2654
        %v2866 = vadd.s32 %v2862, 3
        %v2867 = vand.u32 %v2866, 3
        %vm2868 = vcmp.lt.s32.totalorder %v2867, 2
        %vm2869 = vcmp.eq.s32.totalorder %v2867, 0
        %v2870 = vxor.u32 %v2864, 2147483648
        %v2871 = vsel %vm2869, %v2863, %v2870
        %vm2872 = vcmp.eq.s32.totalorder %v2867, 2
        %v2873 = vxor.u32 %v2863, 2147483648
        %v2874 = vsel %vm2872, %v2873, %v2864
        %v2875 = vsel %vm2868, %v2871, %v2874
        %v2876 = vsel %vm2865, nan, %v2875
        %v2877 = vand.u32 2147483647, %v2655
        %vm2878 = vcmp.le.f32.partialorder %v2877, 0.7853982
        %vm2879 = vcmp.lt.s32.totalorder %v2655, 0
        %v2880 = vand.u32 %v2655, 2139095040
        %v2881 = vshrl.u32 %v2880, 23
        %v2882 = vsub.s32 %v2881, 127
        %v2883 = vand.u32 2147483647, %v2655
        %v2884 = vand.u32 %v2883, 8388607
        %v2885 = vor.u32 %v2884, 8388608
        %v2886 = vsub.s32 0, %v2885
        %v2887 = vadd.s32 %v2882, 1
        %vm2888 = vcmp.gt.s32.totalorder %v2887, 0
        %v2889 = vsel %vm2888, %v2887, 0
        %v2890 = vshrl.u32 %v2889, 5
        %v2891 = vand.u32 %v2889, 31
        %v2892 = vsub.s32 32, %v2891
        %v2893 = vshrl.u32 683565275, %v2892
        %v2894 = vshll.u32 683565275, %v2891
        %v2895 = vshrl.u32 2475754826, %v2892
        %v2896 = vor.u32 %v2894, %v2895
        %v2897 = vshll.u32 2475754826, %v2891
        %v2898 = vshrl.u32 2131351028, %v2892
        %v2899 = vor.u32 %v2897, %v2898
        %v2900 = vshll.u32 2131351028, %v2891
        %v2901 = vshrl.u32 2102212464, %v2892
        %v2902 = vor.u32 %v2900, %v2901
        %v2903 = vshll.u32 2102212464, %v2891
        %v2904 = vshrl.u32 920167782, %v2892
        %v2905 = vor.u32 %v2903, %v2904
        %v2906 = vshll.u32 920167782, %v2891
        %v2907 = vshrl.u32 1326507024, %v2892
        %v2908 = vor.u32 %v2906, %v2907
        %vm2909 = vcmp.lt.s32.totalorder %v2890, 1
        %vm2910 = vcmp.lt.s32.totalorder %v2890, 2
        %vm2911 = vcmp.lt.s32.totalorder %v2890, 3
        %vm2912 = vcmp.lt.s32.totalorder %v2890, 4
        %v2913 = vsel %vm2909, %v2893, %v2896
        %v2914 = vsel %vm2912, %v2902, 2102212464
        %v2915 = vsel %vm2911, %v2899, %v2914
        %v2916 = vsel %vm2910, %v2913, %v2915
        %v2917 = vsel %vm2909, %v2896, %v2899
        %v2918 = vsel %vm2912, %v2905, 920167782
        %v2919 = vsel %vm2911, %v2902, %v2918
        %v2920 = vsel %vm2910, %v2917, %v2919
        %v2921 = vsel %vm2909, %v2899, %v2902
        %v2922 = vsel %vm2912, %v2908, 1326507024
        %v2923 = vsel %vm2911, %v2905, %v2922
        %v2924 = vsel %vm2910, %v2921, %v2923
        %v2925 = vshll.u32 %v2885, 8
        %v2926 = vmul.u32.u64.compose %v2925, %v2924
        %v2927 = vextract.low.u32 %v2926
        %v2928 = vextract.high.u32 %v2926
        %v2929 = vmul.u32.u64.compose %v2925, %v2920
        %v2930 = vextract.low.u32 %v2929
        %v2931 = vextract.high.u32 %v2929
        %v2932 = vmul.u32 %v2925, %v2916
        %v2933 = vadd.s32 %v2928, %v2930
        %vm2934 = vc.u32 %v2928, %v2930
        %v2935 = vadd.s32 %v2931, 1
        %v2936 = vsel %vm2934, %v2935, %v2931
        %v2937 = vadd.s32 %v2932, %v2936
        %v2938 = vadd.s32 %v2937, 536870912
        %v2939 = vshrl.u32 %v2938, 30
        %v2940 = vshll.u32 %v2939, 30
        %v2941 = vsub.s32 %v2937, %v2940
        %vm2942 = vcmp.lt.s32.totalorder %v2941, 0
        %v2943 = vsub.s32 0, %v2941
        %v2944 = vsel %vm2942, %v2943, %v2941
        %v2945 = vclz %v2944
        %v2946 = vsub.s32 %v2945, 2
        %vm2947 = vcmp.gt.s32.totalorder 0, %v2946
        %v2948 = vsel %vm2947, 0, %v2946
        %v2949 = vsub.s32 32, %v2948
        %v2950 = vshll.u32 %v2941, %v2948
        %v2951 = vshrl.u32 %v2933, %v2949
        %v2952 = vor.u32 %v2950, %v2951
        %v2953 = vsub.s32 4294967266, %v2948
        %v2954 = vadd.s32 %v2953, 127
        %v2955 = vshll.u32 %v2954, 23
        %v2956 = vor.u32 4788187, %v2955
        %v2957 = vand.u32 2147483647, %v2956
        %v2959 = vcvt.s32.f32 %v2952
        %v2960 = vmul.f32 %v2959, %v2957
        %v2961 = vxor.u32 %v2960, 2147483648
        %v2962 = vsel %vm2879, %v2961, %v2960
        %v2963 = vsub.s32 4, %v2939
        %v2964 = vsel %vm2879, %v2963, %v2939
        %v2965 = vsel %vm2878, %v2655, %v2962
        %v2966 = vsel %vm2878, 0, %v2964
        %v2967 = vcosq.f32.pop %v2965
        %v2968 = vsinq.f32.pop %v2965
        %vm2969 = vweird.f32 %v2655
        %v2970 = vadd.s32 %v2966, 3
        %v2971 = vand.u32 %v2970, 3
        %vm2972 = vcmp.lt.s32.totalorder %v2971, 2
        %vm2973 = vcmp.eq.s32.totalorder %v2971, 0
        %v2974 = vxor.u32 %v2968, 2147483648
        %v2975 = vsel %vm2973, %v2967, %v2974
        %vm2976 = vcmp.eq.s32.totalorder %v2971, 2
        %v2977 = vxor.u32 %v2967, 2147483648
        %v2978 = vsel %vm2976, %v2977, %v2968
        %v2979 = vsel %vm2972, %v2975, %v2978
        %v2980 = vsel %vm2969, nan, %v2979
        %v2981 = vand.u32 2147483647, %v2656
        %vm2982 = vcmp.le.f32.partialorder %v2981, 0.7853982
        %vm2983 = vcmp.lt.s32.totalorder %v2656, 0
        %v2984 = vand.u32 %v2656, 2139095040
        %v2985 = vshrl.u32 %v2984, 23
        %v2986 = vsub.s32 %v2985, 127
        %v2987 = vand.u32 2147483647, %v2656
        %v2988 = vand.u32 %v2987, 8388607
        %v2989 = vor.u32 %v2988, 8388608
        %v2990 = vsub.s32 0, %v2989
        %v2991 = vadd.s32 %v2986, 1
        %vm2992 = vcmp.gt.s32.totalorder %v2991, 0
        %v2993 = vsel %vm2992, %v2991, 0
        %v2994 = vshrl.u32 %v2993, 5
        %v2995 = vand.u32 %v2993, 31
        %v2996 = vsub.s32 32, %v2995
        %v2997 = vshrl.u32 683565275, %v2996
        %v2998 = vshll.u32 683565275, %v2995
        %v2999 = vshrl.u32 2475754826, %v2996
        %v3000 = vor.u32 %v2998, %v2999
        %v3001 = vshll.u32 2475754826, %v2995
        %v3002 = vshrl.u32 2131351028, %v2996
        %v3003 = vor.u32 %v3001, %v3002
        %v3004 = vshll.u32 2131351028, %v2995
        %v3005 = vshrl.u32 2102212464, %v2996
        %v3006 = vor.u32 %v3004, %v3005
        %v3007 = vshll.u32 2102212464, %v2995
        %v3008 = vshrl.u32 920167782, %v2996
        %v3009 = vor.u32 %v3007, %v3008
        %v3010 = vshll.u32 920167782, %v2995
        %v3011 = vshrl.u32 1326507024, %v2996
        %v3012 = vor.u32 %v3010, %v3011
        %vm3013 = vcmp.lt.s32.totalorder %v2994, 1
        %vm3014 = vcmp.lt.s32.totalorder %v2994, 2
        %vm3015 = vcmp.lt.s32.totalorder %v2994, 3
        %vm3016 = vcmp.lt.s32.totalorder %v2994, 4
        %v3017 = vsel %vm3013, %v2997, %v3000
        %v3018 = vsel %vm3016, %v3006, 2102212464
        %v3019 = vsel %vm3015, %v3003, %v3018
        %v3020 = vsel %vm3014, %v3017, %v3019
        %v3021 = vsel %vm3013, %v3000, %v3003
        %v3022 = vsel %vm3016, %v3009, 920167782
        %v3023 = vsel %vm3015, %v3006, %v3022
        %v3024 = vsel %vm3014, %v3021, %v3023
        %v3025 = vsel %vm3013, %v3003, %v3006
        %v3026 = vsel %vm3016, %v3012, 1326507024
        %v3027 = vsel %vm3015, %v3009, %v3026
        %v3028 = vsel %vm3014, %v3025, %v3027
        %v3029 = vshll.u32 %v2989, 8
        %v3030 = vmul.u32.u64.compose %v3029, %v3028
        %v3031 = vextract.low.u32 %v3030
        %v3032 = vextract.high.u32 %v3030
        %v3033 = vmul.u32.u64.compose %v3029, %v3024
        %v3034 = vextract.low.u32 %v3033
        %v3035 = vextract.high.u32 %v3033
        %v3036 = vmul.u32 %v3029, %v3020
        %v3037 = vadd.s32 %v3032, %v3034
        %vm3038 = vc.u32 %v3032, %v3034
        %v3039 = vadd.s32 %v3035, 1
        %v3040 = vsel %vm3038, %v3039, %v3035
        %v3041 = vadd.s32 %v3036, %v3040
        %v3042 = vadd.s32 %v3041, 536870912
        %v3043 = vshrl.u32 %v3042, 30
        %v3044 = vshll.u32 %v3043, 30
        %v3045 = vsub.s32 %v3041, %v3044
        %vm3046 = vcmp.lt.s32.totalorder %v3045, 0
        %v3047 = vsub.s32 0, %v3045
        %v3048 = vsel %vm3046, %v3047, %v3045
        %v3049 = vclz %v3048
        %v3050 = vsub.s32 %v3049, 2
        %vm3051 = vcmp.gt.s32.totalorder 0, %v3050
        %v3052 = vsel %vm3051, 0, %v3050
        %v3053 = vsub.s32 32, %v3052
        %v3054 = vshll.u32 %v3045, %v3052
        %v3055 = vshrl.u32 %v3037, %v3053
        %v3056 = vor.u32 %v3054, %v3055
        %v3057 = vsub.s32 4294967266, %v3052
        %v3058 = vadd.s32 %v3057, 127
        %v3059 = vshll.u32 %v3058, 23
        %v3060 = vor.u32 4788187, %v3059
        %v3061 = vand.u32 2147483647, %v3060
        %v3063 = vcvt.s32.f32 %v3056
        %v3064 = vmul.f32 %v3063, %v3061
        %v3065 = vxor.u32 %v3064, 2147483648
        %v3066 = vsel %vm2983, %v3065, %v3064
        %v3067 = vsub.s32 4, %v3043
        %v3068 = vsel %vm2983, %v3067, %v3043
        %v3069 = vsel %vm2982, %v2656, %v3066
        %v3070 = vsel %vm2982, 0, %v3068
        %v3071 = vcosq.f32.pop %v3069
        %v3072 = vsinq.f32.pop %v3069
        %vm3073 = vweird.f32 %v2656
        %v3074 = vadd.s32 %v3070, 3
        %v3075 = vand.u32 %v3074, 3
        %vm3076 = vcmp.lt.s32.totalorder %v3075, 2
        %vm3077 = vcmp.eq.s32.totalorder %v3075, 0
        %v3078 = vxor.u32 %v3072, 2147483648
        %v3079 = vsel %vm3077, %v3071, %v3078
        %vm3080 = vcmp.eq.s32.totalorder %v3075, 2
        %v3081 = vxor.u32 %v3071, 2147483648
        %v3082 = vsel %vm3080, %v3081, %v3072
        %v3083 = vsel %vm3076, %v3079, %v3082
        %v3084 = vsel %vm3073, nan, %v3083
        %v3085 = vand.u32 2147483647, %v2657
        %vm3086 = vcmp.le.f32.partialorder %v3085, 0.7853982
        %vm3087 = vcmp.lt.s32.totalorder %v2657, 0
        %v3088 = vand.u32 %v2657, 2139095040
        %v3089 = vshrl.u32 %v3088, 23
        %v3090 = vsub.s32 %v3089, 127
        %v3091 = vand.u32 2147483647, %v2657
        %v3092 = vand.u32 %v3091, 8388607
        %v3093 = vor.u32 %v3092, 8388608
        %v3094 = vsub.s32 0, %v3093
        %v3095 = vadd.s32 %v3090, 1
        %vm3096 = vcmp.gt.s32.totalorder %v3095, 0
        %v3097 = vsel %vm3096, %v3095, 0
        %v3098 = vshrl.u32 %v3097, 5
        %v3099 = vand.u32 %v3097, 31
        %v3100 = vsub.s32 32, %v3099
        %v3101 = vshrl.u32 683565275, %v3100
        %v3102 = vshll.u32 683565275, %v3099
        %v3103 = vshrl.u32 2475754826, %v3100
        %v3104 = vor.u32 %v3102, %v3103
        %v3105 = vshll.u32 2475754826, %v3099
        %v3106 = vshrl.u32 2131351028, %v3100
        %v3107 = vor.u32 %v3105, %v3106
        %v3108 = vshll.u32 2131351028, %v3099
        %v3109 = vshrl.u32 2102212464, %v3100
        %v3110 = vor.u32 %v3108, %v3109
        %v3111 = vshll.u32 2102212464, %v3099
        %v3112 = vshrl.u32 920167782, %v3100
        %v3113 = vor.u32 %v3111, %v3112
        %v3114 = vshll.u32 920167782, %v3099
        %v3115 = vshrl.u32 1326507024, %v3100
        %v3116 = vor.u32 %v3114, %v3115
        %vm3117 = vcmp.lt.s32.totalorder %v3098, 1
        %vm3118 = vcmp.lt.s32.totalorder %v3098, 2
        %vm3119 = vcmp.lt.s32.totalorder %v3098, 3
        %vm3120 = vcmp.lt.s32.totalorder %v3098, 4
        %v3121 = vsel %vm3117, %v3101, %v3104
        %v3122 = vsel %vm3120, %v3110, 2102212464
        %v3123 = vsel %vm3119, %v3107, %v3122
        %v3124 = vsel %vm3118, %v3121, %v3123
        %v3125 = vsel %vm3117, %v3104, %v3107
        %v3126 = vsel %vm3120, %v3113, 920167782
        %v3127 = vsel %vm3119, %v3110, %v3126
        %v3128 = vsel %vm3118, %v3125, %v3127
        %v3129 = vsel %vm3117, %v3107, %v3110
        %v3130 = vsel %vm3120, %v3116, 1326507024
        %v3131 = vsel %vm3119, %v3113, %v3130
        %v3132 = vsel %vm3118, %v3129, %v3131
        %v3133 = vshll.u32 %v3093, 8
        %v3134 = vmul.u32.u64.compose %v3133, %v3132
        %v3135 = vextract.low.u32 %v3134
        %v3136 = vextract.high.u32 %v3134
        %v3137 = vmul.u32.u64.compose %v3133, %v3128
        %v3138 = vextract.low.u32 %v3137
        %v3139 = vextract.high.u32 %v3137
        %v3140 = vmul.u32 %v3133, %v3124
        %v3141 = vadd.s32 %v3136, %v3138
        %vm3142 = vc.u32 %v3136, %v3138
        %v3143 = vadd.s32 %v3139, 1
        %v3144 = vsel %vm3142, %v3143, %v3139
        %v3145 = vadd.s32 %v3140, %v3144
        %v3146 = vadd.s32 %v3145, 536870912
        %v3147 = vshrl.u32 %v3146, 30
        %v3148 = vshll.u32 %v3147, 30
        %v3149 = vsub.s32 %v3145, %v3148
        %vm3150 = vcmp.lt.s32.totalorder %v3149, 0
        %v3151 = vsub.s32 0, %v3149
        %v3152 = vsel %vm3150, %v3151, %v3149
        %v3153 = vclz %v3152
        %v3154 = vsub.s32 %v3153, 2
        %vm3155 = vcmp.gt.s32.totalorder 0, %v3154
        %v3156 = vsel %vm3155, 0, %v3154
        %v3157 = vsub.s32 32, %v3156
        %v3158 = vshll.u32 %v3149, %v3156
        %v3159 = vshrl.u32 %v3141, %v3157
        %v3160 = vor.u32 %v3158, %v3159
        %v3161 = vsub.s32 4294967266, %v3156
        %v3162 = vadd.s32 %v3161, 127
        %v3163 = vshll.u32 %v3162, 23
        %v3164 = vor.u32 4788187, %v3163
        %v3165 = vand.u32 2147483647, %v3164
        %v3167 = vcvt.s32.f32 %v3160
        %v3168 = vmul.f32 %v3167, %v3165
        %v3169 = vxor.u32 %v3168, 2147483648
        %v3170 = vsel %vm3087, %v3169, %v3168
        %v3171 = vsub.s32 4, %v3147
        %v3172 = vsel %vm3087, %v3171, %v3147
        %v3173 = vsel %vm3086, %v2657, %v3170
        %v3174 = vsel %vm3086, 0, %v3172
        %v3175 = vcosq.f32.pop %v3173
        %v3176 = vsinq.f32.pop %v3173
        %vm3177 = vweird.f32 %v2657
        %v3178 = vadd.s32 %v3174, 3
        %v3179 = vand.u32 %v3178, 3
        %vm3180 = vcmp.lt.s32.totalorder %v3179, 2
        %vm3181 = vcmp.eq.s32.totalorder %v3179, 0
        %v3182 = vxor.u32 %v3176, 2147483648
        %v3183 = vsel %vm3181, %v3175, %v3182
        %vm3184 = vcmp.eq.s32.totalorder %v3179, 2
        %v3185 = vxor.u32 %v3175, 2147483648
        %v3186 = vsel %vm3184, %v3185, %v3176
        %v3187 = vsel %vm3180, %v3183, %v3186
        %v3188 = vsel %vm3177, nan, %v3187
        %v3189 = vand.u32 2147483647, %v2658
        %vm3190 = vcmp.le.f32.partialorder %v3189, 0.7853982
        %vm3191 = vcmp.lt.s32.totalorder %v2658, 0
        %v3192 = vand.u32 %v2658, 2139095040
        %v3193 = vshrl.u32 %v3192, 23
        %v3194 = vsub.s32 %v3193, 127
        %v3195 = vand.u32 2147483647, %v2658
        %v3196 = vand.u32 %v3195, 8388607
        %v3197 = vor.u32 %v3196, 8388608
        %v3198 = vsub.s32 0, %v3197
        %v3199 = vadd.s32 %v3194, 1
        %vm3200 = vcmp.gt.s32.totalorder %v3199, 0
        %v3201 = vsel %vm3200, %v3199, 0
        %v3202 = vshrl.u32 %v3201, 5
        %v3203 = vand.u32 %v3201, 31
        %v3204 = vsub.s32 32, %v3203
        %v3205 = vshrl.u32 683565275, %v3204
        %v3206 = vshll.u32 683565275, %v3203
        %v3207 = vshrl.u32 2475754826, %v3204
        %v3208 = vor.u32 %v3206, %v3207
        %v3209 = vshll.u32 2475754826, %v3203
        %v3210 = vshrl.u32 2131351028, %v3204
        %v3211 = vor.u32 %v3209, %v3210
        %v3212 = vshll.u32 2131351028, %v3203
        %v3213 = vshrl.u32 2102212464, %v3204
        %v3214 = vor.u32 %v3212, %v3213
        %v3215 = vshll.u32 2102212464, %v3203
        %v3216 = vshrl.u32 920167782, %v3204
        %v3217 = vor.u32 %v3215, %v3216
        %v3218 = vshll.u32 920167782, %v3203
        %v3219 = vshrl.u32 1326507024, %v3204
        %v3220 = vor.u32 %v3218, %v3219
        %vm3221 = vcmp.lt.s32.totalorder %v3202, 1
        %vm3222 = vcmp.lt.s32.totalorder %v3202, 2
        %vm3223 = vcmp.lt.s32.totalorder %v3202, 3
        %vm3224 = vcmp.lt.s32.totalorder %v3202, 4
        %v3225 = vsel %vm3221, %v3205, %v3208
        %v3226 = vsel %vm3224, %v3214, 2102212464
        %v3227 = vsel %vm3223, %v3211, %v3226
        %v3228 = vsel %vm3222, %v3225, %v3227
        %v3229 = vsel %vm3221, %v3208, %v3211
        %v3230 = vsel %vm3224, %v3217, 920167782
        %v3231 = vsel %vm3223, %v3214, %v3230
        %v3232 = vsel %vm3222, %v3229, %v3231
        %v3233 = vsel %vm3221, %v3211, %v3214
        %v3234 = vsel %vm3224, %v3220, 1326507024
        %v3235 = vsel %vm3223, %v3217, %v3234
        %v3236 = vsel %vm3222, %v3233, %v3235
        %v3237 = vshll.u32 %v3197, 8
        %v3238 = vmul.u32.u64.compose %v3237, %v3236
        %v3239 = vextract.low.u32 %v3238
        %v3240 = vextract.high.u32 %v3238
        %v3241 = vmul.u32.u64.compose %v3237, %v3232
        %v3242 = vextract.low.u32 %v3241
        %v3243 = vextract.high.u32 %v3241
        %v3244 = vmul.u32 %v3237, %v3228
        %v3245 = vadd.s32 %v3240, %v3242
        %vm3246 = vc.u32 %v3240, %v3242
        %v3247 = vadd.s32 %v3243, 1
        %v3248 = vsel %vm3246, %v3247, %v3243
        %v3249 = vadd.s32 %v3244, %v3248
        %v3250 = vadd.s32 %v3249, 536870912
        %v3251 = vshrl.u32 %v3250, 30
        %v3252 = vshll.u32 %v3251, 30
        %v3253 = vsub.s32 %v3249, %v3252
        %vm3254 = vcmp.lt.s32.totalorder %v3253, 0
        %v3255 = vsub.s32 0, %v3253
        %v3256 = vsel %vm3254, %v3255, %v3253
        %v3257 = vclz %v3256
        %v3258 = vsub.s32 %v3257, 2
        %vm3259 = vcmp.gt.s32.totalorder 0, %v3258
        %v3260 = vsel %vm3259, 0, %v3258
        %v3261 = vsub.s32 32, %v3260
        %v3262 = vshll.u32 %v3253, %v3260
        %v3263 = vshrl.u32 %v3245, %v3261
        %v3264 = vor.u32 %v3262, %v3263
        %v3265 = vsub.s32 4294967266, %v3260
        %v3266 = vadd.s32 %v3265, 127
        %v3267 = vshll.u32 %v3266, 23
        %v3268 = vor.u32 4788187, %v3267
        %v3269 = vand.u32 2147483647, %v3268
        %v3271 = vcvt.s32.f32 %v3264
        %v3272 = vmul.f32 %v3271, %v3269
        %v3273 = vxor.u32 %v3272, 2147483648
        %v3274 = vsel %vm3191, %v3273, %v3272
        %v3275 = vsub.s32 4, %v3251
        %v3276 = vsel %vm3191, %v3275, %v3251
        %v3277 = vsel %vm3190, %v2658, %v3274
        %v3278 = vsel %vm3190, 0, %v3276
        %v3279 = vcosq.f32.pop %v3277
        %v3280 = vsinq.f32.pop %v3277
        %vm3281 = vweird.f32 %v2658
        %v3282 = vadd.s32 %v3278, 3
        %v3283 = vand.u32 %v3282, 3
        %vm3284 = vcmp.lt.s32.totalorder %v3283, 2
        %vm3285 = vcmp.eq.s32.totalorder %v3283, 0
        %v3286 = vxor.u32 %v3280, 2147483648
        %v3287 = vsel %vm3285, %v3279, %v3286
        %vm3288 = vcmp.eq.s32.totalorder %v3283, 2
        %v3289 = vxor.u32 %v3279, 2147483648
        %v3290 = vsel %vm3288, %v3289, %v3280
        %v3291 = vsel %vm3284, %v3287, %v3290
        %v3292 = vsel %vm3281, nan, %v3291
        %v3293 = vand.u32 2147483647, %v2659
        %vm3294 = vcmp.le.f32.partialorder %v3293, 0.7853982
        %vm3295 = vcmp.lt.s32.totalorder %v2659, 0
        %v3296 = vand.u32 %v2659, 2139095040
        %v3297 = vshrl.u32 %v3296, 23
        %v3298 = vsub.s32 %v3297, 127
        %v3299 = vand.u32 2147483647, %v2659
        %v3300 = vand.u32 %v3299, 8388607
        %v3301 = vor.u32 %v3300, 8388608
        %v3302 = vsub.s32 0, %v3301
        %v3303 = vadd.s32 %v3298, 1
        %vm3304 = vcmp.gt.s32.totalorder %v3303, 0
        %v3305 = vsel %vm3304, %v3303, 0
        %v3306 = vshrl.u32 %v3305, 5
        %v3307 = vand.u32 %v3305, 31
        %v3308 = vsub.s32 32, %v3307
        %v3309 = vshrl.u32 683565275, %v3308
        %v3310 = vshll.u32 683565275, %v3307
        %v3311 = vshrl.u32 2475754826, %v3308
        %v3312 = vor.u32 %v3310, %v3311
        %v3313 = vshll.u32 2475754826, %v3307
        %v3314 = vshrl.u32 2131351028, %v3308
        %v3315 = vor.u32 %v3313, %v3314
        %v3316 = vshll.u32 2131351028, %v3307
        %v3317 = vshrl.u32 2102212464, %v3308
        %v3318 = vor.u32 %v3316, %v3317
        %v3319 = vshll.u32 2102212464, %v3307
        %v3320 = vshrl.u32 920167782, %v3308
        %v3321 = vor.u32 %v3319, %v3320
        %v3322 = vshll.u32 920167782, %v3307
        %v3323 = vshrl.u32 1326507024, %v3308
        %v3324 = vor.u32 %v3322, %v3323
        %vm3325 = vcmp.lt.s32.totalorder %v3306, 1
        %vm3326 = vcmp.lt.s32.totalorder %v3306, 2
        %vm3327 = vcmp.lt.s32.totalorder %v3306, 3
        %vm3328 = vcmp.lt.s32.totalorder %v3306, 4
        %v3329 = vsel %vm3325, %v3309, %v3312
        %v3330 = vsel %vm3328, %v3318, 2102212464
        %v3331 = vsel %vm3327, %v3315, %v3330
        %v3332 = vsel %vm3326, %v3329, %v3331
        %v3333 = vsel %vm3325, %v3312, %v3315
        %v3334 = vsel %vm3328, %v3321, 920167782
        %v3335 = vsel %vm3327, %v3318, %v3334
        %v3336 = vsel %vm3326, %v3333, %v3335
        %v3337 = vsel %vm3325, %v3315, %v3318
        %v3338 = vsel %vm3328, %v3324, 1326507024
        %v3339 = vsel %vm3327, %v3321, %v3338
        %v3340 = vsel %vm3326, %v3337, %v3339
        %v3341 = vshll.u32 %v3301, 8
        %v3342 = vmul.u32.u64.compose %v3341, %v3340
        %v3343 = vextract.low.u32 %v3342
        %v3344 = vextract.high.u32 %v3342
        %v3345 = vmul.u32.u64.compose %v3341, %v3336
        %v3346 = vextract.low.u32 %v3345
        %v3347 = vextract.high.u32 %v3345
        %v3348 = vmul.u32 %v3341, %v3332
        %v3349 = vadd.s32 %v3344, %v3346
        %vm3350 = vc.u32 %v3344, %v3346
        %v3351 = vadd.s32 %v3347, 1
        %v3352 = vsel %vm3350, %v3351, %v3347
        %v3353 = vadd.s32 %v3348, %v3352
        %v3354 = vadd.s32 %v3353, 536870912
        %v3355 = vshrl.u32 %v3354, 30
        %v3356 = vshll.u32 %v3355, 30
        %v3357 = vsub.s32 %v3353, %v3356
        %vm3358 = vcmp.lt.s32.totalorder %v3357, 0
        %v3359 = vsub.s32 0, %v3357
        %v3360 = vsel %vm3358, %v3359, %v3357
        %v3361 = vclz %v3360
        %v3362 = vsub.s32 %v3361, 2
        %vm3363 = vcmp.gt.s32.totalorder 0, %v3362
        %v3364 = vsel %vm3363, 0, %v3362
        %v3365 = vsub.s32 32, %v3364
        %v3366 = vshll.u32 %v3357, %v3364
        %v3367 = vshrl.u32 %v3349, %v3365
        %v3368 = vor.u32 %v3366, %v3367
        %v3369 = vsub.s32 4294967266, %v3364
        %v3370 = vadd.s32 %v3369, 127
        %v3371 = vshll.u32 %v3370, 23
        %v3372 = vor.u32 4788187, %v3371
        %v3373 = vand.u32 2147483647, %v3372
        %v3375 = vcvt.s32.f32 %v3368
        %v3376 = vmul.f32 %v3375, %v3373
        %v3377 = vxor.u32 %v3376, 2147483648
        %v3378 = vsel %vm3295, %v3377, %v3376
        %v3379 = vsub.s32 4, %v3355
        %v3380 = vsel %vm3295, %v3379, %v3355
        %v3381 = vsel %vm3294, %v2659, %v3378
        %v3382 = vsel %vm3294, 0, %v3380
        %v3383 = vcosq.f32.pop %v3381
        %v3384 = vsinq.f32.pop %v3381
        %vm3385 = vweird.f32 %v2659
        %v3386 = vadd.s32 %v3382, 3
        %v3387 = vand.u32 %v3386, 3
        %vm3388 = vcmp.lt.s32.totalorder %v3387, 2
        %vm3389 = vcmp.eq.s32.totalorder %v3387, 0
        %v3390 = vxor.u32 %v3384, 2147483648
        %v3391 = vsel %vm3389, %v3383, %v3390
        %vm3392 = vcmp.eq.s32.totalorder %v3387, 2
        %v3393 = vxor.u32 %v3383, 2147483648
        %v3394 = vsel %vm3392, %v3393, %v3384
        %v3395 = vsel %vm3388, %v3391, %v3394
        %v3396 = vsel %vm3385, nan, %v3395
        %v3397 = vand.u32 2147483647, %v2660
        %vm3398 = vcmp.le.f32.partialorder %v3397, 0.7853982
        %vm3399 = vcmp.lt.s32.totalorder %v2660, 0
        %v3400 = vand.u32 %v2660, 2139095040
        %v3401 = vshrl.u32 %v3400, 23
        %v3402 = vsub.s32 %v3401, 127
        %v3403 = vand.u32 2147483647, %v2660
        %v3404 = vand.u32 %v3403, 8388607
        %v3405 = vor.u32 %v3404, 8388608
        %v3406 = vsub.s32 0, %v3405
        %v3407 = vadd.s32 %v3402, 1
        %vm3408 = vcmp.gt.s32.totalorder %v3407, 0
        %v3409 = vsel %vm3408, %v3407, 0
        %v3410 = vshrl.u32 %v3409, 5
        %v3411 = vand.u32 %v3409, 31
        %v3412 = vsub.s32 32, %v3411
        %v3413 = vshrl.u32 683565275, %v3412
        %v3414 = vshll.u32 683565275, %v3411
        %v3415 = vshrl.u32 2475754826, %v3412
        %v3416 = vor.u32 %v3414, %v3415
        %v3417 = vshll.u32 2475754826, %v3411
        %v3418 = vshrl.u32 2131351028, %v3412
        %v3419 = vor.u32 %v3417, %v3418
        %v3420 = vshll.u32 2131351028, %v3411
        %v3421 = vshrl.u32 2102212464, %v3412
        %v3422 = vor.u32 %v3420, %v3421
        %v3423 = vshll.u32 2102212464, %v3411
        %v3424 = vshrl.u32 920167782, %v3412
        %v3425 = vor.u32 %v3423, %v3424
        %v3426 = vshll.u32 920167782, %v3411
        %v3427 = vshrl.u32 1326507024, %v3412
        %v3428 = vor.u32 %v3426, %v3427
        %vm3429 = vcmp.lt.s32.totalorder %v3410, 1
        %vm3430 = vcmp.lt.s32.totalorder %v3410, 2
        %vm3431 = vcmp.lt.s32.totalorder %v3410, 3
        %vm3432 = vcmp.lt.s32.totalorder %v3410, 4
        %v3433 = vsel %vm3429, %v3413, %v3416
        %v3434 = vsel %vm3432, %v3422, 2102212464
        %v3435 = vsel %vm3431, %v3419, %v3434
        %v3436 = vsel %vm3430, %v3433, %v3435
        %v3437 = vsel %vm3429, %v3416, %v3419
        %v3438 = vsel %vm3432, %v3425, 920167782
        %v3439 = vsel %vm3431, %v3422, %v3438
        %v3440 = vsel %vm3430, %v3437, %v3439
        %v3441 = vsel %vm3429, %v3419, %v3422
        %v3442 = vsel %vm3432, %v3428, 1326507024
        %v3443 = vsel %vm3431, %v3425, %v3442
        %v3444 = vsel %vm3430, %v3441, %v3443
        %v3445 = vshll.u32 %v3405, 8
        %v3446 = vmul.u32.u64.compose %v3445, %v3444
        %v3447 = vextract.low.u32 %v3446
        %v3448 = vextract.high.u32 %v3446
        %v3449 = vmul.u32.u64.compose %v3445, %v3440
        %v3450 = vextract.low.u32 %v3449
        %v3451 = vextract.high.u32 %v3449
        %v3452 = vmul.u32 %v3445, %v3436
        %v3453 = vadd.s32 %v3448, %v3450
        %vm3454 = vc.u32 %v3448, %v3450
        %v3455 = vadd.s32 %v3451, 1
        %v3456 = vsel %vm3454, %v3455, %v3451
        %v3457 = vadd.s32 %v3452, %v3456
        %v3458 = vadd.s32 %v3457, 536870912
        %v3459 = vshrl.u32 %v3458, 30
        %v3460 = vshll.u32 %v3459, 30
        %v3461 = vsub.s32 %v3457, %v3460
        %vm3462 = vcmp.lt.s32.totalorder %v3461, 0
        %v3463 = vsub.s32 0, %v3461
        %v3464 = vsel %vm3462, %v3463, %v3461
        %v3465 = vclz %v3464
        %v3466 = vsub.s32 %v3465, 2
        %vm3467 = vcmp.gt.s32.totalorder 0, %v3466
        %v3468 = vsel %vm3467, 0, %v3466
        %v3469 = vsub.s32 32, %v3468
        %v3470 = vshll.u32 %v3461, %v3468
        %v3471 = vshrl.u32 %v3453, %v3469
        %v3472 = vor.u32 %v3470, %v3471
        %v3473 = vsub.s32 4294967266, %v3468
        %v3474 = vadd.s32 %v3473, 127
        %v3475 = vshll.u32 %v3474, 23
        %v3476 = vor.u32 4788187, %v3475
        %v3477 = vand.u32 2147483647, %v3476
        %v3479 = vcvt.s32.f32 %v3472
        %v3480 = vmul.f32 %v3479, %v3477
        %v3481 = vxor.u32 %v3480, 2147483648
        %v3482 = vsel %vm3399, %v3481, %v3480
        %v3483 = vsub.s32 4, %v3459
        %v3484 = vsel %vm3399, %v3483, %v3459
        %v3485 = vsel %vm3398, %v2660, %v3482
        %v3486 = vsel %vm3398, 0, %v3484
        %v3487 = vcosq.f32.pop %v3485
        %v3488 = vsinq.f32.pop %v3485
        %vm3489 = vweird.f32 %v2660
        %v3490 = vadd.s32 %v3486, 3
        %v3491 = vand.u32 %v3490, 3
        %vm3492 = vcmp.lt.s32.totalorder %v3491, 2
        %vm3493 = vcmp.eq.s32.totalorder %v3491, 0
        %v3494 = vxor.u32 %v3488, 2147483648
        %v3495 = vsel %vm3493, %v3487, %v3494
        %vm3496 = vcmp.eq.s32.totalorder %v3491, 2
        %v3497 = vxor.u32 %v3487, 2147483648
        %v3498 = vsel %vm3496, %v3497, %v3488
        %v3499 = vsel %vm3492, %v3495, %v3498
        %v3500 = vsel %vm3489, nan, %v3499
        %v3501 = vand.u32 2147483647, %v2661
        %vm3502 = vcmp.le.f32.partialorder %v3501, 0.7853982
        %vm3503 = vcmp.lt.s32.totalorder %v2661, 0
        %v3504 = vand.u32 %v2661, 2139095040
        %v3505 = vshrl.u32 %v3504, 23
        %v3506 = vsub.s32 %v3505, 127
        %v3507 = vand.u32 2147483647, %v2661
        %v3508 = vand.u32 %v3507, 8388607
        %v3509 = vor.u32 %v3508, 8388608
        %v3510 = vsub.s32 0, %v3509
        %v3511 = vadd.s32 %v3506, 1
        %vm3512 = vcmp.gt.s32.totalorder %v3511, 0
        %v3513 = vsel %vm3512, %v3511, 0
        %v3514 = vshrl.u32 %v3513, 5
        %v3515 = vand.u32 %v3513, 31
        %v3516 = vsub.s32 32, %v3515
        %v3517 = vshrl.u32 683565275, %v3516
        %v3518 = vshll.u32 683565275, %v3515
        %v3519 = vshrl.u32 2475754826, %v3516
        %v3520 = vor.u32 %v3518, %v3519
        %v3521 = vshll.u32 2475754826, %v3515
        %v3522 = vshrl.u32 2131351028, %v3516
        %v3523 = vor.u32 %v3521, %v3522
        %v3524 = vshll.u32 2131351028, %v3515
        %v3525 = vshrl.u32 2102212464, %v3516
        %v3526 = vor.u32 %v3524, %v3525
        %v3527 = vshll.u32 2102212464, %v3515
        %v3528 = vshrl.u32 920167782, %v3516
        %v3529 = vor.u32 %v3527, %v3528
        %v3530 = vshll.u32 920167782, %v3515
        %v3531 = vshrl.u32 1326507024, %v3516
        %v3532 = vor.u32 %v3530, %v3531
        %vm3533 = vcmp.lt.s32.totalorder %v3514, 1
        %vm3534 = vcmp.lt.s32.totalorder %v3514, 2
        %vm3535 = vcmp.lt.s32.totalorder %v3514, 3
        %vm3536 = vcmp.lt.s32.totalorder %v3514, 4
        %v3537 = vsel %vm3533, %v3517, %v3520
        %v3538 = vsel %vm3536, %v3526, 2102212464
        %v3539 = vsel %vm3535, %v3523, %v3538
        %v3540 = vsel %vm3534, %v3537, %v3539
        %v3541 = vsel %vm3533, %v3520, %v3523
        %v3542 = vsel %vm3536, %v3529, 920167782
        %v3543 = vsel %vm3535, %v3526, %v3542
        %v3544 = vsel %vm3534, %v3541, %v3543
        %v3545 = vsel %vm3533, %v3523, %v3526
        %v3546 = vsel %vm3536, %v3532, 1326507024
        %v3547 = vsel %vm3535, %v3529, %v3546
        %v3548 = vsel %vm3534, %v3545, %v3547
        %v3549 = vshll.u32 %v3509, 8
        %v3550 = vmul.u32.u64.compose %v3549, %v3548
        %v3551 = vextract.low.u32 %v3550
        %v3552 = vextract.high.u32 %v3550
        %v3553 = vmul.u32.u64.compose %v3549, %v3544
        %v3554 = vextract.low.u32 %v3553
        %v3555 = vextract.high.u32 %v3553
        %v3556 = vmul.u32 %v3549, %v3540
        %v3557 = vadd.s32 %v3552, %v3554
        %vm3558 = vc.u32 %v3552, %v3554
        %v3559 = vadd.s32 %v3555, 1
        %v3560 = vsel %vm3558, %v3559, %v3555
        %v3561 = vadd.s32 %v3556, %v3560
        %v3562 = vadd.s32 %v3561, 536870912
        %v3563 = vshrl.u32 %v3562, 30
        %v3564 = vshll.u32 %v3563, 30
        %v3565 = vsub.s32 %v3561, %v3564
        %vm3566 = vcmp.lt.s32.totalorder %v3565, 0
        %v3567 = vsub.s32 0, %v3565
        %v3568 = vsel %vm3566, %v3567, %v3565
        %v3569 = vclz %v3568
        %v3570 = vsub.s32 %v3569, 2
        %vm3571 = vcmp.gt.s32.totalorder 0, %v3570
        %v3572 = vsel %vm3571, 0, %v3570
        %v3573 = vsub.s32 32, %v3572
        %v3574 = vshll.u32 %v3565, %v3572
        %v3575 = vshrl.u32 %v3557, %v3573
        %v3576 = vor.u32 %v3574, %v3575
        %v3577 = vsub.s32 4294967266, %v3572
        %v3578 = vadd.s32 %v3577, 127
        %v3579 = vshll.u32 %v3578, 23
        %v3580 = vor.u32 4788187, %v3579
        %v3581 = vand.u32 2147483647, %v3580
        %v3583 = vcvt.s32.f32 %v3576
        %v3584 = vmul.f32 %v3583, %v3581
        %v3585 = vxor.u32 %v3584, 2147483648
        %v3586 = vsel %vm3503, %v3585, %v3584
        %v3587 = vsub.s32 4, %v3563
        %v3588 = vsel %vm3503, %v3587, %v3563
        %v3589 = vsel %vm3502, %v2661, %v3586
        %v3590 = vsel %vm3502, 0, %v3588
        %v3591 = vcosq.f32.pop %v3589
        %v3592 = vsinq.f32.pop %v3589
        %vm3593 = vweird.f32 %v2661
        %v3594 = vadd.s32 %v3590, 3
        %v3595 = vand.u32 %v3594, 3
        %vm3596 = vcmp.lt.s32.totalorder %v3595, 2
        %vm3597 = vcmp.eq.s32.totalorder %v3595, 0
        %v3598 = vxor.u32 %v3592, 2147483648
        %v3599 = vsel %vm3597, %v3591, %v3598
        %vm3600 = vcmp.eq.s32.totalorder %v3595, 2
        %v3601 = vxor.u32 %v3591, 2147483648
        %v3602 = vsel %vm3600, %v3601, %v3592
        %v3603 = vsel %vm3596, %v3599, %v3602
        %v3604 = vsel %vm3593, nan, %v3603
        %v3605 = vand.u32 2147483647, %v2662
        %vm3606 = vcmp.le.f32.partialorder %v3605, 0.7853982
        %vm3607 = vcmp.lt.s32.totalorder %v2662, 0
        %v3608 = vand.u32 %v2662, 2139095040
        %v3609 = vshrl.u32 %v3608, 23
        %v3610 = vsub.s32 %v3609, 127
        %v3611 = vand.u32 2147483647, %v2662
        %v3612 = vand.u32 %v3611, 8388607
        %v3613 = vor.u32 %v3612, 8388608
        %v3614 = vsub.s32 0, %v3613
        %v3615 = vadd.s32 %v3610, 1
        %vm3616 = vcmp.gt.s32.totalorder %v3615, 0
        %v3617 = vsel %vm3616, %v3615, 0
        %v3618 = vshrl.u32 %v3617, 5
        %v3619 = vand.u32 %v3617, 31
        %v3620 = vsub.s32 32, %v3619
        %v3621 = vshrl.u32 683565275, %v3620
        %v3622 = vshll.u32 683565275, %v3619
        %v3623 = vshrl.u32 2475754826, %v3620
        %v3624 = vor.u32 %v3622, %v3623
        %v3625 = vshll.u32 2475754826, %v3619
        %v3626 = vshrl.u32 2131351028, %v3620
        %v3627 = vor.u32 %v3625, %v3626
        %v3628 = vshll.u32 2131351028, %v3619
        %v3629 = vshrl.u32 2102212464, %v3620
        %v3630 = vor.u32 %v3628, %v3629
        %v3631 = vshll.u32 2102212464, %v3619
        %v3632 = vshrl.u32 920167782, %v3620
        %v3633 = vor.u32 %v3631, %v3632
        %v3634 = vshll.u32 920167782, %v3619
        %v3635 = vshrl.u32 1326507024, %v3620
        %v3636 = vor.u32 %v3634, %v3635
        %vm3637 = vcmp.lt.s32.totalorder %v3618, 1
        %vm3638 = vcmp.lt.s32.totalorder %v3618, 2
        %vm3639 = vcmp.lt.s32.totalorder %v3618, 3
        %vm3640 = vcmp.lt.s32.totalorder %v3618, 4
        %v3641 = vsel %vm3637, %v3621, %v3624
        %v3642 = vsel %vm3640, %v3630, 2102212464
        %v3643 = vsel %vm3639, %v3627, %v3642
        %v3644 = vsel %vm3638, %v3641, %v3643
        %v3645 = vsel %vm3637, %v3624, %v3627
        %v3646 = vsel %vm3640, %v3633, 920167782
        %v3647 = vsel %vm3639, %v3630, %v3646
        %v3648 = vsel %vm3638, %v3645, %v3647
        %v3649 = vsel %vm3637, %v3627, %v3630
        %v3650 = vsel %vm3640, %v3636, 1326507024
        %v3651 = vsel %vm3639, %v3633, %v3650
        %v3652 = vsel %vm3638, %v3649, %v3651
        %v3653 = vshll.u32 %v3613, 8
        %v3654 = vmul.u32.u64.compose %v3653, %v3652
        %v3655 = vextract.low.u32 %v3654
        %v3656 = vextract.high.u32 %v3654
        %v3657 = vmul.u32.u64.compose %v3653, %v3648
        %v3658 = vextract.low.u32 %v3657
        %v3659 = vextract.high.u32 %v3657
        %v3660 = vmul.u32 %v3653, %v3644
        %v3661 = vadd.s32 %v3656, %v3658
        %vm3662 = vc.u32 %v3656, %v3658
        %v3663 = vadd.s32 %v3659, 1
        %v3664 = vsel %vm3662, %v3663, %v3659
        %v3665 = vadd.s32 %v3660, %v3664
        %v3666 = vadd.s32 %v3665, 536870912
        %v3667 = vshrl.u32 %v3666, 30
        %v3668 = vshll.u32 %v3667, 30
        %v3669 = vsub.s32 %v3665, %v3668
        %vm3670 = vcmp.lt.s32.totalorder %v3669, 0
        %v3671 = vsub.s32 0, %v3669
        %v3672 = vsel %vm3670, %v3671, %v3669
        %v3673 = vclz %v3672
        %v3674 = vsub.s32 %v3673, 2
        %vm3675 = vcmp.gt.s32.totalorder 0, %v3674
        %v3676 = vsel %vm3675, 0, %v3674
        %v3677 = vsub.s32 32, %v3676
        %v3678 = vshll.u32 %v3669, %v3676
        %v3679 = vshrl.u32 %v3661, %v3677
        %v3680 = vor.u32 %v3678, %v3679
        %v3681 = vsub.s32 4294967266, %v3676
        %v3682 = vadd.s32 %v3681, 127
        %v3683 = vshll.u32 %v3682, 23
        %v3684 = vor.u32 4788187, %v3683
        %v3685 = vand.u32 2147483647, %v3684
        %v3687 = vcvt.s32.f32 %v3680
        %v3688 = vmul.f32 %v3687, %v3685
        %v3689 = vxor.u32 %v3688, 2147483648
        %v3690 = vsel %vm3607, %v3689, %v3688
        %v3691 = vsub.s32 4, %v3667
        %v3692 = vsel %vm3607, %v3691, %v3667
        %v3693 = vsel %vm3606, %v2662, %v3690
        %v3694 = vsel %vm3606, 0, %v3692
        %v3695 = vcosq.f32.pop %v3693
        %v3696 = vsinq.f32.pop %v3693
        %vm3697 = vweird.f32 %v2662
        %v3698 = vadd.s32 %v3694, 3
        %v3699 = vand.u32 %v3698, 3
        %vm3700 = vcmp.lt.s32.totalorder %v3699, 2
        %vm3701 = vcmp.eq.s32.totalorder %v3699, 0
        %v3702 = vxor.u32 %v3696, 2147483648
        %v3703 = vsel %vm3701, %v3695, %v3702
        %vm3704 = vcmp.eq.s32.totalorder %v3699, 2
        %v3705 = vxor.u32 %v3695, 2147483648
        %v3706 = vsel %vm3704, %v3705, %v3696
        %v3707 = vsel %vm3700, %v3703, %v3706
        %v3708 = vsel %vm3697, nan, %v3707
        %v3709 = vand.u32 2147483647, %v2663
        %vm3710 = vcmp.le.f32.partialorder %v3709, 0.7853982
        %vm3711 = vcmp.lt.s32.totalorder %v2663, 0
        %v3712 = vand.u32 %v2663, 2139095040
        %v3713 = vshrl.u32 %v3712, 23
        %v3714 = vsub.s32 %v3713, 127
        %v3715 = vand.u32 2147483647, %v2663
        %v3716 = vand.u32 %v3715, 8388607
        %v3717 = vor.u32 %v3716, 8388608
        %v3718 = vsub.s32 0, %v3717
        %v3719 = vadd.s32 %v3714, 1
        %vm3720 = vcmp.gt.s32.totalorder %v3719, 0
        %v3721 = vsel %vm3720, %v3719, 0
        %v3722 = vshrl.u32 %v3721, 5
        %v3723 = vand.u32 %v3721, 31
        %v3724 = vsub.s32 32, %v3723
        %v3725 = vshrl.u32 683565275, %v3724
        %v3726 = vshll.u32 683565275, %v3723
        %v3727 = vshrl.u32 2475754826, %v3724
        %v3728 = vor.u32 %v3726, %v3727
        %v3729 = vshll.u32 2475754826, %v3723
        %v3730 = vshrl.u32 2131351028, %v3724
        %v3731 = vor.u32 %v3729, %v3730
        %v3732 = vshll.u32 2131351028, %v3723
        %v3733 = vshrl.u32 2102212464, %v3724
        %v3734 = vor.u32 %v3732, %v3733
        %v3735 = vshll.u32 2102212464, %v3723
        %v3736 = vshrl.u32 920167782, %v3724
        %v3737 = vor.u32 %v3735, %v3736
        %v3738 = vshll.u32 920167782, %v3723
        %v3739 = vshrl.u32 1326507024, %v3724
        %v3740 = vor.u32 %v3738, %v3739
        %vm3741 = vcmp.lt.s32.totalorder %v3722, 1
        %vm3742 = vcmp.lt.s32.totalorder %v3722, 2
        %vm3743 = vcmp.lt.s32.totalorder %v3722, 3
        %vm3744 = vcmp.lt.s32.totalorder %v3722, 4
        %v3745 = vsel %vm3741, %v3725, %v3728
        %v3746 = vsel %vm3744, %v3734, 2102212464
        %v3747 = vsel %vm3743, %v3731, %v3746
        %v3748 = vsel %vm3742, %v3745, %v3747
        %v3749 = vsel %vm3741, %v3728, %v3731
        %v3750 = vsel %vm3744, %v3737, 920167782
        %v3751 = vsel %vm3743, %v3734, %v3750
        %v3752 = vsel %vm3742, %v3749, %v3751
        %v3753 = vsel %vm3741, %v3731, %v3734
        %v3754 = vsel %vm3744, %v3740, 1326507024
        %v3755 = vsel %vm3743, %v3737, %v3754
        %v3756 = vsel %vm3742, %v3753, %v3755
        %v3757 = vshll.u32 %v3717, 8
        %v3758 = vmul.u32.u64.compose %v3757, %v3756
        %v3759 = vextract.low.u32 %v3758
        %v3760 = vextract.high.u32 %v3758
        %v3761 = vmul.u32.u64.compose %v3757, %v3752
        %v3762 = vextract.low.u32 %v3761
        %v3763 = vextract.high.u32 %v3761
        %v3764 = vmul.u32 %v3757, %v3748
        %v3765 = vadd.s32 %v3760, %v3762
        %vm3766 = vc.u32 %v3760, %v3762
        %v3767 = vadd.s32 %v3763, 1
        %v3768 = vsel %vm3766, %v3767, %v3763
        %v3769 = vadd.s32 %v3764, %v3768
        %v3770 = vadd.s32 %v3769, 536870912
        %v3771 = vshrl.u32 %v3770, 30
        %v3772 = vshll.u32 %v3771, 30
        %v3773 = vsub.s32 %v3769, %v3772
        %vm3774 = vcmp.lt.s32.totalorder %v3773, 0
        %v3775 = vsub.s32 0, %v3773
        %v3776 = vsel %vm3774, %v3775, %v3773
        %v3777 = vclz %v3776
        %v3778 = vsub.s32 %v3777, 2
        %vm3779 = vcmp.gt.s32.totalorder 0, %v3778
        %v3780 = vsel %vm3779, 0, %v3778
        %v3781 = vsub.s32 32, %v3780
        %v3782 = vshll.u32 %v3773, %v3780
        %v3783 = vshrl.u32 %v3765, %v3781
        %v3784 = vor.u32 %v3782, %v3783
        %v3785 = vsub.s32 4294967266, %v3780
        %v3786 = vadd.s32 %v3785, 127
        %v3787 = vshll.u32 %v3786, 23
        %v3788 = vor.u32 4788187, %v3787
        %v3789 = vand.u32 2147483647, %v3788
        %v3791 = vcvt.s32.f32 %v3784
        %v3792 = vmul.f32 %v3791, %v3789
        %v3793 = vxor.u32 %v3792, 2147483648
        %v3794 = vsel %vm3711, %v3793, %v3792
        %v3795 = vsub.s32 4, %v3771
        %v3796 = vsel %vm3711, %v3795, %v3771
        %v3797 = vsel %vm3710, %v2663, %v3794
        %v3798 = vsel %vm3710, 0, %v3796
        %v3799 = vcosq.f32.pop %v3797
        %v3800 = vsinq.f32.pop %v3797
        %vm3801 = vweird.f32 %v2663
        %v3802 = vadd.s32 %v3798, 3
        %v3803 = vand.u32 %v3802, 3
        %vm3804 = vcmp.lt.s32.totalorder %v3803, 2
        %vm3805 = vcmp.eq.s32.totalorder %v3803, 0
        %v3806 = vxor.u32 %v3800, 2147483648
        %v3807 = vsel %vm3805, %v3799, %v3806
        %vm3808 = vcmp.eq.s32.totalorder %v3803, 2
        %v3809 = vxor.u32 %v3799, 2147483648
        %v3810 = vsel %vm3808, %v3809, %v3800
        %v3811 = vsel %vm3804, %v3807, %v3810
        %v3812 = vsel %vm3801, nan, %v3811
        %v3813 = vand.u32 2147483647, %v2664
        %vm3814 = vcmp.le.f32.partialorder %v3813, 0.7853982
        %vm3815 = vcmp.lt.s32.totalorder %v2664, 0
        %v3816 = vand.u32 %v2664, 2139095040
        %v3817 = vshrl.u32 %v3816, 23
        %v3818 = vsub.s32 %v3817, 127
        %v3819 = vand.u32 2147483647, %v2664
        %v3820 = vand.u32 %v3819, 8388607
        %v3821 = vor.u32 %v3820, 8388608
        %v3822 = vsub.s32 0, %v3821
        %v3823 = vadd.s32 %v3818, 1
        %vm3824 = vcmp.gt.s32.totalorder %v3823, 0
        %v3825 = vsel %vm3824, %v3823, 0
        %v3826 = vshrl.u32 %v3825, 5
        %v3827 = vand.u32 %v3825, 31
        %v3828 = vsub.s32 32, %v3827
        %v3829 = vshrl.u32 683565275, %v3828
        %v3830 = vshll.u32 683565275, %v3827
        %v3831 = vshrl.u32 2475754826, %v3828
        %v3832 = vor.u32 %v3830, %v3831
        %v3833 = vshll.u32 2475754826, %v3827
        %v3834 = vshrl.u32 2131351028, %v3828
        %v3835 = vor.u32 %v3833, %v3834
        %v3836 = vshll.u32 2131351028, %v3827
        %v3837 = vshrl.u32 2102212464, %v3828
        %v3838 = vor.u32 %v3836, %v3837
        %v3839 = vshll.u32 2102212464, %v3827
        %v3840 = vshrl.u32 920167782, %v3828
        %v3841 = vor.u32 %v3839, %v3840
        %v3842 = vshll.u32 920167782, %v3827
        %v3843 = vshrl.u32 1326507024, %v3828
        %v3844 = vor.u32 %v3842, %v3843
        %vm3845 = vcmp.lt.s32.totalorder %v3826, 1
        %vm3846 = vcmp.lt.s32.totalorder %v3826, 2
        %vm3847 = vcmp.lt.s32.totalorder %v3826, 3
        %vm3848 = vcmp.lt.s32.totalorder %v3826, 4
        %v3849 = vsel %vm3845, %v3829, %v3832
        %v3850 = vsel %vm3848, %v3838, 2102212464
        %v3851 = vsel %vm3847, %v3835, %v3850
        %v3852 = vsel %vm3846, %v3849, %v3851
        %v3853 = vsel %vm3845, %v3832, %v3835
        %v3854 = vsel %vm3848, %v3841, 920167782
        %v3855 = vsel %vm3847, %v3838, %v3854
        %v3856 = vsel %vm3846, %v3853, %v3855
        %v3857 = vsel %vm3845, %v3835, %v3838
        %v3858 = vsel %vm3848, %v3844, 1326507024
        %v3859 = vsel %vm3847, %v3841, %v3858
        %v3860 = vsel %vm3846, %v3857, %v3859
        %v3861 = vshll.u32 %v3821, 8
        %v3862 = vmul.u32.u64.compose %v3861, %v3860
        %v3863 = vextract.low.u32 %v3862
        %v3864 = vextract.high.u32 %v3862
        %v3865 = vmul.u32.u64.compose %v3861, %v3856
        %v3866 = vextract.low.u32 %v3865
        %v3867 = vextract.high.u32 %v3865
        %v3868 = vmul.u32 %v3861, %v3852
        %v3869 = vadd.s32 %v3864, %v3866
        %vm3870 = vc.u32 %v3864, %v3866
        %v3871 = vadd.s32 %v3867, 1
        %v3872 = vsel %vm3870, %v3871, %v3867
        %v3873 = vadd.s32 %v3868, %v3872
        %v3874 = vadd.s32 %v3873, 536870912
        %v3875 = vshrl.u32 %v3874, 30
        %v3876 = vshll.u32 %v3875, 30
        %v3877 = vsub.s32 %v3873, %v3876
        %vm3878 = vcmp.lt.s32.totalorder %v3877, 0
        %v3879 = vsub.s32 0, %v3877
        %v3880 = vsel %vm3878, %v3879, %v3877
        %v3881 = vclz %v3880
        %v3882 = vsub.s32 %v3881, 2
        %vm3883 = vcmp.gt.s32.totalorder 0, %v3882
        %v3884 = vsel %vm3883, 0, %v3882
        %v3885 = vsub.s32 32, %v3884
        %v3886 = vshll.u32 %v3877, %v3884
        %v3887 = vshrl.u32 %v3869, %v3885
        %v3888 = vor.u32 %v3886, %v3887
        %v3889 = vsub.s32 4294967266, %v3884
        %v3890 = vadd.s32 %v3889, 127
        %v3891 = vshll.u32 %v3890, 23
        %v3892 = vor.u32 4788187, %v3891
        %v3893 = vand.u32 2147483647, %v3892
        %v3895 = vcvt.s32.f32 %v3888
        %v3896 = vmul.f32 %v3895, %v3893
        %v3897 = vxor.u32 %v3896, 2147483648
        %v3898 = vsel %vm3815, %v3897, %v3896
        %v3899 = vsub.s32 4, %v3875
        %v3900 = vsel %vm3815, %v3899, %v3875
        %v3901 = vsel %vm3814, %v2664, %v3898
        %v3902 = vsel %vm3814, 0, %v3900
        %v3903 = vcosq.f32.pop %v3901
        %v3904 = vsinq.f32.pop %v3901
        %vm3905 = vweird.f32 %v2664
        %v3906 = vadd.s32 %v3902, 3
        %v3907 = vand.u32 %v3906, 3
        %vm3908 = vcmp.lt.s32.totalorder %v3907, 2
        %vm3909 = vcmp.eq.s32.totalorder %v3907, 0
        %v3910 = vxor.u32 %v3904, 2147483648
        %v3911 = vsel %vm3909, %v3903, %v3910
        %vm3912 = vcmp.eq.s32.totalorder %v3907, 2
        %v3913 = vxor.u32 %v3903, 2147483648
        %v3914 = vsel %vm3912, %v3913, %v3904
        %v3915 = vsel %vm3908, %v3911, %v3914
        %v3916 = vsel %vm3905, nan, %v3915
        %v3917 = vand.u32 2147483647, %v2665
        %vm3918 = vcmp.le.f32.partialorder %v3917, 0.7853982
        %vm3919 = vcmp.lt.s32.totalorder %v2665, 0
        %v3920 = vand.u32 %v2665, 2139095040
        %v3921 = vshrl.u32 %v3920, 23
        %v3922 = vsub.s32 %v3921, 127
        %v3923 = vand.u32 2147483647, %v2665
        %v3924 = vand.u32 %v3923, 8388607
        %v3925 = vor.u32 %v3924, 8388608
        %v3926 = vsub.s32 0, %v3925
        %v3927 = vadd.s32 %v3922, 1
        %vm3928 = vcmp.gt.s32.totalorder %v3927, 0
        %v3929 = vsel %vm3928, %v3927, 0
        %v3930 = vshrl.u32 %v3929, 5
        %v3931 = vand.u32 %v3929, 31
        %v3932 = vsub.s32 32, %v3931
        %v3933 = vshrl.u32 683565275, %v3932
        %v3934 = vshll.u32 683565275, %v3931
        %v3935 = vshrl.u32 2475754826, %v3932
        %v3936 = vor.u32 %v3934, %v3935
        %v3937 = vshll.u32 2475754826, %v3931
        %v3938 = vshrl.u32 2131351028, %v3932
        %v3939 = vor.u32 %v3937, %v3938
        %v3940 = vshll.u32 2131351028, %v3931
        %v3941 = vshrl.u32 2102212464, %v3932
        %v3942 = vor.u32 %v3940, %v3941
        %v3943 = vshll.u32 2102212464, %v3931
        %v3944 = vshrl.u32 920167782, %v3932
        %v3945 = vor.u32 %v3943, %v3944
        %v3946 = vshll.u32 920167782, %v3931
        %v3947 = vshrl.u32 1326507024, %v3932
        %v3948 = vor.u32 %v3946, %v3947
        %vm3949 = vcmp.lt.s32.totalorder %v3930, 1
        %vm3950 = vcmp.lt.s32.totalorder %v3930, 2
        %vm3951 = vcmp.lt.s32.totalorder %v3930, 3
        %vm3952 = vcmp.lt.s32.totalorder %v3930, 4
        %v3953 = vsel %vm3949, %v3933, %v3936
        %v3954 = vsel %vm3952, %v3942, 2102212464
        %v3955 = vsel %vm3951, %v3939, %v3954
        %v3956 = vsel %vm3950, %v3953, %v3955
        %v3957 = vsel %vm3949, %v3936, %v3939
        %v3958 = vsel %vm3952, %v3945, 920167782
        %v3959 = vsel %vm3951, %v3942, %v3958
        %v3960 = vsel %vm3950, %v3957, %v3959
        %v3961 = vsel %vm3949, %v3939, %v3942
        %v3962 = vsel %vm3952, %v3948, 1326507024
        %v3963 = vsel %vm3951, %v3945, %v3962
        %v3964 = vsel %vm3950, %v3961, %v3963
        %v3965 = vshll.u32 %v3925, 8
        %v3966 = vmul.u32.u64.compose %v3965, %v3964
        %v3967 = vextract.low.u32 %v3966
        %v3968 = vextract.high.u32 %v3966
        %v3969 = vmul.u32.u64.compose %v3965, %v3960
        %v3970 = vextract.low.u32 %v3969
        %v3971 = vextract.high.u32 %v3969
        %v3972 = vmul.u32 %v3965, %v3956
        %v3973 = vadd.s32 %v3968, %v3970
        %vm3974 = vc.u32 %v3968, %v3970
        %v3975 = vadd.s32 %v3971, 1
        %v3976 = vsel %vm3974, %v3975, %v3971
        %v3977 = vadd.s32 %v3972, %v3976
        %v3978 = vadd.s32 %v3977, 536870912
        %v3979 = vshrl.u32 %v3978, 30
        %v3980 = vshll.u32 %v3979, 30
        %v3981 = vsub.s32 %v3977, %v3980
        %vm3982 = vcmp.lt.s32.totalorder %v3981, 0
        %v3983 = vsub.s32 0, %v3981
        %v3984 = vsel %vm3982, %v3983, %v3981
        %v3985 = vclz %v3984
        %v3986 = vsub.s32 %v3985, 2
        %vm3987 = vcmp.gt.s32.totalorder 0, %v3986
        %v3988 = vsel %vm3987, 0, %v3986
        %v3989 = vsub.s32 32, %v3988
        %v3990 = vshll.u32 %v3981, %v3988
        %v3991 = vshrl.u32 %v3973, %v3989
        %v3992 = vor.u32 %v3990, %v3991
        %v3993 = vsub.s32 4294967266, %v3988
        %v3994 = vadd.s32 %v3993, 127
        %v3995 = vshll.u32 %v3994, 23
        %v3996 = vor.u32 4788187, %v3995
        %v3997 = vand.u32 2147483647, %v3996
        %v3999 = vcvt.s32.f32 %v3992
        %v4000 = vmul.f32 %v3999, %v3997
        %v4001 = vxor.u32 %v4000, 2147483648
        %v4002 = vsel %vm3919, %v4001, %v4000
        %v4003 = vsub.s32 4, %v3979
        %v4004 = vsel %vm3919, %v4003, %v3979
        %v4005 = vsel %vm3918, %v2665, %v4002
        %v4006 = vsel %vm3918, 0, %v4004
        %v4007 = vcosq.f32.pop %v4005
        %v4008 = vsinq.f32.pop %v4005
        %vm4009 = vweird.f32 %v2665
        %v4010 = vadd.s32 %v4006, 3
        %v4011 = vand.u32 %v4010, 3
        %vm4012 = vcmp.lt.s32.totalorder %v4011, 2
        %vm4013 = vcmp.eq.s32.totalorder %v4011, 0
        %v4014 = vxor.u32 %v4008, 2147483648
        %v4015 = vsel %vm4013, %v4007, %v4014
        %vm4016 = vcmp.eq.s32.totalorder %v4011, 2
        %v4017 = vxor.u32 %v4007, 2147483648
        %v4018 = vsel %vm4016, %v4017, %v4008
        %v4019 = vsel %vm4012, %v4015, %v4018
        %v4020 = vsel %vm4009, nan, %v4019
        %v4021 = vand.u32 2147483647, %v2666
        %vm4022 = vcmp.le.f32.partialorder %v4021, 0.7853982
        %vm4023 = vcmp.lt.s32.totalorder %v2666, 0
        %v4024 = vand.u32 %v2666, 2139095040
        %v4025 = vshrl.u32 %v4024, 23
        %v4026 = vsub.s32 %v4025, 127
        %v4027 = vand.u32 2147483647, %v2666
        %v4028 = vand.u32 %v4027, 8388607
        %v4029 = vor.u32 %v4028, 8388608
        %v4030 = vsub.s32 0, %v4029
        %v4031 = vadd.s32 %v4026, 1
        %vm4032 = vcmp.gt.s32.totalorder %v4031, 0
        %v4033 = vsel %vm4032, %v4031, 0
        %v4034 = vshrl.u32 %v4033, 5
        %v4035 = vand.u32 %v4033, 31
        %v4036 = vsub.s32 32, %v4035
        %v4037 = vshrl.u32 683565275, %v4036
        %v4038 = vshll.u32 683565275, %v4035
        %v4039 = vshrl.u32 2475754826, %v4036
        %v4040 = vor.u32 %v4038, %v4039
        %v4041 = vshll.u32 2475754826, %v4035
        %v4042 = vshrl.u32 2131351028, %v4036
        %v4043 = vor.u32 %v4041, %v4042
        %v4044 = vshll.u32 2131351028, %v4035
        %v4045 = vshrl.u32 2102212464, %v4036
        %v4046 = vor.u32 %v4044, %v4045
        %v4047 = vshll.u32 2102212464, %v4035
        %v4048 = vshrl.u32 920167782, %v4036
        %v4049 = vor.u32 %v4047, %v4048
        %v4050 = vshll.u32 920167782, %v4035
        %v4051 = vshrl.u32 1326507024, %v4036
        %v4052 = vor.u32 %v4050, %v4051
        %vm4053 = vcmp.lt.s32.totalorder %v4034, 1
        %vm4054 = vcmp.lt.s32.totalorder %v4034, 2
        %vm4055 = vcmp.lt.s32.totalorder %v4034, 3
        %vm4056 = vcmp.lt.s32.totalorder %v4034, 4
        %v4057 = vsel %vm4053, %v4037, %v4040
        %v4058 = vsel %vm4056, %v4046, 2102212464
        %v4059 = vsel %vm4055, %v4043, %v4058
        %v4060 = vsel %vm4054, %v4057, %v4059
        %v4061 = vsel %vm4053, %v4040, %v4043
        %v4062 = vsel %vm4056, %v4049, 920167782
        %v4063 = vsel %vm4055, %v4046, %v4062
        %v4064 = vsel %vm4054, %v4061, %v4063
        %v4065 = vsel %vm4053, %v4043, %v4046
        %v4066 = vsel %vm4056, %v4052, 1326507024
        %v4067 = vsel %vm4055, %v4049, %v4066
        %v4068 = vsel %vm4054, %v4065, %v4067
        %v4069 = vshll.u32 %v4029, 8
        %v4070 = vmul.u32.u64.compose %v4069, %v4068
        %v4071 = vextract.low.u32 %v4070
        %v4072 = vextract.high.u32 %v4070
        %v4073 = vmul.u32.u64.compose %v4069, %v4064
        %v4074 = vextract.low.u32 %v4073
        %v4075 = vextract.high.u32 %v4073
        %v4076 = vmul.u32 %v4069, %v4060
        %v4077 = vadd.s32 %v4072, %v4074
        %vm4078 = vc.u32 %v4072, %v4074
        %v4079 = vadd.s32 %v4075, 1
        %v4080 = vsel %vm4078, %v4079, %v4075
        %v4081 = vadd.s32 %v4076, %v4080
        %v4082 = vadd.s32 %v4081, 536870912
        %v4083 = vshrl.u32 %v4082, 30
        %v4084 = vshll.u32 %v4083, 30
        %v4085 = vsub.s32 %v4081, %v4084
        %vm4086 = vcmp.lt.s32.totalorder %v4085, 0
        %v4087 = vsub.s32 0, %v4085
        %v4088 = vsel %vm4086, %v4087, %v4085
        %v4089 = vclz %v4088
        %v4090 = vsub.s32 %v4089, 2
        %vm4091 = vcmp.gt.s32.totalorder 0, %v4090
        %v4092 = vsel %vm4091, 0, %v4090
        %v4093 = vsub.s32 32, %v4092
        %v4094 = vshll.u32 %v4085, %v4092
        %v4095 = vshrl.u32 %v4077, %v4093
        %v4096 = vor.u32 %v4094, %v4095
        %v4097 = vsub.s32 4294967266, %v4092
        %v4098 = vadd.s32 %v4097, 127
        %v4099 = vshll.u32 %v4098, 23
        %v4100 = vor.u32 4788187, %v4099
        %v4101 = vand.u32 2147483647, %v4100
        %v4103 = vcvt.s32.f32 %v4096
        %v4104 = vmul.f32 %v4103, %v4101
        %v4105 = vxor.u32 %v4104, 2147483648
        %v4106 = vsel %vm4023, %v4105, %v4104
        %v4107 = vsub.s32 4, %v4083
        %v4108 = vsel %vm4023, %v4107, %v4083
        %v4109 = vsel %vm4022, %v2666, %v4106
        %v4110 = vsel %vm4022, 0, %v4108
        %v4111 = vcosq.f32.pop %v4109
        %v4112 = vsinq.f32.pop %v4109
        %vm4113 = vweird.f32 %v2666
        %v4114 = vadd.s32 %v4110, 3
        %v4115 = vand.u32 %v4114, 3
        %vm4116 = vcmp.lt.s32.totalorder %v4115, 2
        %vm4117 = vcmp.eq.s32.totalorder %v4115, 0
        %v4118 = vxor.u32 %v4112, 2147483648
        %v4119 = vsel %vm4117, %v4111, %v4118
        %vm4120 = vcmp.eq.s32.totalorder %v4115, 2
        %v4121 = vxor.u32 %v4111, 2147483648
        %v4122 = vsel %vm4120, %v4121, %v4112
        %v4123 = vsel %vm4116, %v4119, %v4122
        %v4124 = vsel %vm4113, nan, %v4123
        %v4125 = vand.u32 2147483647, %v2667
        %vm4126 = vcmp.le.f32.partialorder %v4125, 0.7853982
        %vm4127 = vcmp.lt.s32.totalorder %v2667, 0
        %v4128 = vand.u32 %v2667, 2139095040
        %v4129 = vshrl.u32 %v4128, 23
        %v4130 = vsub.s32 %v4129, 127
        %v4131 = vand.u32 2147483647, %v2667
        %v4132 = vand.u32 %v4131, 8388607
        %v4133 = vor.u32 %v4132, 8388608
        %v4134 = vsub.s32 0, %v4133
        %v4135 = vadd.s32 %v4130, 1
        %vm4136 = vcmp.gt.s32.totalorder %v4135, 0
        %v4137 = vsel %vm4136, %v4135, 0
        %v4138 = vshrl.u32 %v4137, 5
        %v4139 = vand.u32 %v4137, 31
        %v4140 = vsub.s32 32, %v4139
        %v4141 = vshrl.u32 683565275, %v4140
        %v4142 = vshll.u32 683565275, %v4139
        %v4143 = vshrl.u32 2475754826, %v4140
        %v4144 = vor.u32 %v4142, %v4143
        %v4145 = vshll.u32 2475754826, %v4139
        %v4146 = vshrl.u32 2131351028, %v4140
        %v4147 = vor.u32 %v4145, %v4146
        %v4148 = vshll.u32 2131351028, %v4139
        %v4149 = vshrl.u32 2102212464, %v4140
        %v4150 = vor.u32 %v4148, %v4149
        %v4151 = vshll.u32 2102212464, %v4139
        %v4152 = vshrl.u32 920167782, %v4140
        %v4153 = vor.u32 %v4151, %v4152
        %v4154 = vshll.u32 920167782, %v4139
        %v4155 = vshrl.u32 1326507024, %v4140
        %v4156 = vor.u32 %v4154, %v4155
        %vm4157 = vcmp.lt.s32.totalorder %v4138, 1
        %vm4158 = vcmp.lt.s32.totalorder %v4138, 2
        %vm4159 = vcmp.lt.s32.totalorder %v4138, 3
        %vm4160 = vcmp.lt.s32.totalorder %v4138, 4
        %v4161 = vsel %vm4157, %v4141, %v4144
        %v4162 = vsel %vm4160, %v4150, 2102212464
        %v4163 = vsel %vm4159, %v4147, %v4162
        %v4164 = vsel %vm4158, %v4161, %v4163
        %v4165 = vsel %vm4157, %v4144, %v4147
        %v4166 = vsel %vm4160, %v4153, 920167782
        %v4167 = vsel %vm4159, %v4150, %v4166
        %v4168 = vsel %vm4158, %v4165, %v4167
        %v4169 = vsel %vm4157, %v4147, %v4150
        %v4170 = vsel %vm4160, %v4156, 1326507024
        %v4171 = vsel %vm4159, %v4153, %v4170
        %v4172 = vsel %vm4158, %v4169, %v4171
        %v4173 = vshll.u32 %v4133, 8
        %v4174 = vmul.u32.u64.compose %v4173, %v4172
        %v4175 = vextract.low.u32 %v4174
        %v4176 = vextract.high.u32 %v4174
        %v4177 = vmul.u32.u64.compose %v4173, %v4168
        %v4178 = vextract.low.u32 %v4177
        %v4179 = vextract.high.u32 %v4177
        %v4180 = vmul.u32 %v4173, %v4164
        %v4181 = vadd.s32 %v4176, %v4178
        %vm4182 = vc.u32 %v4176, %v4178
        %v4183 = vadd.s32 %v4179, 1
        %v4184 = vsel %vm4182, %v4183, %v4179
        %v4185 = vadd.s32 %v4180, %v4184
        %v4186 = vadd.s32 %v4185, 536870912
        %v4187 = vshrl.u32 %v4186, 30
        %v4188 = vshll.u32 %v4187, 30
        %v4189 = vsub.s32 %v4185, %v4188
        %vm4190 = vcmp.lt.s32.totalorder %v4189, 0
        %v4191 = vsub.s32 0, %v4189
        %v4192 = vsel %vm4190, %v4191, %v4189
        %v4193 = vclz %v4192
        %v4194 = vsub.s32 %v4193, 2
        %vm4195 = vcmp.gt.s32.totalorder 0, %v4194
        %v4196 = vsel %vm4195, 0, %v4194
        %v4197 = vsub.s32 32, %v4196
        %v4198 = vshll.u32 %v4189, %v4196
        %v4199 = vshrl.u32 %v4181, %v4197
        %v4200 = vor.u32 %v4198, %v4199
        %v4201 = vsub.s32 4294967266, %v4196
        %v4202 = vadd.s32 %v4201, 127
        %v4203 = vshll.u32 %v4202, 23
        %v4204 = vor.u32 4788187, %v4203
        %v4205 = vand.u32 2147483647, %v4204
        %v4207 = vcvt.s32.f32 %v4200
        %v4208 = vmul.f32 %v4207, %v4205
        %v4209 = vxor.u32 %v4208, 2147483648
        %v4210 = vsel %vm4127, %v4209, %v4208
        %v4211 = vsub.s32 4, %v4187
        %v4212 = vsel %vm4127, %v4211, %v4187
        %v4213 = vsel %vm4126, %v2667, %v4210
        %v4214 = vsel %vm4126, 0, %v4212
        %v4215 = vcosq.f32.pop %v4213
        %v4216 = vsinq.f32.pop %v4213
        %vm4217 = vweird.f32 %v2667
        %v4218 = vadd.s32 %v4214, 3
        %v4219 = vand.u32 %v4218, 3
        %vm4220 = vcmp.lt.s32.totalorder %v4219, 2
        %vm4221 = vcmp.eq.s32.totalorder %v4219, 0
        %v4222 = vxor.u32 %v4216, 2147483648
        %v4223 = vsel %vm4221, %v4215, %v4222
        %vm4224 = vcmp.eq.s32.totalorder %v4219, 2
        %v4225 = vxor.u32 %v4215, 2147483648
        %v4226 = vsel %vm4224, %v4225, %v4216
        %v4227 = vsel %vm4220, %v4223, %v4226
        %v4228 = vsel %vm4217, nan, %v4227
        %v4229 = vand.u32 2147483647, %v2668
        %vm4230 = vcmp.le.f32.partialorder %v4229, 0.7853982
        %vm4231 = vcmp.lt.s32.totalorder %v2668, 0
        %v4232 = vand.u32 %v2668, 2139095040
        %v4233 = vshrl.u32 %v4232, 23
        %v4234 = vsub.s32 %v4233, 127
        %v4235 = vand.u32 2147483647, %v2668
        %v4236 = vand.u32 %v4235, 8388607
        %v4237 = vor.u32 %v4236, 8388608
        %v4238 = vsub.s32 0, %v4237
        %v4239 = vadd.s32 %v4234, 1
        %vm4240 = vcmp.gt.s32.totalorder %v4239, 0
        %v4241 = vsel %vm4240, %v4239, 0
        %v4242 = vshrl.u32 %v4241, 5
        %v4243 = vand.u32 %v4241, 31
        %v4244 = vsub.s32 32, %v4243
        %v4245 = vshrl.u32 683565275, %v4244
        %v4246 = vshll.u32 683565275, %v4243
        %v4247 = vshrl.u32 2475754826, %v4244
        %v4248 = vor.u32 %v4246, %v4247
        %v4249 = vshll.u32 2475754826, %v4243
        %v4250 = vshrl.u32 2131351028, %v4244
        %v4251 = vor.u32 %v4249, %v4250
        %v4252 = vshll.u32 2131351028, %v4243
        %v4253 = vshrl.u32 2102212464, %v4244
        %v4254 = vor.u32 %v4252, %v4253
        %v4255 = vshll.u32 2102212464, %v4243
        %v4256 = vshrl.u32 920167782, %v4244
        %v4257 = vor.u32 %v4255, %v4256
        %v4258 = vshll.u32 920167782, %v4243
        %v4259 = vshrl.u32 1326507024, %v4244
        %v4260 = vor.u32 %v4258, %v4259
        %vm4261 = vcmp.lt.s32.totalorder %v4242, 1
        %vm4262 = vcmp.lt.s32.totalorder %v4242, 2
        %vm4263 = vcmp.lt.s32.totalorder %v4242, 3
        %vm4264 = vcmp.lt.s32.totalorder %v4242, 4
        %v4265 = vsel %vm4261, %v4245, %v4248
        %v4266 = vsel %vm4264, %v4254, 2102212464
        %v4267 = vsel %vm4263, %v4251, %v4266
        %v4268 = vsel %vm4262, %v4265, %v4267
        %v4269 = vsel %vm4261, %v4248, %v4251
        %v4270 = vsel %vm4264, %v4257, 920167782
        %v4271 = vsel %vm4263, %v4254, %v4270
        %v4272 = vsel %vm4262, %v4269, %v4271
        %v4273 = vsel %vm4261, %v4251, %v4254
        %v4274 = vsel %vm4264, %v4260, 1326507024
        %v4275 = vsel %vm4263, %v4257, %v4274
        %v4276 = vsel %vm4262, %v4273, %v4275
        %v4277 = vshll.u32 %v4237, 8
        %v4278 = vmul.u32.u64.compose %v4277, %v4276
        %v4279 = vextract.low.u32 %v4278
        %v4280 = vextract.high.u32 %v4278
        %v4281 = vmul.u32.u64.compose %v4277, %v4272
        %v4282 = vextract.low.u32 %v4281
        %v4283 = vextract.high.u32 %v4281
        %v4284 = vmul.u32 %v4277, %v4268
        %v4285 = vadd.s32 %v4280, %v4282
        %vm4286 = vc.u32 %v4280, %v4282
        %v4287 = vadd.s32 %v4283, 1
        %v4288 = vsel %vm4286, %v4287, %v4283
        %v4289 = vadd.s32 %v4284, %v4288
        %v4290 = vadd.s32 %v4289, 536870912
        %v4291 = vshrl.u32 %v4290, 30
        %v4292 = vshll.u32 %v4291, 30
        %v4293 = vsub.s32 %v4289, %v4292
        %vm4294 = vcmp.lt.s32.totalorder %v4293, 0
        %v4295 = vsub.s32 0, %v4293
        %v4296 = vsel %vm4294, %v4295, %v4293
        %v4297 = vclz %v4296
        %v4298 = vsub.s32 %v4297, 2
        %vm4299 = vcmp.gt.s32.totalorder 0, %v4298
        %v4300 = vsel %vm4299, 0, %v4298
        %v4301 = vsub.s32 32, %v4300
        %v4302 = vshll.u32 %v4293, %v4300
        %v4303 = vshrl.u32 %v4285, %v4301
        %v4304 = vor.u32 %v4302, %v4303
        %v4305 = vsub.s32 4294967266, %v4300
        %v4306 = vadd.s32 %v4305, 127
        %v4307 = vshll.u32 %v4306, 23
        %v4308 = vor.u32 4788187, %v4307
        %v4309 = vand.u32 2147483647, %v4308
        %v4311 = vcvt.s32.f32 %v4304
        %v4312 = vmul.f32 %v4311, %v4309
        %v4313 = vxor.u32 %v4312, 2147483648
        %v4314 = vsel %vm4231, %v4313, %v4312
        %v4315 = vsub.s32 4, %v4291
        %v4316 = vsel %vm4231, %v4315, %v4291
        %v4317 = vsel %vm4230, %v2668, %v4314
        %v4318 = vsel %vm4230, 0, %v4316
        %v4319 = vcosq.f32.pop %v4317
        %v4320 = vsinq.f32.pop %v4317
        %vm4321 = vweird.f32 %v2668
        %v4322 = vadd.s32 %v4318, 3
        %v4323 = vand.u32 %v4322, 3
        %vm4324 = vcmp.lt.s32.totalorder %v4323, 2
        %vm4325 = vcmp.eq.s32.totalorder %v4323, 0
        %v4326 = vxor.u32 %v4320, 2147483648
        %v4327 = vsel %vm4325, %v4319, %v4326
        %vm4328 = vcmp.eq.s32.totalorder %v4323, 2
        %v4329 = vxor.u32 %v4319, 2147483648
        %v4330 = vsel %vm4328, %v4329, %v4320
        %v4331 = vsel %vm4324, %v4327, %v4330
        %v4332 = vsel %vm4321, nan, %v4331
        %v4333 = vpack.c.bf16 %v2876, %v2772
        %v4334 = vpack.c.bf16 %v3084, %v2980
        %v4335 = vpack.c.bf16 %v3292, %v3188
        %v4336 = vpack.c.bf16 %v3500, %v3396
        %v4337 = vpack.c.bf16 %v3708, %v3604
        %v4338 = vpack.c.bf16 %v3916, %v3812
        %v4339 = vpack.c.bf16 %v4124, %v4020
        %v4340 = vpack.c.bf16 %v4332, %v4228
        %v4341 = vand.u32 2147483647, %v2653
        %vm4342 = vcmp.le.f32.partialorder %v4341, 0.7853982
        %vm4343 = vcmp.lt.s32.totalorder %v2653, 0
        %v4344 = vand.u32 %v2653, 2139095040
        %v4345 = vshrl.u32 %v4344, 23
        %v4346 = vsub.s32 %v4345, 127
        %v4347 = vand.u32 2147483647, %v2653
        %v4348 = vand.u32 %v4347, 8388607
        %v4349 = vor.u32 %v4348, 8388608
        %v4350 = vsub.s32 0, %v4349
        %v4351 = vadd.s32 %v4346, 1
        %vm4352 = vcmp.gt.s32.totalorder %v4351, 0
        %v4353 = vsel %vm4352, %v4351, 0
        %v4354 = vshrl.u32 %v4353, 5
        %v4355 = vand.u32 %v4353, 31
        %v4356 = vsub.s32 32, %v4355
        %v4357 = vshrl.u32 683565275, %v4356
        %v4358 = vshll.u32 683565275, %v4355
        %v4359 = vshrl.u32 2475754826, %v4356
        %v4360 = vor.u32 %v4358, %v4359
        %v4361 = vshll.u32 2475754826, %v4355
        %v4362 = vshrl.u32 2131351028, %v4356
        %v4363 = vor.u32 %v4361, %v4362
        %v4364 = vshll.u32 2131351028, %v4355
        %v4365 = vshrl.u32 2102212464, %v4356
        %v4366 = vor.u32 %v4364, %v4365
        %v4367 = vshll.u32 2102212464, %v4355
        %v4368 = vshrl.u32 920167782, %v4356
        %v4369 = vor.u32 %v4367, %v4368
        %v4370 = vshll.u32 920167782, %v4355
        %v4371 = vshrl.u32 1326507024, %v4356
        %v4372 = vor.u32 %v4370, %v4371
        %vm4373 = vcmp.lt.s32.totalorder %v4354, 1
        %vm4374 = vcmp.lt.s32.totalorder %v4354, 2
        %vm4375 = vcmp.lt.s32.totalorder %v4354, 3
        %vm4376 = vcmp.lt.s32.totalorder %v4354, 4
        %v4377 = vsel %vm4373, %v4357, %v4360
        %v4378 = vsel %vm4376, %v4366, 2102212464
        %v4379 = vsel %vm4375, %v4363, %v4378
        %v4380 = vsel %vm4374, %v4377, %v4379
        %v4381 = vsel %vm4373, %v4360, %v4363
        %v4382 = vsel %vm4376, %v4369, 920167782
        %v4383 = vsel %vm4375, %v4366, %v4382
        %v4384 = vsel %vm4374, %v4381, %v4383
        %v4385 = vsel %vm4373, %v4363, %v4366
        %v4386 = vsel %vm4376, %v4372, 1326507024
        %v4387 = vsel %vm4375, %v4369, %v4386
        %v4388 = vsel %vm4374, %v4385, %v4387
        %v4389 = vshll.u32 %v4349, 8
        %v4390 = vmul.u32.u64.compose %v4389, %v4388
        %v4391 = vextract.low.u32 %v4390
        %v4392 = vextract.high.u32 %v4390
        %v4393 = vmul.u32.u64.compose %v4389, %v4384
        %v4394 = vextract.low.u32 %v4393
        %v4395 = vextract.high.u32 %v4393
        %v4396 = vmul.u32 %v4389, %v4380
        %v4397 = vadd.s32 %v4392, %v4394
        %vm4398 = vc.u32 %v4392, %v4394
        %v4399 = vadd.s32 %v4395, 1
        %v4400 = vsel %vm4398, %v4399, %v4395
        %v4401 = vadd.s32 %v4396, %v4400
        %v4402 = vadd.s32 %v4401, 536870912
        %v4403 = vshrl.u32 %v4402, 30
        %v4404 = vshll.u32 %v4403, 30
        %v4405 = vsub.s32 %v4401, %v4404
        %vm4406 = vcmp.lt.s32.totalorder %v4405, 0
        %v4407 = vsub.s32 0, %v4405
        %v4408 = vsel %vm4406, %v4407, %v4405
        %v4409 = vclz %v4408
        %v4410 = vsub.s32 %v4409, 2
        %vm4411 = vcmp.gt.s32.totalorder 0, %v4410
        %v4412 = vsel %vm4411, 0, %v4410
        %v4413 = vsub.s32 32, %v4412
        %v4414 = vshll.u32 %v4405, %v4412
        %v4415 = vshrl.u32 %v4397, %v4413
        %v4416 = vor.u32 %v4414, %v4415
        %v4417 = vsub.s32 4294967266, %v4412
        %v4418 = vadd.s32 %v4417, 127
        %v4419 = vshll.u32 %v4418, 23
        %v4420 = vor.u32 4788187, %v4419
        %v4421 = vand.u32 2147483647, %v4420
        %v4423 = vcvt.s32.f32 %v4416
        %v4424 = vmul.f32 %v4423, %v4421
        %v4425 = vxor.u32 %v4424, 2147483648
        %v4426 = vsel %vm4343, %v4425, %v4424
        %v4427 = vsub.s32 4, %v4403
        %v4428 = vsel %vm4343, %v4427, %v4403
        %v4429 = vsel %vm4342, %v2653, %v4426
        %v4430 = vsel %vm4342, 0, %v4428
        %v4431 = vcosq.f32.pop %v4429
        %v4432 = vsinq.f32.pop %v4429
        %vm4433 = vweird.f32 %v2653
        %v4434 = vand.u32 %v4430, 3
        %vm4435 = vcmp.lt.s32.totalorder %v4434, 2
        %vm4436 = vcmp.eq.s32.totalorder %v4434, 0
        %v4437 = vxor.u32 %v4432, 2147483648
        %v4438 = vsel %vm4436, %v4431, %v4437
        %vm4439 = vcmp.eq.s32.totalorder %v4434, 2
        %v4440 = vxor.u32 %v4431, 2147483648
        %v4441 = vsel %vm4439, %v4440, %v4432
        %v4442 = vsel %vm4435, %v4438, %v4441
        %v4443 = vsel %vm4433, nan, %v4442
        %v4444 = vand.u32 2147483647, %v2654
        %vm4445 = vcmp.le.f32.partialorder %v4444, 0.7853982
        %vm4446 = vcmp.lt.s32.totalorder %v2654, 0
        %v4447 = vand.u32 %v2654, 2139095040
        %v4448 = vshrl.u32 %v4447, 23
        %v4449 = vsub.s32 %v4448, 127
        %v4450 = vand.u32 2147483647, %v2654
        %v4451 = vand.u32 %v4450, 8388607
        %v4452 = vor.u32 %v4451, 8388608
        %v4453 = vsub.s32 0, %v4452
        %v4454 = vadd.s32 %v4449, 1
        %vm4455 = vcmp.gt.s32.totalorder %v4454, 0
        %v4456 = vsel %vm4455, %v4454, 0
        %v4457 = vshrl.u32 %v4456, 5
        %v4458 = vand.u32 %v4456, 31
        %v4459 = vsub.s32 32, %v4458
        %v4460 = vshrl.u32 683565275, %v4459
        %v4461 = vshll.u32 683565275, %v4458
        %v4462 = vshrl.u32 2475754826, %v4459
        %v4463 = vor.u32 %v4461, %v4462
        %v4464 = vshll.u32 2475754826, %v4458
        %v4465 = vshrl.u32 2131351028, %v4459
        %v4466 = vor.u32 %v4464, %v4465
        %v4467 = vshll.u32 2131351028, %v4458
        %v4468 = vshrl.u32 2102212464, %v4459
        %v4469 = vor.u32 %v4467, %v4468
        %v4470 = vshll.u32 2102212464, %v4458
        %v4471 = vshrl.u32 920167782, %v4459
        %v4472 = vor.u32 %v4470, %v4471
        %v4473 = vshll.u32 920167782, %v4458
        %v4474 = vshrl.u32 1326507024, %v4459
        %v4475 = vor.u32 %v4473, %v4474
        %vm4476 = vcmp.lt.s32.totalorder %v4457, 1
        %vm4477 = vcmp.lt.s32.totalorder %v4457, 2
        %vm4478 = vcmp.lt.s32.totalorder %v4457, 3
        %vm4479 = vcmp.lt.s32.totalorder %v4457, 4
        %v4480 = vsel %vm4476, %v4460, %v4463
        %v4481 = vsel %vm4479, %v4469, 2102212464
        %v4482 = vsel %vm4478, %v4466, %v4481
        %v4483 = vsel %vm4477, %v4480, %v4482
        %v4484 = vsel %vm4476, %v4463, %v4466
        %v4485 = vsel %vm4479, %v4472, 920167782
        %v4486 = vsel %vm4478, %v4469, %v4485
        %v4487 = vsel %vm4477, %v4484, %v4486
        %v4488 = vsel %vm4476, %v4466, %v4469
        %v4489 = vsel %vm4479, %v4475, 1326507024
        %v4490 = vsel %vm4478, %v4472, %v4489
        %v4491 = vsel %vm4477, %v4488, %v4490
        %v4492 = vshll.u32 %v4452, 8
        %v4493 = vmul.u32.u64.compose %v4492, %v4491
        %v4494 = vextract.low.u32 %v4493
        %v4495 = vextract.high.u32 %v4493
        %v4496 = vmul.u32.u64.compose %v4492, %v4487
        %v4497 = vextract.low.u32 %v4496
        %v4498 = vextract.high.u32 %v4496
        %v4499 = vmul.u32 %v4492, %v4483
        %v4500 = vadd.s32 %v4495, %v4497
        %vm4501 = vc.u32 %v4495, %v4497
        %v4502 = vadd.s32 %v4498, 1
        %v4503 = vsel %vm4501, %v4502, %v4498
        %v4504 = vadd.s32 %v4499, %v4503
        %v4505 = vadd.s32 %v4504, 536870912
        %v4506 = vshrl.u32 %v4505, 30
        %v4507 = vshll.u32 %v4506, 30
        %v4508 = vsub.s32 %v4504, %v4507
        %vm4509 = vcmp.lt.s32.totalorder %v4508, 0
        %v4510 = vsub.s32 0, %v4508
        %v4511 = vsel %vm4509, %v4510, %v4508
        %v4512 = vclz %v4511
        %v4513 = vsub.s32 %v4512, 2
        %vm4514 = vcmp.gt.s32.totalorder 0, %v4513
        %v4515 = vsel %vm4514, 0, %v4513
        %v4516 = vsub.s32 32, %v4515
        %v4517 = vshll.u32 %v4508, %v4515
        %v4518 = vshrl.u32 %v4500, %v4516
        %v4519 = vor.u32 %v4517, %v4518
        %v4520 = vsub.s32 4294967266, %v4515
        %v4521 = vadd.s32 %v4520, 127
        %v4522 = vshll.u32 %v4521, 23
        %v4523 = vor.u32 4788187, %v4522
        %v4524 = vand.u32 2147483647, %v4523
        %v4526 = vcvt.s32.f32 %v4519
        %v4527 = vmul.f32 %v4526, %v4524
        %v4528 = vxor.u32 %v4527, 2147483648
        %v4529 = vsel %vm4446, %v4528, %v4527
        %v4530 = vsub.s32 4, %v4506
        %v4531 = vsel %vm4446, %v4530, %v4506
        %v4532 = vsel %vm4445, %v2654, %v4529
        %v4533 = vsel %vm4445, 0, %v4531
        %v4534 = vcosq.f32.pop %v4532
        %v4535 = vsinq.f32.pop %v4532
        %vm4536 = vweird.f32 %v2654
        %v4537 = vand.u32 %v4533, 3
        %vm4538 = vcmp.lt.s32.totalorder %v4537, 2
        %vm4539 = vcmp.eq.s32.totalorder %v4537, 0
        %v4540 = vxor.u32 %v4535, 2147483648
        %v4541 = vsel %vm4539, %v4534, %v4540
        %vm4542 = vcmp.eq.s32.totalorder %v4537, 2
        %v4543 = vxor.u32 %v4534, 2147483648
        %v4544 = vsel %vm4542, %v4543, %v4535
        %v4545 = vsel %vm4538, %v4541, %v4544
        %v4546 = vsel %vm4536, nan, %v4545
        %v4547 = vand.u32 2147483647, %v2655
        %vm4548 = vcmp.le.f32.partialorder %v4547, 0.7853982
        %vm4549 = vcmp.lt.s32.totalorder %v2655, 0
        %v4550 = vand.u32 %v2655, 2139095040
        %v4551 = vshrl.u32 %v4550, 23
        %v4552 = vsub.s32 %v4551, 127
        %v4553 = vand.u32 2147483647, %v2655
        %v4554 = vand.u32 %v4553, 8388607
        %v4555 = vor.u32 %v4554, 8388608
        %v4556 = vsub.s32 0, %v4555
        %v4557 = vadd.s32 %v4552, 1
        %vm4558 = vcmp.gt.s32.totalorder %v4557, 0
        %v4559 = vsel %vm4558, %v4557, 0
        %v4560 = vshrl.u32 %v4559, 5
        %v4561 = vand.u32 %v4559, 31
        %v4562 = vsub.s32 32, %v4561
        %v4563 = vshrl.u32 683565275, %v4562
        %v4564 = vshll.u32 683565275, %v4561
        %v4565 = vshrl.u32 2475754826, %v4562
        %v4566 = vor.u32 %v4564, %v4565
        %v4567 = vshll.u32 2475754826, %v4561
        %v4568 = vshrl.u32 2131351028, %v4562
        %v4569 = vor.u32 %v4567, %v4568
        %v4570 = vshll.u32 2131351028, %v4561
        %v4571 = vshrl.u32 2102212464, %v4562
        %v4572 = vor.u32 %v4570, %v4571
        %v4573 = vshll.u32 2102212464, %v4561
        %v4574 = vshrl.u32 920167782, %v4562
        %v4575 = vor.u32 %v4573, %v4574
        %v4576 = vshll.u32 920167782, %v4561
        %v4577 = vshrl.u32 1326507024, %v4562
        %v4578 = vor.u32 %v4576, %v4577
        %vm4579 = vcmp.lt.s32.totalorder %v4560, 1
        %vm4580 = vcmp.lt.s32.totalorder %v4560, 2
        %vm4581 = vcmp.lt.s32.totalorder %v4560, 3
        %vm4582 = vcmp.lt.s32.totalorder %v4560, 4
        %v4583 = vsel %vm4579, %v4563, %v4566
        %v4584 = vsel %vm4582, %v4572, 2102212464
        %v4585 = vsel %vm4581, %v4569, %v4584
        %v4586 = vsel %vm4580, %v4583, %v4585
        %v4587 = vsel %vm4579, %v4566, %v4569
        %v4588 = vsel %vm4582, %v4575, 920167782
        %v4589 = vsel %vm4581, %v4572, %v4588
        %v4590 = vsel %vm4580, %v4587, %v4589
        %v4591 = vsel %vm4579, %v4569, %v4572
        %v4592 = vsel %vm4582, %v4578, 1326507024
        %v4593 = vsel %vm4581, %v4575, %v4592
        %v4594 = vsel %vm4580, %v4591, %v4593
        %v4595 = vshll.u32 %v4555, 8
        %v4596 = vmul.u32.u64.compose %v4595, %v4594
        %v4597 = vextract.low.u32 %v4596
        %v4598 = vextract.high.u32 %v4596
        %v4599 = vmul.u32.u64.compose %v4595, %v4590
        %v4600 = vextract.low.u32 %v4599
        %v4601 = vextract.high.u32 %v4599
        %v4602 = vmul.u32 %v4595, %v4586
        %v4603 = vadd.s32 %v4598, %v4600
        %vm4604 = vc.u32 %v4598, %v4600
        %v4605 = vadd.s32 %v4601, 1
        %v4606 = vsel %vm4604, %v4605, %v4601
        %v4607 = vadd.s32 %v4602, %v4606
        %v4608 = vadd.s32 %v4607, 536870912
        %v4609 = vshrl.u32 %v4608, 30
        %v4610 = vshll.u32 %v4609, 30
        %v4611 = vsub.s32 %v4607, %v4610
        %vm4612 = vcmp.lt.s32.totalorder %v4611, 0
        %v4613 = vsub.s32 0, %v4611
        %v4614 = vsel %vm4612, %v4613, %v4611
        %v4615 = vclz %v4614
        %v4616 = vsub.s32 %v4615, 2
        %vm4617 = vcmp.gt.s32.totalorder 0, %v4616
        %v4618 = vsel %vm4617, 0, %v4616
        %v4619 = vsub.s32 32, %v4618
        %v4620 = vshll.u32 %v4611, %v4618
        %v4621 = vshrl.u32 %v4603, %v4619
        %v4622 = vor.u32 %v4620, %v4621
        %v4623 = vsub.s32 4294967266, %v4618
        %v4624 = vadd.s32 %v4623, 127
        %v4625 = vshll.u32 %v4624, 23
        %v4626 = vor.u32 4788187, %v4625
        %v4627 = vand.u32 2147483647, %v4626
        %v4629 = vcvt.s32.f32 %v4622
        %v4630 = vmul.f32 %v4629, %v4627
        %v4631 = vxor.u32 %v4630, 2147483648
        %v4632 = vsel %vm4549, %v4631, %v4630
        %v4633 = vsub.s32 4, %v4609
        %v4634 = vsel %vm4549, %v4633, %v4609
        %v4635 = vsel %vm4548, %v2655, %v4632
        %v4636 = vsel %vm4548, 0, %v4634
        %v4637 = vcosq.f32.pop %v4635
        %v4638 = vsinq.f32.pop %v4635
        %vm4639 = vweird.f32 %v2655
        %v4640 = vand.u32 %v4636, 3
        %vm4641 = vcmp.lt.s32.totalorder %v4640, 2
        %vm4642 = vcmp.eq.s32.totalorder %v4640, 0
        %v4643 = vxor.u32 %v4638, 2147483648
        %v4644 = vsel %vm4642, %v4637, %v4643
        %vm4645 = vcmp.eq.s32.totalorder %v4640, 2
        %v4646 = vxor.u32 %v4637, 2147483648
        %v4647 = vsel %vm4645, %v4646, %v4638
        %v4648 = vsel %vm4641, %v4644, %v4647
        %v4649 = vsel %vm4639, nan, %v4648
        %v4650 = vand.u32 2147483647, %v2656
        %vm4651 = vcmp.le.f32.partialorder %v4650, 0.7853982
        %vm4652 = vcmp.lt.s32.totalorder %v2656, 0
        %v4653 = vand.u32 %v2656, 2139095040
        %v4654 = vshrl.u32 %v4653, 23
        %v4655 = vsub.s32 %v4654, 127
        %v4656 = vand.u32 2147483647, %v2656
        %v4657 = vand.u32 %v4656, 8388607
        %v4658 = vor.u32 %v4657, 8388608
        %v4659 = vsub.s32 0, %v4658
        %v4660 = vadd.s32 %v4655, 1
        %vm4661 = vcmp.gt.s32.totalorder %v4660, 0
        %v4662 = vsel %vm4661, %v4660, 0
        %v4663 = vshrl.u32 %v4662, 5
        %v4664 = vand.u32 %v4662, 31
        %v4665 = vsub.s32 32, %v4664
        %v4666 = vshrl.u32 683565275, %v4665
        %v4667 = vshll.u32 683565275, %v4664
        %v4668 = vshrl.u32 2475754826, %v4665
        %v4669 = vor.u32 %v4667, %v4668
        %v4670 = vshll.u32 2475754826, %v4664
        %v4671 = vshrl.u32 2131351028, %v4665
        %v4672 = vor.u32 %v4670, %v4671
        %v4673 = vshll.u32 2131351028, %v4664
        %v4674 = vshrl.u32 2102212464, %v4665
        %v4675 = vor.u32 %v4673, %v4674
        %v4676 = vshll.u32 2102212464, %v4664
        %v4677 = vshrl.u32 920167782, %v4665
        %v4678 = vor.u32 %v4676, %v4677
        %v4679 = vshll.u32 920167782, %v4664
        %v4680 = vshrl.u32 1326507024, %v4665
        %v4681 = vor.u32 %v4679, %v4680
        %vm4682 = vcmp.lt.s32.totalorder %v4663, 1
        %vm4683 = vcmp.lt.s32.totalorder %v4663, 2
        %vm4684 = vcmp.lt.s32.totalorder %v4663, 3
        %vm4685 = vcmp.lt.s32.totalorder %v4663, 4
        %v4686 = vsel %vm4682, %v4666, %v4669
        %v4687 = vsel %vm4685, %v4675, 2102212464
        %v4688 = vsel %vm4684, %v4672, %v4687
        %v4689 = vsel %vm4683, %v4686, %v4688
        %v4690 = vsel %vm4682, %v4669, %v4672
        %v4691 = vsel %vm4685, %v4678, 920167782
        %v4692 = vsel %vm4684, %v4675, %v4691
        %v4693 = vsel %vm4683, %v4690, %v4692
        %v4694 = vsel %vm4682, %v4672, %v4675
        %v4695 = vsel %vm4685, %v4681, 1326507024
        %v4696 = vsel %vm4684, %v4678, %v4695
        %v4697 = vsel %vm4683, %v4694, %v4696
        %v4698 = vshll.u32 %v4658, 8
        %v4699 = vmul.u32.u64.compose %v4698, %v4697
        %v4700 = vextract.low.u32 %v4699
        %v4701 = vextract.high.u32 %v4699
        %v4702 = vmul.u32.u64.compose %v4698, %v4693
        %v4703 = vextract.low.u32 %v4702
        %v4704 = vextract.high.u32 %v4702
        %v4705 = vmul.u32 %v4698, %v4689
        %v4706 = vadd.s32 %v4701, %v4703
        %vm4707 = vc.u32 %v4701, %v4703
        %v4708 = vadd.s32 %v4704, 1
        %v4709 = vsel %vm4707, %v4708, %v4704
        %v4710 = vadd.s32 %v4705, %v4709
        %v4711 = vadd.s32 %v4710, 536870912
        %v4712 = vshrl.u32 %v4711, 30
        %v4713 = vshll.u32 %v4712, 30
        %v4714 = vsub.s32 %v4710, %v4713
        %vm4715 = vcmp.lt.s32.totalorder %v4714, 0
        %v4716 = vsub.s32 0, %v4714
        %v4717 = vsel %vm4715, %v4716, %v4714
        %v4718 = vclz %v4717
        %v4719 = vsub.s32 %v4718, 2
        %vm4720 = vcmp.gt.s32.totalorder 0, %v4719
        %v4721 = vsel %vm4720, 0, %v4719
        %v4722 = vsub.s32 32, %v4721
        %v4723 = vshll.u32 %v4714, %v4721
        %v4724 = vshrl.u32 %v4706, %v4722
        %v4725 = vor.u32 %v4723, %v4724
        %v4726 = vsub.s32 4294967266, %v4721
        %v4727 = vadd.s32 %v4726, 127
        %v4728 = vshll.u32 %v4727, 23
        %v4729 = vor.u32 4788187, %v4728
        %v4730 = vand.u32 2147483647, %v4729
        %v4732 = vcvt.s32.f32 %v4725
        %v4733 = vmul.f32 %v4732, %v4730
        %v4734 = vxor.u32 %v4733, 2147483648
        %v4735 = vsel %vm4652, %v4734, %v4733
        %v4736 = vsub.s32 4, %v4712
        %v4737 = vsel %vm4652, %v4736, %v4712
        %v4738 = vsel %vm4651, %v2656, %v4735
        %v4739 = vsel %vm4651, 0, %v4737
        %v4740 = vcosq.f32.pop %v4738
        %v4741 = vsinq.f32.pop %v4738
        %vm4742 = vweird.f32 %v2656
        %v4743 = vand.u32 %v4739, 3
        %vm4744 = vcmp.lt.s32.totalorder %v4743, 2
        %vm4745 = vcmp.eq.s32.totalorder %v4743, 0
        %v4746 = vxor.u32 %v4741, 2147483648
        %v4747 = vsel %vm4745, %v4740, %v4746
        %vm4748 = vcmp.eq.s32.totalorder %v4743, 2
        %v4749 = vxor.u32 %v4740, 2147483648
        %v4750 = vsel %vm4748, %v4749, %v4741
        %v4751 = vsel %vm4744, %v4747, %v4750
        %v4752 = vsel %vm4742, nan, %v4751
        %v4753 = vand.u32 2147483647, %v2657
        %vm4754 = vcmp.le.f32.partialorder %v4753, 0.7853982
        %vm4755 = vcmp.lt.s32.totalorder %v2657, 0
        %v4756 = vand.u32 %v2657, 2139095040
        %v4757 = vshrl.u32 %v4756, 23
        %v4758 = vsub.s32 %v4757, 127
        %v4759 = vand.u32 2147483647, %v2657
        %v4760 = vand.u32 %v4759, 8388607
        %v4761 = vor.u32 %v4760, 8388608
        %v4762 = vsub.s32 0, %v4761
        %v4763 = vadd.s32 %v4758, 1
        %vm4764 = vcmp.gt.s32.totalorder %v4763, 0
        %v4765 = vsel %vm4764, %v4763, 0
        %v4766 = vshrl.u32 %v4765, 5
        %v4767 = vand.u32 %v4765, 31
        %v4768 = vsub.s32 32, %v4767
        %v4769 = vshrl.u32 683565275, %v4768
        %v4770 = vshll.u32 683565275, %v4767
        %v4771 = vshrl.u32 2475754826, %v4768
        %v4772 = vor.u32 %v4770, %v4771
        %v4773 = vshll.u32 2475754826, %v4767
        %v4774 = vshrl.u32 2131351028, %v4768
        %v4775 = vor.u32 %v4773, %v4774
        %v4776 = vshll.u32 2131351028, %v4767
        %v4777 = vshrl.u32 2102212464, %v4768
        %v4778 = vor.u32 %v4776, %v4777
        %v4779 = vshll.u32 2102212464, %v4767
        %v4780 = vshrl.u32 920167782, %v4768
        %v4781 = vor.u32 %v4779, %v4780
        %v4782 = vshll.u32 920167782, %v4767
        %v4783 = vshrl.u32 1326507024, %v4768
        %v4784 = vor.u32 %v4782, %v4783
        %vm4785 = vcmp.lt.s32.totalorder %v4766, 1
        %vm4786 = vcmp.lt.s32.totalorder %v4766, 2
        %vm4787 = vcmp.lt.s32.totalorder %v4766, 3
        %vm4788 = vcmp.lt.s32.totalorder %v4766, 4
        %v4789 = vsel %vm4785, %v4769, %v4772
        %v4790 = vsel %vm4788, %v4778, 2102212464
        %v4791 = vsel %vm4787, %v4775, %v4790
        %v4792 = vsel %vm4786, %v4789, %v4791
        %v4793 = vsel %vm4785, %v4772, %v4775
        %v4794 = vsel %vm4788, %v4781, 920167782
        %v4795 = vsel %vm4787, %v4778, %v4794
        %v4796 = vsel %vm4786, %v4793, %v4795
        %v4797 = vsel %vm4785, %v4775, %v4778
        %v4798 = vsel %vm4788, %v4784, 1326507024
        %v4799 = vsel %vm4787, %v4781, %v4798
        %v4800 = vsel %vm4786, %v4797, %v4799
        %v4801 = vshll.u32 %v4761, 8
        %v4802 = vmul.u32.u64.compose %v4801, %v4800
        %v4803 = vextract.low.u32 %v4802
        %v4804 = vextract.high.u32 %v4802
        %v4805 = vmul.u32.u64.compose %v4801, %v4796
        %v4806 = vextract.low.u32 %v4805
        %v4807 = vextract.high.u32 %v4805
        %v4808 = vmul.u32 %v4801, %v4792
        %v4809 = vadd.s32 %v4804, %v4806
        %vm4810 = vc.u32 %v4804, %v4806
        %v4811 = vadd.s32 %v4807, 1
        %v4812 = vsel %vm4810, %v4811, %v4807
        %v4813 = vadd.s32 %v4808, %v4812
        %v4814 = vadd.s32 %v4813, 536870912
        %v4815 = vshrl.u32 %v4814, 30
        %v4816 = vshll.u32 %v4815, 30
        %v4817 = vsub.s32 %v4813, %v4816
        %vm4818 = vcmp.lt.s32.totalorder %v4817, 0
        %v4819 = vsub.s32 0, %v4817
        %v4820 = vsel %vm4818, %v4819, %v4817
        %v4821 = vclz %v4820
        %v4822 = vsub.s32 %v4821, 2
        %vm4823 = vcmp.gt.s32.totalorder 0, %v4822
        %v4824 = vsel %vm4823, 0, %v4822
        %v4825 = vsub.s32 32, %v4824
        %v4826 = vshll.u32 %v4817, %v4824
        %v4827 = vshrl.u32 %v4809, %v4825
        %v4828 = vor.u32 %v4826, %v4827
        %v4829 = vsub.s32 4294967266, %v4824
        %v4830 = vadd.s32 %v4829, 127
        %v4831 = vshll.u32 %v4830, 23
        %v4832 = vor.u32 4788187, %v4831
        %v4833 = vand.u32 2147483647, %v4832
        %v4835 = vcvt.s32.f32 %v4828
        %v4836 = vmul.f32 %v4835, %v4833
        %v4837 = vxor.u32 %v4836, 2147483648
        %v4838 = vsel %vm4755, %v4837, %v4836
        %v4839 = vsub.s32 4, %v4815
        %v4840 = vsel %vm4755, %v4839, %v4815
        %v4841 = vsel %vm4754, %v2657, %v4838
        %v4842 = vsel %vm4754, 0, %v4840
        %v4843 = vcosq.f32.pop %v4841
        %v4844 = vsinq.f32.pop %v4841
        %vm4845 = vweird.f32 %v2657
        %v4846 = vand.u32 %v4842, 3
        %vm4847 = vcmp.lt.s32.totalorder %v4846, 2
        %vm4848 = vcmp.eq.s32.totalorder %v4846, 0
        %v4849 = vxor.u32 %v4844, 2147483648
        %v4850 = vsel %vm4848, %v4843, %v4849
        %vm4851 = vcmp.eq.s32.totalorder %v4846, 2
        %v4852 = vxor.u32 %v4843, 2147483648
        %v4853 = vsel %vm4851, %v4852, %v4844
        %v4854 = vsel %vm4847, %v4850, %v4853
        %v4855 = vsel %vm4845, nan, %v4854
        %v4856 = vand.u32 2147483647, %v2658
        %vm4857 = vcmp.le.f32.partialorder %v4856, 0.7853982
        %vm4858 = vcmp.lt.s32.totalorder %v2658, 0
        %v4859 = vand.u32 %v2658, 2139095040
        %v4860 = vshrl.u32 %v4859, 23
        %v4861 = vsub.s32 %v4860, 127
        %v4862 = vand.u32 2147483647, %v2658
        %v4863 = vand.u32 %v4862, 8388607
        %v4864 = vor.u32 %v4863, 8388608
        %v4865 = vsub.s32 0, %v4864
        %v4866 = vadd.s32 %v4861, 1
        %vm4867 = vcmp.gt.s32.totalorder %v4866, 0
        %v4868 = vsel %vm4867, %v4866, 0
        %v4869 = vshrl.u32 %v4868, 5
        %v4870 = vand.u32 %v4868, 31
        %v4871 = vsub.s32 32, %v4870
        %v4872 = vshrl.u32 683565275, %v4871
        %v4873 = vshll.u32 683565275, %v4870
        %v4874 = vshrl.u32 2475754826, %v4871
        %v4875 = vor.u32 %v4873, %v4874
        %v4876 = vshll.u32 2475754826, %v4870
        %v4877 = vshrl.u32 2131351028, %v4871
        %v4878 = vor.u32 %v4876, %v4877
        %v4879 = vshll.u32 2131351028, %v4870
        %v4880 = vshrl.u32 2102212464, %v4871
        %v4881 = vor.u32 %v4879, %v4880
        %v4882 = vshll.u32 2102212464, %v4870
        %v4883 = vshrl.u32 920167782, %v4871
        %v4884 = vor.u32 %v4882, %v4883
        %v4885 = vshll.u32 920167782, %v4870
        %v4886 = vshrl.u32 1326507024, %v4871
        %v4887 = vor.u32 %v4885, %v4886
        %vm4888 = vcmp.lt.s32.totalorder %v4869, 1
        %vm4889 = vcmp.lt.s32.totalorder %v4869, 2
        %vm4890 = vcmp.lt.s32.totalorder %v4869, 3
        %vm4891 = vcmp.lt.s32.totalorder %v4869, 4
        %v4892 = vsel %vm4888, %v4872, %v4875
        %v4893 = vsel %vm4891, %v4881, 2102212464
        %v4894 = vsel %vm4890, %v4878, %v4893
        %v4895 = vsel %vm4889, %v4892, %v4894
        %v4896 = vsel %vm4888, %v4875, %v4878
        %v4897 = vsel %vm4891, %v4884, 920167782
        %v4898 = vsel %vm4890, %v4881, %v4897
        %v4899 = vsel %vm4889, %v4896, %v4898
        %v4900 = vsel %vm4888, %v4878, %v4881
        %v4901 = vsel %vm4891, %v4887, 1326507024
        %v4902 = vsel %vm4890, %v4884, %v4901
        %v4903 = vsel %vm4889, %v4900, %v4902
        %v4904 = vshll.u32 %v4864, 8
        %v4905 = vmul.u32.u64.compose %v4904, %v4903
        %v4906 = vextract.low.u32 %v4905
        %v4907 = vextract.high.u32 %v4905
        %v4908 = vmul.u32.u64.compose %v4904, %v4899
        %v4909 = vextract.low.u32 %v4908
        %v4910 = vextract.high.u32 %v4908
        %v4911 = vmul.u32 %v4904, %v4895
        %v4912 = vadd.s32 %v4907, %v4909
        %vm4913 = vc.u32 %v4907, %v4909
        %v4914 = vadd.s32 %v4910, 1
        %v4915 = vsel %vm4913, %v4914, %v4910
        %v4916 = vadd.s32 %v4911, %v4915
        %v4917 = vadd.s32 %v4916, 536870912
        %v4918 = vshrl.u32 %v4917, 30
        %v4919 = vshll.u32 %v4918, 30
        %v4920 = vsub.s32 %v4916, %v4919
        %vm4921 = vcmp.lt.s32.totalorder %v4920, 0
        %v4922 = vsub.s32 0, %v4920
        %v4923 = vsel %vm4921, %v4922, %v4920
        %v4924 = vclz %v4923
        %v4925 = vsub.s32 %v4924, 2
        %vm4926 = vcmp.gt.s32.totalorder 0, %v4925
        %v4927 = vsel %vm4926, 0, %v4925
        %v4928 = vsub.s32 32, %v4927
        %v4929 = vshll.u32 %v4920, %v4927
        %v4930 = vshrl.u32 %v4912, %v4928
        %v4931 = vor.u32 %v4929, %v4930
        %v4932 = vsub.s32 4294967266, %v4927
        %v4933 = vadd.s32 %v4932, 127
        %v4934 = vshll.u32 %v4933, 23
        %v4935 = vor.u32 4788187, %v4934
        %v4936 = vand.u32 2147483647, %v4935
        %v4938 = vcvt.s32.f32 %v4931
        %v4939 = vmul.f32 %v4938, %v4936
        %v4940 = vxor.u32 %v4939, 2147483648
        %v4941 = vsel %vm4858, %v4940, %v4939
        %v4942 = vsub.s32 4, %v4918
        %v4943 = vsel %vm4858, %v4942, %v4918
        %v4944 = vsel %vm4857, %v2658, %v4941
        %v4945 = vsel %vm4857, 0, %v4943
        %v4946 = vcosq.f32.pop %v4944
        %v4947 = vsinq.f32.pop %v4944
        %vm4948 = vweird.f32 %v2658
        %v4949 = vand.u32 %v4945, 3
        %vm4950 = vcmp.lt.s32.totalorder %v4949, 2
        %vm4951 = vcmp.eq.s32.totalorder %v4949, 0
        %v4952 = vxor.u32 %v4947, 2147483648
        %v4953 = vsel %vm4951, %v4946, %v4952
        %vm4954 = vcmp.eq.s32.totalorder %v4949, 2
        %v4955 = vxor.u32 %v4946, 2147483648
        %v4956 = vsel %vm4954, %v4955, %v4947
        %v4957 = vsel %vm4950, %v4953, %v4956
        %v4958 = vsel %vm4948, nan, %v4957
        %v4959 = vand.u32 2147483647, %v2659
        %vm4960 = vcmp.le.f32.partialorder %v4959, 0.7853982
        %vm4961 = vcmp.lt.s32.totalorder %v2659, 0
        %v4962 = vand.u32 %v2659, 2139095040
        %v4963 = vshrl.u32 %v4962, 23
        %v4964 = vsub.s32 %v4963, 127
        %v4965 = vand.u32 2147483647, %v2659
        %v4966 = vand.u32 %v4965, 8388607
        %v4967 = vor.u32 %v4966, 8388608
        %v4968 = vsub.s32 0, %v4967
        %v4969 = vadd.s32 %v4964, 1
        %vm4970 = vcmp.gt.s32.totalorder %v4969, 0
        %v4971 = vsel %vm4970, %v4969, 0
        %v4972 = vshrl.u32 %v4971, 5
        %v4973 = vand.u32 %v4971, 31
        %v4974 = vsub.s32 32, %v4973
        %v4975 = vshrl.u32 683565275, %v4974
        %v4976 = vshll.u32 683565275, %v4973
        %v4977 = vshrl.u32 2475754826, %v4974
        %v4978 = vor.u32 %v4976, %v4977
        %v4979 = vshll.u32 2475754826, %v4973
        %v4980 = vshrl.u32 2131351028, %v4974
        %v4981 = vor.u32 %v4979, %v4980
        %v4982 = vshll.u32 2131351028, %v4973
        %v4983 = vshrl.u32 2102212464, %v4974
        %v4984 = vor.u32 %v4982, %v4983
        %v4985 = vshll.u32 2102212464, %v4973
        %v4986 = vshrl.u32 920167782, %v4974
        %v4987 = vor.u32 %v4985, %v4986
        %v4988 = vshll.u32 920167782, %v4973
        %v4989 = vshrl.u32 1326507024, %v4974
        %v4990 = vor.u32 %v4988, %v4989
        %vm4991 = vcmp.lt.s32.totalorder %v4972, 1
        %vm4992 = vcmp.lt.s32.totalorder %v4972, 2
        %vm4993 = vcmp.lt.s32.totalorder %v4972, 3
        %vm4994 = vcmp.lt.s32.totalorder %v4972, 4
        %v4995 = vsel %vm4991, %v4975, %v4978
        %v4996 = vsel %vm4994, %v4984, 2102212464
        %v4997 = vsel %vm4993, %v4981, %v4996
        %v4998 = vsel %vm4992, %v4995, %v4997
        %v4999 = vsel %vm4991, %v4978, %v4981
        %v5000 = vsel %vm4994, %v4987, 920167782
        %v5001 = vsel %vm4993, %v4984, %v5000
        %v5002 = vsel %vm4992, %v4999, %v5001
        %v5003 = vsel %vm4991, %v4981, %v4984
        %v5004 = vsel %vm4994, %v4990, 1326507024
        %v5005 = vsel %vm4993, %v4987, %v5004
        %v5006 = vsel %vm4992, %v5003, %v5005
        %v5007 = vshll.u32 %v4967, 8
        %v5008 = vmul.u32.u64.compose %v5007, %v5006
        %v5009 = vextract.low.u32 %v5008
        %v5010 = vextract.high.u32 %v5008
        %v5011 = vmul.u32.u64.compose %v5007, %v5002
        %v5012 = vextract.low.u32 %v5011
        %v5013 = vextract.high.u32 %v5011
        %v5014 = vmul.u32 %v5007, %v4998
        %v5015 = vadd.s32 %v5010, %v5012
        %vm5016 = vc.u32 %v5010, %v5012
        %v5017 = vadd.s32 %v5013, 1
        %v5018 = vsel %vm5016, %v5017, %v5013
        %v5019 = vadd.s32 %v5014, %v5018
        %v5020 = vadd.s32 %v5019, 536870912
        %v5021 = vshrl.u32 %v5020, 30
        %v5022 = vshll.u32 %v5021, 30
        %v5023 = vsub.s32 %v5019, %v5022
        %vm5024 = vcmp.lt.s32.totalorder %v5023, 0
        %v5025 = vsub.s32 0, %v5023
        %v5026 = vsel %vm5024, %v5025, %v5023
        %v5027 = vclz %v5026
        %v5028 = vsub.s32 %v5027, 2
        %vm5029 = vcmp.gt.s32.totalorder 0, %v5028
        %v5030 = vsel %vm5029, 0, %v5028
        %v5031 = vsub.s32 32, %v5030
        %v5032 = vshll.u32 %v5023, %v5030
        %v5033 = vshrl.u32 %v5015, %v5031
        %v5034 = vor.u32 %v5032, %v5033
        %v5035 = vsub.s32 4294967266, %v5030
        %v5036 = vadd.s32 %v5035, 127
        %v5037 = vshll.u32 %v5036, 23
        %v5038 = vor.u32 4788187, %v5037
        %v5039 = vand.u32 2147483647, %v5038
        %v5041 = vcvt.s32.f32 %v5034
        %v5042 = vmul.f32 %v5041, %v5039
        %v5043 = vxor.u32 %v5042, 2147483648
        %v5044 = vsel %vm4961, %v5043, %v5042
        %v5045 = vsub.s32 4, %v5021
        %v5046 = vsel %vm4961, %v5045, %v5021
        %v5047 = vsel %vm4960, %v2659, %v5044
        %v5048 = vsel %vm4960, 0, %v5046
        %v5049 = vcosq.f32.pop %v5047
        %v5050 = vsinq.f32.pop %v5047
        %vm5051 = vweird.f32 %v2659
        %v5052 = vand.u32 %v5048, 3
        %vm5053 = vcmp.lt.s32.totalorder %v5052, 2
        %vm5054 = vcmp.eq.s32.totalorder %v5052, 0
        %v5055 = vxor.u32 %v5050, 2147483648
        %v5056 = vsel %vm5054, %v5049, %v5055
        %vm5057 = vcmp.eq.s32.totalorder %v5052, 2
        %v5058 = vxor.u32 %v5049, 2147483648
        %v5059 = vsel %vm5057, %v5058, %v5050
        %v5060 = vsel %vm5053, %v5056, %v5059
        %v5061 = vsel %vm5051, nan, %v5060
        %v5062 = vand.u32 2147483647, %v2660
        %vm5063 = vcmp.le.f32.partialorder %v5062, 0.7853982
        %vm5064 = vcmp.lt.s32.totalorder %v2660, 0
        %v5065 = vand.u32 %v2660, 2139095040
        %v5066 = vshrl.u32 %v5065, 23
        %v5067 = vsub.s32 %v5066, 127
        %v5068 = vand.u32 2147483647, %v2660
        %v5069 = vand.u32 %v5068, 8388607
        %v5070 = vor.u32 %v5069, 8388608
        %v5071 = vsub.s32 0, %v5070
        %v5072 = vadd.s32 %v5067, 1
        %vm5073 = vcmp.gt.s32.totalorder %v5072, 0
        %v5074 = vsel %vm5073, %v5072, 0
        %v5075 = vshrl.u32 %v5074, 5
        %v5076 = vand.u32 %v5074, 31
        %v5077 = vsub.s32 32, %v5076
        %v5078 = vshrl.u32 683565275, %v5077
        %v5079 = vshll.u32 683565275, %v5076
        %v5080 = vshrl.u32 2475754826, %v5077
        %v5081 = vor.u32 %v5079, %v5080
        %v5082 = vshll.u32 2475754826, %v5076
        %v5083 = vshrl.u32 2131351028, %v5077
        %v5084 = vor.u32 %v5082, %v5083
        %v5085 = vshll.u32 2131351028, %v5076
        %v5086 = vshrl.u32 2102212464, %v5077
        %v5087 = vor.u32 %v5085, %v5086
        %v5088 = vshll.u32 2102212464, %v5076
        %v5089 = vshrl.u32 920167782, %v5077
        %v5090 = vor.u32 %v5088, %v5089
        %v5091 = vshll.u32 920167782, %v5076
        %v5092 = vshrl.u32 1326507024, %v5077
        %v5093 = vor.u32 %v5091, %v5092
        %vm5094 = vcmp.lt.s32.totalorder %v5075, 1
        %vm5095 = vcmp.lt.s32.totalorder %v5075, 2
        %vm5096 = vcmp.lt.s32.totalorder %v5075, 3
        %vm5097 = vcmp.lt.s32.totalorder %v5075, 4
        %v5098 = vsel %vm5094, %v5078, %v5081
        %v5099 = vsel %vm5097, %v5087, 2102212464
        %v5100 = vsel %vm5096, %v5084, %v5099
        %v5101 = vsel %vm5095, %v5098, %v5100
        %v5102 = vsel %vm5094, %v5081, %v5084
        %v5103 = vsel %vm5097, %v5090, 920167782
        %v5104 = vsel %vm5096, %v5087, %v5103
        %v5105 = vsel %vm5095, %v5102, %v5104
        %v5106 = vsel %vm5094, %v5084, %v5087
        %v5107 = vsel %vm5097, %v5093, 1326507024
        %v5108 = vsel %vm5096, %v5090, %v5107
        %v5109 = vsel %vm5095, %v5106, %v5108
        %v5110 = vshll.u32 %v5070, 8
        %v5111 = vmul.u32.u64.compose %v5110, %v5109
        %v5112 = vextract.low.u32 %v5111
        %v5113 = vextract.high.u32 %v5111
        %v5114 = vmul.u32.u64.compose %v5110, %v5105
        %v5115 = vextract.low.u32 %v5114
        %v5116 = vextract.high.u32 %v5114
        %v5117 = vmul.u32 %v5110, %v5101
        %v5118 = vadd.s32 %v5113, %v5115
        %vm5119 = vc.u32 %v5113, %v5115
        %v5120 = vadd.s32 %v5116, 1
        %v5121 = vsel %vm5119, %v5120, %v5116
        %v5122 = vadd.s32 %v5117, %v5121
        %v5123 = vadd.s32 %v5122, 536870912
        %v5124 = vshrl.u32 %v5123, 30
        %v5125 = vshll.u32 %v5124, 30
        %v5126 = vsub.s32 %v5122, %v5125
        %vm5127 = vcmp.lt.s32.totalorder %v5126, 0
        %v5128 = vsub.s32 0, %v5126
        %v5129 = vsel %vm5127, %v5128, %v5126
        %v5130 = vclz %v5129
        %v5131 = vsub.s32 %v5130, 2
        %vm5132 = vcmp.gt.s32.totalorder 0, %v5131
        %v5133 = vsel %vm5132, 0, %v5131
        %v5134 = vsub.s32 32, %v5133
        %v5135 = vshll.u32 %v5126, %v5133
        %v5136 = vshrl.u32 %v5118, %v5134
        %v5137 = vor.u32 %v5135, %v5136
        %v5138 = vsub.s32 4294967266, %v5133
        %v5139 = vadd.s32 %v5138, 127
        %v5140 = vshll.u32 %v5139, 23
        %v5141 = vor.u32 4788187, %v5140
        %v5142 = vand.u32 2147483647, %v5141
        %v5144 = vcvt.s32.f32 %v5137
        %v5145 = vmul.f32 %v5144, %v5142
        %v5146 = vxor.u32 %v5145, 2147483648
        %v5147 = vsel %vm5064, %v5146, %v5145
        %v5148 = vsub.s32 4, %v5124
        %v5149 = vsel %vm5064, %v5148, %v5124
        %v5150 = vsel %vm5063, %v2660, %v5147
        %v5151 = vsel %vm5063, 0, %v5149
        %v5152 = vcosq.f32.pop %v5150
        %v5153 = vsinq.f32.pop %v5150
        %vm5154 = vweird.f32 %v2660
        %v5155 = vand.u32 %v5151, 3
        %vm5156 = vcmp.lt.s32.totalorder %v5155, 2
        %vm5157 = vcmp.eq.s32.totalorder %v5155, 0
        %v5158 = vxor.u32 %v5153, 2147483648
        %v5159 = vsel %vm5157, %v5152, %v5158
        %vm5160 = vcmp.eq.s32.totalorder %v5155, 2
        %v5161 = vxor.u32 %v5152, 2147483648
        %v5162 = vsel %vm5160, %v5161, %v5153
        %v5163 = vsel %vm5156, %v5159, %v5162
        %v5164 = vsel %vm5154, nan, %v5163
        %v5165 = vand.u32 2147483647, %v2661
        %vm5166 = vcmp.le.f32.partialorder %v5165, 0.7853982
        %vm5167 = vcmp.lt.s32.totalorder %v2661, 0
        %v5168 = vand.u32 %v2661, 2139095040
        %v5169 = vshrl.u32 %v5168, 23
        %v5170 = vsub.s32 %v5169, 127
        %v5171 = vand.u32 2147483647, %v2661
        %v5172 = vand.u32 %v5171, 8388607
        %v5173 = vor.u32 %v5172, 8388608
        %v5174 = vsub.s32 0, %v5173
        %v5175 = vadd.s32 %v5170, 1
        %vm5176 = vcmp.gt.s32.totalorder %v5175, 0
        %v5177 = vsel %vm5176, %v5175, 0
        %v5178 = vshrl.u32 %v5177, 5
        %v5179 = vand.u32 %v5177, 31
        %v5180 = vsub.s32 32, %v5179
        %v5181 = vshrl.u32 683565275, %v5180
        %v5182 = vshll.u32 683565275, %v5179
        %v5183 = vshrl.u32 2475754826, %v5180
        %v5184 = vor.u32 %v5182, %v5183
        %v5185 = vshll.u32 2475754826, %v5179
        %v5186 = vshrl.u32 2131351028, %v5180
        %v5187 = vor.u32 %v5185, %v5186
        %v5188 = vshll.u32 2131351028, %v5179
        %v5189 = vshrl.u32 2102212464, %v5180
        %v5190 = vor.u32 %v5188, %v5189
        %v5191 = vshll.u32 2102212464, %v5179
        %v5192 = vshrl.u32 920167782, %v5180
        %v5193 = vor.u32 %v5191, %v5192
        %v5194 = vshll.u32 920167782, %v5179
        %v5195 = vshrl.u32 1326507024, %v5180
        %v5196 = vor.u32 %v5194, %v5195
        %vm5197 = vcmp.lt.s32.totalorder %v5178, 1
        %vm5198 = vcmp.lt.s32.totalorder %v5178, 2
        %vm5199 = vcmp.lt.s32.totalorder %v5178, 3
        %vm5200 = vcmp.lt.s32.totalorder %v5178, 4
        %v5201 = vsel %vm5197, %v5181, %v5184
        %v5202 = vsel %vm5200, %v5190, 2102212464
        %v5203 = vsel %vm5199, %v5187, %v5202
        %v5204 = vsel %vm5198, %v5201, %v5203
        %v5205 = vsel %vm5197, %v5184, %v5187
        %v5206 = vsel %vm5200, %v5193, 920167782
        %v5207 = vsel %vm5199, %v5190, %v5206
        %v5208 = vsel %vm5198, %v5205, %v5207
        %v5209 = vsel %vm5197, %v5187, %v5190
        %v5210 = vsel %vm5200, %v5196, 1326507024
        %v5211 = vsel %vm5199, %v5193, %v5210
        %v5212 = vsel %vm5198, %v5209, %v5211
        %v5213 = vshll.u32 %v5173, 8
        %v5214 = vmul.u32.u64.compose %v5213, %v5212
        %v5215 = vextract.low.u32 %v5214
        %v5216 = vextract.high.u32 %v5214
        %v5217 = vmul.u32.u64.compose %v5213, %v5208
        %v5218 = vextract.low.u32 %v5217
        %v5219 = vextract.high.u32 %v5217
        %v5220 = vmul.u32 %v5213, %v5204
        %v5221 = vadd.s32 %v5216, %v5218
        %vm5222 = vc.u32 %v5216, %v5218
        %v5223 = vadd.s32 %v5219, 1
        %v5224 = vsel %vm5222, %v5223, %v5219
        %v5225 = vadd.s32 %v5220, %v5224
        %v5226 = vadd.s32 %v5225, 536870912
        %v5227 = vshrl.u32 %v5226, 30
        %v5228 = vshll.u32 %v5227, 30
        %v5229 = vsub.s32 %v5225, %v5228
        %vm5230 = vcmp.lt.s32.totalorder %v5229, 0
        %v5231 = vsub.s32 0, %v5229
        %v5232 = vsel %vm5230, %v5231, %v5229
        %v5233 = vclz %v5232
        %v5234 = vsub.s32 %v5233, 2
        %vm5235 = vcmp.gt.s32.totalorder 0, %v5234
        %v5236 = vsel %vm5235, 0, %v5234
        %v5237 = vsub.s32 32, %v5236
        %v5238 = vshll.u32 %v5229, %v5236
        %v5239 = vshrl.u32 %v5221, %v5237
        %v5240 = vor.u32 %v5238, %v5239
        %v5241 = vsub.s32 4294967266, %v5236
        %v5242 = vadd.s32 %v5241, 127
        %v5243 = vshll.u32 %v5242, 23
        %v5244 = vor.u32 4788187, %v5243
        %v5245 = vand.u32 2147483647, %v5244
        %v5247 = vcvt.s32.f32 %v5240
        %v5248 = vmul.f32 %v5247, %v5245
        %v5249 = vxor.u32 %v5248, 2147483648
        %v5250 = vsel %vm5167, %v5249, %v5248
        %v5251 = vsub.s32 4, %v5227
        %v5252 = vsel %vm5167, %v5251, %v5227
        %v5253 = vsel %vm5166, %v2661, %v5250
        %v5254 = vsel %vm5166, 0, %v5252
        %v5255 = vcosq.f32.pop %v5253
        %v5256 = vsinq.f32.pop %v5253
        %vm5257 = vweird.f32 %v2661
        %v5258 = vand.u32 %v5254, 3
        %vm5259 = vcmp.lt.s32.totalorder %v5258, 2
        %vm5260 = vcmp.eq.s32.totalorder %v5258, 0
        %v5261 = vxor.u32 %v5256, 2147483648
        %v5262 = vsel %vm5260, %v5255, %v5261
        %vm5263 = vcmp.eq.s32.totalorder %v5258, 2
        %v5264 = vxor.u32 %v5255, 2147483648
        %v5265 = vsel %vm5263, %v5264, %v5256
        %v5266 = vsel %vm5259, %v5262, %v5265
        %v5267 = vsel %vm5257, nan, %v5266
        %v5268 = vand.u32 2147483647, %v2662
        %vm5269 = vcmp.le.f32.partialorder %v5268, 0.7853982
        %vm5270 = vcmp.lt.s32.totalorder %v2662, 0
        %v5271 = vand.u32 %v2662, 2139095040
        %v5272 = vshrl.u32 %v5271, 23
        %v5273 = vsub.s32 %v5272, 127
        %v5274 = vand.u32 2147483647, %v2662
        %v5275 = vand.u32 %v5274, 8388607
        %v5276 = vor.u32 %v5275, 8388608
        %v5277 = vsub.s32 0, %v5276
        %v5278 = vadd.s32 %v5273, 1
        %vm5279 = vcmp.gt.s32.totalorder %v5278, 0
        %v5280 = vsel %vm5279, %v5278, 0
        %v5281 = vshrl.u32 %v5280, 5
        %v5282 = vand.u32 %v5280, 31
        %v5283 = vsub.s32 32, %v5282
        %v5284 = vshrl.u32 683565275, %v5283
        %v5285 = vshll.u32 683565275, %v5282
        %v5286 = vshrl.u32 2475754826, %v5283
        %v5287 = vor.u32 %v5285, %v5286
        %v5288 = vshll.u32 2475754826, %v5282
        %v5289 = vshrl.u32 2131351028, %v5283
        %v5290 = vor.u32 %v5288, %v5289
        %v5291 = vshll.u32 2131351028, %v5282
        %v5292 = vshrl.u32 2102212464, %v5283
        %v5293 = vor.u32 %v5291, %v5292
        %v5294 = vshll.u32 2102212464, %v5282
        %v5295 = vshrl.u32 920167782, %v5283
        %v5296 = vor.u32 %v5294, %v5295
        %v5297 = vshll.u32 920167782, %v5282
        %v5298 = vshrl.u32 1326507024, %v5283
        %v5299 = vor.u32 %v5297, %v5298
        %vm5300 = vcmp.lt.s32.totalorder %v5281, 1
        %vm5301 = vcmp.lt.s32.totalorder %v5281, 2
        %vm5302 = vcmp.lt.s32.totalorder %v5281, 3
        %vm5303 = vcmp.lt.s32.totalorder %v5281, 4
        %v5304 = vsel %vm5300, %v5284, %v5287
        %v5305 = vsel %vm5303, %v5293, 2102212464
        %v5306 = vsel %vm5302, %v5290, %v5305
        %v5307 = vsel %vm5301, %v5304, %v5306
        %v5308 = vsel %vm5300, %v5287, %v5290
        %v5309 = vsel %vm5303, %v5296, 920167782
        %v5310 = vsel %vm5302, %v5293, %v5309
        %v5311 = vsel %vm5301, %v5308, %v5310
        %v5312 = vsel %vm5300, %v5290, %v5293
        %v5313 = vsel %vm5303, %v5299, 1326507024
        %v5314 = vsel %vm5302, %v5296, %v5313
        %v5315 = vsel %vm5301, %v5312, %v5314
        %v5316 = vshll.u32 %v5276, 8
        %v5317 = vmul.u32.u64.compose %v5316, %v5315
        %v5318 = vextract.low.u32 %v5317
        %v5319 = vextract.high.u32 %v5317
        %v5320 = vmul.u32.u64.compose %v5316, %v5311
        %v5321 = vextract.low.u32 %v5320
        %v5322 = vextract.high.u32 %v5320
        %v5323 = vmul.u32 %v5316, %v5307
        %v5324 = vadd.s32 %v5319, %v5321
        %vm5325 = vc.u32 %v5319, %v5321
        %v5326 = vadd.s32 %v5322, 1
        %v5327 = vsel %vm5325, %v5326, %v5322
        %v5328 = vadd.s32 %v5323, %v5327
        %v5329 = vadd.s32 %v5328, 536870912
        %v5330 = vshrl.u32 %v5329, 30
        %v5331 = vshll.u32 %v5330, 30
        %v5332 = vsub.s32 %v5328, %v5331
        %vm5333 = vcmp.lt.s32.totalorder %v5332, 0
        %v5334 = vsub.s32 0, %v5332
        %v5335 = vsel %vm5333, %v5334, %v5332
        %v5336 = vclz %v5335
        %v5337 = vsub.s32 %v5336, 2
        %vm5338 = vcmp.gt.s32.totalorder 0, %v5337
        %v5339 = vsel %vm5338, 0, %v5337
        %v5340 = vsub.s32 32, %v5339
        %v5341 = vshll.u32 %v5332, %v5339
        %v5342 = vshrl.u32 %v5324, %v5340
        %v5343 = vor.u32 %v5341, %v5342
        %v5344 = vsub.s32 4294967266, %v5339
        %v5345 = vadd.s32 %v5344, 127
        %v5346 = vshll.u32 %v5345, 23
        %v5347 = vor.u32 4788187, %v5346
        %v5348 = vand.u32 2147483647, %v5347
        %v5350 = vcvt.s32.f32 %v5343
        %v5351 = vmul.f32 %v5350, %v5348
        %v5352 = vxor.u32 %v5351, 2147483648
        %v5353 = vsel %vm5270, %v5352, %v5351
        %v5354 = vsub.s32 4, %v5330
        %v5355 = vsel %vm5270, %v5354, %v5330
        %v5356 = vsel %vm5269, %v2662, %v5353
        %v5357 = vsel %vm5269, 0, %v5355
        %v5358 = vcosq.f32.pop %v5356
        %v5359 = vsinq.f32.pop %v5356
        %vm5360 = vweird.f32 %v2662
        %v5361 = vand.u32 %v5357, 3
        %vm5362 = vcmp.lt.s32.totalorder %v5361, 2
        %vm5363 = vcmp.eq.s32.totalorder %v5361, 0
        %v5364 = vxor.u32 %v5359, 2147483648
        %v5365 = vsel %vm5363, %v5358, %v5364
        %vm5366 = vcmp.eq.s32.totalorder %v5361, 2
        %v5367 = vxor.u32 %v5358, 2147483648
        %v5368 = vsel %vm5366, %v5367, %v5359
        %v5369 = vsel %vm5362, %v5365, %v5368
        %v5370 = vsel %vm5360, nan, %v5369
        %v5371 = vand.u32 2147483647, %v2663
        %vm5372 = vcmp.le.f32.partialorder %v5371, 0.7853982
        %vm5373 = vcmp.lt.s32.totalorder %v2663, 0
        %v5374 = vand.u32 %v2663, 2139095040
        %v5375 = vshrl.u32 %v5374, 23
        %v5376 = vsub.s32 %v5375, 127
        %v5377 = vand.u32 2147483647, %v2663
        %v5378 = vand.u32 %v5377, 8388607
        %v5379 = vor.u32 %v5378, 8388608
        %v5380 = vsub.s32 0, %v5379
        %v5381 = vadd.s32 %v5376, 1
        %vm5382 = vcmp.gt.s32.totalorder %v5381, 0
        %v5383 = vsel %vm5382, %v5381, 0
        %v5384 = vshrl.u32 %v5383, 5
        %v5385 = vand.u32 %v5383, 31
        %v5386 = vsub.s32 32, %v5385
        %v5387 = vshrl.u32 683565275, %v5386
        %v5388 = vshll.u32 683565275, %v5385
        %v5389 = vshrl.u32 2475754826, %v5386
        %v5390 = vor.u32 %v5388, %v5389
        %v5391 = vshll.u32 2475754826, %v5385
        %v5392 = vshrl.u32 2131351028, %v5386
        %v5393 = vor.u32 %v5391, %v5392
        %v5394 = vshll.u32 2131351028, %v5385
        %v5395 = vshrl.u32 2102212464, %v5386
        %v5396 = vor.u32 %v5394, %v5395
        %v5397 = vshll.u32 2102212464, %v5385
        %v5398 = vshrl.u32 920167782, %v5386
        %v5399 = vor.u32 %v5397, %v5398
        %v5400 = vshll.u32 920167782, %v5385
        %v5401 = vshrl.u32 1326507024, %v5386
        %v5402 = vor.u32 %v5400, %v5401
        %vm5403 = vcmp.lt.s32.totalorder %v5384, 1
        %vm5404 = vcmp.lt.s32.totalorder %v5384, 2
        %vm5405 = vcmp.lt.s32.totalorder %v5384, 3
        %vm5406 = vcmp.lt.s32.totalorder %v5384, 4
        %v5407 = vsel %vm5403, %v5387, %v5390
        %v5408 = vsel %vm5406, %v5396, 2102212464
        %v5409 = vsel %vm5405, %v5393, %v5408
        %v5410 = vsel %vm5404, %v5407, %v5409
        %v5411 = vsel %vm5403, %v5390, %v5393
        %v5412 = vsel %vm5406, %v5399, 920167782
        %v5413 = vsel %vm5405, %v5396, %v5412
        %v5414 = vsel %vm5404, %v5411, %v5413
        %v5415 = vsel %vm5403, %v5393, %v5396
        %v5416 = vsel %vm5406, %v5402, 1326507024
        %v5417 = vsel %vm5405, %v5399, %v5416
        %v5418 = vsel %vm5404, %v5415, %v5417
        %v5419 = vshll.u32 %v5379, 8
        %v5420 = vmul.u32.u64.compose %v5419, %v5418
        %v5421 = vextract.low.u32 %v5420
        %v5422 = vextract.high.u32 %v5420
        %v5423 = vmul.u32.u64.compose %v5419, %v5414
        %v5424 = vextract.low.u32 %v5423
        %v5425 = vextract.high.u32 %v5423
        %v5426 = vmul.u32 %v5419, %v5410
        %v5427 = vadd.s32 %v5422, %v5424
        %vm5428 = vc.u32 %v5422, %v5424
        %v5429 = vadd.s32 %v5425, 1
        %v5430 = vsel %vm5428, %v5429, %v5425
        %v5431 = vadd.s32 %v5426, %v5430
        %v5432 = vadd.s32 %v5431, 536870912
        %v5433 = vshrl.u32 %v5432, 30
        %v5434 = vshll.u32 %v5433, 30
        %v5435 = vsub.s32 %v5431, %v5434
        %vm5436 = vcmp.lt.s32.totalorder %v5435, 0
        %v5437 = vsub.s32 0, %v5435
        %v5438 = vsel %vm5436, %v5437, %v5435
        %v5439 = vclz %v5438
        %v5440 = vsub.s32 %v5439, 2
        %vm5441 = vcmp.gt.s32.totalorder 0, %v5440
        %v5442 = vsel %vm5441, 0, %v5440
        %v5443 = vsub.s32 32, %v5442
        %v5444 = vshll.u32 %v5435, %v5442
        %v5445 = vshrl.u32 %v5427, %v5443
        %v5446 = vor.u32 %v5444, %v5445
        %v5447 = vsub.s32 4294967266, %v5442
        %v5448 = vadd.s32 %v5447, 127
        %v5449 = vshll.u32 %v5448, 23
        %v5450 = vor.u32 4788187, %v5449
        %v5451 = vand.u32 2147483647, %v5450
        %v5453 = vcvt.s32.f32 %v5446
        %v5454 = vmul.f32 %v5453, %v5451
        %v5455 = vxor.u32 %v5454, 2147483648
        %v5456 = vsel %vm5373, %v5455, %v5454
        %v5457 = vsub.s32 4, %v5433
        %v5458 = vsel %vm5373, %v5457, %v5433
        %v5459 = vsel %vm5372, %v2663, %v5456
        %v5460 = vsel %vm5372, 0, %v5458
        %v5461 = vcosq.f32.pop %v5459
        %v5462 = vsinq.f32.pop %v5459
        %vm5463 = vweird.f32 %v2663
        %v5464 = vand.u32 %v5460, 3
        %vm5465 = vcmp.lt.s32.totalorder %v5464, 2
        %vm5466 = vcmp.eq.s32.totalorder %v5464, 0
        %v5467 = vxor.u32 %v5462, 2147483648
        %v5468 = vsel %vm5466, %v5461, %v5467
        %vm5469 = vcmp.eq.s32.totalorder %v5464, 2
        %v5470 = vxor.u32 %v5461, 2147483648
        %v5471 = vsel %vm5469, %v5470, %v5462
        %v5472 = vsel %vm5465, %v5468, %v5471
        %v5473 = vsel %vm5463, nan, %v5472
        %v5474 = vand.u32 2147483647, %v2664
        %vm5475 = vcmp.le.f32.partialorder %v5474, 0.7853982
        %vm5476 = vcmp.lt.s32.totalorder %v2664, 0
        %v5477 = vand.u32 %v2664, 2139095040
        %v5478 = vshrl.u32 %v5477, 23
        %v5479 = vsub.s32 %v5478, 127
        %v5480 = vand.u32 2147483647, %v2664
        %v5481 = vand.u32 %v5480, 8388607
        %v5482 = vor.u32 %v5481, 8388608
        %v5483 = vsub.s32 0, %v5482
        %v5484 = vadd.s32 %v5479, 1
        %vm5485 = vcmp.gt.s32.totalorder %v5484, 0
        %v5486 = vsel %vm5485, %v5484, 0
        %v5487 = vshrl.u32 %v5486, 5
        %v5488 = vand.u32 %v5486, 31
        %v5489 = vsub.s32 32, %v5488
        %v5490 = vshrl.u32 683565275, %v5489
        %v5491 = vshll.u32 683565275, %v5488
        %v5492 = vshrl.u32 2475754826, %v5489
        %v5493 = vor.u32 %v5491, %v5492
        %v5494 = vshll.u32 2475754826, %v5488
        %v5495 = vshrl.u32 2131351028, %v5489
        %v5496 = vor.u32 %v5494, %v5495
        %v5497 = vshll.u32 2131351028, %v5488
        %v5498 = vshrl.u32 2102212464, %v5489
        %v5499 = vor.u32 %v5497, %v5498
        %v5500 = vshll.u32 2102212464, %v5488
        %v5501 = vshrl.u32 920167782, %v5489
        %v5502 = vor.u32 %v5500, %v5501
        %v5503 = vshll.u32 920167782, %v5488
        %v5504 = vshrl.u32 1326507024, %v5489
        %v5505 = vor.u32 %v5503, %v5504
        %vm5506 = vcmp.lt.s32.totalorder %v5487, 1
        %vm5507 = vcmp.lt.s32.totalorder %v5487, 2
        %vm5508 = vcmp.lt.s32.totalorder %v5487, 3
        %vm5509 = vcmp.lt.s32.totalorder %v5487, 4
        %v5510 = vsel %vm5506, %v5490, %v5493
        %v5511 = vsel %vm5509, %v5499, 2102212464
        %v5512 = vsel %vm5508, %v5496, %v5511
        %v5513 = vsel %vm5507, %v5510, %v5512
        %v5514 = vsel %vm5506, %v5493, %v5496
        %v5515 = vsel %vm5509, %v5502, 920167782
        %v5516 = vsel %vm5508, %v5499, %v5515
        %v5517 = vsel %vm5507, %v5514, %v5516
        %v5518 = vsel %vm5506, %v5496, %v5499
        %v5519 = vsel %vm5509, %v5505, 1326507024
        %v5520 = vsel %vm5508, %v5502, %v5519
        %v5521 = vsel %vm5507, %v5518, %v5520
        %v5522 = vshll.u32 %v5482, 8
        %v5523 = vmul.u32.u64.compose %v5522, %v5521
        %v5524 = vextract.low.u32 %v5523
        %v5525 = vextract.high.u32 %v5523
        %v5526 = vmul.u32.u64.compose %v5522, %v5517
        %v5527 = vextract.low.u32 %v5526
        %v5528 = vextract.high.u32 %v5526
        %v5529 = vmul.u32 %v5522, %v5513
        %v5530 = vadd.s32 %v5525, %v5527
        %vm5531 = vc.u32 %v5525, %v5527
        %v5532 = vadd.s32 %v5528, 1
        %v5533 = vsel %vm5531, %v5532, %v5528
        %v5534 = vadd.s32 %v5529, %v5533
        %v5535 = vadd.s32 %v5534, 536870912
        %v5536 = vshrl.u32 %v5535, 30
        %v5537 = vshll.u32 %v5536, 30
        %v5538 = vsub.s32 %v5534, %v5537
        %vm5539 = vcmp.lt.s32.totalorder %v5538, 0
        %v5540 = vsub.s32 0, %v5538
        %v5541 = vsel %vm5539, %v5540, %v5538
        %v5542 = vclz %v5541
        %v5543 = vsub.s32 %v5542, 2
        %vm5544 = vcmp.gt.s32.totalorder 0, %v5543
        %v5545 = vsel %vm5544, 0, %v5543
        %v5546 = vsub.s32 32, %v5545
        %v5547 = vshll.u32 %v5538, %v5545
        %v5548 = vshrl.u32 %v5530, %v5546
        %v5549 = vor.u32 %v5547, %v5548
        %v5550 = vsub.s32 4294967266, %v5545
        %v5551 = vadd.s32 %v5550, 127
        %v5552 = vshll.u32 %v5551, 23
        %v5553 = vor.u32 4788187, %v5552
        %v5554 = vand.u32 2147483647, %v5553
        %v5556 = vcvt.s32.f32 %v5549
        %v5557 = vmul.f32 %v5556, %v5554
        %v5558 = vxor.u32 %v5557, 2147483648
        %v5559 = vsel %vm5476, %v5558, %v5557
        %v5560 = vsub.s32 4, %v5536
        %v5561 = vsel %vm5476, %v5560, %v5536
        %v5562 = vsel %vm5475, %v2664, %v5559
        %v5563 = vsel %vm5475, 0, %v5561
        %v5564 = vcosq.f32.pop %v5562
        %v5565 = vsinq.f32.pop %v5562
        %vm5566 = vweird.f32 %v2664
        %v5567 = vand.u32 %v5563, 3
        %vm5568 = vcmp.lt.s32.totalorder %v5567, 2
        %vm5569 = vcmp.eq.s32.totalorder %v5567, 0
        %v5570 = vxor.u32 %v5565, 2147483648
        %v5571 = vsel %vm5569, %v5564, %v5570
        %vm5572 = vcmp.eq.s32.totalorder %v5567, 2
        %v5573 = vxor.u32 %v5564, 2147483648
        %v5574 = vsel %vm5572, %v5573, %v5565
        %v5575 = vsel %vm5568, %v5571, %v5574
        %v5576 = vsel %vm5566, nan, %v5575
        %v5577 = vand.u32 2147483647, %v2665
        %vm5578 = vcmp.le.f32.partialorder %v5577, 0.7853982
        %vm5579 = vcmp.lt.s32.totalorder %v2665, 0
        %v5580 = vand.u32 %v2665, 2139095040
        %v5581 = vshrl.u32 %v5580, 23
        %v5582 = vsub.s32 %v5581, 127
        %v5583 = vand.u32 2147483647, %v2665
        %v5584 = vand.u32 %v5583, 8388607
        %v5585 = vor.u32 %v5584, 8388608
        %v5586 = vsub.s32 0, %v5585
        %v5587 = vadd.s32 %v5582, 1
        %vm5588 = vcmp.gt.s32.totalorder %v5587, 0
        %v5589 = vsel %vm5588, %v5587, 0
        %v5590 = vshrl.u32 %v5589, 5
        %v5591 = vand.u32 %v5589, 31
        %v5592 = vsub.s32 32, %v5591
        %v5593 = vshrl.u32 683565275, %v5592
        %v5594 = vshll.u32 683565275, %v5591
        %v5595 = vshrl.u32 2475754826, %v5592
        %v5596 = vor.u32 %v5594, %v5595
        %v5597 = vshll.u32 2475754826, %v5591
        %v5598 = vshrl.u32 2131351028, %v5592
        %v5599 = vor.u32 %v5597, %v5598
        %v5600 = vshll.u32 2131351028, %v5591
        %v5601 = vshrl.u32 2102212464, %v5592
        %v5602 = vor.u32 %v5600, %v5601
        %v5603 = vshll.u32 2102212464, %v5591
        %v5604 = vshrl.u32 920167782, %v5592
        %v5605 = vor.u32 %v5603, %v5604
        %v5606 = vshll.u32 920167782, %v5591
        %v5607 = vshrl.u32 1326507024, %v5592
        %v5608 = vor.u32 %v5606, %v5607
        %vm5609 = vcmp.lt.s32.totalorder %v5590, 1
        %vm5610 = vcmp.lt.s32.totalorder %v5590, 2
        %vm5611 = vcmp.lt.s32.totalorder %v5590, 3
        %vm5612 = vcmp.lt.s32.totalorder %v5590, 4
        %v5613 = vsel %vm5609, %v5593, %v5596
        %v5614 = vsel %vm5612, %v5602, 2102212464
        %v5615 = vsel %vm5611, %v5599, %v5614
        %v5616 = vsel %vm5610, %v5613, %v5615
        %v5617 = vsel %vm5609, %v5596, %v5599
        %v5618 = vsel %vm5612, %v5605, 920167782
        %v5619 = vsel %vm5611, %v5602, %v5618
        %v5620 = vsel %vm5610, %v5617, %v5619
        %v5621 = vsel %vm5609, %v5599, %v5602
        %v5622 = vsel %vm5612, %v5608, 1326507024
        %v5623 = vsel %vm5611, %v5605, %v5622
        %v5624 = vsel %vm5610, %v5621, %v5623
        %v5625 = vshll.u32 %v5585, 8
        %v5626 = vmul.u32.u64.compose %v5625, %v5624
        %v5627 = vextract.low.u32 %v5626
        %v5628 = vextract.high.u32 %v5626
        %v5629 = vmul.u32.u64.compose %v5625, %v5620
        %v5630 = vextract.low.u32 %v5629
        %v5631 = vextract.high.u32 %v5629
        %v5632 = vmul.u32 %v5625, %v5616
        %v5633 = vadd.s32 %v5628, %v5630
        %vm5634 = vc.u32 %v5628, %v5630
        %v5635 = vadd.s32 %v5631, 1
        %v5636 = vsel %vm5634, %v5635, %v5631
        %v5637 = vadd.s32 %v5632, %v5636
        %v5638 = vadd.s32 %v5637, 536870912
        %v5639 = vshrl.u32 %v5638, 30
        %v5640 = vshll.u32 %v5639, 30
        %v5641 = vsub.s32 %v5637, %v5640
        %vm5642 = vcmp.lt.s32.totalorder %v5641, 0
        %v5643 = vsub.s32 0, %v5641
        %v5644 = vsel %vm5642, %v5643, %v5641
        %v5645 = vclz %v5644
        %v5646 = vsub.s32 %v5645, 2
        %vm5647 = vcmp.gt.s32.totalorder 0, %v5646
        %v5648 = vsel %vm5647, 0, %v5646
        %v5649 = vsub.s32 32, %v5648
        %v5650 = vshll.u32 %v5641, %v5648
        %v5651 = vshrl.u32 %v5633, %v5649
        %v5652 = vor.u32 %v5650, %v5651
        %v5653 = vsub.s32 4294967266, %v5648
        %v5654 = vadd.s32 %v5653, 127
        %v5655 = vshll.u32 %v5654, 23
        %v5656 = vor.u32 4788187, %v5655
        %v5657 = vand.u32 2147483647, %v5656
        %v5659 = vcvt.s32.f32 %v5652
        %v5660 = vmul.f32 %v5659, %v5657
        %v5661 = vxor.u32 %v5660, 2147483648
        %v5662 = vsel %vm5579, %v5661, %v5660
        %v5663 = vsub.s32 4, %v5639
        %v5664 = vsel %vm5579, %v5663, %v5639
        %v5665 = vsel %vm5578, %v2665, %v5662
        %v5666 = vsel %vm5578, 0, %v5664
        %v5667 = vcosq.f32.pop %v5665
        %v5668 = vsinq.f32.pop %v5665
        %vm5669 = vweird.f32 %v2665
        %v5670 = vand.u32 %v5666, 3
        %vm5671 = vcmp.lt.s32.totalorder %v5670, 2
        %vm5672 = vcmp.eq.s32.totalorder %v5670, 0
        %v5673 = vxor.u32 %v5668, 2147483648
        %v5674 = vsel %vm5672, %v5667, %v5673
        %vm5675 = vcmp.eq.s32.totalorder %v5670, 2
        %v5676 = vxor.u32 %v5667, 2147483648
        %v5677 = vsel %vm5675, %v5676, %v5668
        %v5678 = vsel %vm5671, %v5674, %v5677
        %v5679 = vsel %vm5669, nan, %v5678
        %v5680 = vand.u32 2147483647, %v2666
        %vm5681 = vcmp.le.f32.partialorder %v5680, 0.7853982
        %vm5682 = vcmp.lt.s32.totalorder %v2666, 0
        %v5683 = vand.u32 %v2666, 2139095040
        %v5684 = vshrl.u32 %v5683, 23
        %v5685 = vsub.s32 %v5684, 127
        %v5686 = vand.u32 2147483647, %v2666
        %v5687 = vand.u32 %v5686, 8388607
        %v5688 = vor.u32 %v5687, 8388608
        %v5689 = vsub.s32 0, %v5688
        %v5690 = vadd.s32 %v5685, 1
        %vm5691 = vcmp.gt.s32.totalorder %v5690, 0
        %v5692 = vsel %vm5691, %v5690, 0
        %v5693 = vshrl.u32 %v5692, 5
        %v5694 = vand.u32 %v5692, 31
        %v5695 = vsub.s32 32, %v5694
        %v5696 = vshrl.u32 683565275, %v5695
        %v5697 = vshll.u32 683565275, %v5694
        %v5698 = vshrl.u32 2475754826, %v5695
        %v5699 = vor.u32 %v5697, %v5698
        %v5700 = vshll.u32 2475754826, %v5694
        %v5701 = vshrl.u32 2131351028, %v5695
        %v5702 = vor.u32 %v5700, %v5701
        %v5703 = vshll.u32 2131351028, %v5694
        %v5704 = vshrl.u32 2102212464, %v5695
        %v5705 = vor.u32 %v5703, %v5704
        %v5706 = vshll.u32 2102212464, %v5694
        %v5707 = vshrl.u32 920167782, %v5695
        %v5708 = vor.u32 %v5706, %v5707
        %v5709 = vshll.u32 920167782, %v5694
        %v5710 = vshrl.u32 1326507024, %v5695
        %v5711 = vor.u32 %v5709, %v5710
        %vm5712 = vcmp.lt.s32.totalorder %v5693, 1
        %vm5713 = vcmp.lt.s32.totalorder %v5693, 2
        %vm5714 = vcmp.lt.s32.totalorder %v5693, 3
        %vm5715 = vcmp.lt.s32.totalorder %v5693, 4
        %v5716 = vsel %vm5712, %v5696, %v5699
        %v5717 = vsel %vm5715, %v5705, 2102212464
        %v5718 = vsel %vm5714, %v5702, %v5717
        %v5719 = vsel %vm5713, %v5716, %v5718
        %v5720 = vsel %vm5712, %v5699, %v5702
        %v5721 = vsel %vm5715, %v5708, 920167782
        %v5722 = vsel %vm5714, %v5705, %v5721
        %v5723 = vsel %vm5713, %v5720, %v5722
        %v5724 = vsel %vm5712, %v5702, %v5705
        %v5725 = vsel %vm5715, %v5711, 1326507024
        %v5726 = vsel %vm5714, %v5708, %v5725
        %v5727 = vsel %vm5713, %v5724, %v5726
        %v5728 = vshll.u32 %v5688, 8
        %v5729 = vmul.u32.u64.compose %v5728, %v5727
        %v5730 = vextract.low.u32 %v5729
        %v5731 = vextract.high.u32 %v5729
        %v5732 = vmul.u32.u64.compose %v5728, %v5723
        %v5733 = vextract.low.u32 %v5732
        %v5734 = vextract.high.u32 %v5732
        %v5735 = vmul.u32 %v5728, %v5719
        %v5736 = vadd.s32 %v5731, %v5733
        %vm5737 = vc.u32 %v5731, %v5733
        %v5738 = vadd.s32 %v5734, 1
        %v5739 = vsel %vm5737, %v5738, %v5734
        %v5740 = vadd.s32 %v5735, %v5739
        %v5741 = vadd.s32 %v5740, 536870912
        %v5742 = vshrl.u32 %v5741, 30
        %v5743 = vshll.u32 %v5742, 30
        %v5744 = vsub.s32 %v5740, %v5743
        %vm5745 = vcmp.lt.s32.totalorder %v5744, 0
        %v5746 = vsub.s32 0, %v5744
        %v5747 = vsel %vm5745, %v5746, %v5744
        %v5748 = vclz %v5747
        %v5749 = vsub.s32 %v5748, 2
        %vm5750 = vcmp.gt.s32.totalorder 0, %v5749
        %v5751 = vsel %vm5750, 0, %v5749
        %v5752 = vsub.s32 32, %v5751
        %v5753 = vshll.u32 %v5744, %v5751
        %v5754 = vshrl.u32 %v5736, %v5752
        %v5755 = vor.u32 %v5753, %v5754
        %v5756 = vsub.s32 4294967266, %v5751
        %v5757 = vadd.s32 %v5756, 127
        %v5758 = vshll.u32 %v5757, 23
        %v5759 = vor.u32 4788187, %v5758
        %v5760 = vand.u32 2147483647, %v5759
        %v5762 = vcvt.s32.f32 %v5755
        %v5763 = vmul.f32 %v5762, %v5760
        %v5764 = vxor.u32 %v5763, 2147483648
        %v5765 = vsel %vm5682, %v5764, %v5763
        %v5766 = vsub.s32 4, %v5742
        %v5767 = vsel %vm5682, %v5766, %v5742
        %v5768 = vsel %vm5681, %v2666, %v5765
        %v5769 = vsel %vm5681, 0, %v5767
        %v5770 = vcosq.f32.pop %v5768
        %v5771 = vsinq.f32.pop %v5768
        %vm5772 = vweird.f32 %v2666
        %v5773 = vand.u32 %v5769, 3
        %vm5774 = vcmp.lt.s32.totalorder %v5773, 2
        %vm5775 = vcmp.eq.s32.totalorder %v5773, 0
        %v5776 = vxor.u32 %v5771, 2147483648
        %v5777 = vsel %vm5775, %v5770, %v5776
        %vm5778 = vcmp.eq.s32.totalorder %v5773, 2
        %v5779 = vxor.u32 %v5770, 2147483648
        %v5780 = vsel %vm5778, %v5779, %v5771
        %v5781 = vsel %vm5774, %v5777, %v5780
        %v5782 = vsel %vm5772, nan, %v5781
        %v5783 = vand.u32 2147483647, %v2667
        %vm5784 = vcmp.le.f32.partialorder %v5783, 0.7853982
        %vm5785 = vcmp.lt.s32.totalorder %v2667, 0
        %v5786 = vand.u32 %v2667, 2139095040
        %v5787 = vshrl.u32 %v5786, 23
        %v5788 = vsub.s32 %v5787, 127
        %v5789 = vand.u32 2147483647, %v2667
        %v5790 = vand.u32 %v5789, 8388607
        %v5791 = vor.u32 %v5790, 8388608
        %v5792 = vsub.s32 0, %v5791
        %v5793 = vadd.s32 %v5788, 1
        %vm5794 = vcmp.gt.s32.totalorder %v5793, 0
        %v5795 = vsel %vm5794, %v5793, 0
        %v5796 = vshrl.u32 %v5795, 5
        %v5797 = vand.u32 %v5795, 31
        %v5798 = vsub.s32 32, %v5797
        %v5799 = vshrl.u32 683565275, %v5798
        %v5800 = vshll.u32 683565275, %v5797
        %v5801 = vshrl.u32 2475754826, %v5798
        %v5802 = vor.u32 %v5800, %v5801
        %v5803 = vshll.u32 2475754826, %v5797
        %v5804 = vshrl.u32 2131351028, %v5798
        %v5805 = vor.u32 %v5803, %v5804
        %v5806 = vshll.u32 2131351028, %v5797
        %v5807 = vshrl.u32 2102212464, %v5798
        %v5808 = vor.u32 %v5806, %v5807
        %v5809 = vshll.u32 2102212464, %v5797
        %v5810 = vshrl.u32 920167782, %v5798
        %v5811 = vor.u32 %v5809, %v5810
        %v5812 = vshll.u32 920167782, %v5797
        %v5813 = vshrl.u32 1326507024, %v5798
        %v5814 = vor.u32 %v5812, %v5813
        %vm5815 = vcmp.lt.s32.totalorder %v5796, 1
        %vm5816 = vcmp.lt.s32.totalorder %v5796, 2
        %vm5817 = vcmp.lt.s32.totalorder %v5796, 3
        %vm5818 = vcmp.lt.s32.totalorder %v5796, 4
        %v5819 = vsel %vm5815, %v5799, %v5802
        %v5820 = vsel %vm5818, %v5808, 2102212464
        %v5821 = vsel %vm5817, %v5805, %v5820
        %v5822 = vsel %vm5816, %v5819, %v5821
        %v5823 = vsel %vm5815, %v5802, %v5805
        %v5824 = vsel %vm5818, %v5811, 920167782
        %v5825 = vsel %vm5817, %v5808, %v5824
        %v5826 = vsel %vm5816, %v5823, %v5825
        %v5827 = vsel %vm5815, %v5805, %v5808
        %v5828 = vsel %vm5818, %v5814, 1326507024
        %v5829 = vsel %vm5817, %v5811, %v5828
        %v5830 = vsel %vm5816, %v5827, %v5829
        %v5831 = vshll.u32 %v5791, 8
        %v5832 = vmul.u32.u64.compose %v5831, %v5830
        %v5833 = vextract.low.u32 %v5832
        %v5834 = vextract.high.u32 %v5832
        %v5835 = vmul.u32.u64.compose %v5831, %v5826
        %v5836 = vextract.low.u32 %v5835
        %v5837 = vextract.high.u32 %v5835
        %v5838 = vmul.u32 %v5831, %v5822
        %v5839 = vadd.s32 %v5834, %v5836
        %vm5840 = vc.u32 %v5834, %v5836
        %v5841 = vadd.s32 %v5837, 1
        %v5842 = vsel %vm5840, %v5841, %v5837
        %v5843 = vadd.s32 %v5838, %v5842
        %v5844 = vadd.s32 %v5843, 536870912
        %v5845 = vshrl.u32 %v5844, 30
        %v5846 = vshll.u32 %v5845, 30
        %v5847 = vsub.s32 %v5843, %v5846
        %vm5848 = vcmp.lt.s32.totalorder %v5847, 0
        %v5849 = vsub.s32 0, %v5847
        %v5850 = vsel %vm5848, %v5849, %v5847
        %v5851 = vclz %v5850
        %v5852 = vsub.s32 %v5851, 2
        %vm5853 = vcmp.gt.s32.totalorder 0, %v5852
        %v5854 = vsel %vm5853, 0, %v5852
        %v5855 = vsub.s32 32, %v5854
        %v5856 = vshll.u32 %v5847, %v5854
        %v5857 = vshrl.u32 %v5839, %v5855
        %v5858 = vor.u32 %v5856, %v5857
        %v5859 = vsub.s32 4294967266, %v5854
        %v5860 = vadd.s32 %v5859, 127
        %v5861 = vshll.u32 %v5860, 23
        %v5862 = vor.u32 4788187, %v5861
        %v5863 = vand.u32 2147483647, %v5862
        %v5865 = vcvt.s32.f32 %v5858
        %v5866 = vmul.f32 %v5865, %v5863
        %v5867 = vxor.u32 %v5866, 2147483648
        %v5868 = vsel %vm5785, %v5867, %v5866
        %v5869 = vsub.s32 4, %v5845
        %v5870 = vsel %vm5785, %v5869, %v5845
        %v5871 = vsel %vm5784, %v2667, %v5868
        %v5872 = vsel %vm5784, 0, %v5870
        %v5873 = vcosq.f32.pop %v5871
        %v5874 = vsinq.f32.pop %v5871
        %vm5875 = vweird.f32 %v2667
        %v5876 = vand.u32 %v5872, 3
        %vm5877 = vcmp.lt.s32.totalorder %v5876, 2
        %vm5878 = vcmp.eq.s32.totalorder %v5876, 0
        %v5879 = vxor.u32 %v5874, 2147483648
        %v5880 = vsel %vm5878, %v5873, %v5879
        %vm5881 = vcmp.eq.s32.totalorder %v5876, 2
        %v5882 = vxor.u32 %v5873, 2147483648
        %v5883 = vsel %vm5881, %v5882, %v5874
        %v5884 = vsel %vm5877, %v5880, %v5883
        %v5885 = vsel %vm5875, nan, %v5884
        %v5886 = vand.u32 2147483647, %v2668
        %vm5887 = vcmp.le.f32.partialorder %v5886, 0.7853982
        %vm5888 = vcmp.lt.s32.totalorder %v2668, 0
        %v5889 = vand.u32 %v2668, 2139095040
        %v5890 = vshrl.u32 %v5889, 23
        %v5891 = vsub.s32 %v5890, 127
        %v5892 = vand.u32 2147483647, %v2668
        %v5893 = vand.u32 %v5892, 8388607
        %v5894 = vor.u32 %v5893, 8388608
        %v5895 = vsub.s32 0, %v5894
        %v5896 = vadd.s32 %v5891, 1
        %vm5897 = vcmp.gt.s32.totalorder %v5896, 0
        %v5898 = vsel %vm5897, %v5896, 0
        %v5899 = vshrl.u32 %v5898, 5
        %v5900 = vand.u32 %v5898, 31
        %v5901 = vsub.s32 32, %v5900
        %v5902 = vshrl.u32 683565275, %v5901
        %v5903 = vshll.u32 683565275, %v5900
        %v5904 = vshrl.u32 2475754826, %v5901
        %v5905 = vor.u32 %v5903, %v5904
        %v5906 = vshll.u32 2475754826, %v5900
        %v5907 = vshrl.u32 2131351028, %v5901
        %v5908 = vor.u32 %v5906, %v5907
        %v5909 = vshll.u32 2131351028, %v5900
        %v5910 = vshrl.u32 2102212464, %v5901
        %v5911 = vor.u32 %v5909, %v5910
        %v5912 = vshll.u32 2102212464, %v5900
        %v5913 = vshrl.u32 920167782, %v5901
        %v5914 = vor.u32 %v5912, %v5913
        %v5915 = vshll.u32 920167782, %v5900
        %v5916 = vshrl.u32 1326507024, %v5901
        %v5917 = vor.u32 %v5915, %v5916
        %vm5918 = vcmp.lt.s32.totalorder %v5899, 1
        %vm5919 = vcmp.lt.s32.totalorder %v5899, 2
        %vm5920 = vcmp.lt.s32.totalorder %v5899, 3
        %vm5921 = vcmp.lt.s32.totalorder %v5899, 4
        %v5922 = vsel %vm5918, %v5902, %v5905
        %v5923 = vsel %vm5921, %v5911, 2102212464
        %v5924 = vsel %vm5920, %v5908, %v5923
        %v5925 = vsel %vm5919, %v5922, %v5924
        %v5926 = vsel %vm5918, %v5905, %v5908
        %v5927 = vsel %vm5921, %v5914, 920167782
        %v5928 = vsel %vm5920, %v5911, %v5927
        %v5929 = vsel %vm5919, %v5926, %v5928
        %v5930 = vsel %vm5918, %v5908, %v5911
        %v5931 = vsel %vm5921, %v5917, 1326507024
        %v5932 = vsel %vm5920, %v5914, %v5931
        %v5933 = vsel %vm5919, %v5930, %v5932
        %v5934 = vshll.u32 %v5894, 8
        %v5935 = vmul.u32.u64.compose %v5934, %v5933
        %v5936 = vextract.low.u32 %v5935
        %v5937 = vextract.high.u32 %v5935
        %v5938 = vmul.u32.u64.compose %v5934, %v5929
        %v5939 = vextract.low.u32 %v5938
        %v5940 = vextract.high.u32 %v5938
        %v5941 = vmul.u32 %v5934, %v5925
        %v5942 = vadd.s32 %v5937, %v5939
        %vm5943 = vc.u32 %v5937, %v5939
        %v5944 = vadd.s32 %v5940, 1
        %v5945 = vsel %vm5943, %v5944, %v5940
        %v5946 = vadd.s32 %v5941, %v5945
        %v5947 = vadd.s32 %v5946, 536870912
        %v5948 = vshrl.u32 %v5947, 30
        %v5949 = vshll.u32 %v5948, 30
        %v5950 = vsub.s32 %v5946, %v5949
        %vm5951 = vcmp.lt.s32.totalorder %v5950, 0
        %v5952 = vsub.s32 0, %v5950
        %v5953 = vsel %vm5951, %v5952, %v5950
        %v5954 = vclz %v5953
        %v5955 = vsub.s32 %v5954, 2
        %vm5956 = vcmp.gt.s32.totalorder 0, %v5955
        %v5957 = vsel %vm5956, 0, %v5955
        %v5958 = vsub.s32 32, %v5957
        %v5959 = vshll.u32 %v5950, %v5957
        %v5960 = vshrl.u32 %v5942, %v5958
        %v5961 = vor.u32 %v5959, %v5960
        %v5962 = vsub.s32 4294967266, %v5957
        %v5963 = vadd.s32 %v5962, 127
        %v5964 = vshll.u32 %v5963, 23
        %v5965 = vor.u32 4788187, %v5964
        %v5966 = vand.u32 2147483647, %v5965
        %v5968 = vcvt.s32.f32 %v5961
        %v5969 = vmul.f32 %v5968, %v5966
        %v5970 = vxor.u32 %v5969, 2147483648
        %v5971 = vsel %vm5888, %v5970, %v5969
        %v5972 = vsub.s32 4, %v5948
        %v5973 = vsel %vm5888, %v5972, %v5948
        %v5974 = vsel %vm5887, %v2668, %v5971
        %v5975 = vsel %vm5887, 0, %v5973
        %v5976 = vcosq.f32.pop %v5974
        %v5977 = vsinq.f32.pop %v5974
        %vm5978 = vweird.f32 %v2668
        %v5979 = vand.u32 %v5975, 3
        %vm5980 = vcmp.lt.s32.totalorder %v5979, 2
        %vm5981 = vcmp.eq.s32.totalorder %v5979, 0
        %v5982 = vxor.u32 %v5977, 2147483648
        %v5983 = vsel %vm5981, %v5976, %v5982
        %vm5984 = vcmp.eq.s32.totalorder %v5979, 2
        %v5985 = vxor.u32 %v5976, 2147483648
        %v5986 = vsel %vm5984, %v5985, %v5977
        %v5987 = vsel %vm5980, %v5983, %v5986
        %v5988 = vsel %vm5978, nan, %v5987
        %v5989 = vpack.c.bf16 %v4546, %v4443
        %v5990 = vpack.c.bf16 %v4752, %v4649
        %v5991 = vpack.c.bf16 %v4958, %v4855
        %v5992 = vpack.c.bf16 %v5164, %v5061
        %v5993 = vpack.c.bf16 %v5370, %v5267
        %v5994 = vpack.c.bf16 %v5576, %v5473
        %v5995 = vpack.c.bf16 %v5782, %v5679
        %v5996 = vpack.c.bf16 %v5988, %v5885
        %v5997 = vld [vmem:[#allocation2] sm:$0xff]
        %v5998 = vld [vmem:[#allocation2 + $0x8] sm:$0xff]
        %v5999 = vld [vmem:[#allocation2 + $0x10] sm:$0xff]
        %v6000 = vld [vmem:[#allocation2 + $0x18] sm:$0xff]
        %v6001 = vld [vmem:[#allocation2 + $0x20] sm:$0xff]
        %v6002 = vld [vmem:[#allocation2 + $0x28] sm:$0xff]
        %v6003 = vld [vmem:[#allocation2 + $0x30] sm:$0xff]
        %v6004 = vld [vmem:[#allocation2 + $0x38] sm:$0xff]
        %v6005 = vld [vmem:[#allocation2 + $0x40] sm:$0xff]
        %v6006 = vld [vmem:[#allocation2 + $0x48] sm:$0xff]
        %v6007 = vld [vmem:[#allocation2 + $0x50] sm:$0xff]
        %v6008 = vld [vmem:[#allocation2 + $0x58] sm:$0xff]
        %v6009 = vld [vmem:[#allocation2 + $0x60] sm:$0xff]
        %v6010 = vld [vmem:[#allocation2 + $0x68] sm:$0xff]
        %v6011 = vld [vmem:[#allocation2 + $0x70] sm:$0xff]
        %v6012 = vld [vmem:[#allocation2 + $0x78] sm:$0xff]
        %v6013 = vpack.c.bf16 %v5998, %v5997
        %v6014 = vpack.c.bf16 %v6000, %v5999
        %v6015 = vpack.c.bf16 %v6002, %v6001
        %v6016 = vpack.c.bf16 %v6004, %v6003
        %v6017 = vpack.c.bf16 %v6006, %v6005
        %v6018 = vpack.c.bf16 %v6008, %v6007
        %v6019 = vpack.c.bf16 %v6010, %v6009
        %v6020 = vpack.c.bf16 %v6012, %v6011
        %v6021 = vld [vmem:[%s3] sm:$0xf]
        %v6022 = vld [vmem:[%s3 + $0x4] sm:$0xf]
        %v6023 = vld [vmem:[%s4] sm:$0xf]
        %v6024 = vld [vmem:[%s4 + $0x4] sm:$0xf]
        %v6027 = vunpack.c.l.b16 %v6023
        %v6028 = vunpack.c.l.b16 %v6024
        %v6029 = vpack.c.b16 %v6028, %v6027
        %vm6031 = vcmask 130048
        %v6033 = vsel %vm6031, %v5989, 0
        %v6036 = vsel %vm6031, %v5990, 0
        %v6039 = vsel %vm6031, %v5991, 0
        %v6042 = vsel %vm6031, %v5992, 0
        %v6045 = vsel %vm6031, %v5993, 0
        %v6048 = vsel %vm6031, %v5994, 0
        %v6051 = vsel %vm6031, %v5995, 0
        %v6054 = vsel %vm6031, %v5996, 0
        %6056 = vmatprep.subr.bf16.mxu0 0
        %6057 = vmatpush1.bf16.msra.mxu0 %v6029
        %6058 = vmatprep.subr.bf16.mxu0 0
        %6059 = vmatpush1.bf16.msra.mxu0 0
        %6060 = vmatprep.subr.bf16.mxu0 0
        %6061 = vmatpush1.bf16.msra.mxu0 0
        %6062 = vmatprep.subr.bf16.mxu0 0
        %6063 = vmatpush1.bf16.msra.mxu0 0
        %6064 = vmatprep.subr.bf16.mxu0 0
        %6065 = vmatpush1.bf16.msra.mxu0 0
        %6066 = vmatprep.subr.bf16.mxu0 0
        %6067 = vmatpush1.bf16.msra.mxu0 0
        %6068 = vmatprep.subr.bf16.mxu0 0
        %6069 = vmatpush1.bf16.msra.mxu0 0
        %6070 = vmatprep.subr.bf16.mxu0 0
        %6071 = vmatpush1.bf16.msra.mxu0 0
        %6072 = vmatprep.subr.bf16.mxu0 0
        %6073 = vmatpush1.bf16.msra.mxu0 0
        %6074 = vmatprep.subr.bf16.mxu0 0
        %6075 = vmatpush1.bf16.msra.mxu0 0
        %6076 = vmatprep.subr.bf16.mxu0 0
        %6077 = vmatpush1.bf16.msra.mxu0 0
        %6078 = vmatprep.subr.bf16.mxu0 0
        %6079 = vmatpush1.bf16.msra.mxu0 0
        %6080 = vmatprep.subr.bf16.mxu0 0
        %6081 = vmatpush1.bf16.msra.mxu0 0
        %6082 = vmatprep.subr.bf16.mxu0 0
        %6083 = vmatpush1.bf16.msra.mxu0 0
        %6084 = vmatprep.subr.bf16.mxu0 0
        %6085 = vmatpush1.bf16.msra.mxu0 0
        %6086 = vmatprep.subr.bf16.mxu0 0
        %6087 = vmatpush1.bf16.msra.mxu0 0
        %6088 = vmatprep.mubr.bf16.mxu0 0
        %6089 = vmatmul.mubr.bf16.gmra.mrb[0].mxu0 %v6033
        %v6090 = vpop.f32.mrb[0].mxu0
        %v6091 = vadd.f32 0.0, %v6090
        %v6092 = vpop.f32.mrb[0].mxu0
        %v6093 = vpop.f32.mrb[0].mxu0
        %v6094 = vadd.f32 0.0, %v6093
        %v6095 = vpop.f32.mrb[0].mxu0
        %6096 = vmatprep.mubr.bf16.mxu0 0
        %6097 = vmatmul.mubr.bf16.gmra.mrb[0].mxu0 %v6036
        %v6098 = vpop.f32.mrb[0].mxu0
        %v6099 = vadd.f32 0.0, %v6098
        %v6100 = vpop.f32.mrb[0].mxu0
        %v6101 = vpop.f32.mrb[0].mxu0
        %v6102 = vadd.f32 0.0, %v6101
        %v6103 = vpop.f32.mrb[0].mxu0
        %6104 = vmatprep.mubr.bf16.mxu0 0
        %6105 = vmatmul.mubr.bf16.gmra.mrb[0].mxu0 %v6039
        %v6106 = vpop.f32.mrb[0].mxu0
        %v6107 = vadd.f32 0.0, %v6106
        %v6108 = vpop.f32.mrb[0].mxu0
        %v6109 = vpop.f32.mrb[0].mxu0
        %v6110 = vadd.f32 0.0, %v6109
        %v6111 = vpop.f32.mrb[0].mxu0
        %6112 = vmatprep.mubr.bf16.mxu0 0
        %6113 = vmatmul.mubr.bf16.gmra.mrb[0].mxu0 %v6042
        %v6114 = vpop.f32.mrb[0].mxu0
        %v6115 = vadd.f32 0.0, %v6114
        %v6116 = vpop.f32.mrb[0].mxu0
        %v6117 = vpop.f32.mrb[0].mxu0
        %v6118 = vadd.f32 0.0, %v6117
        %v6119 = vpop.f32.mrb[0].mxu0
        %6120 = vmatprep.mubr.bf16.mxu0 0
        %6121 = vmatmul.mubr.bf16.gmra.mrb[0].mxu0 %v6045
        %v6122 = vpop.f32.mrb[0].mxu0
        %v6123 = vadd.f32 0.0, %v6122
        %v6124 = vpop.f32.mrb[0].mxu0
        %v6125 = vpop.f32.mrb[0].mxu0
        %v6126 = vadd.f32 0.0, %v6125
        %v6127 = vpop.f32.mrb[0].mxu0
        %6128 = vmatprep.mubr.bf16.mxu0 0
        %6129 = vmatmul.mubr.bf16.gmra.mrb[0].mxu0 %v6048
        %v6130 = vpop.f32.mrb[0].mxu0
        %v6131 = vadd.f32 0.0, %v6130
        %v6132 = vpop.f32.mrb[0].mxu0
        %v6133 = vpop.f32.mrb[0].mxu0
        %v6134 = vadd.f32 0.0, %v6133
        %v6135 = vpop.f32.mrb[0].mxu0
        %6136 = vmatprep.mubr.bf16.mxu0 0
        %6137 = vmatmul.mubr.bf16.gmra.mrb[0].mxu0 %v6051
        %v6138 = vpop.f32.mrb[0].mxu0
        %v6139 = vadd.f32 0.0, %v6138
        %v6140 = vpop.f32.mrb[0].mxu0
        %v6141 = vpop.f32.mrb[0].mxu0
        %v6142 = vadd.f32 0.0, %v6141
        %v6143 = vpop.f32.mrb[0].mxu0
        %6144 = vmatprep.mubr.bf16.mxu0 0
        %6145 = vmatmul.mubr.bf16.gmra.mrb[0].mxu0 %v6054
        %v6146 = vpop.f32.mrb[0].mxu0
        %v6147 = vadd.f32 0.0, %v6146
        %v6148 = vpop.f32.mrb[0].mxu0
        %v6149 = vpop.f32.mrb[0].mxu0
        %v6150 = vadd.f32 0.0, %v6149
        %v6151 = vpop.f32.mrb[0].mxu0
        %6152 = vdwg.mxu0
        %v6155 = vunpack.c.l.b16 %v6021
        %v6156 = vunpack.c.l.b16 %v6022
        %v6157 = vpack.c.b16 %v6156, %v6155
        %v6160 = vsel %vm6031, %v4333, 0
        %v6163 = vsel %vm6031, %v4334, 0
        %v6166 = vsel %vm6031, %v4335, 0
        %v6169 = vsel %vm6031, %v4336, 0
        %v6172 = vsel %vm6031, %v4337, 0
        %v6175 = vsel %vm6031, %v4338, 0
        %v6178 = vsel %vm6031, %v4339, 0
        %v6181 = vsel %vm6031, %v4340, 0
        %6183 = vmatprep.subr.bf16.mxu0 0
        %6184 = vmatpush1.bf16.msra.mxu0 %v6157
        %6185 = vmatprep.subr.bf16.mxu0 0
        %6186 = vmatpush1.bf16.msra.mxu0 0
        %6187 = vmatprep.subr.bf16.mxu0 0
        %6188 = vmatpush1.bf16.msra.mxu0 0
        %6189 = vmatprep.subr.bf16.mxu0 0
        %6190 = vmatpush1.bf16.msra.mxu0 0
        %6191 = vmatprep.subr.bf16.mxu0 0
        %6192 = vmatpush1.bf16.msra.mxu0 0
        %6193 = vmatprep.subr.bf16.mxu0 0
        %6194 = vmatpush1.bf16.msra.mxu0 0
        %6195 = vmatprep.subr.bf16.mxu0 0
        %6196 = vmatpush1.bf16.msra.mxu0 0
        %6197 = vmatprep.subr.bf16.mxu0 0
        %6198 = vmatpush1.bf16.msra.mxu0 0
        %6199 = vmatprep.subr.bf16.mxu0 0
        %6200 = vmatpush1.bf16.msra.mxu0 0
        %6201 = vmatprep.subr.bf16.mxu0 0
        %6202 = vmatpush1.bf16.msra.mxu0 0
        %6203 = vmatprep.subr.bf16.mxu0 0
        %6204 = vmatpush1.bf16.msra.mxu0 0
        %6205 = vmatprep.subr.bf16.mxu0 0
        %6206 = vmatpush1.bf16.msra.mxu0 0
        %6207 = vmatprep.subr.bf16.mxu0 0
        %6208 = vmatpush1.bf16.msra.mxu0 0
        %6209 = vmatprep.subr.bf16.mxu0 0
        %6210 = vmatpush1.bf16.msra.mxu0 0
        %6211 = vmatprep.subr.bf16.mxu0 0
        %6212 = vmatpush1.bf16.msra.mxu0 0
        %6213 = vmatprep.subr.bf16.mxu0 0
        %6214 = vmatpush1.bf16.msra.mxu0 0
        %6215 = vmatprep.mubr.bf16.mxu0 0
        %6216 = vmatmul.mubr.bf16.gmra.mrb[0].mxu0 %v6160
        %v6217 = vpop.f32.mrb[0].mxu0
        %v6218 = vadd.f32 %v6091, %v6217
        %v6219 = vpop.f32.mrb[0].mxu0
        %v6220 = vpop.f32.mrb[0].mxu0
        %v6221 = vadd.f32 %v6094, %v6220
        %v6222 = vpop.f32.mrb[0].mxu0
        %6223 = vmatprep.mubr.bf16.mxu0 0
        %6224 = vmatmul.mubr.bf16.gmra.mrb[0].mxu0 %v6163
        %v6225 = vpop.f32.mrb[0].mxu0
        %v6226 = vadd.f32 %v6099, %v6225
        %v6227 = vpop.f32.mrb[0].mxu0
        %v6228 = vpop.f32.mrb[0].mxu0
        %v6229 = vadd.f32 %v6102, %v6228
        %v6230 = vpop.f32.mrb[0].mxu0
        %6231 = vmatprep.mubr.bf16.mxu0 0
        %6232 = vmatmul.mubr.bf16.gmra.mrb[0].mxu0 %v6166
        %v6233 = vpop.f32.mrb[0].mxu0
        %v6234 = vadd.f32 %v6107, %v6233
        %v6235 = vpop.f32.mrb[0].mxu0
        %v6236 = vpop.f32.mrb[0].mxu0
        %v6237 = vadd.f32 %v6110, %v6236
        %v6238 = vpop.f32.mrb[0].mxu0
        %6239 = vmatprep.mubr.bf16.mxu0 0
        %6240 = vmatmul.mubr.bf16.gmra.mrb[0].mxu0 %v6169
        %v6241 = vpop.f32.mrb[0].mxu0
        %v6242 = vadd.f32 %v6115, %v6241
        %v6243 = vpop.f32.mrb[0].mxu0
        %v6244 = vpop.f32.mrb[0].mxu0
        %v6245 = vadd.f32 %v6118, %v6244
        %v6246 = vpop.f32.mrb[0].mxu0
        %6247 = vmatprep.mubr.bf16.mxu0 0
        %6248 = vmatmul.mubr.bf16.gmra.mrb[0].mxu0 %v6172
        %v6249 = vpop.f32.mrb[0].mxu0
        %v6250 = vadd.f32 %v6123, %v6249
        %v6251 = vpop.f32.mrb[0].mxu0
        %v6252 = vpop.f32.mrb[0].mxu0
        %v6253 = vadd.f32 %v6126, %v6252
        %v6254 = vpop.f32.mrb[0].mxu0
        %6255 = vmatprep.mubr.bf16.mxu0 0
        %6256 = vmatmul.mubr.bf16.gmra.mrb[0].mxu0 %v6175
        %v6257 = vpop.f32.mrb[0].mxu0
        %v6258 = vadd.f32 %v6131, %v6257
        %v6259 = vpop.f32.mrb[0].mxu0
        %v6260 = vpop.f32.mrb[0].mxu0
        %v6261 = vadd.f32 %v6134, %v6260
        %v6262 = vpop.f32.mrb[0].mxu0
        %6263 = vmatprep.mubr.bf16.mxu0 0
        %6264 = vmatmul.mubr.bf16.gmra.mrb[0].mxu0 %v6178
        %v6265 = vpop.f32.mrb[0].mxu0
        %v6266 = vadd.f32 %v6139, %v6265
        %v6267 = vpop.f32.mrb[0].mxu0
        %v6268 = vpop.f32.mrb[0].mxu0
        %v6269 = vadd.f32 %v6142, %v6268
        %v6270 = vpop.f32.mrb[0].mxu0
        %6271 = vmatprep.mubr.bf16.mxu0 0
        %6272 = vmatmul.mubr.bf16.gmra.mrb[0].mxu0 %v6181
        %v6273 = vpop.f32.mrb[0].mxu0
        %v6274 = vadd.f32 %v6147, %v6273
        %v6275 = vpop.f32.mrb[0].mxu0
        %v6276 = vpop.f32.mrb[0].mxu0
        %v6277 = vadd.f32 %v6150, %v6276
        %v6278 = vpop.f32.mrb[0].mxu0
        %6279 = vdwg.mxu0
        %v6280 = vld [vmem:[%s5] sm:$0x3]
        %v6282 = vsel %vm2384, %v6013, 0
        %v6285 = vsel %vm2384, %v6014, 0
        %v6288 = vsel %vm2384, %v6015, 0
        %v6291 = vsel %vm2384, %v6016, 0
        %v6294 = vsel %vm2384, %v6017, 0
        %v6297 = vsel %vm2384, %v6018, 0
        %v6300 = vsel %vm2384, %v6019, 0
        %v6303 = vsel %vm2384, %v6020, 0
        %vm6305 = vcmask 1041408
        %v6307 = vsel %vm6305, %v6280, 0
        %6309 = vmatprep.subr.bf16.mxu0 0
        %6310 = vmatpush1.bf16.msra.mxu0 %v6307
        %6311 = vmatprep.subr.bf16.mxu0 0
        %6312 = vmatpush1.bf16.msra.mxu0 0
        %6313 = vmatprep.subr.bf16.mxu0 0
        %6314 = vmatpush1.bf16.msra.mxu0 0
        %6315 = vmatprep.subr.bf16.mxu0 0
        %6316 = vmatpush1.bf16.msra.mxu0 0
        %6317 = vmatprep.subr.bf16.mxu0 0
        %6318 = vmatpush1.bf16.msra.mxu0 0
        %6319 = vmatprep.subr.bf16.mxu0 0
        %6320 = vmatpush1.bf16.msra.mxu0 0
        %6321 = vmatprep.subr.bf16.mxu0 0
        %6322 = vmatpush1.bf16.msra.mxu0 0
        %6323 = vmatprep.subr.bf16.mxu0 0
        %6324 = vmatpush1.bf16.msra.mxu0 0
        %6325 = vmatprep.subr.bf16.mxu0 0
        %6326 = vmatpush1.bf16.msra.mxu0 0
        %6327 = vmatprep.subr.bf16.mxu0 0
        %6328 = vmatpush1.bf16.msra.mxu0 0
        %6329 = vmatprep.subr.bf16.mxu0 0
        %6330 = vmatpush1.bf16.msra.mxu0 0
        %6331 = vmatprep.subr.bf16.mxu0 0
        %6332 = vmatpush1.bf16.msra.mxu0 0
        %6333 = vmatprep.subr.bf16.mxu0 0
        %6334 = vmatpush1.bf16.msra.mxu0 0
        %6335 = vmatprep.subr.bf16.mxu0 0
        %6336 = vmatpush1.bf16.msra.mxu0 0
        %6337 = vmatprep.subr.bf16.mxu0 0
        %6338 = vmatpush1.bf16.msra.mxu0 0
        %6339 = vmatprep.subr.bf16.mxu0 0
        %6340 = vmatpush1.bf16.msra.mxu0 0
        %6341 = vmatprep.mubr.bf16.mxu0 0
        %6342 = vmatmul.mubr.bf16.gmra.mrb[0].mxu0 %v6282
        %v6343 = vpop.f32.mrb[0].mxu0
        %v6344 = vadd.f32 0.0, %v6343
        %v6345 = vpop.f32.mrb[0].mxu0
        %v6346 = vpop.f32.mrb[0].mxu0
        %v6347 = vadd.f32 0.0, %v6346
        %v6348 = vpop.f32.mrb[0].mxu0
        %6349 = vmatprep.mubr.bf16.mxu0 0
        %6350 = vmatmul.mubr.bf16.gmra.mrb[0].mxu0 %v6285
        %v6351 = vpop.f32.mrb[0].mxu0
        %v6352 = vadd.f32 0.0, %v6351
        %v6353 = vpop.f32.mrb[0].mxu0
        %v6354 = vpop.f32.mrb[0].mxu0
        %v6355 = vadd.f32 0.0, %v6354
        %v6356 = vpop.f32.mrb[0].mxu0
        %6357 = vmatprep.mubr.bf16.mxu0 0
        %6358 = vmatmul.mubr.bf16.gmra.mrb[0].mxu0 %v6288
        %v6359 = vpop.f32.mrb[0].mxu0
        %v6360 = vadd.f32 0.0, %v6359
        %v6361 = vpop.f32.mrb[0].mxu0
        %v6362 = vpop.f32.mrb[0].mxu0
        %v6363 = vadd.f32 0.0, %v6362
        %v6364 = vpop.f32.mrb[0].mxu0
        %6365 = vmatprep.mubr.bf16.mxu0 0
        %6366 = vmatmul.mubr.bf16.gmra.mrb[0].mxu0 %v6291
        %v6367 = vpop.f32.mrb[0].mxu0
        %v6368 = vadd.f32 0.0, %v6367
        %v6369 = vpop.f32.mrb[0].mxu0
        %v6370 = vpop.f32.mrb[0].mxu0
        %v6371 = vadd.f32 0.0, %v6370
        %v6372 = vpop.f32.mrb[0].mxu0
        %6373 = vmatprep.mubr.bf16.mxu0 0
        %6374 = vmatmul.mubr.bf16.gmra.mrb[0].mxu0 %v6294
        %v6375 = vpop.f32.mrb[0].mxu0
        %v6376 = vadd.f32 0.0, %v6375
        %v6377 = vpop.f32.mrb[0].mxu0
        %v6378 = vpop.f32.mrb[0].mxu0
        %v6379 = vadd.f32 0.0, %v6378
        %v6380 = vpop.f32.mrb[0].mxu0
        %6381 = vmatprep.mubr.bf16.mxu0 0
        %6382 = vmatmul.mubr.bf16.gmra.mrb[0].mxu0 %v6297
        %v6383 = vpop.f32.mrb[0].mxu0
        %v6384 = vadd.f32 0.0, %v6383
        %v6385 = vpop.f32.mrb[0].mxu0
        %v6386 = vpop.f32.mrb[0].mxu0
        %v6387 = vadd.f32 0.0, %v6386
        %v6388 = vpop.f32.mrb[0].mxu0
        %6389 = vmatprep.mubr.bf16.mxu0 0
        %6390 = vmatmul.mubr.bf16.gmra.mrb[0].mxu0 %v6300
        %v6391 = vpop.f32.mrb[0].mxu0
        %v6392 = vadd.f32 0.0, %v6391
        %v6393 = vpop.f32.mrb[0].mxu0
        %v6394 = vpop.f32.mrb[0].mxu0
        %v6395 = vadd.f32 0.0, %v6394
        %v6396 = vpop.f32.mrb[0].mxu0
        %6397 = vmatprep.mubr.bf16.mxu0 0
        %6398 = vmatmul.mubr.bf16.gmra.mrb[0].mxu0 %v6303
        %v6399 = vpop.f32.mrb[0].mxu0
        %v6400 = vadd.f32 0.0, %v6399
        %v6401 = vpop.f32.mrb[0].mxu0
        %v6402 = vpop.f32.mrb[0].mxu0
        %v6403 = vadd.f32 0.0, %v6402
        %v6404 = vpop.f32.mrb[0].mxu0
        %6405 = vdwg.mxu0
        %v6406 = vadd.f32 %v6218, %v6344
        %v6407 = vadd.f32 %v6221, %v6347
        %v6408 = vadd.f32 %v6226, %v6352
        %v6409 = vadd.f32 %v6229, %v6355
        %v6410 = vadd.f32 %v6234, %v6360
        %v6411 = vadd.f32 %v6237, %v6363
        %v6412 = vadd.f32 %v6242, %v6368
        %v6413 = vadd.f32 %v6245, %v6371
        %v6414 = vadd.f32 %v6250, %v6376
        %v6415 = vadd.f32 %v6253, %v6379
        %v6416 = vadd.f32 %v6258, %v6384
        %v6417 = vadd.f32 %v6261, %v6387
        %v6418 = vadd.f32 %v6266, %v6392
        %v6419 = vadd.f32 %v6269, %v6395
        %v6420 = vadd.f32 %v6274, %v6400
        %v6421 = vadd.f32 %v6277, %v6403
        %v6422 = vld [vmem:[%s6] sm:$0x1]
        %v6424 = vlaneseq
        %v6425 = vshrl.u32 %v6424, 7
        %v6426 = vsub.s32 0, %v6425
        %v6427 = vrot.slane %v6422, %v6426
        %v6429 = vadd.f32 %v6406, %v6427
        %v6430 = vadd.f32 %v6407, %v6427
        %v6431 = vadd.f32 %v6408, %v6427
        %v6432 = vadd.f32 %v6409, %v6427
        %v6433 = vadd.f32 %v6410, %v6427
        %v6434 = vadd.f32 %v6411, %v6427
        %v6435 = vadd.f32 %v6412, %v6427
        %v6436 = vadd.f32 %v6413, %v6427
        %v6437 = vadd.f32 %v6414, %v6427
        %v6438 = vadd.f32 %v6415, %v6427
        %v6439 = vadd.f32 %v6416, %v6427
        %v6440 = vadd.f32 %v6417, %v6427
        %v6441 = vadd.f32 %v6418, %v6427
        %v6442 = vadd.f32 %v6419, %v6427
        %v6443 = vadd.f32 %v6420, %v6427
        %v6444 = vadd.f32 %v6421, %v6427
        %v6445 = vmax.f32 %v6429, 0.0
        %v6446 = vmax.f32 %v6430, 0.0
        %v6447 = vmax.f32 %v6431, 0.0
        %v6448 = vmax.f32 %v6432, 0.0
        %v6449 = vmax.f32 %v6433, 0.0
        %v6450 = vmax.f32 %v6434, 0.0
        %v6451 = vmax.f32 %v6435, 0.0
        %v6452 = vmax.f32 %v6436, 0.0
        %v6453 = vmax.f32 %v6437, 0.0
        %v6454 = vmax.f32 %v6438, 0.0
        %v6455 = vmax.f32 %v6439, 0.0
        %v6456 = vmax.f32 %v6440, 0.0
        %v6457 = vmax.f32 %v6441, 0.0
        %v6458 = vmax.f32 %v6442, 0.0
        %v6459 = vmax.f32 %v6443, 0.0
        %v6460 = vmax.f32 %v6444, 0.0
        %v6461 = vld [vmem:[%s7] sm:$0xf]
        %v6462 = vld [vmem:[%s7 + $0x4] sm:$0xf]
        %v6463 = vld [vmem:[%s7 + $0x8] sm:$0xf]
        %v6464 = vld [vmem:[%s7 + $0xc] sm:$0xf]
        %v6465 = vld [vmem:[%s8] sm:$0x1]
        %v6466 = vpack.c.bf16 %v6446, %v6445
        %v6467 = vpack.c.bf16 %v6448, %v6447
        %v6468 = vpack.c.bf16 %v6450, %v6449
        %v6469 = vpack.c.bf16 %v6452, %v6451
        %v6470 = vpack.c.bf16 %v6454, %v6453
        %v6471 = vpack.c.bf16 %v6456, %v6455
        %v6472 = vpack.c.bf16 %v6458, %v6457
        %v6473 = vpack.c.bf16 %v6460, %v6459
        %v6475 = vlaneseq
        %v6476 = vshrl.u32 %v6475, 7
        %v6477 = vsub.s32 0, %v6476
        %v6478 = vrot.slane %v6465, %v6477
        %v6484 = vunpack.c.l.b16 %v6461
        %v6485 = vunpack.c.l.b16 %v6462
        %v6486 = vunpack.c.l.b16 %v6463
        %v6487 = vunpack.c.l.b16 %v6464
        %v6488 = vpack.c.b16 %v6485, %v6484
        %v6489 = vpack.c.b16 %v6487, %v6486
        %vm6492 = vcmask 261120
        %v6494 = vsel %vm6492, %v6466, 0
        %v6497 = vsel %vm6492, %v6467, 0
        %v6500 = vsel %vm6492, %v6468, 0
        %v6503 = vsel %vm6492, %v6469, 0
        %v6506 = vsel %vm6492, %v6470, 0
        %v6509 = vsel %vm6492, %v6471, 0
        %v6512 = vsel %vm6492, %v6472, 0
        %v6515 = vsel %vm6492, %v6473, 0
        %6517 = vmatprep.subr.bf16.mxu0 0
        %6518 = vmatpush1.bf16.msra.mxu0 %v6488
        %6519 = vmatprep.subr.bf16.mxu0 0
        %6520 = vmatpush1.bf16.msra.mxu0 %v6489
        %6521 = vmatprep.subr.bf16.mxu0 0
        %6522 = vmatpush1.bf16.msra.mxu0 0
        %6523 = vmatprep.subr.bf16.mxu0 0
        %6524 = vmatpush1.bf16.msra.mxu0 0
        %6525 = vmatprep.subr.bf16.mxu0 0
        %6526 = vmatpush1.bf16.msra.mxu0 0
        %6527 = vmatprep.subr.bf16.mxu0 0
        %6528 = vmatpush1.bf16.msra.mxu0 0
        %6529 = vmatprep.subr.bf16.mxu0 0
        %6530 = vmatpush1.bf16.msra.mxu0 0
        %6531 = vmatprep.subr.bf16.mxu0 0
        %6532 = vmatpush1.bf16.msra.mxu0 0
        %6533 = vmatprep.subr.bf16.mxu0 0
        %6534 = vmatpush1.bf16.msra.mxu0 0
        %6535 = vmatprep.subr.bf16.mxu0 0
        %6536 = vmatpush1.bf16.msra.mxu0 0
        %6537 = vmatprep.subr.bf16.mxu0 0
        %6538 = vmatpush1.bf16.msra.mxu0 0
        %6539 = vmatprep.subr.bf16.mxu0 0
        %6540 = vmatpush1.bf16.msra.mxu0 0
        %6541 = vmatprep.subr.bf16.mxu0 0
        %6542 = vmatpush1.bf16.msra.mxu0 0
        %6543 = vmatprep.subr.bf16.mxu0 0
        %6544 = vmatpush1.bf16.msra.mxu0 0
        %6545 = vmatprep.subr.bf16.mxu0 0
        %6546 = vmatpush1.bf16.msra.mxu0 0
        %6547 = vmatprep.subr.bf16.mxu0 0
        %6548 = vmatpush1.bf16.msra.mxu0 0
        %6549 = vmatprep.mubr.bf16.mxu0 0
        %6550 = vmatmul.mubr.bf16.gmra.mrb[0].mxu0 %v6494
        %v6551 = vpop.f32.mrb[0].mxu0
        %v6552 = vadd.f32 %v6478, %v6551
        %v6553 = vpop.f32.mrb[0].mxu0
        %v6554 = vpop.f32.mrb[0].mxu0
        %v6555 = vadd.f32 %v6478, %v6554
        %v6556 = vpop.f32.mrb[0].mxu0
        %6557 = vmatprep.mubr.bf16.mxu0 0
        %6558 = vmatmul.mubr.bf16.gmra.mrb[0].mxu0 %v6497
        %v6559 = vpop.f32.mrb[0].mxu0
        %v6560 = vadd.f32 %v6478, %v6559
        %v6561 = vpop.f32.mrb[0].mxu0
        %v6562 = vpop.f32.mrb[0].mxu0
        %v6563 = vadd.f32 %v6478, %v6562
        %v6564 = vpop.f32.mrb[0].mxu0
        %6565 = vmatprep.mubr.bf16.mxu0 0
        %6566 = vmatmul.mubr.bf16.gmra.mrb[0].mxu0 %v6500
        %v6567 = vpop.f32.mrb[0].mxu0
        %v6568 = vadd.f32 %v6478, %v6567
        %v6569 = vpop.f32.mrb[0].mxu0
        %v6570 = vpop.f32.mrb[0].mxu0
        %v6571 = vadd.f32 %v6478, %v6570
        %v6572 = vpop.f32.mrb[0].mxu0
        %6573 = vmatprep.mubr.bf16.mxu0 0
        %6574 = vmatmul.mubr.bf16.gmra.mrb[0].mxu0 %v6503
        %v6575 = vpop.f32.mrb[0].mxu0
        %v6576 = vadd.f32 %v6478, %v6575
        %v6577 = vpop.f32.mrb[0].mxu0
        %v6578 = vpop.f32.mrb[0].mxu0
        %v6579 = vadd.f32 %v6478, %v6578
        %v6580 = vpop.f32.mrb[0].mxu0
        %6581 = vmatprep.mubr.bf16.mxu0 0
        %6582 = vmatmul.mubr.bf16.gmra.mrb[0].mxu0 %v6506
        %v6583 = vpop.f32.mrb[0].mxu0
        %v6584 = vadd.f32 %v6478, %v6583
        %v6585 = vpop.f32.mrb[0].mxu0
        %v6586 = vpop.f32.mrb[0].mxu0
        %v6587 = vadd.f32 %v6478, %v6586
        %v6588 = vpop.f32.mrb[0].mxu0
        %6589 = vmatprep.mubr.bf16.mxu0 0
        %6590 = vmatmul.mubr.bf16.gmra.mrb[0].mxu0 %v6509
        %v6591 = vpop.f32.mrb[0].mxu0
        %v6592 = vadd.f32 %v6478, %v6591
        %v6593 = vpop.f32.mrb[0].mxu0
        %v6594 = vpop.f32.mrb[0].mxu0
        %v6595 = vadd.f32 %v6478, %v6594
        %v6596 = vpop.f32.mrb[0].mxu0
        %6597 = vmatprep.mubr.bf16.mxu0 0
        %6598 = vmatmul.mubr.bf16.gmra.mrb[0].mxu0 %v6512
        %v6599 = vpop.f32.mrb[0].mxu0
        %v6600 = vadd.f32 %v6478, %v6599
        %v6601 = vpop.f32.mrb[0].mxu0
        %v6602 = vpop.f32.mrb[0].mxu0
        %v6603 = vadd.f32 %v6478, %v6602
        %v6604 = vpop.f32.mrb[0].mxu0
        %6605 = vmatprep.mubr.bf16.mxu0 0
        %6606 = vmatmul.mubr.bf16.gmra.mrb[0].mxu0 %v6515
        %v6607 = vpop.f32.mrb[0].mxu0
        %v6608 = vadd.f32 %v6478, %v6607
        %v6609 = vpop.f32.mrb[0].mxu0
        %v6610 = vpop.f32.mrb[0].mxu0
        %v6611 = vadd.f32 %v6478, %v6610
        %v6612 = vpop.f32.mrb[0].mxu0
        %6613 = vdwg.mxu0
        %v6614 = vmax.f32 %v6552, 0.0
        %v6615 = vmax.f32 %v6555, 0.0
        %v6616 = vmax.f32 %v6560, 0.0
        %v6617 = vmax.f32 %v6563, 0.0
        %v6618 = vmax.f32 %v6568, 0.0
        %v6619 = vmax.f32 %v6571, 0.0
        %v6620 = vmax.f32 %v6576, 0.0
        %v6621 = vmax.f32 %v6579, 0.0
        %v6622 = vmax.f32 %v6584, 0.0
        %v6623 = vmax.f32 %v6587, 0.0
        %v6624 = vmax.f32 %v6592, 0.0
        %v6625 = vmax.f32 %v6595, 0.0
        %v6626 = vmax.f32 %v6600, 0.0
        %v6627 = vmax.f32 %v6603, 0.0
        %v6628 = vmax.f32 %v6608, 0.0
        %v6629 = vmax.f32 %v6611, 0.0
        %v6630 = vld [vmem:[%s9] sm:$0xf]
        %v6631 = vpack.c.bf16 %v6615, %v6614
        %v6632 = vpack.c.bf16 %v6617, %v6616
        %v6633 = vpack.c.bf16 %v6619, %v6618
        %v6634 = vpack.c.bf16 %v6621, %v6620
        %v6635 = vpack.c.bf16 %v6623, %v6622
        %v6636 = vpack.c.bf16 %v6625, %v6624
        %v6637 = vpack.c.bf16 %v6627, %v6626
        %v6638 = vpack.c.bf16 %v6629, %v6628
        %v6639 = vld [vmem:[%s10] sm:$0xff]
        %6641 = vset.pattern.permute.xlu0 0
        %6642 = vperm.xlu0 %6641, %v6639
        %v6643 = vpop.permute.xlu0 %6642
        %v6646 = vsel %vm6492, %v6630, 0
        %v6649 = vsel %vm6492, %v6631, 0
        %v6652 = vsel %vm6492, %v6632, 0
        %v6655 = vsel %vm6492, %v6633, 0
        %v6658 = vsel %vm6492, %v6634, 0
        %v6661 = vsel %vm6492, %v6635, 0
        %v6664 = vsel %vm6492, %v6636, 0
        %v6667 = vsel %vm6492, %v6637, 0
        %v6670 = vsel %vm6492, %v6638, 0
        %6672 = vmatprep.subr.bf16.mxu0 0
        %6673 = vmatpush1.bf16.xpose.msra.mxu0 %v6649
        %6674 = vmatprep.subr.bf16.mxu0 0
        %6675 = vmatpush1.bf16.xpose.msra.mxu0 %v6652
        %6676 = vmatprep.subr.bf16.mxu0 0
        %6677 = vmatpush1.bf16.xpose.msra.mxu0 %v6655
        %6678 = vmatprep.subr.bf16.mxu0 0
        %6679 = vmatpush1.bf16.xpose.msra.mxu0 %v6658
        %6680 = vmatprep.subr.bf16.mxu0 0
        %6681 = vmatpush1.bf16.xpose.msra.mxu0 %v6661
        %6682 = vmatprep.subr.bf16.mxu0 0
        %6683 = vmatpush1.bf16.xpose.msra.mxu0 %v6664
        %6684 = vmatprep.subr.bf16.mxu0 0
        %6685 = vmatpush1.bf16.xpose.msra.mxu0 %v6667
        %6686 = vmatprep.subr.bf16.mxu0 0
        %6687 = vmatpush1.bf16.xpose.msra.mxu0 %v6670
        %6688 = vmatprep.subr.bf16.mxu0 0
        %6689 = vmatpush1.bf16.xpose.msra.mxu0 0
        %6690 = vmatprep.subr.bf16.mxu0 0
        %6691 = vmatpush1.bf16.xpose.msra.mxu0 0
        %6692 = vmatprep.subr.bf16.mxu0 0
        %6693 = vmatpush1.bf16.xpose.msra.mxu0 0
        %6694 = vmatprep.subr.bf16.mxu0 0
        %6695 = vmatpush1.bf16.xpose.msra.mxu0 0
        %6696 = vmatprep.subr.bf16.mxu0 0
        %6697 = vmatpush1.bf16.xpose.msra.mxu0 0
        %6698 = vmatprep.subr.bf16.mxu0 0
        %6699 = vmatpush1.bf16.xpose.msra.mxu0 0
        %6700 = vmatprep.subr.bf16.mxu0 0
        %6701 = vmatpush1.bf16.xpose.msra.mxu0 0
        %6702 = vmatprep.subr.bf16.mxu0 0
        %6703 = vmatpush1.bf16.xpose.msra.mxu0 0
        %6704 = vmatprep.mubr.bf16.mxu0 0
        %6705 = vmatmul.mubr.bf16.gmra.mrb[0].mxu0 %v6646
        %v6706 = vpop.f32.mrb[0].mxu0
        %v6707 = vadd.f32 %v6643, %v6706
        %v6708 = vpop.f32.mrb[0].mxu0
        %v6709 = vpop.f32.mrb[0].mxu0
        %v6710 = vpop.f32.mrb[0].mxu0
        %6711 = vdwg.mxu0
        %6712 = vst [vmem:[%s463] sm:$0xff] %v6707
      $region72: #{subdivision_inference.3} parent=63 // pred_fallthru
        _
      %p6713 = scmp.lt.s32.totalorder %s27, 1
      %s6714 = scalar_select %p6713, %s27, 1
      %p6715 = scmp.lt.s32.totalorder %s28, 0
      %s6716 = scalar_select %p6715, %s28, 0
      %s6717 = sadd.s32 %s6716, %s6714
      %s6718 = smul.addr %s6717, 8
      %s6719 = scalar_lea.vmem %s11, %s6718
      // Predicated region
      $region73: #{subdivision_inference.3} parent=63 // pred_check
        %p6720 = pneg %p306
      $region74: #{subdivision_inference.3} parent=63 // pred_check_branch
        %6722 = sbr.rel (%p6720) target = $region76
      $region75: #{subdivision_inference.3} parent=63 // pred_region
        _
      $region76: #{subdivision_inference.3} parent=63 // pred_fallthru
        _
    $region64: #{subdivision_inference.3} parent=5 // pred_fallthru
      _
    %p6723 = scmp.le.s32.totalorder 2, %s17
    // Predicated region
    $region77: #{subdivision_inference.3} parent=5 // pred_check
      %p6724 = pneg %p6723
    $region78: #{subdivision_inference.3} parent=5 // pred_check_branch
      %6726 = sbr.rel (%p6724) target = $region80
    $region79: #{subdivision_inference.3} parent=5 // pred_region
      %s6727 = ssub.s32 %s17, 2
      // Predicated region
      $region81: #{subdivision_inference.3} parent=79 // pred_check
        %p6728 = pneg %p312
      $region82: #{subdivision_inference.3} parent=79 // pred_check_branch
        %6730 = sbr.rel (%p6728) target = $region84
      $region83: #{subdivision_inference.3} parent=79 // pred_region
        %p6731 = scmp.lt.s32.totalorder %s30, 1
        %s6732 = scalar_select %p6731, %s30, 1
        %p6733 = scmp.lt.s32.totalorder %s31, 0
        %s6734 = scalar_select %p6733, %s31, 0
        %s6735 = sadd.s32 %s6734, %s6732
        %s6736 = smul.addr %s6735, 8
        %s6737 = scalar_lea.vmem %s11, %s6736
      $region84: #{subdivision_inference.3} parent=79 // pred_fallthru
        _
    $region80: #{subdivision_inference.3} parent=5 // pred_fallthru
      _
  $region6: #{subdivision_inference.3} parent=0 // loop_footer
    %s21 = sadd.s32 1, %s17
  $region7: #{subdivision_inference.3} parent=0 // loop_footer_branch
    %16 = sbr.rel target = $region3
  $region8: #{subdivision_inference.3} parent=0 // loop_exit
    _

</llo_original>
